<compile_context>
chip_gen: v5e
topology: v5e:2x2
jax: 0.10.0
libtpu: 0.0.40
codegen_flags: <defaults>
</compile_context>

<pallas_src>
import functools

import jax
import jax.numpy as jnp
from jax import lax
from jax.experimental import pallas as pl
from jax.experimental.pallas import tpu as pltpu


# ============================================================================
# Runtime probes / tile planning
# ============================================================================
def _ceil_to(x, m):
    return ((x + m - 1) // m) * m


@functools.lru_cache(maxsize=None)
def _vmem_budget_bytes():
    """Per-generation VMEM budget: ~96 MiB on v5e/v6e, ~48 MiB on v7x."""
    try:
        cap = int(pltpu.get_tpu_info().vmem_capacity_bytes)
        return max((cap * 3) // 4, 32 * 1024 * 1024)
    except Exception:
        return 48 * 1024 * 1024                 # safe on every generation


def _probe_kernel(x_ref, y_ref, o_ref):
    o_ref[...] = x_ref[...] + y_ref[...]


@functools.lru_cache(maxsize=None)
def _single_buffer_ok():
    """Whether pipeline_mode=pl.Buffered(1) is supported by this Pallas."""
    try:
        fn = pl.pallas_call(
            _probe_kernel,
            out_shape=jax.ShapeDtypeStruct((16, 128), jnp.float32),
            grid=(2,),
            in_specs=[pl.BlockSpec((8, 128), lambda i: (0, 0),
                                   pipeline_mode=pl.Buffered(1)),
                      pl.BlockSpec((8, 128), lambda i: (i, 0))],
            out_specs=pl.BlockSpec((8, 128), lambda i: (i, 0)),
        )
        jax.block_until_ready(
            fn(jnp.zeros((8, 128), jnp.float32),
               jnp.zeros((16, 128), jnp.float32)))
        return True
    except Exception:
        return False


def _const_spec(block_shape):
    """BlockSpec for a grid-invariant operand; single-buffered when possible."""
    index_map = lambda i: (0,) * len(block_shape)
    if _single_buffer_ok():
        return pl.BlockSpec(block_shape, index_map,
                            pipeline_mode=pl.Buffered(1))
    return pl.BlockSpec(block_shape, index_map)


def _plan_rows(M, K, C, budget, *, out_bytes, max_tm=None,
               force_two_pass=False):
    """Pick (tm, Mp, n_tiles, resident) from the VMEM budget and K / C."""
    M8 = _ceil_to(max(int(M), 1), 8)
    res_bytes = M8 * C * out_bytes
    resident = (not force_two_pass) and (res_bytes * 3 <= budget)
    # Conservative: count the weight block as double-buffered even when we
    # manage to single-buffer it via pl.Buffered(1).
    fixed = 2 * K * C * 2 + 8 * C * 4 + (res_bytes if resident else 0)
    per_row = 2 * K * 2 + (0 if resident else 2 * C * out_bytes)
    avail = budget - fixed
    cap = avail // per_row if avail > 8 * per_row else 8
    cap = int(max(8, min(cap, 4096, M8)))
    if max_tm is not None:
        cap = max(8, min(cap, int(max_tm)))
    n = -(-M8 // cap)                      # number of row tiles
    tm = _ceil_to(-(-M8 // n), 8)          # even split, sublane aligned
    return tm, tm * n, n, resident


# ============================================================================
# In-kernel BatchNorm helper (phase-major columns, no (C, C) reduce matrix)
# ============================================================================
def _bn_scale_shift(col_sum, col_sq, gamma, beta, inv_count, eps, nph):
    """col_sum/col_sq: (1, nph*c) f32 per-column stats; gamma/beta: (1, c).

    Reduces the stats over the nph phase blocks with static lane slices and
    broadcasts the per-channel affine back to (1, nph*c) with a concatenate
    (replaces the old (C, C) phase-reduce matmul).
    """
    c = gamma.shape[-1]
    s_c = col_sum[:, 0:c]
    q_c = col_sq[:, 0:c]
    for ph in range(1, nph):
        s_c = s_c + col_sum[:, ph * c:(ph + 1) * c]
        q_c = q_c + col_sq[:, ph * c:(ph + 1) * c]
    mean = s_c * inv_count
    # biased variance (PyTorch training-mode BN); clamp against cancellation
    var = jnp.maximum(q_c * inv_count - mean * mean, 0.0)
    scale_c = gamma * lax.rsqrt(var + eps)
    shift_c = beta - mean * scale_c
    if nph == 1:
        return scale_c, shift_c
    scale = jnp.concatenate([scale_c] * nph, axis=-1)
    shift = jnp.concatenate([shift_c] * nph, axis=-1)
    return scale, shift


# ============================================================================
# Kernels
# ============================================================================
def _conv_bn_relu_resident_kernel(p_ref, w_ref, g_ref, b_ref, o_ref,
                                  sum_sc, sq_sc, *, inv_count, eps, tm, nph):
    """Fused matmul + BN(train) + ReLU with the whole layer output resident."""
    mi = pl.program_id(0)
    nm = pl.num_programs(0)

    @pl.when(mi == 0)
    def _init():
        sum_sc[...] = jnp.zeros_like(sum_sc)
        sq_sc[...] = jnp.zeros_like(sq_sc)

    # Row tile of the phase-conv matmul: bf16 x bf16 -> f32 on the MXU.
    t = jnp.dot(p_ref[...], w_ref[...], preferred_element_type=jnp.float32)
    row0 = pl.multiple_of(mi * tm, tm)
    o_ref[pl.ds(row0, tm), :] = t.astype(o_ref.dtype)     # bf16 resident store
    sum_sc[...] += jnp.sum(t, axis=0, keepdims=True)
    sq_sc[...] += jnp.sum(t * t, axis=0, keepdims=True)

    @pl.when(mi == nm - 1)
    def _finalize():
        scale, shift = _bn_scale_shift(sum_sc[...], sq_sc[...],
                                       g_ref[...], b_ref[...],
                                       inv_count, eps, nph)

        # Apply the affine + ReLU tile-by-tile (bounded code size / vregs).
        def _apply(i, carry):
            r0 = pl.multiple_of(i * tm, tm)
            blk = o_ref[pl.ds(r0, tm), :].astype(jnp.float32)
            o_ref[pl.ds(r0, tm), :] = jnp.maximum(
                blk * scale + shift, 0.0).astype(o_ref.dtype)
            return carry

        lax.fori_loop(0, nm, _apply, 0)


def _conv_bn_stats_kernel(p_ref, w_ref, g_ref, b_ref, y_ref, scale_ref,
                          shift_ref, sum_sc, sq_sc, *, inv_count, eps, nph):
    """Two-pass fallback, pass A: tiled matmul + stats, finalize scale/shift."""
    mi = pl.program_id(0)
    nm = pl.num_programs(0)

    @pl.when(mi == 0)
    def _init():
        sum_sc[...] = jnp.zeros_like(sum_sc)
        sq_sc[...] = jnp.zeros_like(sq_sc)

    t = jnp.dot(p_ref[...], w_ref[...], preferred_element_type=jnp.float32)
    y_ref[...] = t.astype(y_ref.dtype)                    # pre-BN bf16 to HBM
    sum_sc[...] += jnp.sum(t, axis=0, keepdims=True)
    sq_sc[...] += jnp.sum(t * t, axis=0, keepdims=True)

    @pl.when(mi == nm - 1)
    def _finalize():
        scale, shift = _bn_scale_shift(sum_sc[...], sq_sc[...],
                                       g_ref[...], b_ref[...],
                                       inv_count, eps, nph)
        scale_ref[...] = scale
        shift_ref[...] = shift


def _bn_relu_apply_kernel(y_ref, scale_ref, shift_ref, o_ref):
    """Two-pass fallback, pass B: elementwise affine + ReLU."""
    y = y_ref[...].astype(jnp.float32)
    o_ref[...] = jnp.maximum(y * scale_ref[...] + shift_ref[...],
                             0.0).astype(o_ref.dtype)


def _conv_tanh_kernel(p_ref, w_ref, o_ref):
    o_ref[...] = jnp.tanh(
        jnp.dot(p_ref[...], w_ref[...], preferred_element_type=jnp.float32))


# ============================================================================
# Layer wrappers
# ============================================================================
def conv_bn_relu(P, Wall, gamma, beta, *, n_phases, budget, max_tm=None,
                 force_two_pass=False, eps=1e-5):
    """Fused phase-conv matmul + BatchNorm(train) + ReLU.  Returns bf16 (M, C)."""
    M, K = P.shape
    C = Wall.shape[1]
    tm, Mp, n_tiles, resident = _plan_rows(
        M, K, C, budget, out_bytes=2, max_tm=max_tm,
        force_two_pass=force_two_pass)
    Pp = jnp.pad(P, ((0, Mp - M), (0, 0)))        # zero rows: exact stats below
    inv_count = 1.0 / float(M * n_phases)
    grid = (n_tiles,)
    w_spec = _const_spec((K, C))
    g_spec = _const_spec((1, gamma.shape[1]))
    b_spec = _const_spec((1, beta.shape[1]))
    stats_params = pltpu.CompilerParams(
        dimension_semantics=("arbitrary",),       # batch stats couple row tiles
        vmem_limit_bytes=budget)

    if resident:
        kernel = functools.partial(_conv_bn_relu_resident_kernel,
                                   inv_count=inv_count, eps=eps, tm=tm,
                                   nph=n_phases)
        O = pl.pallas_call(
            kernel,
            out_shape=jax.ShapeDtypeStruct((Mp, C), jnp.bfloat16),
            grid_spec=pltpu.PrefetchScalarGridSpec(
                num_scalar_prefetch=0, grid=grid,
                in_specs=[pl.BlockSpec((tm, K), lambda i: (i, 0)),
                          w_spec, g_spec, b_spec],
                out_specs=pl.BlockSpec((Mp, C), lambda i: (0, 0)),
                scratch_shapes=[pltpu.VMEM((1, C), jnp.float32),
                                pltpu.VMEM((1, C), jnp.float32)]),
            compiler_params=stats_params,
        )(Pp, Wall, gamma, beta)
        return O[:M]

    # Two-pass fallback (resident output too large for the VMEM budget).
    kernel = functools.partial(_conv_bn_stats_kernel, inv_count=inv_count,
                               eps=eps, nph=n_phases)
    Ypre, scale, shift = pl.pallas_call(
        kernel,
        out_shape=(jax.ShapeDtypeStruct((Mp, C), jnp.bfloat16),
                   jax.ShapeDtypeStruct((1, C), jnp.float32),
                   jax.ShapeDtypeStruct((1, C), jnp.float32)),
        grid_spec=pltpu.PrefetchScalarGridSpec(
            num_scalar_prefetch=0, grid=grid,
            in_specs=[pl.BlockSpec((tm, K), lambda i: (i, 0)),
                      w_spec, g_spec, b_spec],
            out_specs=(pl.BlockSpec((tm, C), lambda i: (i, 0)),
                       pl.BlockSpec((1, C), lambda i: (0, 0)),
                       pl.BlockSpec((1, C), lambda i: (0, 0))),
            scratch_shapes=[pltpu.VMEM((1, C), jnp.float32),
                            pltpu.VMEM((1, C), jnp.float32)]),
        compiler_params=stats_params,
    )(Pp, Wall, gamma, beta)

    O = pl.pallas_call(
        _bn_relu_apply_kernel,
        out_shape=jax.ShapeDtypeStruct((Mp, C), jnp.bfloat16),
        grid_spec=pltpu.PrefetchScalarGridSpec(
            num_scalar_prefetch=0, grid=grid,
            in_specs=[pl.BlockSpec((tm, C), lambda i: (i, 0)),
                      _const_spec((1, C)), _const_spec((1, C))],
            out_specs=pl.BlockSpec((tm, C), lambda i: (i, 0))),
        compiler_params=pltpu.CompilerParams(
            dimension_semantics=("parallel",),
            vmem_limit_bytes=budget),
    )(Ypre, scale, shift)
    return O[:M]


def conv_tanh(P, Wall, *, budget, max_tm=None):
    """Last layer: phase-conv matmul + tanh, large budget-driven row tiles."""
    M, K = P.shape
    C = Wall.shape[1]
    tm, Mp, n_tiles, _ = _plan_rows(M, K, C, budget, out_bytes=4,
                                    max_tm=max_tm, force_two_pass=True)
    Pp = jnp.pad(P, ((0, Mp - M), (0, 0)))
    # TODO(synk): C = 4*nc (=12) output lanes -> masked stores / tiny MXU N; a
    # transposed (C, M) layout would fix it but needs a transposed patch
    # matrix (extra glue traffic); the layer is DMA-bound on the patch read.
    O = pl.pallas_call(
        _conv_tanh_kernel,
        out_shape=jax.ShapeDtypeStruct((Mp, C), jnp.float32),
        grid_spec=pltpu.PrefetchScalarGridSpec(
            num_scalar_prefetch=0, grid=(n_tiles,),
            in_specs=[pl.BlockSpec((tm, K), lambda i: (i, 0)),
                      _const_spec((K, C))],
            out_specs=pl.BlockSpec((tm, C), lambda i: (i, 0))),
        compiler_params=pltpu.CompilerParams(
            dimension_semantics=("parallel",),
            vmem_limit_bytes=budget),
    )(Pp, Wall)
    return O[:M]


# ============================================================================
# Glue: phase decomposition of ConvTranspose2d(k=4, s=2, p=1)
#   y[n, 2p+rh, 2q+rw, co] = sum_{dh,dw in {-1,0,1}} sum_ci
#       x[n, p+dh, q+dw, ci] * W[ci, co, rh+1-2dh, rw+1-2dw]   (kernel idx valid)
# ============================================================================
_DELTAS = tuple((dh, dw) for dh in (-1, 0, 1) for dw in (-1, 0, 1))
_PHASES = tuple((rh, rw) for rh in (0, 1) for rw in (0, 1))


def _phase_weight_s2(W):
    # W: (Cin, Cout, 4, 4) PyTorch ConvTranspose2d layout -> (9*Cin, 4*Cout)
    cin, cout = W.shape[0], W.shape[1]
    Wall = jnp.zeros((9 * cin, 4 * cout), jnp.float32)
    for ti, (dh, dw) in enumerate(_DELTAS):
        for phi, (rh, rw) in enumerate(_PHASES):
            kh = rh + 1 - 2 * dh
            kw = rw + 1 - 2 * dw
            if 0 <= kh <= 3 and 0 <= kw <= 3:
                Wall = Wall.at[ti * cin:(ti + 1) * cin,
                               phi * cout:(phi + 1) * cout].set(W[:, :, kh, kw])
    return Wall


def _patches_s2(x):
    # x: (N, H, W, Cin) NHWC (bf16) -> (N*H*W, 9*Cin); no zero-upsampling.
    # TODO(synk): fuse this 9-tap gather (and the phase interleave below) into
    # the kernels via halo DMA of the NHWC activation; it is the remaining
    # dominant HBM-traffic term at production sizes.
    n, h, w, cin = x.shape
    xp = jnp.pad(x, ((0, 0), (1, 1), (1, 1), (0, 0)))
    taps = [xp[:, 1 + dh:1 + dh + h, 1 + dw:1 + dw + w, :] for dh, dw in _DELTAS]
    return jnp.concatenate(taps, axis=-1).reshape(n * h * w, 9 * cin)


def _interleave_phases(O, n, h, w, cout):
    # O: (N*H*W, 4*Cout) phase-major columns -> (N, 2H, 2W, Cout) NHWC
    O = O.reshape(n, h, w, 2, 2, cout)
    O = jnp.transpose(O, (0, 1, 3, 2, 4, 5))
    return O.reshape(n, 2 * h, 2 * w, cout)


# ============================================================================
# _netG parameters (PyTorch layout) and kernel-ready re-layout
# ============================================================================
def init_netg_params(key, nz, ngf, nc):
    chans = [nz, ngf * 8, ngf * 4, ngf * 2, ngf, nc]
    params = {}
    for li in range(5):
        key, sub = jax.random.split(key)
        # PyTorch ConvTranspose2d weight shape: (in_channels, out_channels, kH, kW)
        params[f"w{li}"] = 0.02 * jax.random.normal(
            sub, (chans[li], chans[li + 1], 4, 4), dtype=jnp.float32)
        if li < 4:
            params[f"gamma{li}"] = jnp.ones((chans[li + 1],), jnp.float32)
            params[f"beta{li}"] = jnp.zeros((chans[li + 1],), jnp.float32)
    return params


def prepare_netg_params(params):
    """One-time re-layout of PyTorch-style weights into kernel-ready matrices."""
    prep = {}
    # Layer 0: ConvTranspose2d(nz, ngf*8, 4, 1, 0) on a 1x1 input is a dense
    # projection; output columns ordered (kh, kw, co) -> 16 "phases" of C1.
    W0 = params["w0"]
    nz, c1 = W0.shape[0], W0.shape[1]
    prep["w0"] = (jnp.transpose(W0, (0, 2, 3, 1))
                  .reshape(nz, 16 * c1).astype(jnp.bfloat16))
    for li in range(1, 5):
        prep[f"w{li}"] = _phase_weight_s2(params[f"w{li}"]).astype(jnp.bfloat16)
    for li in range(4):
        prep[f"gamma{li}"] = params[f"gamma{li}"].reshape(1, -1).astype(jnp.float32)
        prep[f"beta{li}"] = params[f"beta{li}"].reshape(1, -1).astype(jnp.float32)
    return prep


# ============================================================================
# _netG forward (dropout=None path; BatchNorm uses training-mode batch stats)
# ============================================================================
def netg_forward(x_nchw, prep, *, max_tm=None, force_two_pass=False):
    # x_nchw: (N, nz, 1, 1)  ->  output (N, nc, 64, 64)
    # TODO(synk): Dropout2d branch (dropout is not None) is not implemented.
    budget = _vmem_budget_bytes()
    n, nz = x_nchw.shape[0], x_nchw.shape[1]

    # ---- layer 0: 1x1 -> 4x4, 16-phase dense projection + BN + ReLU --------
    P = x_nchw.reshape(n, nz).astype(jnp.bfloat16)
    O = conv_bn_relu(P, prep["w0"], prep["gamma0"], prep["beta0"],
                     n_phases=16, budget=budget, max_tm=max_tm,
                     force_two_pass=force_two_pass)
    c1 = prep["gamma0"].shape[1]
    x = O.reshape(n, 4, 4, c1)                            # NHWC, bf16

    # ---- layers 1-3: stride-2 conv-transpose (4 phases) + BN + ReLU --------
    for li in range(1, 4):
        nb, h, w, _ = x.shape
        cout = prep[f"gamma{li}"].shape[1]
        O = conv_bn_relu(_patches_s2(x), prep[f"w{li}"], prep[f"gamma{li}"],
                         prep[f"beta{li}"], n_phases=4, budget=budget,
                         max_tm=max_tm, force_two_pass=force_two_pass)
        x = _interleave_phases(O, nb, h, w, cout)

    # ---- layer 4: stride-2 conv-transpose + Tanh ----------------------------
    nb, h, w, _ = x.shape
    cout = prep["w4"].shape[1] // 4
    O = conv_tanh(_patches_s2(x), prep["w4"], budget=budget, max_tm=max_tm)
    y = _interleave_phases(O, nb, h, w, cout)
    return jnp.transpose(y, (0, 3, 1, 2))                 # back to NCHW, f32


# ============================================================================
# Pure-JAX f32 reference of the PyTorch module (for correctness checking)
# ============================================================================
def _convt_ref(x, W, stride, pad):
    k = W.shape[-1]
    Wf = jnp.transpose(W[:, :, ::-1, ::-1], (2, 3, 0, 1))   # (kh, kw, Cin, Cout)
    return lax.conv_general_dilated(
        x, Wf, window_strides=(1, 1),
        padding=[(k - 1 - pad, k - 1 - pad)] * 2,
        lhs_dilation=(stride, stride),
        dimension_numbers=("NCHW", "HWIO", "NCHW"),
        precision=lax.Precision.HIGHEST)


def _bn_relu_ref(y, gamma, beta, eps=1e-5):
    mean = jnp.mean(y, axis=(0, 2, 3), keepdims=True)
    var = jnp.mean((y - mean) ** 2, axis=(0, 2, 3), keepdims=True)
    yh = (y - mean) * lax.rsqrt(var + eps)
    return jnp.maximum(yh * gamma[None, :, None, None]
                       + beta[None, :, None, None], 0.0)


def netg_reference(x, params):
    y = _bn_relu_ref(_convt_ref(x, params["w0"], 1, 0),
                     params["gamma0"], params["beta0"])
    for li in range(1, 4):
        y = _bn_relu_ref(_convt_ref(y, params[f"w{li}"], 2, 1),
                         params[f"gamma{li}"], params[f"beta{li}"])
    return jnp.tanh(_convt_ref(y, params["w4"], 2, 1))


if __name__ == "__main__":
    nz, ngf, nc, batch = 16, 8, 3, 2
    key = jax.random.PRNGKey(0)
    key, kx = jax.random.split(key)
    x = jax.random.normal(kx, (batch, nz, 1, 1), dtype=jnp.float32)
    params = init_netg_params(key, nz, ngf, nc)
    prep = prepare_netg_params(params)

    # Pre-warm the cached hardware / feature probes outside of jit tracing.
    _vmem_budget_bytes()
    _single_buffer_ok()

    # Default path: budget-driven tiles, whole-layer-resident BN epilogue.
    out = jax.block_until_ready(jax.jit(netg_forward)(x, prep))
    assert out.shape == (batch, nc, 64, 64), out.shape
    assert bool(jnp.all(jnp.isfinite(out)))

    # Also exercise the two-pass fallback + multi-step grids and cross-check.
    fwd2 = jax.jit(functools.partial(netg_forward, max_tm=128,
                                     force_two_pass=True))
    out2 = jax.block_until_ready(fwd2(x, prep))
    assert out2.shape == out.shape
    assert bool(jnp.all(jnp.isfinite(out2)))
    assert float(jnp.max(jnp.abs(out - out2))) < 0.1

    # Check against the pure-JAX f32 reference (bf16 operands -> loose tol).
    ref = jax.block_until_ready(jax.jit(netg_reference)(x, params))
    assert float(jnp.max(jnp.abs(out - ref))) < 0.2

    print("KERNEL_OK")
</pallas_src>

<mosaic_0001>
module attributes {stable_mosaic.version = 11 : i64} {
  func.func @_probe_kernel(%arg0: i32, %arg1: memref<8x128xf32, #tpu.memory_space<vmem>>, %arg2: memref<8x128xf32, #tpu.memory_space<vmem>>, %arg3: memref<8x128xf32, #tpu.memory_space<vmem>>) attributes {dimension_semantics = [#tpu.dimension_semantics<arbitrary>], iteration_bounds = array<i64: 2>, scalar_prefetch = 0 : i64, scratch_operands = 0 : i64, tpu.core_type = #tpu.core_type<tc>, window_params = [{pipeline_mode = #tpu.pipeline_mode<synchronous>, transform_indices = @transform_0, window_bounds = array<i64: 8, 128>}, {transform_indices = @transform_1, window_bounds = array<i64: 8, 128>}, {transform_indices = @transform_2, window_bounds = array<i64: 8, 128>}]} {
    %c0 = arith.constant 0 : index
    %c0_0 = arith.constant 0 : index
    %0 = vector.load %arg1[%c0, %c0_0] : memref<8x128xf32, #tpu.memory_space<vmem>>, vector<8x128xf32>
    %c0_1 = arith.constant 0 : index
    %c0_2 = arith.constant 0 : index
    %1 = vector.load %arg2[%c0_1, %c0_2] : memref<8x128xf32, #tpu.memory_space<vmem>>, vector<8x128xf32>
    %2 = arith.addf %0, %1 : vector<8x128xf32>
    %c0_3 = arith.constant 0 : index
    %c0_4 = arith.constant 0 : index
    %3 = vector.load %arg3[%c0_3, %c0_4] : memref<8x128xf32, #tpu.memory_space<vmem>>, vector<8x128xf32>
    tpu.vector_store %arg3[%c0_3, %c0_4], %2 {strides = array<i32>} : memref<8x128xf32, #tpu.memory_space<vmem>>, vector<8x128xf32>,
    return
  }
  func.func @transform_0(%arg0: i32) -> (i32, i32) {
    %c0_i32 = arith.constant 0 : i32
    %c0_i32_0 = arith.constant 0 : i32
    %c0_i32_1 = arith.constant 0 : i32
    return %c0_i32, %c0_i32_0 : i32, i32
  }
  func.func @transform_1(%arg0: i32) -> (i32, i32) {
    %c0_i32 = arith.constant 0 : i32
    %c0_i32_0 = arith.constant 0 : i32
    return %arg0, %c0_i32 : i32, i32
  }
  func.func @transform_2(%arg0: i32) -> (i32, i32) {
    %c0_i32 = arith.constant 0 : i32
    %c0_i32_0 = arith.constant 0 : i32
    return %arg0, %c0_i32 : i32, i32
  }
}

module attributes {stable_mosaic.version = 11 : i64} {
  func.func @_conv_bn_relu_resident_kernel(%arg0: i32, %arg1: memref<8x16xbf16, #tpu.memory_space<vmem>>, %arg2: memref<16x1024xbf16, #tpu.memory_space<vmem>>, %arg3: memref<1x64xf32, #tpu.memory_space<vmem>>, %arg4: memref<1x64xf32, #tpu.memory_space<vmem>>, %arg5: memref<8x1024xbf16, #tpu.memory_space<vmem>>, %arg6: memref<1x1024xf32, #tpu.memory_space<vmem>>, %arg7: memref<1x1024xf32, #tpu.memory_space<vmem>>) attributes {dimension_semantics = [#tpu.dimension_semantics<arbitrary>], iteration_bounds = array<i64: 1>, scalar_prefetch = 0 : i64, scratch_operands = 2 : i64, tpu.core_type = #tpu.core_type<tc>, window_params = [{transform_indices = @transform_0, window_bounds = array<i64: 8, 16>}, {pipeline_mode = #tpu.pipeline_mode<synchronous>, transform_indices = @transform_1, window_bounds = array<i64: 16, 1024>}, {pipeline_mode = #tpu.pipeline_mode<synchronous>, transform_indices = @transform_2, window_bounds = array<i64: 1, 64>}, {pipeline_mode = #tpu.pipeline_mode<synchronous>, transform_indices = @transform_3, window_bounds = array<i64: 1, 64>}, {pipeline_mode = #tpu.pipeline_mode<synchronous>, transform_indices = @transform_4, window_bounds = array<i64: 8, 1024>}]} {
    %c0_i32 = arith.constant 0 : i32
    %0 = arith.cmpi eq, %arg0, %c0_i32 : i32
    %1 = arith.extui %0 : i1 to i32
    %c0_i32_0 = arith.constant 0 : i32
    %2 = arith.cmpi ne, %1, %c0_i32_0 : i32
    scf.if %2 {
      %cst_17 = arith.constant 0.000000e+00 : f32
      %25 = vector.broadcast %cst_17 : f32 to vector<1x1024xf32>
      %c0_18 = arith.constant 0 : index
      %c0_19 = arith.constant 0 : index
      %26 = vector.load %arg6[%c0_18, %c0_19] : memref<1x1024xf32, #tpu.memory_space<vmem>>, vector<1x1024xf32>
      tpu.vector_store %arg6[%c0_18, %c0_19], %25 {strides = array<i32>} : memref<1x1024xf32, #tpu.memory_space<vmem>>, vector<1x1024xf32>,
      %cst_20 = arith.constant 0.000000e+00 : f32
      %27 = vector.broadcast %cst_20 : f32 to vector<1x1024xf32>
      %c0_21 = arith.constant 0 : index
      %c0_22 = arith.constant 0 : index
      %28 = vector.load %arg7[%c0_21, %c0_22] : memref<1x1024xf32, #tpu.memory_space<vmem>>, vector<1x1024xf32>
      tpu.vector_store %arg7[%c0_21, %c0_22], %27 {strides = array<i32>} : memref<1x1024xf32, #tpu.memory_space<vmem>>, vector<1x1024xf32>,
    } else {
    }
    %c0 = arith.constant 0 : index
    %c0_1 = arith.constant 0 : index
    %3 = vector.load %arg1[%c0, %c0_1] : memref<8x16xbf16, #tpu.memory_space<vmem>>, vector<8x16xbf16>
    %c0_2 = arith.constant 0 : index
    %c0_3 = arith.constant 0 : index
    %4 = vector.load %arg2[%c0_2, %c0_3] : memref<16x1024xbf16, #tpu.memory_space<vmem>>, vector<16x1024xbf16>
    %cst = arith.constant dense<0.000000e+00> : vector<8x1024xf32>
    %5 = tpu.matmul %3, %4, %cst {dimension_numbers = #tpu.dot_dimension_numbers<[1], [0], [0], [1], [0, 0, 1, 1], [], []>} : vector<8x16xbf16>, vector<16x1024xbf16>, vector<8x1024xf32> -> vector<8x1024xf32>
    %c8_i32 = arith.constant 8 : i32
    %6 = arith.muli %arg0, %c8_i32 : i32
    %7 = tpu.assume_multiple %6, 8 : i32
    %8 = arith.truncf %5 : vector<8x1024xf32> to vector<8x1024xbf16>
    %9 = arith.index_cast %7 : i32 to index
    %c0_4 = arith.constant 0 : index
    %10 = vector.load %arg5[%9, %c0_4] : memref<8x1024xbf16, #tpu.memory_space<vmem>>, vector<8x1024xbf16>
    tpu.vector_store %arg5[%9, %c0_4], %8 {strides = array<i32>} : memref<8x1024xbf16, #tpu.memory_space<vmem>>, vector<8x1024xbf16>,
    %c0_5 = arith.constant 0 : index
    %c0_6 = arith.constant 0 : index
    %11 = vector.load %arg6[%c0_5, %c0_6] : memref<1x1024xf32, #tpu.memory_space<vmem>>, vector<1x1024xf32>
    %cst_7 = arith.constant dense<0.000000e+00> : vector<1024xf32>
    %12 = vector.multi_reduction <add>, %5, %cst_7 [0] : vector<8x1024xf32> to vector<1024xf32>
    %13 = vector.shape_cast %12 : vector<1024xf32> to vector<1x1024xf32>
    %14 = arith.addf %11, %13 : vector<1x1024xf32>
    %c0_8 = arith.constant 0 : index
    %c0_9 = arith.constant 0 : index
    %15 = vector.load %arg6[%c0_8, %c0_9] : memref<1x1024xf32, #tpu.memory_space<vmem>>, vector<1x1024xf32>
    tpu.vector_store %arg6[%c0_8, %c0_9], %14 {strides = array<i32>} : memref<1x1024xf32, #tpu.memory_space<vmem>>, vector<1x1024xf32>,
    %c0_10 = arith.constant 0 : index
    %c0_11 = arith.constant 0 : index
    %16 = vector.load %arg7[%c0_10, %c0_11] : memref<1x1024xf32, #tpu.memory_space<vmem>>, vector<1x1024xf32>
    %17 = arith.mulf %5, %5 : vector<8x1024xf32>
    %cst_12 = arith.constant dense<0.000000e+00> : vector<1024xf32>
    %18 = vector.multi_reduction <add>, %17, %cst_12 [0] : vector<8x1024xf32> to vector<1024xf32>
    %19 = vector.shape_cast %18 : vector<1024xf32> to vector<1x1024xf32>
    %20 = arith.addf %16, %19 : vector<1x1024xf32>
    %c0_13 = arith.constant 0 : index
    %c0_14 = arith.constant 0 : index
    %21 = vector.load %arg7[%c0_13, %c0_14] : memref<1x1024xf32, #tpu.memory_space<vmem>>, vector<1x1024xf32>
    tpu.vector_store %arg7[%c0_13, %c0_14], %20 {strides = array<i32>} : memref<1x1024xf32, #tpu.memory_space<vmem>>, vector<1x1024xf32>,
    %c0_i32_15 = arith.constant 0 : i32
    %22 = arith.cmpi eq, %arg0, %c0_i32_15 : i32
    %23 = arith.extui %22 : i1 to i32
    %c0_i32_16 = arith.constant 0 : i32
    %24 = arith.cmpi ne, %23, %c0_i32_16 : i32
    scf.if %24 {
      %c0_17 = arith.constant 0 : index
      %c0_18 = arith.constant 0 : index
      %25 = vector.load %arg6[%c0_17, %c0_18] : memref<1x1024xf32, #tpu.memory_space<vmem>>, vector<1x1024xf32>
      %c0_19 = arith.constant 0 : index
      %c0_20 = arith.constant 0 : index
      %26 = vector.load %arg7[%c0_19, %c0_20] : memref<1x1024xf32, #tpu.memory_space<vmem>>, vector<1x1024xf32>
      %c0_21 = arith.constant 0 : index
      %c0_22 = arith.constant 0 : index
      %27 = vector.load %arg3[%c0_21, %c0_22] : memref<1x64xf32, #tpu.memory_space<vmem>>, vector<1x64xf32>
      %c0_23 = arith.constant 0 : index
      %c0_24 = arith.constant 0 : index
      %28 = vector.load %arg4[%c0_23, %c0_24] : memref<1x64xf32, #tpu.memory_space<vmem>>, vector<1x64xf32>
      %29 = vector.extract_strided_slice %25 {offsets = [0, 0], sizes = [1, 64], strides = [1, 1]} : vector<1x1024xf32> to vector<1x64xf32>
      %30 = vector.extract_strided_slice %26 {offsets = [0, 0], sizes = [1, 64], strides = [1, 1]} : vector<1x1024xf32> to vector<1x64xf32>
      %31 = vector.extract_strided_slice %25 {offsets = [0, 64], sizes = [1, 64], strides = [1, 1]} : vector<1x1024xf32> to vector<1x64xf32>
      %32 = arith.addf %29, %31 : vector<1x64xf32>
      %33 = vector.extract_strided_slice %26 {offsets = [0, 64], sizes = [1, 64], strides = [1, 1]} : vector<1x1024xf32> to vector<1x64xf32>
      %34 = arith.addf %30, %33 : vector<1x64xf32>
      %35 = vector.extract_strided_slice %25 {offsets = [0, 128], sizes = [1, 64], strides = [1, 1]} : vector<1x1024xf32> to vector<1x64xf32>
      %36 = arith.addf %32, %35 : vector<1x64xf32>
      %37 = vector.extract_strided_slice %26 {offsets = [0, 128], sizes = [1, 64], strides = [1, 1]} : vector<1x1024xf32> to vector<1x64xf32>
      %38 = arith.addf %34, %37 : vector<1x64xf32>
      %39 = vector.extract_strided_slice %25 {offsets = [0, 192], sizes = [1, 64], strides = [1, 1]} : vector<1x1024xf32> to vector<1x64xf32>
      %40 = arith.addf %36, %39 : vector<1x64xf32>
      %41 = vector.extract_strided_slice %26 {offsets = [0, 192], sizes = [1, 64], strides = [1, 1]} : vector<1x1024xf32> to vector<1x64xf32>
      %42 = arith.addf %38, %41 : vector<1x64xf32>
      %43 = vector.extract_strided_slice %25 {offsets = [0, 256], sizes = [1, 64], strides = [1, 1]} : vector<1x1024xf32> to vector<1x64xf32>
      %44 = arith.addf %40, %43 : vector<1x64xf32>
      %45 = vector.extract_strided_slice %26 {offsets = [0, 256], sizes = [1, 64], strides = [1, 1]} : vector<1x1024xf32> to vector<1x64xf32>
      %46 = arith.addf %42, %45 : vector<1x64xf32>
      %47 = vector.extract_strided_slice %25 {offsets = [0, 320], sizes = [1, 64], strides = [1, 1]} : vector<1x1024xf32> to vector<1x64xf32>
      %48 = arith.addf %44, %47 : vector<1x64xf32>
      %49 = vector.extract_strided_slice %26 {offsets = [0, 320], sizes = [1, 64], strides = [1, 1]} : vector<1x1024xf32> to vector<1x64xf32>
      %50 = arith.addf %46, %49 : vector<1x64xf32>
      %51 = vector.extract_strided_slice %25 {offsets = [0, 384], sizes = [1, 64], strides = [1, 1]} : vector<1x1024xf32> to vector<1x64xf32>
      %52 = arith.addf %48, %51 : vector<1x64xf32>
      %53 = vector.extract_strided_slice %26 {offsets = [0, 384], sizes = [1, 64], strides = [1, 1]} : vector<1x1024xf32> to vector<1x64xf32>
      %54 = arith.addf %50, %53 : vector<1x64xf32>
      %55 = vector.extract_strided_slice %25 {offsets = [0, 448], sizes = [1, 64], strides = [1, 1]} : vector<1x1024xf32> to vector<1x64xf32>
      %56 = arith.addf %52, %55 : vector<1x64xf32>
      %57 = vector.extract_strided_slice %26 {offsets = [0, 448], sizes = [1, 64], strides = [1, 1]} : vector<1x1024xf32> to vector<1x64xf32>
      %58 = arith.addf %54, %57 : vector<1x64xf32>
      %59 = vector.extract_strided_slice %25 {offsets = [0, 512], sizes = [1, 64], strides = [1, 1]} : vector<1x1024xf32> to vector<1x64xf32>
      %60 = arith.addf %56, %59 : vector<1x64xf32>
      %61 = vector.extract_strided_slice %26 {offsets = [0, 512], sizes = [1, 64], strides = [1, 1]} : vector<1x1024xf32> to vector<1x64xf32>
      %62 = arith.addf %58, %61 : vector<1x64xf32>
      %63 = vector.extract_strided_slice %25 {offsets = [0, 576], sizes = [1, 64], strides = [1, 1]} : vector<1x1024xf32> to vector<1x64xf32>
      %64 = arith.addf %60, %63 : vector<1x64xf32>
      %65 = vector.extract_strided_slice %26 {offsets = [0, 576], sizes = [1, 64], strides = [1, 1]} : vector<1x1024xf32> to vector<1x64xf32>
      %66 = arith.addf %62, %65 : vector<1x64xf32>
      %67 = vector.extract_strided_slice %25 {offsets = [0, 640], sizes = [1, 64], strides = [1, 1]} : vector<1x1024xf32> to vector<1x64xf32>
      %68 = arith.addf %64, %67 : vector<1x64xf32>
      %69 = vector.extract_strided_slice %26 {offsets = [0, 640], sizes = [1, 64], strides = [1, 1]} : vector<1x1024xf32> to vector<1x64xf32>
      %70 = arith.addf %66, %69 : vector<1x64xf32>
      %71 = vector.extract_strided_slice %25 {offsets = [0, 704], sizes = [1, 64], strides = [1, 1]} : vector<1x1024xf32> to vector<1x64xf32>
      %72 = arith.addf %68, %71 : vector<1x64xf32>
      %73 = vector.extract_strided_slice %26 {offsets = [0, 704], sizes = [1, 64], strides = [1, 1]} : vector<1x1024xf32> to vector<1x64xf32>
      %74 = arith.addf %70, %73 : vector<1x64xf32>
      %75 = vector.extract_strided_slice %25 {offsets = [0, 768], sizes = [1, 64], strides = [1, 1]} : vector<1x1024xf32> to vector<1x64xf32>
      %76 = arith.addf %72, %75 : vector<1x64xf32>
      %77 = vector.extract_strided_slice %26 {offsets = [0, 768], sizes = [1, 64], strides = [1, 1]} : vector<1x1024xf32> to vector<1x64xf32>
      %78 = arith.addf %74, %77 : vector<1x64xf32>
      %79 = vector.extract_strided_slice %25 {offsets = [0, 832], sizes = [1, 64], strides = [1, 1]} : vector<1x1024xf32> to vector<1x64xf32>
      %80 = arith.addf %76, %79 : vector<1x64xf32>
      %81 = vector.extract_strided_slice %26 {offsets = [0, 832], sizes = [1, 64], strides = [1, 1]} : vector<1x1024xf32> to vector<1x64xf32>
      %82 = arith.addf %78, %81 : vector<1x64xf32>
      %83 = vector.extract_strided_slice %25 {offsets = [0, 896], sizes = [1, 64], strides = [1, 1]} : vector<1x1024xf32> to vector<1x64xf32>
      %84 = arith.addf %80, %83 : vector<1x64xf32>
      %85 = vector.extract_strided_slice %26 {offsets = [0, 896], sizes = [1, 64], strides = [1, 1]} : vector<1x1024xf32> to vector<1x64xf32>
      %86 = arith.addf %82, %85 : vector<1x64xf32>
      %87 = vector.extract_strided_slice %25 {offsets = [0, 960], sizes = [1, 64], strides = [1, 1]} : vector<1x1024xf32> to vector<1x64xf32>
      %88 = arith.addf %84, %87 : vector<1x64xf32>
      %89 = vector.extract_strided_slice %26 {offsets = [0, 960], sizes = [1, 64], strides = [1, 1]} : vector<1x1024xf32> to vector<1x64xf32>
      %90 = arith.addf %86, %89 : vector<1x64xf32>
      %cst_25 = arith.constant 3.125000e-02 : f32
      %91 = vector.broadcast %cst_25 : f32 to vector<1x64xf32>
      %92 = arith.mulf %88, %91 : vector<1x64xf32>
      %cst_26 = arith.constant 3.125000e-02 : f32
      %93 = vector.broadcast %cst_26 : f32 to vector<1x64xf32>
      %94 = arith.mulf %90, %93 : vector<1x64xf32>
      %95 = arith.mulf %92, %92 : vector<1x64xf32>
      %96 = arith.subf %94, %95 : vector<1x64xf32>
      %cst_27 = arith.constant 0.000000e+00 : f32
      %97 = vector.broadcast %cst_27 : f32 to vector<1x64xf32>
      %98 = arith.maximumf %96, %97 : vector<1x64xf32>
      %cst_28 = arith.constant 9.99999974E-6 : f32
      %99 = vector.broadcast %cst_28 : f32 to vector<1x64xf32>
      %100 = arith.addf %98, %99 : vector<1x64xf32>
      %101 = math.rsqrt %100 : vector<1x64xf32>
      %102 = arith.mulf %27, %101 : vector<1x64xf32>
      %103 = arith.mulf %92, %102 : vector<1x64xf32>
      %104 = arith.subf %28, %103 : vector<1x64xf32>
      %105 = tpu.concatenate %102, %102, %102, %102, %102, %102, %102, %102, %102, %102, %102, %102, %102, %102, %102, %102 in 1 : vector<1x64xf32>, vector<1x64xf32>, vector<1x64xf32>, vector<1x64xf32>, vector<1x64xf32>, vector<1x64xf32>, vector<1x64xf32>, vector<1x64xf32>, vector<1x64xf32>, vector<1x64xf32>, vector<1x64xf32>, vector<1x64xf32>, vector<1x64xf32>, vector<1x64xf32>, vector<1x64xf32>, vector<1x64xf32> -> vector<1x1024xf32>
      %106 = tpu.concatenate %104, %104, %104, %104, %104, %104, %104, %104, %104, %104, %104, %104, %104, %104, %104, %104 in 1 : vector<1x64xf32>, vector<1x64xf32>, vector<1x64xf32>, vector<1x64xf32>, vector<1x64xf32>, vector<1x64xf32>, vector<1x64xf32>, vector<1x64xf32>, vector<1x64xf32>, vector<1x64xf32>, vector<1x64xf32>, vector<1x64xf32>, vector<1x64xf32>, vector<1x64xf32>, vector<1x64xf32>, vector<1x64xf32> -> vector<1x1024xf32>
      %c0_i32_29 = arith.constant 0 : i32
      %c8_i32_30 = arith.constant 8 : i32
      %107 = arith.muli %c0_i32_29, %c8_i32_30 : i32
      %108 = tpu.assume_multiple %107, 8 : i32
      %109 = arith.index_cast %108 : i32 to index
      %c0_31 = arith.constant 0 : index
      %110 = vector.load %arg5[%109, %c0_31] : memref<8x1024xbf16, #tpu.memory_space<vmem>>, vector<8x1024xbf16>
      %111 = arith.extf %110 : vector<8x1024xbf16> to vector<8x1024xf32>
      %112 = vector.broadcast %105 : vector<1x1024xf32> to vector<8x1024xf32>
      %113 = arith.mulf %111, %112 : vector<8x1024xf32>
      %114 = vector.broadcast %106 : vector<1x1024xf32> to vector<8x1024xf32>
      %115 = arith.addf %113, %114 : vector<8x1024xf32>
      %cst_32 = arith.constant 0.000000e+00 : f32
      %116 = vector.broadcast %cst_32 : f32 to vector<8x1024xf32>
      %117 = arith.maximumf %115, %116 : vector<8x1024xf32>
      %118 = arith.truncf %117 : vector<8x1024xf32> to vector<8x1024xbf16>
      %119 = arith.index_cast %108 : i32 to index
      %c0_33 = arith.constant 0 : index
      %120 = vector.load %arg5[%119, %c0_33] : memref<8x1024xbf16, #tpu.memory_space<vmem>>, vector<8x1024xbf16>
      tpu.vector_store %arg5[%119, %c0_33], %118 {strides = array<i32>} : memref<8x1024xbf16, #tpu.memory_space<vmem>>, vector<8x1024xbf16>,
      %c1_i32 = arith.constant 1 : i32
    } else {
    }
    return
  }
  func.func @transform_0(%arg0: i32) -> (i32, i32) {
    %c0_i32 = arith.constant 0 : i32
    %c0_i32_0 = arith.constant 0 : i32
    return %arg0, %c0_i32 : i32, i32
  }
  func.func @transform_1(%arg0: i32) -> (i32, i32) {
    %c0_i32 = arith.constant 0 : i32
    %c0_i32_0 = arith.constant 0 : i32
    %c0_i32_1 = arith.constant 0 : i32
    return %c0_i32, %c0_i32_0 : i32, i32
  }
  func.func @transform_2(%arg0: i32) -> (i32, i32) {
    %c0_i32 = arith.constant 0 : i32
    %c0_i32_0 = arith.constant 0 : i32
    %c0_i32_1 = arith.constant 0 : i32
    return %c0_i32, %c0_i32_0 : i32, i32
  }
  func.func @transform_3(%arg0: i32) -> (i32, i32) {
    %c0_i32 = arith.constant 0 : i32
    %c0_i32_0 = arith.constant 0 : i32
    %c0_i32_1 = arith.constant 0 : i32
    return %c0_i32, %c0_i32_0 : i32, i32
  }
  func.func @transform_4(%arg0: i32) -> (i32, i32) {
    %c0_i32 = arith.constant 0 : i32
    %c0_i32_0 = arith.constant 0 : i32
    %c0_i32_1 = arith.constant 0 : i32
    return %c0_i32, %c0_i32_0 : i32, i32
  }
}

module attributes {stable_mosaic.version = 11 : i64} {
  func.func @_conv_bn_relu_resident_kernel(%arg0: i32, %arg1: memref<32x576xbf16, #tpu.memory_space<vmem>>, %arg2: memref<576x128xbf16, #tpu.memory_space<vmem>>, %arg3: memref<1x32xf32, #tpu.memory_space<vmem>>, %arg4: memref<1x32xf32, #tpu.memory_space<vmem>>, %arg5: memref<32x128xbf16, #tpu.memory_space<vmem>>, %arg6: memref<1x128xf32, #tpu.memory_space<vmem>>, %arg7: memref<1x128xf32, #tpu.memory_space<vmem>>) attributes {dimension_semantics = [#tpu.dimension_semantics<arbitrary>], iteration_bounds = array<i64: 1>, scalar_prefetch = 0 : i64, scratch_operands = 2 : i64, tpu.core_type = #tpu.core_type<tc>, window_params = [{transform_indices = @transform_0, window_bounds = array<i64: 32, 576>}, {pipeline_mode = #tpu.pipeline_mode<synchronous>, transform_indices = @transform_1, window_bounds = array<i64: 576, 128>}, {pipeline_mode = #tpu.pipeline_mode<synchronous>, transform_indices = @transform_2, window_bounds = array<i64: 1, 32>}, {pipeline_mode = #tpu.pipeline_mode<synchronous>, transform_indices = @transform_3, window_bounds = array<i64: 1, 32>}, {pipeline_mode = #tpu.pipeline_mode<synchronous>, transform_indices = @transform_4, window_bounds = array<i64: 32, 128>}]} {
    %c0_i32 = arith.constant 0 : i32
    %0 = arith.cmpi eq, %arg0, %c0_i32 : i32
    %1 = arith.extui %0 : i1 to i32
    %c0_i32_0 = arith.constant 0 : i32
    %2 = arith.cmpi ne, %1, %c0_i32_0 : i32
    scf.if %2 {
      %cst_17 = arith.constant 0.000000e+00 : f32
      %25 = vector.broadcast %cst_17 : f32 to vector<1x128xf32>
      %c0_18 = arith.constant 0 : index
      %c0_19 = arith.constant 0 : index
      %26 = vector.load %arg6[%c0_18, %c0_19] : memref<1x128xf32, #tpu.memory_space<vmem>>, vector<1x128xf32>
      tpu.vector_store %arg6[%c0_18, %c0_19], %25 {strides = array<i32>} : memref<1x128xf32, #tpu.memory_space<vmem>>, vector<1x128xf32>,
      %cst_20 = arith.constant 0.000000e+00 : f32
      %27 = vector.broadcast %cst_20 : f32 to vector<1x128xf32>
      %c0_21 = arith.constant 0 : index
      %c0_22 = arith.constant 0 : index
      %28 = vector.load %arg7[%c0_21, %c0_22] : memref<1x128xf32, #tpu.memory_space<vmem>>, vector<1x128xf32>
      tpu.vector_store %arg7[%c0_21, %c0_22], %27 {strides = array<i32>} : memref<1x128xf32, #tpu.memory_space<vmem>>, vector<1x128xf32>,
    } else {
    }
    %c0 = arith.constant 0 : index
    %c0_1 = arith.constant 0 : index
    %3 = vector.load %arg1[%c0, %c0_1] : memref<32x576xbf16, #tpu.memory_space<vmem>>, vector<32x576xbf16>
    %c0_2 = arith.constant 0 : index
    %c0_3 = arith.constant 0 : index
    %4 = vector.load %arg2[%c0_2, %c0_3] : memref<576x128xbf16, #tpu.memory_space<vmem>>, vector<576x128xbf16>
    %cst = arith.constant dense<0.000000e+00> : vector<32x128xf32>
    %5 = tpu.matmul %3, %4, %cst {dimension_numbers = #tpu.dot_dimension_numbers<[1], [0], [0], [1], [0, 0, 1, 1], [], []>} : vector<32x576xbf16>, vector<576x128xbf16>, vector<32x128xf32> -> vector<32x128xf32>
    %c32_i32 = arith.constant 32 : i32
    %6 = arith.muli %arg0, %c32_i32 : i32
    %7 = tpu.assume_multiple %6, 32 : i32
    %8 = arith.truncf %5 : vector<32x128xf32> to vector<32x128xbf16>
    %9 = arith.index_cast %7 : i32 to index
    %c0_4 = arith.constant 0 : index
    %10 = vector.load %arg5[%9, %c0_4] : memref<32x128xbf16, #tpu.memory_space<vmem>>, vector<32x128xbf16>
    tpu.vector_store %arg5[%9, %c0_4], %8 {strides = array<i32>} : memref<32x128xbf16, #tpu.memory_space<vmem>>, vector<32x128xbf16>,
    %c0_5 = arith.constant 0 : index
    %c0_6 = arith.constant 0 : index
    %11 = vector.load %arg6[%c0_5, %c0_6] : memref<1x128xf32, #tpu.memory_space<vmem>>, vector<1x128xf32>
    %cst_7 = arith.constant dense<0.000000e+00> : vector<128xf32>
    %12 = vector.multi_reduction <add>, %5, %cst_7 [0] : vector<32x128xf32> to vector<128xf32>
    %13 = vector.shape_cast %12 : vector<128xf32> to vector<1x128xf32>
    %14 = arith.addf %11, %13 : vector<1x128xf32>
    %c0_8 = arith.constant 0 : index
    %c0_9 = arith.constant 0 : index
    %15 = vector.load %arg6[%c0_8, %c0_9] : memref<1x128xf32, #tpu.memory_space<vmem>>, vector<1x128xf32>
    tpu.vector_store %arg6[%c0_8, %c0_9], %14 {strides = array<i32>} : memref<1x128xf32, #tpu.memory_space<vmem>>, vector<1x128xf32>,
    %c0_10 = arith.constant 0 : index
    %c0_11 = arith.constant 0 : index
    %16 = vector.load %arg7[%c0_10, %c0_11] : memref<1x128xf32, #tpu.memory_space<vmem>>, vector<1x128xf32>
    %17 = arith.mulf %5, %5 : vector<32x128xf32>
    %cst_12 = arith.constant dense<0.000000e+00> : vector<128xf32>
    %18 = vector.multi_reduction <add>, %17, %cst_12 [0] : vector<32x128xf32> to vector<128xf32>
    %19 = vector.shape_cast %18 : vector<128xf32> to vector<1x128xf32>
    %20 = arith.addf %16, %19 : vector<1x128xf32>
    %c0_13 = arith.constant 0 : index
    %c0_14 = arith.constant 0 : index
    %21 = vector.load %arg7[%c0_13, %c0_14] : memref<1x128xf32, #tpu.memory_space<vmem>>, vector<1x128xf32>
    tpu.vector_store %arg7[%c0_13, %c0_14], %20 {strides = array<i32>} : memref<1x128xf32, #tpu.memory_space<vmem>>, vector<1x128xf32>,
    %c0_i32_15 = arith.constant 0 : i32
    %22 = arith.cmpi eq, %arg0, %c0_i32_15 : i32
    %23 = arith.extui %22 : i1 to i32
    %c0_i32_16 = arith.constant 0 : i32
    %24 = arith.cmpi ne, %23, %c0_i32_16 : i32
    scf.if %24 {
      %c0_17 = arith.constant 0 : index
      %c0_18 = arith.constant 0 : index
      %25 = vector.load %arg6[%c0_17, %c0_18] : memref<1x128xf32, #tpu.memory_space<vmem>>, vector<1x128xf32>
      %c0_19 = arith.constant 0 : index
      %c0_20 = arith.constant 0 : index
      %26 = vector.load %arg7[%c0_19, %c0_20] : memref<1x128xf32, #tpu.memory_space<vmem>>, vector<1x128xf32>
      %c0_21 = arith.constant 0 : index
      %c0_22 = arith.constant 0 : index
      %27 = vector.load %arg3[%c0_21, %c0_22] : memref<1x32xf32, #tpu.memory_space<vmem>>, vector<1x32xf32>
      %c0_23 = arith.constant 0 : index
      %c0_24 = arith.constant 0 : index
      %28 = vector.load %arg4[%c0_23, %c0_24] : memref<1x32xf32, #tpu.memory_space<vmem>>, vector<1x32xf32>
      %29 = vector.extract_strided_slice %25 {offsets = [0, 0], sizes = [1, 32], strides = [1, 1]} : vector<1x128xf32> to vector<1x32xf32>
      %30 = vector.extract_strided_slice %26 {offsets = [0, 0], sizes = [1, 32], strides = [1, 1]} : vector<1x128xf32> to vector<1x32xf32>
      %31 = vector.extract_strided_slice %25 {offsets = [0, 32], sizes = [1, 32], strides = [1, 1]} : vector<1x128xf32> to vector<1x32xf32>
      %32 = arith.addf %29, %31 : vector<1x32xf32>
      %33 = vector.extract_strided_slice %26 {offsets = [0, 32], sizes = [1, 32], strides = [1, 1]} : vector<1x128xf32> to vector<1x32xf32>
      %34 = arith.addf %30, %33 : vector<1x32xf32>
      %35 = vector.extract_strided_slice %25 {offsets = [0, 64], sizes = [1, 32], strides = [1, 1]} : vector<1x128xf32> to vector<1x32xf32>
      %36 = arith.addf %32, %35 : vector<1x32xf32>
      %37 = vector.extract_strided_slice %26 {offsets = [0, 64], sizes = [1, 32], strides = [1, 1]} : vector<1x128xf32> to vector<1x32xf32>
      %38 = arith.addf %34, %37 : vector<1x32xf32>
      %39 = vector.extract_strided_slice %25 {offsets = [0, 96], sizes = [1, 32], strides = [1, 1]} : vector<1x128xf32> to vector<1x32xf32>
      %40 = arith.addf %36, %39 : vector<1x32xf32>
      %41 = vector.extract_strided_slice %26 {offsets = [0, 96], sizes = [1, 32], strides = [1, 1]} : vector<1x128xf32> to vector<1x32xf32>
      %42 = arith.addf %38, %41 : vector<1x32xf32>
      %cst_25 = arith.constant 7.812500e-03 : f32
      %43 = vector.broadcast %cst_25 : f32 to vector<1x32xf32>
      %44 = arith.mulf %40, %43 : vector<1x32xf32>
      %cst_26 = arith.constant 7.812500e-03 : f32
      %45 = vector.broadcast %cst_26 : f32 to vector<1x32xf32>
      %46 = arith.mulf %42, %45 : vector<1x32xf32>
      %47 = arith.mulf %44, %44 : vector<1x32xf32>
      %48 = arith.subf %46, %47 : vector<1x32xf32>
      %cst_27 = arith.constant 0.000000e+00 : f32
      %49 = vector.broadcast %cst_27 : f32 to vector<1x32xf32>
      %50 = arith.maximumf %48, %49 : vector<1x32xf32>
      %cst_28 = arith.constant 9.99999974E-6 : f32
      %51 = vector.broadcast %cst_28 : f32 to vector<1x32xf32>
      %52 = arith.addf %50, %51 : vector<1x32xf32>
      %53 = math.rsqrt %52 : vector<1x32xf32>
      %54 = arith.mulf %27, %53 : vector<1x32xf32>
      %55 = arith.mulf %44, %54 : vector<1x32xf32>
      %56 = arith.subf %28, %55 : vector<1x32xf32>
      %57 = tpu.concatenate %54, %54, %54, %54 in 1 : vector<1x32xf32>, vector<1x32xf32>, vector<1x32xf32>, vector<1x32xf32> -> vector<1x128xf32>
      %58 = tpu.concatenate %56, %56, %56, %56 in 1 : vector<1x32xf32>, vector<1x32xf32>, vector<1x32xf32>, vector<1x32xf32> -> vector<1x128xf32>
      %c0_i32_29 = arith.constant 0 : i32
      %c32_i32_30 = arith.constant 32 : i32
      %59 = arith.muli %c0_i32_29, %c32_i32_30 : i32
      %60 = tpu.assume_multiple %59, 32 : i32
      %61 = arith.index_cast %60 : i32 to index
      %c0_31 = arith.constant 0 : index
      %62 = vector.load %arg5[%61, %c0_31] : memref<32x128xbf16, #tpu.memory_space<vmem>>, vector<32x128xbf16>
      %63 = arith.extf %62 : vector<32x128xbf16> to vector<32x128xf32>
      %64 = vector.broadcast %57 : vector<1x128xf32> to vector<32x128xf32>
      %65 = arith.mulf %63, %64 : vector<32x128xf32>
      %66 = vector.broadcast %58 : vector<1x128xf32> to vector<32x128xf32>
      %67 = arith.addf %65, %66 : vector<32x128xf32>
      %cst_32 = arith.constant 0.000000e+00 : f32
      %68 = vector.broadcast %cst_32 : f32 to vector<32x128xf32>
      %69 = arith.maximumf %67, %68 : vector<32x128xf32>
      %70 = arith.truncf %69 : vector<32x128xf32> to vector<32x128xbf16>
      %71 = arith.index_cast %60 : i32 to index
      %c0_33 = arith.constant 0 : index
      %72 = vector.load %arg5[%71, %c0_33] : memref<32x128xbf16, #tpu.memory_space<vmem>>, vector<32x128xbf16>
      tpu.vector_store %arg5[%71, %c0_33], %70 {strides = array<i32>} : memref<32x128xbf16, #tpu.memory_space<vmem>>, vector<32x128xbf16>,
      %c1_i32 = arith.constant 1 : i32
    } else {
    }
    return
  }
  func.func @transform_0(%arg0: i32) -> (i32, i32) {
    %c0_i32 = arith.constant 0 : i32
    %c0_i32_0 = arith.constant 0 : i32
    return %arg0, %c0_i32 : i32, i32
  }
  func.func @transform_1(%arg0: i32) -> (i32, i32) {
    %c0_i32 = arith.constant 0 : i32
    %c0_i32_0 = arith.constant 0 : i32
    %c0_i32_1 = arith.constant 0 : i32
    return %c0_i32, %c0_i32_0 : i32, i32
  }
  func.func @transform_2(%arg0: i32) -> (i32, i32) {
    %c0_i32 = arith.constant 0 : i32
    %c0_i32_0 = arith.constant 0 : i32
    %c0_i32_1 = arith.constant 0 : i32
    return %c0_i32, %c0_i32_0 : i32, i32
  }
  func.func @transform_3(%arg0: i32) -> (i32, i32) {
    %c0_i32 = arith.constant 0 : i32
    %c0_i32_0 = arith.constant 0 : i32
    %c0_i32_1 = arith.constant 0 : i32
    return %c0_i32, %c0_i32_0 : i32, i32
  }
  func.func @transform_4(%arg0: i32) -> (i32, i32) {
    %c0_i32 = arith.constant 0 : i32
    %c0_i32_0 = arith.constant 0 : i32
    %c0_i32_1 = arith.constant 0 : i32
    return %c0_i32, %c0_i32_0 : i32, i32
  }
}

module attributes {stable_mosaic.version = 11 : i64} {
  func.func @_conv_bn_relu_resident_kernel(%arg0: i32, %arg1: memref<128x288xbf16, #tpu.memory_space<vmem>>, %arg2: memref<288x64xbf16, #tpu.memory_space<vmem>>, %arg3: memref<1x16xf32, #tpu.memory_space<vmem>>, %arg4: memref<1x16xf32, #tpu.memory_space<vmem>>, %arg5: memref<128x64xbf16, #tpu.memory_space<vmem>>, %arg6: memref<1x64xf32, #tpu.memory_space<vmem>>, %arg7: memref<1x64xf32, #tpu.memory_space<vmem>>) attributes {dimension_semantics = [#tpu.dimension_semantics<arbitrary>], iteration_bounds = array<i64: 1>, scalar_prefetch = 0 : i64, scratch_operands = 2 : i64, tpu.core_type = #tpu.core_type<tc>, window_params = [{transform_indices = @transform_0, window_bounds = array<i64: 128, 288>}, {pipeline_mode = #tpu.pipeline_mode<synchronous>, transform_indices = @transform_1, window_bounds = array<i64: 288, 64>}, {pipeline_mode = #tpu.pipeline_mode<synchronous>, transform_indices = @transform_2, window_bounds = array<i64: 1, 16>}, {pipeline_mode = #tpu.pipeline_mode<synchronous>, transform_indices = @transform_3, window_bounds = array<i64: 1, 16>}, {pipeline_mode = #tpu.pipeline_mode<synchronous>, transform_indices = @transform_4, window_bounds = array<i64: 128, 64>}]} {
    %c0_i32 = arith.constant 0 : i32
    %0 = arith.cmpi eq, %arg0, %c0_i32 : i32
    %1 = arith.extui %0 : i1 to i32
    %c0_i32_0 = arith.constant 0 : i32
    %2 = arith.cmpi ne, %1, %c0_i32_0 : i32
    scf.if %2 {
      %cst_17 = arith.constant 0.000000e+00 : f32
      %25 = vector.broadcast %cst_17 : f32 to vector<1x64xf32>
      %c0_18 = arith.constant 0 : index
      %c0_19 = arith.constant 0 : index
      %26 = vector.load %arg6[%c0_18, %c0_19] : memref<1x64xf32, #tpu.memory_space<vmem>>, vector<1x64xf32>
      tpu.vector_store %arg6[%c0_18, %c0_19], %25 {strides = array<i32>} : memref<1x64xf32, #tpu.memory_space<vmem>>, vector<1x64xf32>,
      %cst_20 = arith.constant 0.000000e+00 : f32
      %27 = vector.broadcast %cst_20 : f32 to vector<1x64xf32>
      %c0_21 = arith.constant 0 : index
      %c0_22 = arith.constant 0 : index
      %28 = vector.load %arg7[%c0_21, %c0_22] : memref<1x64xf32, #tpu.memory_space<vmem>>, vector<1x64xf32>
      tpu.vector_store %arg7[%c0_21, %c0_22], %27 {strides = array<i32>} : memref<1x64xf32, #tpu.memory_space<vmem>>, vector<1x64xf32>,
    } else {
    }
    %c0 = arith.constant 0 : index
    %c0_1 = arith.constant 0 : index
    %3 = vector.load %arg1[%c0, %c0_1] : memref<128x288xbf16, #tpu.memory_space<vmem>>, vector<128x288xbf16>
    %c0_2 = arith.constant 0 : index
    %c0_3 = arith.constant 0 : index
    %4 = vector.load %arg2[%c0_2, %c0_3] : memref<288x64xbf16, #tpu.memory_space<vmem>>, vector<288x64xbf16>
    %cst = arith.constant dense<0.000000e+00> : vector<128x64xf32>
    %5 = tpu.matmul %3, %4, %cst {dimension_numbers = #tpu.dot_dimension_numbers<[1], [0], [0], [1], [0, 0, 1, 1], [], []>} : vector<128x288xbf16>, vector<288x64xbf16>, vector<128x64xf32> -> vector<128x64xf32>
    %c128_i32 = arith.constant 128 : i32
    %6 = arith.muli %arg0, %c128_i32 : i32
    %7 = tpu.assume_multiple %6, 128 : i32
    %8 = arith.truncf %5 : vector<128x64xf32> to vector<128x64xbf16>
    %9 = arith.index_cast %7 : i32 to index
    %c0_4 = arith.constant 0 : index
    %10 = vector.load %arg5[%9, %c0_4] : memref<128x64xbf16, #tpu.memory_space<vmem>>, vector<128x64xbf16>
    tpu.vector_store %arg5[%9, %c0_4], %8 {strides = array<i32>} : memref<128x64xbf16, #tpu.memory_space<vmem>>, vector<128x64xbf16>,
    %c0_5 = arith.constant 0 : index
    %c0_6 = arith.constant 0 : index
    %11 = vector.load %arg6[%c0_5, %c0_6] : memref<1x64xf32, #tpu.memory_space<vmem>>, vector<1x64xf32>
    %cst_7 = arith.constant dense<0.000000e+00> : vector<64xf32>
    %12 = vector.multi_reduction <add>, %5, %cst_7 [0] : vector<128x64xf32> to vector<64xf32>
    %13 = vector.shape_cast %12 : vector<64xf32> to vector<1x64xf32>
    %14 = arith.addf %11, %13 : vector<1x64xf32>
    %c0_8 = arith.constant 0 : index
    %c0_9 = arith.constant 0 : index
    %15 = vector.load %arg6[%c0_8, %c0_9] : memref<1x64xf32, #tpu.memory_space<vmem>>, vector<1x64xf32>
    tpu.vector_store %arg6[%c0_8, %c0_9], %14 {strides = array<i32>} : memref<1x64xf32, #tpu.memory_space<vmem>>, vector<1x64xf32>,
    %c0_10 = arith.constant 0 : index
    %c0_11 = arith.constant 0 : index
    %16 = vector.load %arg7[%c0_10, %c0_11] : memref<1x64xf32, #tpu.memory_space<vmem>>, vector<1x64xf32>
    %17 = arith.mulf %5, %5 : vector<128x64xf32>
    %cst_12 = arith.constant dense<0.000000e+00> : vector<64xf32>
    %18 = vector.multi_reduction <add>, %17, %cst_12 [0] : vector<128x64xf32> to vector<64xf32>
    %19 = vector.shape_cast %18 : vector<64xf32> to vector<1x64xf32>
    %20 = arith.addf %16, %19 : vector<1x64xf32>
    %c0_13 = arith.constant 0 : index
    %c0_14 = arith.constant 0 : index
    %21 = vector.load %arg7[%c0_13, %c0_14] : memref<1x64xf32, #tpu.memory_space<vmem>>, vector<1x64xf32>
    tpu.vector_store %arg7[%c0_13, %c0_14], %20 {strides = array<i32>} : memref<1x64xf32, #tpu.memory_space<vmem>>, vector<1x64xf32>,
    %c0_i32_15 = arith.constant 0 : i32
    %22 = arith.cmpi eq, %arg0, %c0_i32_15 : i32
    %23 = arith.extui %22 : i1 to i32
    %c0_i32_16 = arith.constant 0 : i32
    %24 = arith.cmpi ne, %23, %c0_i32_16 : i32
    scf.if %24 {
      %c0_17 = arith.constant 0 : index
      %c0_18 = arith.constant 0 : index
      %25 = vector.load %arg6[%c0_17, %c0_18] : memref<1x64xf32, #tpu.memory_space<vmem>>, vector<1x64xf32>
      %c0_19 = arith.constant 0 : index
      %c0_20 = arith.constant 0 : index
      %26 = vector.load %arg7[%c0_19, %c0_20] : memref<1x64xf32, #tpu.memory_space<vmem>>, vector<1x64xf32>
      %c0_21 = arith.constant 0 : index
      %c0_22 = arith.constant 0 : index
      %27 = vector.load %arg3[%c0_21, %c0_22] : memref<1x16xf32, #tpu.memory_space<vmem>>, vector<1x16xf32>
      %c0_23 = arith.constant 0 : index
      %c0_24 = arith.constant 0 : index
      %28 = vector.load %arg4[%c0_23, %c0_24] : memref<1x16xf32, #tpu.memory_space<vmem>>, vector<1x16xf32>
      %29 = vector.extract_strided_slice %25 {offsets = [0, 0], sizes = [1, 16], strides = [1, 1]} : vector<1x64xf32> to vector<1x16xf32>
      %30 = vector.extract_strided_slice %26 {offsets = [0, 0], sizes = [1, 16], strides = [1, 1]} : vector<1x64xf32> to vector<1x16xf32>
      %31 = vector.extract_strided_slice %25 {offsets = [0, 16], sizes = [1, 16], strides = [1, 1]} : vector<1x64xf32> to vector<1x16xf32>
      %32 = arith.addf %29, %31 : vector<1x16xf32>
      %33 = vector.extract_strided_slice %26 {offsets = [0, 16], sizes = [1, 16], strides = [1, 1]} : vector<1x64xf32> to vector<1x16xf32>
      %34 = arith.addf %30, %33 : vector<1x16xf32>
      %35 = vector.extract_strided_slice %25 {offsets = [0, 32], sizes = [1, 16], strides = [1, 1]} : vector<1x64xf32> to vector<1x16xf32>
      %36 = arith.addf %32, %35 : vector<1x16xf32>
      %37 = vector.extract_strided_slice %26 {offsets = [0, 32], sizes = [1, 16], strides = [1, 1]} : vector<1x64xf32> to vector<1x16xf32>
      %38 = arith.addf %34, %37 : vector<1x16xf32>
      %39 = vector.extract_strided_slice %25 {offsets = [0, 48], sizes = [1, 16], strides = [1, 1]} : vector<1x64xf32> to vector<1x16xf32>
      %40 = arith.addf %36, %39 : vector<1x16xf32>
      %41 = vector.extract_strided_slice %26 {offsets = [0, 48], sizes = [1, 16], strides = [1, 1]} : vector<1x64xf32> to vector<1x16xf32>
      %42 = arith.addf %38, %41 : vector<1x16xf32>
      %cst_25 = arith.constant 0.001953125 : f32
      %43 = vector.broadcast %cst_25 : f32 to vector<1x16xf32>
      %44 = arith.mulf %40, %43 : vector<1x16xf32>
      %cst_26 = arith.constant 0.001953125 : f32
      %45 = vector.broadcast %cst_26 : f32 to vector<1x16xf32>
      %46 = arith.mulf %42, %45 : vector<1x16xf32>
      %47 = arith.mulf %44, %44 : vector<1x16xf32>
      %48 = arith.subf %46, %47 : vector<1x16xf32>
      %cst_27 = arith.constant 0.000000e+00 : f32
      %49 = vector.broadcast %cst_27 : f32 to vector<1x16xf32>
      %50 = arith.maximumf %48, %49 : vector<1x16xf32>
      %cst_28 = arith.constant 9.99999974E-6 : f32
      %51 = vector.broadcast %cst_28 : f32 to vector<1x16xf32>
      %52 = arith.addf %50, %51 : vector<1x16xf32>
      %53 = math.rsqrt %52 : vector<1x16xf32>
      %54 = arith.mulf %27, %53 : vector<1x16xf32>
      %55 = arith.mulf %44, %54 : vector<1x16xf32>
      %56 = arith.subf %28, %55 : vector<1x16xf32>
      %57 = tpu.concatenate %54, %54, %54, %54 in 1 : vector<1x16xf32>, vector<1x16xf32>, vector<1x16xf32>, vector<1x16xf32> -> vector<1x64xf32>
      %58 = tpu.concatenate %56, %56, %56, %56 in 1 : vector<1x16xf32>, vector<1x16xf32>, vector<1x16xf32>, vector<1x16xf32> -> vector<1x64xf32>
      %c0_i32_29 = arith.constant 0 : i32
      %c128_i32_30 = arith.constant 128 : i32
      %59 = arith.muli %c0_i32_29, %c128_i32_30 : i32
      %60 = tpu.assume_multiple %59, 128 : i32
      %61 = arith.index_cast %60 : i32 to index
      %c0_31 = arith.constant 0 : index
      %62 = vector.load %arg5[%61, %c0_31] : memref<128x64xbf16, #tpu.memory_space<vmem>>, vector<128x64xbf16>
      %63 = arith.extf %62 : vector<128x64xbf16> to vector<128x64xf32>
      %64 = vector.broadcast %57 : vector<1x64xf32> to vector<128x64xf32>
      %65 = arith.mulf %63, %64 : vector<128x64xf32>
      %66 = vector.broadcast %58 : vector<1x64xf32> to vector<128x64xf32>
      %67 = arith.addf %65, %66 : vector<128x64xf32>
      %cst_32 = arith.constant 0.000000e+00 : f32
      %68 = vector.broadcast %cst_32 : f32 to vector<128x64xf32>
      %69 = arith.maximumf %67, %68 : vector<128x64xf32>
      %70 = arith.truncf %69 : vector<128x64xf32> to vector<128x64xbf16>
      %71 = arith.index_cast %60 : i32 to index
      %c0_33 = arith.constant 0 : index
      %72 = vector.load %arg5[%71, %c0_33] : memref<128x64xbf16, #tpu.memory_space<vmem>>, vector<128x64xbf16>
      tpu.vector_store %arg5[%71, %c0_33], %70 {strides = array<i32>} : memref<128x64xbf16, #tpu.memory_space<vmem>>, vector<128x64xbf16>,
      %c1_i32 = arith.constant 1 : i32
    } else {
    }
    return
  }
  func.func @transform_0(%arg0: i32) -> (i32, i32) {
    %c0_i32 = arith.constant 0 : i32
    %c0_i32_0 = arith.constant 0 : i32
    return %arg0, %c0_i32 : i32, i32
  }
  func.func @transform_1(%arg0: i32) -> (i32, i32) {
    %c0_i32 = arith.constant 0 : i32
    %c0_i32_0 = arith.constant 0 : i32
    %c0_i32_1 = arith.constant 0 : i32
    return %c0_i32, %c0_i32_0 : i32, i32
  }
  func.func @transform_2(%arg0: i32) -> (i32, i32) {
    %c0_i32 = arith.constant 0 : i32
    %c0_i32_0 = arith.constant 0 : i32
    %c0_i32_1 = arith.constant 0 : i32
    return %c0_i32, %c0_i32_0 : i32, i32
  }
  func.func @transform_3(%arg0: i32) -> (i32, i32) {
    %c0_i32 = arith.constant 0 : i32
    %c0_i32_0 = arith.constant 0 : i32
    %c0_i32_1 = arith.constant 0 : i32
    return %c0_i32, %c0_i32_0 : i32, i32
  }
  func.func @transform_4(%arg0: i32) -> (i32, i32) {
    %c0_i32 = arith.constant 0 : i32
    %c0_i32_0 = arith.constant 0 : i32
    %c0_i32_1 = arith.constant 0 : i32
    return %c0_i32, %c0_i32_0 : i32, i32
  }
}

module attributes {stable_mosaic.version = 11 : i64} {
  func.func @_conv_bn_relu_resident_kernel(%arg0: i32, %arg1: memref<512x144xbf16, #tpu.memory_space<vmem>>, %arg2: memref<144x32xbf16, #tpu.memory_space<vmem>>, %arg3: memref<1x8xf32, #tpu.memory_space<vmem>>, %arg4: memref<1x8xf32, #tpu.memory_space<vmem>>, %arg5: memref<512x32xbf16, #tpu.memory_space<vmem>>, %arg6: memref<1x32xf32, #tpu.memory_space<vmem>>, %arg7: memref<1x32xf32, #tpu.memory_space<vmem>>) attributes {dimension_semantics = [#tpu.dimension_semantics<arbitrary>], iteration_bounds = array<i64: 1>, scalar_prefetch = 0 : i64, scratch_operands = 2 : i64, tpu.core_type = #tpu.core_type<tc>, window_params = [{transform_indices = @transform_0, window_bounds = array<i64: 512, 144>}, {pipeline_mode = #tpu.pipeline_mode<synchronous>, transform_indices = @transform_1, window_bounds = array<i64: 144, 32>}, {pipeline_mode = #tpu.pipeline_mode<synchronous>, transform_indices = @transform_2, window_bounds = array<i64: 1, 8>}, {pipeline_mode = #tpu.pipeline_mode<synchronous>, transform_indices = @transform_3, window_bounds = array<i64: 1, 8>}, {pipeline_mode = #tpu.pipeline_mode<synchronous>, transform_indices = @transform_4, window_bounds = array<i64: 512, 32>}]} {
    %c0_i32 = arith.constant 0 : i32
    %0 = arith.cmpi eq, %arg0, %c0_i32 : i32
    %1 = arith.extui %0 : i1 to i32
    %c0_i32_0 = arith.constant 0 : i32
    %2 = arith.cmpi ne, %1, %c0_i32_0 : i32
    scf.if %2 {
      %cst_17 = arith.constant 0.000000e+00 : f32
      %25 = vector.broadcast %cst_17 : f32 to vector<1x32xf32>
      %c0_18 = arith.constant 0 : index
      %c0_19 = arith.constant 0 : index
      %26 = vector.load %arg6[%c0_18, %c0_19] : memref<1x32xf32, #tpu.memory_space<vmem>>, vector<1x32xf32>
      tpu.vector_store %arg6[%c0_18, %c0_19], %25 {strides = array<i32>} : memref<1x32xf32, #tpu.memory_space<vmem>>, vector<1x32xf32>,
      %cst_20 = arith.constant 0.000000e+00 : f32
      %27 = vector.broadcast %cst_20 : f32 to vector<1x32xf32>
      %c0_21 = arith.constant 0 : index
      %c0_22 = arith.constant 0 : index
      %28 = vector.load %arg7[%c0_21, %c0_22] : memref<1x32xf32, #tpu.memory_space<vmem>>, vector<1x32xf32>
      tpu.vector_store %arg7[%c0_21, %c0_22], %27 {strides = array<i32>} : memref<1x32xf32, #tpu.memory_space<vmem>>, vector<1x32xf32>,
    } else {
    }
    %c0 = arith.constant 0 : index
    %c0_1 = arith.constant 0 : index
    %3 = vector.load %arg1[%c0, %c0_1] : memref<512x144xbf16, #tpu.memory_space<vmem>>, vector<512x144xbf16>
    %c0_2 = arith.constant 0 : index
    %c0_3 = arith.constant 0 : index
    %4 = vector.load %arg2[%c0_2, %c0_3] : memref<144x32xbf16, #tpu.memory_space<vmem>>, vector<144x32xbf16>
    %cst = arith.constant dense<0.000000e+00> : vector<512x32xf32>
    %5 = tpu.matmul %3, %4, %cst {dimension_numbers = #tpu.dot_dimension_numbers<[1], [0], [0], [1], [0, 0, 1, 1], [], []>} : vector<512x144xbf16>, vector<144x32xbf16>, vector<512x32xf32> -> vector<512x32xf32>
    %c512_i32 = arith.constant 512 : i32
    %6 = arith.muli %arg0, %c512_i32 : i32
    %7 = tpu.assume_multiple %6, 512 : i32
    %8 = arith.truncf %5 : vector<512x32xf32> to vector<512x32xbf16>
    %9 = arith.index_cast %7 : i32 to index
    %c0_4 = arith.constant 0 : index
    %10 = vector.load %arg5[%9, %c0_4] : memref<512x32xbf16, #tpu.memory_space<vmem>>, vector<512x32xbf16>
    tpu.vector_store %arg5[%9, %c0_4], %8 {strides = array<i32>} : memref<512x32xbf16, #tpu.memory_space<vmem>>, vector<512x32xbf16>,
    %c0_5 = arith.constant 0 : index
    %c0_6 = arith.constant 0 : index
    %11 = vector.load %arg6[%c0_5, %c0_6] : memref<1x32xf32, #tpu.memory_space<vmem>>, vector<1x32xf32>
    %cst_7 = arith.constant dense<0.000000e+00> : vector<32xf32>
    %12 = vector.multi_reduction <add>, %5, %cst_7 [0] : vector<512x32xf32> to vector<32xf32>
    %13 = vector.shape_cast %12 : vector<32xf32> to vector<1x32xf32>
    %14 = arith.addf %11, %13 : vector<1x32xf32>
    %c0_8 = arith.constant 0 : index
    %c0_9 = arith.constant 0 : index
    %15 = vector.load %arg6[%c0_8, %c0_9] : memref<1x32xf32, #tpu.memory_space<vmem>>, vector<1x32xf32>
    tpu.vector_store %arg6[%c0_8, %c0_9], %14 {strides = array<i32>} : memref<1x32xf32, #tpu.memory_space<vmem>>, vector<1x32xf32>,
    %c0_10 = arith.constant 0 : index
    %c0_11 = arith.constant 0 : index
    %16 = vector.load %arg7[%c0_10, %c0_11] : memref<1x32xf32, #tpu.memory_space<vmem>>, vector<1x32xf32>
    %17 = arith.mulf %5, %5 : vector<512x32xf32>
    %cst_12 = arith.constant dense<0.000000e+00> : vector<32xf32>
    %18 = vector.multi_reduction <add>, %17, %cst_12 [0] : vector<512x32xf32> to vector<32xf32>
    %19 = vector.shape_cast %18 : vector<32xf32> to vector<1x32xf32>
    %20 = arith.addf %16, %19 : vector<1x32xf32>
    %c0_13 = arith.constant 0 : index
    %c0_14 = arith.constant 0 : index
    %21 = vector.load %arg7[%c0_13, %c0_14] : memref<1x32xf32, #tpu.memory_space<vmem>>, vector<1x32xf32>
    tpu.vector_store %arg7[%c0_13, %c0_14], %20 {strides = array<i32>} : memref<1x32xf32, #tpu.memory_space<vmem>>, vector<1x32xf32>,
    %c0_i32_15 = arith.constant 0 : i32
    %22 = arith.cmpi eq, %arg0, %c0_i32_15 : i32
    %23 = arith.extui %22 : i1 to i32
    %c0_i32_16 = arith.constant 0 : i32
    %24 = arith.cmpi ne, %23, %c0_i32_16 : i32
    scf.if %24 {
      %c0_17 = arith.constant 0 : index
      %c0_18 = arith.constant 0 : index
      %25 = vector.load %arg6[%c0_17, %c0_18] : memref<1x32xf32, #tpu.memory_space<vmem>>, vector<1x32xf32>
      %c0_19 = arith.constant 0 : index
      %c0_20 = arith.constant 0 : index
      %26 = vector.load %arg7[%c0_19, %c0_20] : memref<1x32xf32, #tpu.memory_space<vmem>>, vector<1x32xf32>
      %c0_21 = arith.constant 0 : index
      %c0_22 = arith.constant 0 : index
      %27 = vector.load %arg3[%c0_21, %c0_22] : memref<1x8xf32, #tpu.memory_space<vmem>>, vector<1x8xf32>
      %c0_23 = arith.constant 0 : index
      %c0_24 = arith.constant 0 : index
      %28 = vector.load %arg4[%c0_23, %c0_24] : memref<1x8xf32, #tpu.memory_space<vmem>>, vector<1x8xf32>
      %29 = vector.extract_strided_slice %25 {offsets = [0, 0], sizes = [1, 8], strides = [1, 1]} : vector<1x32xf32> to vector<1x8xf32>
      %30 = vector.extract_strided_slice %26 {offsets = [0, 0], sizes = [1, 8], strides = [1, 1]} : vector<1x32xf32> to vector<1x8xf32>
      %31 = vector.extract_strided_slice %25 {offsets = [0, 8], sizes = [1, 8], strides = [1, 1]} : vector<1x32xf32> to vector<1x8xf32>
      %32 = arith.addf %29, %31 : vector<1x8xf32>
      %33 = vector.extract_strided_slice %26 {offsets = [0, 8], sizes = [1, 8], strides = [1, 1]} : vector<1x32xf32> to vector<1x8xf32>
      %34 = arith.addf %30, %33 : vector<1x8xf32>
      %35 = vector.extract_strided_slice %25 {offsets = [0, 16], sizes = [1, 8], strides = [1, 1]} : vector<1x32xf32> to vector<1x8xf32>
      %36 = arith.addf %32, %35 : vector<1x8xf32>
      %37 = vector.extract_strided_slice %26 {offsets = [0, 16], sizes = [1, 8], strides = [1, 1]} : vector<1x32xf32> to vector<1x8xf32>
      %38 = arith.addf %34, %37 : vector<1x8xf32>
      %39 = vector.extract_strided_slice %25 {offsets = [0, 24], sizes = [1, 8], strides = [1, 1]} : vector<1x32xf32> to vector<1x8xf32>
      %40 = arith.addf %36, %39 : vector<1x8xf32>
      %41 = vector.extract_strided_slice %26 {offsets = [0, 24], sizes = [1, 8], strides = [1, 1]} : vector<1x32xf32> to vector<1x8xf32>
      %42 = arith.addf %38, %41 : vector<1x8xf32>
      %cst_25 = arith.constant 4.8828125E-4 : f32
      %43 = vector.broadcast %cst_25 : f32 to vector<1x8xf32>
      %44 = arith.mulf %40, %43 : vector<1x8xf32>
      %cst_26 = arith.constant 4.8828125E-4 : f32
      %45 = vector.broadcast %cst_26 : f32 to vector<1x8xf32>
      %46 = arith.mulf %42, %45 : vector<1x8xf32>
      %47 = arith.mulf %44, %44 : vector<1x8xf32>
      %48 = arith.subf %46, %47 : vector<1x8xf32>
      %cst_27 = arith.constant 0.000000e+00 : f32
      %49 = vector.broadcast %cst_27 : f32 to vector<1x8xf32>
      %50 = arith.maximumf %48, %49 : vector<1x8xf32>
      %cst_28 = arith.constant 9.99999974E-6 : f32
      %51 = vector.broadcast %cst_28 : f32 to vector<1x8xf32>
      %52 = arith.addf %50, %51 : vector<1x8xf32>
      %53 = math.rsqrt %52 : vector<1x8xf32>
      %54 = arith.mulf %27, %53 : vector<1x8xf32>
      %55 = arith.mulf %44, %54 : vector<1x8xf32>
      %56 = arith.subf %28, %55 : vector<1x8xf32>
      %57 = tpu.concatenate %54, %54, %54, %54 in 1 : vector<1x8xf32>, vector<1x8xf32>, vector<1x8xf32>, vector<1x8xf32> -> vector<1x32xf32>
      %58 = tpu.concatenate %56, %56, %56, %56 in 1 : vector<1x8xf32>, vector<1x8xf32>, vector<1x8xf32>, vector<1x8xf32> -> vector<1x32xf32>
      %c0_i32_29 = arith.constant 0 : i32
      %c512_i32_30 = arith.constant 512 : i32
      %59 = arith.muli %c0_i32_29, %c512_i32_30 : i32
      %60 = tpu.assume_multiple %59, 512 : i32
      %61 = arith.index_cast %60 : i32 to index
      %c0_31 = arith.constant 0 : index
      %62 = vector.load %arg5[%61, %c0_31] : memref<512x32xbf16, #tpu.memory_space<vmem>>, vector<512x32xbf16>
      %63 = arith.extf %62 : vector<512x32xbf16> to vector<512x32xf32>
      %64 = vector.broadcast %57 : vector<1x32xf32> to vector<512x32xf32>
      %65 = arith.mulf %63, %64 : vector<512x32xf32>
      %66 = vector.broadcast %58 : vector<1x32xf32> to vector<512x32xf32>
      %67 = arith.addf %65, %66 : vector<512x32xf32>
      %cst_32 = arith.constant 0.000000e+00 : f32
      %68 = vector.broadcast %cst_32 : f32 to vector<512x32xf32>
      %69 = arith.maximumf %67, %68 : vector<512x32xf32>
      %70 = arith.truncf %69 : vector<512x32xf32> to vector<512x32xbf16>
      %71 = arith.index_cast %60 : i32 to index
      %c0_33 = arith.constant 0 : index
      %72 = vector.load %arg5[%71, %c0_33] : memref<512x32xbf16, #tpu.memory_space<vmem>>, vector<512x32xbf16>
      tpu.vector_store %arg5[%71, %c0_33], %70 {strides = array<i32>} : memref<512x32xbf16, #tpu.memory_space<vmem>>, vector<512x32xbf16>,
      %c1_i32 = arith.constant 1 : i32
    } else {
    }
    return
  }
  func.func @transform_0(%arg0: i32) -> (i32, i32) {
    %c0_i32 = arith.constant 0 : i32
    %c0_i32_0 = arith.constant 0 : i32
    return %arg0, %c0_i32 : i32, i32
  }
  func.func @transform_1(%arg0: i32) -> (i32, i32) {
    %c0_i32 = arith.constant 0 : i32
    %c0_i32_0 = arith.constant 0 : i32
    %c0_i32_1 = arith.constant 0 : i32
    return %c0_i32, %c0_i32_0 : i32, i32
  }
  func.func @transform_2(%arg0: i32) -> (i32, i32) {
    %c0_i32 = arith.constant 0 : i32
    %c0_i32_0 = arith.constant 0 : i32
    %c0_i32_1 = arith.constant 0 : i32
    return %c0_i32, %c0_i32_0 : i32, i32
  }
  func.func @transform_3(%arg0: i32) -> (i32, i32) {
    %c0_i32 = arith.constant 0 : i32
    %c0_i32_0 = arith.constant 0 : i32
    %c0_i32_1 = arith.constant 0 : i32
    return %c0_i32, %c0_i32_0 : i32, i32
  }
  func.func @transform_4(%arg0: i32) -> (i32, i32) {
    %c0_i32 = arith.constant 0 : i32
    %c0_i32_0 = arith.constant 0 : i32
    %c0_i32_1 = arith.constant 0 : i32
    return %c0_i32, %c0_i32_0 : i32, i32
  }
}

module attributes {stable_mosaic.version = 11 : i64} {
  func.func @_conv_tanh_kernel(%arg0: i32, %arg1: memref<2048x72xbf16, #tpu.memory_space<vmem>>, %arg2: memref<72x12xbf16, #tpu.memory_space<vmem>>, %arg3: memref<2048x12xf32, #tpu.memory_space<vmem>>) attributes {dimension_semantics = [#tpu.dimension_semantics<parallel>], iteration_bounds = array<i64: 1>, scalar_prefetch = 0 : i64, scratch_operands = 0 : i64, tpu.core_type = #tpu.core_type<tc>, window_params = [{transform_indices = @transform_0, window_bounds = array<i64: 2048, 72>}, {pipeline_mode = #tpu.pipeline_mode<synchronous>, transform_indices = @transform_1, window_bounds = array<i64: 72, 12>}, {transform_indices = @transform_2, window_bounds = array<i64: 2048, 12>}]} {
    %c0 = arith.constant 0 : index
    %c0_0 = arith.constant 0 : index
    %0 = vector.load %arg1[%c0, %c0_0] : memref<2048x72xbf16, #tpu.memory_space<vmem>>, vector<2048x72xbf16>
    %c0_1 = arith.constant 0 : index
    %c0_2 = arith.constant 0 : index
    %1 = vector.load %arg2[%c0_1, %c0_2] : memref<72x12xbf16, #tpu.memory_space<vmem>>, vector<72x12xbf16>
    %cst = arith.constant dense<0.000000e+00> : vector<2048x12xf32>
    %2 = tpu.matmul %0, %1, %cst {dimension_numbers = #tpu.dot_dimension_numbers<[1], [0], [0], [1], [0, 0, 1, 1], [], []>} : vector<2048x72xbf16>, vector<72x12xbf16>, vector<2048x12xf32> -> vector<2048x12xf32>
    %3 = math.tanh %2 : vector<2048x12xf32>
    %c0_3 = arith.constant 0 : index
    %c0_4 = arith.constant 0 : index
    %4 = vector.load %arg3[%c0_3, %c0_4] : memref<2048x12xf32, #tpu.memory_space<vmem>>, vector<2048x12xf32>
    tpu.vector_store %arg3[%c0_3, %c0_4], %3 {strides = array<i32>} : memref<2048x12xf32, #tpu.memory_space<vmem>>, vector<2048x12xf32>,
    return
  }
  func.func @transform_0(%arg0: i32) -> (i32, i32) {
    %c0_i32 = arith.constant 0 : i32
    %c0_i32_0 = arith.constant 0 : i32
    return %arg0, %c0_i32 : i32, i32
  }
  func.func @transform_1(%arg0: i32) -> (i32, i32) {
    %c0_i32 = arith.constant 0 : i32
    %c0_i32_0 = arith.constant 0 : i32
    %c0_i32_1 = arith.constant 0 : i32
    return %c0_i32, %c0_i32_0 : i32, i32
  }
  func.func @transform_2(%arg0: i32) -> (i32, i32) {
    %c0_i32 = arith.constant 0 : i32
    %c0_i32_0 = arith.constant 0 : i32
    return %arg0, %c0_i32 : i32, i32
  }
}

</mosaic_0001>

<llo_original>
// kernel: tpu_custom_call.1
$region0: #{tpu_custom_call.1}
  #allocation0 [shape = 'u32[]', space=smem, size = 0x4, offset = 0x4, fixed_abs, tag = 'smem constant byte address 0x4 - core index']
  #allocation1 [shape = 'u32[72,128]{1,0:T(1,128)}', space=vmem, size = 0x9000, scoped, tag = 'internal scratch']
  %s0 = inlined_call_operand.hbm [shape: f32[8,128], index: 0, kind: input, shape index: {}]
  %s1 = inlined_call_operand.hbm [shape: f32[16,128], index: 1, kind: input, shape index: {}]
  %s2 = inlined_call_operand.hbm [shape: f32[16,128], index: 2, kind: output, shape index: {}]
  %s3 = sld [smem:[#allocation0]]
  $region49: #{tpu_custom_call.1} parent=0
    _
  %s5 = ssub.s32 1, %s3
  %s6 = scalar_select 0, %s5, %s3
  $region1: #{tpu_custom_call.1} parent=0
    #allocation2 [shape = 'u8[4096]{0}', space=vmem, size = 0x1000, scoped, tag = 'input window, operand 0, single buffered']
    #allocation3 [shape = 's32[2]{0}', space=sflag, size = 0x8, scoped, tag = 'scoped memory for tpu_custom_call.1']
    #allocation4 [shape = 's32[2]{0}', space=sflag, size = 0x8, scoped, tag = 'scoped memory for tpu_custom_call.1']
    #allocation5 [shape = 'u8[8192]{0}', space=vmem, size = 0x2000, scoped, tag = 'input window, operand 1']
    #allocation6 [shape = 's32[2]{0}', space=sflag, size = 0x8, scoped, tag = 'scoped memory for tpu_custom_call.1']
    #allocation7 [shape = 'u8[8192]{0}', space=vmem, size = 0x2000, scoped, tag = 'output window, operand 0']
    %7 = vsyncpa [#allocation3], 0
    %8 = vsyncpa [#allocation6], 0
    %s9 = scalar_lea.sflag [#allocation6], 1
    %10 = vsyncpa %s9, 0
    %11 = vsyncpa [#allocation4], 0
    %s12 = scalar_lea.sflag [#allocation4], 1
    %13 = vsyncpa %s12, 0
    loop: start=0, step=1, limit=4
    $region2: #{tpu_custom_call.1} parent=1 // loop_pre_header
      _
    $region3: #{tpu_custom_call.1} parent=1 // loop_header
      %s15 = sphi 0, %s19
      %p16 = scmp.ge.s32.totalorder %s15, 4
      %s23 = sphi 0, %s23
      %s25 = sphi 0, %s23
      %s26 = sphi 0, %s25
      %s40 = sphi 0, %s26
      %s46 = sphi 0, %s48
      %s49 = sphi 0, %s46
      %s50 = sphi 0, %s49
      %s66 = sphi 0, %s50
      %s72 = sphi 0, %s74
      %s75 = sphi 0, %s72
      %s76 = sphi 0, %s75
      %s92 = sphi 0, %s76
    $region4: #{tpu_custom_call.1} parent=1 // loop_header_branch
      %18 = sbr.rel (%p16) target = $region8
    $region5: #{tpu_custom_call.1} parent=1 // loop_body
      %s20 = ssub.s32 %s15, 1
      %s21 = ssub.s32 %s15, 2
      %s22 = sadd.s32 %s15, 1
      %s24 = sadd.s32 %s23, 1
      %p27 = scmp.eq.s32.totalorder %s15, 1
      %p28 = scmp.ne.s32.totalorder %s23, %s25
      %p29 = scmp.eq.s32.totalorder %s15, 0
      %p30 = por %p28, %p29
      %p31 = scmp.ne.s32.totalorder %s23, %s25
      %p32 = scmp.eq.s32.totalorder %s20, 1
      %p33 = por %p31, %p32
      %p34 = scmp.ne.s32.totalorder %s25, %s26
      %p35 = scmp.eq.s32.totalorder %s20, 0
      %p36 = por %p34, %p35
      %p37 = scmp.ne.s32.totalorder %s25, %s26
      %p38 = scmp.eq.s32.totalorder %s21, 1
      %p39 = por %p37, %p38
      %p41 = scmp.ne.s32.totalorder %s26, %s40
      %p42 = scmp.eq.s32.totalorder %s21, 0
      %p43 = por %p41, %p42
      %s44 = ssub.s32 %s15, %s22
      %p45 = scmp.eq.s32.totalorder %s44, 0
      %s47 = sadd.s32 %s46, 1
      %s48 = scalar_select %p45, %s46, %s47
      %p51 = pneg %p45
      %p52 = scmp.eq.s32.totalorder %s15, 1
      %p53 = por %p51, %p52
      %p54 = scmp.ne.s32.totalorder %s46, %s49
      %p55 = scmp.eq.s32.totalorder %s15, 0
      %p56 = por %p54, %p55
      %p57 = scmp.ne.s32.totalorder %s46, %s49
      %p58 = scmp.eq.s32.totalorder %s20, 1
      %p59 = por %p57, %p58
      %p60 = scmp.ne.s32.totalorder %s49, %s50
      %p61 = scmp.eq.s32.totalorder %s20, 0
      %p62 = por %p60, %p61
      %p63 = scmp.ne.s32.totalorder %s49, %s50
      %p64 = scmp.eq.s32.totalorder %s21, 1
      %p65 = por %p63, %p64
      %p67 = scmp.ne.s32.totalorder %s50, %s66
      %p68 = scmp.eq.s32.totalorder %s21, 0
      %p69 = por %p67, %p68
      %s70 = ssub.s32 %s15, %s22
      %p71 = scmp.eq.s32.totalorder %s70, 0
      %s73 = sadd.s32 %s72, 1
      %s74 = scalar_select %p71, %s72, %s73
      %p77 = pneg %p71
      %p78 = scmp.eq.s32.totalorder %s15, 1
      %p79 = por %p77, %p78
      %p80 = scmp.ne.s32.totalorder %s72, %s75
      %p81 = scmp.eq.s32.totalorder %s15, 0
      %p82 = por %p80, %p81
      %p83 = scmp.ne.s32.totalorder %s72, %s75
      %p84 = scmp.eq.s32.totalorder %s20, 1
      %p85 = por %p83, %p84
      %p86 = scmp.ne.s32.totalorder %s75, %s76
      %p87 = scmp.eq.s32.totalorder %s20, 0
      %p88 = por %p86, %p87
      %p89 = scmp.ne.s32.totalorder %s75, %s76
      %p90 = scmp.eq.s32.totalorder %s21, 1
      %p91 = por %p89, %p90
      %p93 = scmp.ne.s32.totalorder %s76, %s92
      %p94 = scmp.eq.s32.totalorder %s21, 0
      %p95 = por %p93, %p94
      %p96 = scmp.le.s32.totalorder 1, %s15
      %p97 = scmp.lt.s32.totalorder %s15, 3
      %p98 = pnand %p96, %p97
      %p99 = pneg %p98
      // Predicated region
      $region9: #{tpu_custom_call.1} parent=5 // pred_check
        _
      $region10: #{tpu_custom_call.1} parent=5 // pred_check_branch
        %101 = sbr.rel (%p98) target = $region12
      $region11: #{tpu_custom_call.1} parent=5 // pred_region
        %s102 = ssub.s32 %s15, 1
        // Predicated region
        $region13: #{tpu_custom_call.1} parent=11 // pred_check
          %p103 = pneg %p36
        $region14: #{tpu_custom_call.1} parent=11 // pred_check_branch
          %105 = sbr.rel (%p103) target = $region16
        $region15: #{tpu_custom_call.1} parent=11 // pred_region
          %107 = vsyncadd [#allocation3], 0
          %s109 = sshll.u32 %s0, 4
          %s110 = int_to_ptr.hbm [resolvable:$true] %s109
          %s111 = sshll.u32 [#allocation2], 4
          %s112 = int_to_ptr.vmem [resolvable:$true] %s111
          %114 = dma.hbm_to_vmem [thread:$0]  %s110, 128, %s112, [#allocation3]
        $region16: #{tpu_custom_call.1} parent=11 // pred_fallthru
          _
      $region12: #{tpu_custom_call.1} parent=5 // pred_fallthru
        _
      %p115 = scmp.lt.s32.totalorder %s15, 2
      // Predicated region
      $region17: #{tpu_custom_call.1} parent=5 // pred_check
        %p116 = pneg %p115
      $region18: #{tpu_custom_call.1} parent=5 // pred_check_branch
        %118 = sbr.rel (%p116) target = $region20
      $region19: #{tpu_custom_call.1} parent=5 // pred_region
        // Predicated region
        $region21: #{tpu_custom_call.1} parent=19 // pred_check
          %p119 = pneg %p56
        $region22: #{tpu_custom_call.1} parent=19 // pred_check_branch
          %121 = sbr.rel (%p119) target = $region24
        $region23: #{tpu_custom_call.1} parent=19 // pred_region
          %s122 = sand.u32 %s46, 1
          %s123 = scalar_lea.sflag [#allocation6], %s122
          %s124 = sand.u32 %s46, 1
          %s125 = smul.addr %s124, 8
          %s126 = scalar_lea.vmem [#allocation5], %s125
          %128 = vsyncadd %s123, 0
          %s129 = smul.addr %s15, 8
          %s130 = scalar_lea.hbm %s1, %s129
          %s132 = sshll.u32 %s130, 4
          %s133 = int_to_ptr.hbm [resolvable:$true] %s132
          %s134 = sshll.u32 %s126, 4
          %s135 = int_to_ptr.vmem [resolvable:$true] %s134
          %137 = dma.hbm_to_vmem [thread:$0]  %s133, 128, %s135, %s123
        $region24: #{tpu_custom_call.1} parent=19 // pred_fallthru
          _
      $region20: #{tpu_custom_call.1} parent=5 // pred_fallthru
        _
      %p138 = scmp.le.s32.totalorder 1, %s15
      %p139 = scmp.lt.s32.totalorder %s15, 3
      %p140 = pnand %p138, %p139
      %p141 = pneg %p140
      // Predicated region
      $region25: #{tpu_custom_call.1} parent=5 // pred_check
        _
      $region26: #{tpu_custom_call.1} parent=5 // pred_check_branch
        %143 = sbr.rel (%p140) target = $region28
      $region27: #{tpu_custom_call.1} parent=5 // pred_region
        %s144 = ssub.s32 %s15, 1
        // Predicated region
        $region29: #{tpu_custom_call.1} parent=27 // pred_check
          %p145 = pneg %p36
        $region30: #{tpu_custom_call.1} parent=27 // pred_check_branch
          %147 = sbr.rel (%p145) target = $region32
        $region31: #{tpu_custom_call.1} parent=27 // pred_region
          %149 = dma.done [#allocation3], 128
        $region32: #{tpu_custom_call.1} parent=27 // pred_fallthru
          _
        %s150 = sand.u32 %s49, 1
        %s151 = scalar_lea.sflag [#allocation6], %s150
        %s152 = sand.u32 %s49, 1
        %s153 = smul.addr %s152, 8
        %s154 = scalar_lea.vmem [#allocation5], %s153
        // Predicated region
        $region33: #{tpu_custom_call.1} parent=27 // pred_check
          %p155 = pneg %p62
        $region34: #{tpu_custom_call.1} parent=27 // pred_check_branch
          %157 = sbr.rel (%p155) target = $region36
        $region35: #{tpu_custom_call.1} parent=27 // pred_region
          %159 = dma.done %s151, 128
        $region36: #{tpu_custom_call.1} parent=27 // pred_fallthru
          _
        %p160 = pneg %p36
        %p161 = pneg %p33
        %s162 = sand.u32 %s49, 1
        %s163 = scalar_lea.sflag [#allocation6], %s162
        %s164 = sand.u32 %s49, 1
        %s165 = smul.addr %s164, 8
        %s166 = scalar_lea.vmem [#allocation5], %s165
        %p167 = pneg %p62
        %p168 = pneg %p59
        %p169 = pneg %p88
        %p170 = pneg %p85
        %s171 = sand.u32 %s75, 1
        %s172 = scalar_lea.sflag [#allocation4], %s171
        %s173 = sand.u32 %s75, 1
        %s174 = smul.addr %s173, 8
        %s175 = scalar_lea.vmem [#allocation7], %s174
        %v176 = vld [vmem:[#allocation2] sm:$0xff]
        %v177 = vld [vmem:[%s154] sm:$0xff]
        %v178 = vadd.f32 %v176, %v177
        %179 = vst [vmem:[%s175] sm:$0xff] %v178
        %s180 = sand.u32 %s75, 1
        %s181 = scalar_lea.sflag [#allocation4], %s180
        %s182 = sand.u32 %s75, 1
        %s183 = smul.addr %s182, 8
        %s184 = scalar_lea.vmem [#allocation7], %s183
        // Predicated region
        $region37: #{tpu_custom_call.1} parent=27 // pred_check
          %p185 = pneg %p85
        $region38: #{tpu_custom_call.1} parent=27 // pred_check_branch
          %187 = sbr.rel (%p185) target = $region40
        $region39: #{tpu_custom_call.1} parent=27 // pred_region
          %189 = vsyncadd %s181, 0
          %s190 = smul.addr %s20, 8
          %s191 = scalar_lea.hbm %s2, %s190
          %s193 = sshll.u32 %s184, 4
          %s194 = int_to_ptr.vmem [resolvable:$true] %s193
          %s195 = sshll.u32 %s191, 4
          %s196 = int_to_ptr.hbm [resolvable:$true] %s195
          %198 = dma.vmem_to_hbm [thread:$0]  %s194, 128, %s196, %s181
        $region40: #{tpu_custom_call.1} parent=27 // pred_fallthru
          _
      $region28: #{tpu_custom_call.1} parent=5 // pred_fallthru
        _
      %p199 = scmp.le.s32.totalorder 2, %s15
      // Predicated region
      $region41: #{tpu_custom_call.1} parent=5 // pred_check
        %p200 = pneg %p199
      $region42: #{tpu_custom_call.1} parent=5 // pred_check_branch
        %202 = sbr.rel (%p200) target = $region44
      $region43: #{tpu_custom_call.1} parent=5 // pred_region
        %s203 = ssub.s32 %s15, 2
        // Predicated region
        $region45: #{tpu_custom_call.1} parent=43 // pred_check
          %p204 = pneg %p91
        $region46: #{tpu_custom_call.1} parent=43 // pred_check_branch
          %206 = sbr.rel (%p204) target = $region48
        $region47: #{tpu_custom_call.1} parent=43 // pred_region
          %s207 = sand.u32 %s76, 1
          %s208 = scalar_lea.sflag [#allocation4], %s207
          %s209 = sand.u32 %s76, 1
          %s210 = smul.addr %s209, 8
          %s211 = scalar_lea.vmem [#allocation7], %s210
          %213 = dma.done %s208, 128
        $region48: #{tpu_custom_call.1} parent=43 // pred_fallthru
          _
      $region44: #{tpu_custom_call.1} parent=5 // pred_fallthru
        _
    $region6: #{tpu_custom_call.1} parent=1 // loop_footer
      %s19 = sadd.s32 1, %s15
    $region7: #{tpu_custom_call.1} parent=1 // loop_footer_branch
      %14 = sbr.rel target = $region3
    $region8: #{tpu_custom_call.1} parent=1 // loop_exit
      _
    %214 = vsyncpa [#allocation3], 1
    %s215 = scalar_lea.sflag [#allocation3], 1
    %216 = vsyncpa %s215, 1
    %217 = vsyncpa [#allocation6], 1
    %s218 = scalar_lea.sflag [#allocation6], 1
    %219 = vsyncpa %s218, 1
    %220 = vsyncpa [#allocation4], 1
    %s221 = scalar_lea.sflag [#allocation4], 1
    %222 = vsyncpa %s221, 1

// kernel: netg_forward.5
$region0: #{netg_forward.5}
  #allocation0 [shape = 'u32[]', space=smem, size = 0x4, offset = 0x4, fixed_abs, tag = 'smem constant byte address 0x4 - core index']
  #allocation1 [shape = 'u32[72,128]{1,0:T(1,128)}', space=vmem, size = 0x9000, scoped, tag = 'internal scratch']
  #allocation2 [shape = 'f32[1,1024]{1,0:T(1,128)}', space=vmem, size = 0x1000, scoped, tag = 'scratch operand']
  #allocation3 [shape = 'f32[1,1024]{1,0:T(1,128)}', space=vmem, size = 0x1000, scoped, tag = 'scratch operand']
  %s0 = inlined_call_operand.vmem [shape: bf16[8,16], index: 0, kind: input, shape index: {}]
  %s1 = inlined_call_operand.hbm [shape: bf16[16,1024], index: 1, kind: input, shape index: {}]
  %s2 = inlined_call_operand.hbm [shape: f32[1,64], index: 2, kind: input, shape index: {}]
  %s3 = inlined_call_operand.hbm [shape: f32[1,64], index: 3, kind: input, shape index: {}]
  %s4 = inlined_call_operand.vmem [shape: bf16[8,1024], index: 4, kind: output, shape index: {}]
  %s5 = sld [smem:[#allocation0]]
  $region46: #{netg_forward.5} parent=0
    _
  %s7 = ssub.s32 1, %s5
  %s8 = scalar_select 0, %s7, %s5
  $region1: #{netg_forward.5} parent=0
    #allocation4 [shape = 'u8[32768]{0}', space=vmem, size = 0x8000, scoped, tag = 'input window, operand 1, single buffered']
    #allocation5 [shape = 's32[1]{0}', space=sflag, size = 0x4, scoped, tag = 'scoped memory for netg_forward.5']
    #allocation6 [shape = 'u8[512]{0}', space=vmem, size = 0x400, scoped, tag = 'input window, operand 2, single buffered']
    #allocation7 [shape = 's32[1]{0}', space=sflag, size = 0x4, scoped, tag = 'scoped memory for netg_forward.5']
    #allocation8 [shape = 'u8[512]{0}', space=vmem, size = 0x400, scoped, tag = 'input window, operand 3, single buffered']
    %9 = vsyncpa [#allocation5], 0
    %10 = vsyncpa [#allocation7], 0
    // Predicated region
    $region2: #{netg_forward.5} parent=1 // pred_check
      _
    $region3: #{netg_forward.5} parent=1 // pred_check_branch
      %12 = sbr.rel (0) target = $region5
    $region4: #{netg_forward.5} parent=1 // pred_region
      _
    $region5: #{netg_forward.5} parent=1 // pred_fallthru
      _
    // Predicated region
    $region6: #{netg_forward.5} parent=1 // pred_check
      _
    $region7: #{netg_forward.5} parent=1 // pred_check_branch
      %14 = sbr.rel (0) target = $region9
    $region8: #{netg_forward.5} parent=1 // pred_region
      %16 = vsyncadd [#allocation5], 0
      %s17 = sshll.u32 %s1, 4
      %s18 = int_to_ptr.hbm [resolvable:$true] %s17
      %s19 = sshll.u32 [#allocation4], 4
      %s20 = int_to_ptr.vmem [resolvable:$true] %s19
      %25 = dma.hbm_to_vmem [thread:$0]  %s18, 1024, %s20, [#allocation5], 512, 512, 32
    $region9: #{netg_forward.5} parent=1 // pred_fallthru
      _
    // Predicated region
    $region10: #{netg_forward.5} parent=1 // pred_check
      _
    $region11: #{netg_forward.5} parent=1 // pred_check_branch
      %27 = sbr.rel (0) target = $region13
    $region12: #{netg_forward.5} parent=1 // pred_region
      %29 = vsyncadd [#allocation7], 0
      %s31 = sshll.u32 %s2, 4
      %s32 = int_to_ptr.hbm [resolvable:$true] %s31
      %s33 = sshll.u32 [#allocation6], 4
      %s34 = int_to_ptr.vmem [resolvable:$true] %s33
      %36 = dma.hbm_to_vmem [thread:$0]  %s32, 16, %s34, [#allocation7]
    $region13: #{netg_forward.5} parent=1 // pred_fallthru
      _
    // Predicated region
    $region14: #{netg_forward.5} parent=1 // pred_check
      _
    $region15: #{netg_forward.5} parent=1 // pred_check_branch
      %38 = sbr.rel (0) target = $region17
    $region16: #{netg_forward.5} parent=1 // pred_region
      %40 = vsyncadd [#allocation7], 0
      %s42 = sshll.u32 %s3, 4
      %s43 = int_to_ptr.hbm [resolvable:$true] %s42
      %s44 = sshll.u32 [#allocation8], 4
      %s45 = int_to_ptr.vmem [resolvable:$true] %s44
      %47 = dma.hbm_to_vmem [thread:$0]  %s43, 16, %s45, [#allocation7]
    $region17: #{netg_forward.5} parent=1 // pred_fallthru
      _
    // Predicated region
    $region18: #{netg_forward.5} parent=1 // pred_check
      _
    $region19: #{netg_forward.5} parent=1 // pred_check_branch
      %49 = sbr.rel (0) target = $region21
    $region20: #{netg_forward.5} parent=1 // pred_region
      %51 = dma.done [#allocation5], 1024
    $region21: #{netg_forward.5} parent=1 // pred_fallthru
      _
    // Predicated region
    $region22: #{netg_forward.5} parent=1 // pred_check
      _
    $region23: #{netg_forward.5} parent=1 // pred_check_branch
      %53 = sbr.rel (0) target = $region25
    $region24: #{netg_forward.5} parent=1 // pred_region
      %55 = dma.done [#allocation7], 16
    $region25: #{netg_forward.5} parent=1 // pred_fallthru
      _
    // Predicated region
    $region26: #{netg_forward.5} parent=1 // pred_check
      _
    $region27: #{netg_forward.5} parent=1 // pred_check_branch
      %57 = sbr.rel (0) target = $region29
    $region28: #{netg_forward.5} parent=1 // pred_region
      %59 = dma.done [#allocation7], 16
    $region29: #{netg_forward.5} parent=1 // pred_fallthru
      _
    %p61 = scmp.eq.s32.totalorder 0, 0
    // Predicated region
    $region30: #{netg_forward.5} parent=1 // pred_check
      %p62 = pneg %p61
    $region31: #{netg_forward.5} parent=1 // pred_check_branch
      %64 = sbr.rel (%p62) target = $region33
    $region32: #{netg_forward.5} parent=1 // pred_region
      %65 = vst [vmem:[#allocation2] sm:$0xff] 0.0
      %66 = vst [vmem:[#allocation3] sm:$0xff] 0.0
    $region33: #{netg_forward.5} parent=1 // pred_fallthru
      _
    %v67 = vld [vmem:[%s0] sm:$0xf]
    %v68 = vld [vmem:[#allocation4] sm:$0xff]
    %v69 = vld [vmem:[#allocation4 + $0x8] sm:$0xff]
    %v70 = vld [vmem:[#allocation4 + $0x10] sm:$0xff]
    %v71 = vld [vmem:[#allocation4 + $0x18] sm:$0xff]
    %v72 = vld [vmem:[#allocation4 + $0x20] sm:$0xff]
    %v73 = vld [vmem:[#allocation4 + $0x28] sm:$0xff]
    %v74 = vld [vmem:[#allocation4 + $0x30] sm:$0xff]
    %v75 = vld [vmem:[#allocation4 + $0x38] sm:$0xff]
    %v84 = vunpack.c.l.b16 %v68
    %v85 = vunpack.c.h.b16 %v68
    %v86 = vunpack.c.l.b16 %v69
    %v87 = vunpack.c.h.b16 %v69
    %v88 = vunpack.c.l.b16 %v70
    %v89 = vunpack.c.h.b16 %v70
    %v90 = vunpack.c.l.b16 %v71
    %v91 = vunpack.c.h.b16 %v71
    %v92 = vunpack.c.l.b16 %v72
    %v93 = vunpack.c.h.b16 %v72
    %v94 = vunpack.c.l.b16 %v73
    %v95 = vunpack.c.h.b16 %v73
    %v96 = vunpack.c.l.b16 %v74
    %v97 = vunpack.c.h.b16 %v74
    %v98 = vunpack.c.l.b16 %v75
    %v99 = vunpack.c.h.b16 %v75
    %v100 = vpack.c.b16 %v92, %v84
    %v101 = vpack.c.b16 %v93, %v85
    %v102 = vpack.c.b16 %v94, %v86
    %v103 = vpack.c.b16 %v95, %v87
    %v104 = vpack.c.b16 %v96, %v88
    %v105 = vpack.c.b16 %v97, %v89
    %v106 = vpack.c.b16 %v98, %v90
    %v107 = vpack.c.b16 %v99, %v91
    %vm116 = vcmask 130048
    %v118 = vsel %vm116, %v67, 0
    %120 = vmatpush.bf16.msra.mxu0 0
    %121 = vmatpush.bf16.msra.mxu0 0
    %122 = vmatpush.bf16.msra.mxu0 0
    %123 = vmatpush.bf16.msra.mxu0 0
    %124 = vmatpush.bf16.msra.mxu0 0
    %125 = vmatpush.bf16.msra.mxu0 0
    %126 = vmatpush.bf16.msra.mxu0 0
    %127 = vmatpush.bf16.msra.mxu0 %v100
    %128 = vmatmul.bf16.gmra.mxu0 %v118
    %v129 = vpop.f32.mrf.mxu0
    %v130 = vadd.f32 0.0, %v129
    %v131 = vpop.f32.mrf.mxu0
    %132 = vdwg.mxu0
    %133 = vmatpush.bf16.msra.mxu0 0
    %134 = vmatpush.bf16.msra.mxu0 0
    %135 = vmatpush.bf16.msra.mxu0 0
    %136 = vmatpush.bf16.msra.mxu0 0
    %137 = vmatpush.bf16.msra.mxu0 0
    %138 = vmatpush.bf16.msra.mxu0 0
    %139 = vmatpush.bf16.msra.mxu0 0
    %140 = vmatpush.bf16.msra.mxu0 %v101
    %141 = vmatmul.bf16.gmra.mxu0 %v118
    %v142 = vpop.f32.mrf.mxu0
    %v143 = vadd.f32 0.0, %v142
    %v144 = vpop.f32.mrf.mxu0
    %145 = vdwg.mxu0
    %146 = vmatpush.bf16.msra.mxu0 0
    %147 = vmatpush.bf16.msra.mxu0 0
    %148 = vmatpush.bf16.msra.mxu0 0
    %149 = vmatpush.bf16.msra.mxu0 0
    %150 = vmatpush.bf16.msra.mxu0 0
    %151 = vmatpush.bf16.msra.mxu0 0
    %152 = vmatpush.bf16.msra.mxu0 0
    %153 = vmatpush.bf16.msra.mxu0 %v102
    %154 = vmatmul.bf16.gmra.mxu0 %v118
    %v155 = vpop.f32.mrf.mxu0
    %v156 = vadd.f32 0.0, %v155
    %v157 = vpop.f32.mrf.mxu0
    %158 = vdwg.mxu0
    %159 = vmatpush.bf16.msra.mxu0 0
    %160 = vmatpush.bf16.msra.mxu0 0
    %161 = vmatpush.bf16.msra.mxu0 0
    %162 = vmatpush.bf16.msra.mxu0 0
    %163 = vmatpush.bf16.msra.mxu0 0
    %164 = vmatpush.bf16.msra.mxu0 0
    %165 = vmatpush.bf16.msra.mxu0 0
    %166 = vmatpush.bf16.msra.mxu0 %v103
    %167 = vmatmul.bf16.gmra.mxu0 %v118
    %v168 = vpop.f32.mrf.mxu0
    %v169 = vadd.f32 0.0, %v168
    %v170 = vpop.f32.mrf.mxu0
    %171 = vdwg.mxu0
    %172 = vmatpush.bf16.msra.mxu0 0
    %173 = vmatpush.bf16.msra.mxu0 0
    %174 = vmatpush.bf16.msra.mxu0 0
    %175 = vmatpush.bf16.msra.mxu0 0
    %176 = vmatpush.bf16.msra.mxu0 0
    %177 = vmatpush.bf16.msra.mxu0 0
    %178 = vmatpush.bf16.msra.mxu0 0
    %179 = vmatpush.bf16.msra.mxu0 %v104
    %180 = vmatmul.bf16.gmra.mxu0 %v118
    %v181 = vpop.f32.mrf.mxu0
    %v182 = vadd.f32 0.0, %v181
    %v183 = vpop.f32.mrf.mxu0
    %184 = vdwg.mxu0
    %185 = vmatpush.bf16.msra.mxu0 0
    %186 = vmatpush.bf16.msra.mxu0 0
    %187 = vmatpush.bf16.msra.mxu0 0
    %188 = vmatpush.bf16.msra.mxu0 0
    %189 = vmatpush.bf16.msra.mxu0 0
    %190 = vmatpush.bf16.msra.mxu0 0
    %191 = vmatpush.bf16.msra.mxu0 0
    %192 = vmatpush.bf16.msra.mxu0 %v105
    %193 = vmatmul.bf16.gmra.mxu0 %v118
    %v194 = vpop.f32.mrf.mxu0
    %v195 = vadd.f32 0.0, %v194
    %v196 = vpop.f32.mrf.mxu0
    %197 = vdwg.mxu0
    %198 = vmatpush.bf16.msra.mxu0 0
    %199 = vmatpush.bf16.msra.mxu0 0
    %200 = vmatpush.bf16.msra.mxu0 0
    %201 = vmatpush.bf16.msra.mxu0 0
    %202 = vmatpush.bf16.msra.mxu0 0
    %203 = vmatpush.bf16.msra.mxu0 0
    %204 = vmatpush.bf16.msra.mxu0 0
    %205 = vmatpush.bf16.msra.mxu0 %v106
    %206 = vmatmul.bf16.gmra.mxu0 %v118
    %v207 = vpop.f32.mrf.mxu0
    %v208 = vadd.f32 0.0, %v207
    %v209 = vpop.f32.mrf.mxu0
    %210 = vdwg.mxu0
    %211 = vmatpush.bf16.msra.mxu0 0
    %212 = vmatpush.bf16.msra.mxu0 0
    %213 = vmatpush.bf16.msra.mxu0 0
    %214 = vmatpush.bf16.msra.mxu0 0
    %215 = vmatpush.bf16.msra.mxu0 0
    %216 = vmatpush.bf16.msra.mxu0 0
    %217 = vmatpush.bf16.msra.mxu0 0
    %218 = vmatpush.bf16.msra.mxu0 %v107
    %219 = vmatmul.bf16.gmra.mxu0 %v118
    %v220 = vpop.f32.mrf.mxu0
    %v221 = vadd.f32 0.0, %v220
    %v222 = vpop.f32.mrf.mxu0
    %223 = vdwg.mxu0
    %s224 = smul.u32 0, 8
    %v225 = vpack.c.bf16 %v143, %v130
    %v226 = vpack.c.bf16 %v169, %v156
    %v227 = vpack.c.bf16 %v195, %v182
    %v228 = vpack.c.bf16 %v221, %v208
    %s229 = sshra.s32 %s224, 3
    %s230 = sand.u32 %s224, 7
    %s231 = smul.u32 %s229, 8
    %s232 = smul.addr %s231, 4
    %s233 = scalar_lea.vmem %s4, %s232
    %234 = vst [vmem:[%s233] sm:$0xff] %v225
    %235 = vst [vmem:[%s233 + $0x8] sm:$0xff] %v226
    %236 = vst [vmem:[%s233 + $0x10] sm:$0xff] %v227
    %237 = vst [vmem:[%s233 + $0x18] sm:$0xff] %v228
    %v238 = vld [vmem:[#allocation2] sm:$0xff]
    %v239 = vrot.slane %v130, 4
    %v240 = vadd.f32 %v130, %v239
    %v241 = vrot.slane %v240, 2
    %v242 = vadd.f32 %v240, %v241
    %v243 = vrot.slane %v242, 1
    %v244 = vadd.f32 %v242, %v243
    %v245 = vrot.slane %v143, 4
    %v246 = vadd.f32 %v143, %v245
    %v247 = vrot.slane %v246, 2
    %v248 = vadd.f32 %v246, %v247
    %v249 = vrot.slane %v248, 1
    %v250 = vadd.f32 %v248, %v249
    %v251 = vrot.slane %v156, 4
    %v252 = vadd.f32 %v156, %v251
    %v253 = vrot.slane %v252, 2
    %v254 = vadd.f32 %v252, %v253
    %v255 = vrot.slane %v254, 1
    %v256 = vadd.f32 %v254, %v255
    %v257 = vrot.slane %v169, 4
    %v258 = vadd.f32 %v169, %v257
    %v259 = vrot.slane %v258, 2
    %v260 = vadd.f32 %v258, %v259
    %v261 = vrot.slane %v260, 1
    %v262 = vadd.f32 %v260, %v261
    %v263 = vrot.slane %v182, 4
    %v264 = vadd.f32 %v182, %v263
    %v265 = vrot.slane %v264, 2
    %v266 = vadd.f32 %v264, %v265
    %v267 = vrot.slane %v266, 1
    %v268 = vadd.f32 %v266, %v267
    %v269 = vrot.slane %v195, 4
    %v270 = vadd.f32 %v195, %v269
    %v271 = vrot.slane %v270, 2
    %v272 = vadd.f32 %v270, %v271
    %v273 = vrot.slane %v272, 1
    %v274 = vadd.f32 %v272, %v273
    %v275 = vrot.slane %v208, 4
    %v276 = vadd.f32 %v208, %v275
    %v277 = vrot.slane %v276, 2
    %v278 = vadd.f32 %v276, %v277
    %v279 = vrot.slane %v278, 1
    %v280 = vadd.f32 %v278, %v279
    %v281 = vrot.slane %v221, 4
    %v282 = vadd.f32 %v221, %v281
    %v283 = vrot.slane %v282, 2
    %v284 = vadd.f32 %v282, %v283
    %v285 = vrot.slane %v284, 1
    %v286 = vadd.f32 %v284, %v285
    %v295 = vrot.slane %v250, 7
    %v296 = vrot.slane %v256, 6
    %v297 = vrot.slane %v262, 5
    %v298 = vrot.slane %v268, 4
    %v299 = vrot.slane %v274, 3
    %v300 = vrot.slane %v280, 2
    %v301 = vrot.slane %v286, 1
    %vm302 = vcmask 1040384
    %v303 = vsel %vm302, %v244, %v295
    %vm304 = vcmask 1042434
    %v305 = vsel %vm304, %v296, %v297
    %vm306 = vcmask 1041408
    %v307 = vsel %vm306, %v303, %v305
    %vm308 = vcmask 1044484
    %v309 = vsel %vm308, %v298, %v299
    %vm310 = vcmask 1046534
    %v311 = vsel %vm310, %v300, %v301
    %vm312 = vcmask 1045508
    %v313 = vsel %vm312, %v309, %v311
    %vm314 = vcmask 1043456
    %v315 = vsel %vm314, %v307, %v313
    %v317 = vadd.f32 %v238, %v315
    %318 = vst [vmem:[#allocation2] sm:$0xff] %v317
    %v319 = vld [vmem:[#allocation3] sm:$0xff]
    %v320 = vmul.f32 %v130, %v130
    %v321 = vmul.f32 %v143, %v143
    %v322 = vmul.f32 %v156, %v156
    %v323 = vmul.f32 %v169, %v169
    %v324 = vmul.f32 %v182, %v182
    %v325 = vmul.f32 %v195, %v195
    %v326 = vmul.f32 %v208, %v208
    %v327 = vmul.f32 %v221, %v221
    %v328 = vrot.slane %v320, 4
    %v329 = vadd.f32 %v320, %v328
    %v330 = vrot.slane %v329, 2
    %v331 = vadd.f32 %v329, %v330
    %v332 = vrot.slane %v331, 1
    %v333 = vadd.f32 %v331, %v332
    %v334 = vrot.slane %v321, 4
    %v335 = vadd.f32 %v321, %v334
    %v336 = vrot.slane %v335, 2
    %v337 = vadd.f32 %v335, %v336
    %v338 = vrot.slane %v337, 1
    %v339 = vadd.f32 %v337, %v338
    %v340 = vrot.slane %v322, 4
    %v341 = vadd.f32 %v322, %v340
    %v342 = vrot.slane %v341, 2
    %v343 = vadd.f32 %v341, %v342
    %v344 = vrot.slane %v343, 1
    %v345 = vadd.f32 %v343, %v344
    %v346 = vrot.slane %v323, 4
    %v347 = vadd.f32 %v323, %v346
    %v348 = vrot.slane %v347, 2
    %v349 = vadd.f32 %v347, %v348
    %v350 = vrot.slane %v349, 1
    %v351 = vadd.f32 %v349, %v350
    %v352 = vrot.slane %v324, 4
    %v353 = vadd.f32 %v324, %v352
    %v354 = vrot.slane %v353, 2
    %v355 = vadd.f32 %v353, %v354
    %v356 = vrot.slane %v355, 1
    %v357 = vadd.f32 %v355, %v356
    %v358 = vrot.slane %v325, 4
    %v359 = vadd.f32 %v325, %v358
    %v360 = vrot.slane %v359, 2
    %v361 = vadd.f32 %v359, %v360
    %v362 = vrot.slane %v361, 1
    %v363 = vadd.f32 %v361, %v362
    %v364 = vrot.slane %v326, 4
    %v365 = vadd.f32 %v326, %v364
    %v366 = vrot.slane %v365, 2
    %v367 = vadd.f32 %v365, %v366
    %v368 = vrot.slane %v367, 1
    %v369 = vadd.f32 %v367, %v368
    %v370 = vrot.slane %v327, 4
    %v371 = vadd.f32 %v327, %v370
    %v372 = vrot.slane %v371, 2
    %v373 = vadd.f32 %v371, %v372
    %v374 = vrot.slane %v373, 1
    %v375 = vadd.f32 %v373, %v374
    %v384 = vrot.slane %v339, 7
    %v385 = vrot.slane %v345, 6
    %v386 = vrot.slane %v351, 5
    %v387 = vrot.slane %v357, 4
    %v388 = vrot.slane %v363, 3
    %v389 = vrot.slane %v369, 2
    %v390 = vrot.slane %v375, 1
    %v391 = vsel %vm302, %v333, %v384
    %v392 = vsel %vm304, %v385, %v386
    %v393 = vsel %vm306, %v391, %v392
    %v394 = vsel %vm308, %v387, %v388
    %v395 = vsel %vm310, %v389, %v390
    %v396 = vsel %vm312, %v394, %v395
    %v397 = vsel %vm314, %v393, %v396
    %v399 = vadd.f32 %v319, %v397
    %400 = vst [vmem:[#allocation3] sm:$0xff] %v399
    // Predicated region
    $region34: #{netg_forward.5} parent=1 // pred_check
      %p401 = pneg %p61
    $region35: #{netg_forward.5} parent=1 // pred_check_branch
      %403 = sbr.rel (%p401) target = $region37
    $region36: #{netg_forward.5} parent=1 // pred_region
      %v404 = vld [vmem:[#allocation2] sm:$0xff]
      %v405 = vld [vmem:[#allocation3] sm:$0xff]
      %v406 = vld [vmem:[#allocation6] sm:$0x1]
      %v407 = vld [vmem:[#allocation8] sm:$0x1]
      %409 = vrot.lane.b32.xlu0 %v404, 64
      %v410 = vpop.permute.xlu0 %409
      %v412 = vadd.f32 %v404, %v410
      %414 = vrot.lane.b32.xlu0 %v405, 64
      %v415 = vpop.permute.xlu0 %414
      %v417 = vadd.f32 %v405, %v415
      %v418 = vrot.slane %v404, 1
      %v420 = vadd.f32 %v412, %v418
      %v421 = vrot.slane %v405, 1
      %v423 = vadd.f32 %v417, %v421
      %v424 = vrot.slane %v410, 1
      %v426 = vadd.f32 %v420, %v424
      %v427 = vrot.slane %v415, 1
      %v429 = vadd.f32 %v423, %v427
      %v430 = vrot.slane %v404, 2
      %v432 = vadd.f32 %v426, %v430
      %v433 = vrot.slane %v405, 2
      %v435 = vadd.f32 %v429, %v433
      %v436 = vrot.slane %v410, 2
      %v438 = vadd.f32 %v432, %v436
      %v439 = vrot.slane %v415, 2
      %v441 = vadd.f32 %v435, %v439
      %v442 = vrot.slane %v404, 3
      %v444 = vadd.f32 %v438, %v442
      %v445 = vrot.slane %v405, 3
      %v447 = vadd.f32 %v441, %v445
      %v448 = vrot.slane %v410, 3
      %v450 = vadd.f32 %v444, %v448
      %v451 = vrot.slane %v415, 3
      %v453 = vadd.f32 %v447, %v451
      %v454 = vrot.slane %v404, 4
      %v456 = vadd.f32 %v450, %v454
      %v457 = vrot.slane %v405, 4
      %v459 = vadd.f32 %v453, %v457
      %v460 = vrot.slane %v410, 4
      %v462 = vadd.f32 %v456, %v460
      %v463 = vrot.slane %v415, 4
      %v465 = vadd.f32 %v459, %v463
      %v466 = vrot.slane %v404, 5
      %v468 = vadd.f32 %v462, %v466
      %v469 = vrot.slane %v405, 5
      %v471 = vadd.f32 %v465, %v469
      %v472 = vrot.slane %v410, 5
      %v474 = vadd.f32 %v468, %v472
      %v475 = vrot.slane %v415, 5
      %v477 = vadd.f32 %v471, %v475
      %v478 = vrot.slane %v404, 6
      %v480 = vadd.f32 %v474, %v478
      %v481 = vrot.slane %v405, 6
      %v483 = vadd.f32 %v477, %v481
      %v484 = vrot.slane %v410, 6
      %v486 = vadd.f32 %v480, %v484
      %v487 = vrot.slane %v415, 6
      %v489 = vadd.f32 %v483, %v487
      %v490 = vrot.slane %v404, 7
      %v492 = vadd.f32 %v486, %v490
      %v493 = vrot.slane %v405, 7
      %v495 = vadd.f32 %v489, %v493
      %v496 = vrot.slane %v410, 7
      %v498 = vadd.f32 %v492, %v496
      %v499 = vrot.slane %v415, 7
      %v501 = vadd.f32 %v495, %v499
      %v502 = vmul.f32 %v498, 0.03125
      %v503 = vmul.f32 %v501, 0.03125
      %v504 = vmul.f32 %v502, %v502
      %v505 = vsub.f32 %v503, %v504
      %v506 = vmax.f32 %v505, 0.0
      %v507 = vadd.f32 %v506, 1e-05
      %v508 = vrsqrt.pop %v507
      %v509 = vmul.f32 %v508, %v507
      %v510 = vmul.f32 %v509, %v508
      %v511 = vmul.f32 0.5, %v510
      %v512 = vsub.f32 1.5, %v511
      %v513 = vmul.f32 %v508, %v512
      %vm514 = vweird.f32 %v507
      %vm515 = vweird.f32 %v508
      %vm516 = vmor %vm514, %vm515
      %v517 = vsel %vm516, %v508, %v513
      %v518 = vmul.f32 %v406, %v517
      %v519 = vmul.f32 %v502, %v518
      %v520 = vsub.f32 %v407, %v519
      %v522 = vperm.slane %v518, 0
      %523 = vrot.lane.b32.xlu0 %v522, 64
      %v524 = vpop.permute.xlu0 %523
      %vm526 = vcmask 523264
      %v527 = vsel %vm526, %v518, %v524
      %v529 = vperm.slane %v520, 0
      %530 = vrot.lane.b32.xlu0 %v529, 64
      %v531 = vpop.permute.xlu0 %530
      %v533 = vsel %vm526, %v520, %v531
      %s534 = smul.u32 0, 8
      %s535 = smul.addr %s534, 4
      %s536 = scalar_lea.vmem %s4, %s535
      %v537 = vld [vmem:[%s536] sm:$0xff]
      %v538 = vld [vmem:[%s536 + $0x8] sm:$0xff]
      %v539 = vld [vmem:[%s536 + $0x10] sm:$0xff]
      %v540 = vld [vmem:[%s536 + $0x18] sm:$0xff]
      %v541 = vunpack.c.l.bf16 %v537
      %v542 = vunpack.c.h.bf16 %v537
      %v543 = vunpack.c.l.bf16 %v538
      %v544 = vunpack.c.h.bf16 %v538
      %v545 = vunpack.c.l.bf16 %v539
      %v546 = vunpack.c.h.bf16 %v539
      %v547 = vunpack.c.l.bf16 %v540
      %v548 = vunpack.c.h.bf16 %v540
      %v549 = vperm.slane %v527, 0
      %v550 = vmul.f32 %v541, %v549
      %v551 = vmul.f32 %v542, %v549
      %v552 = vmul.f32 %v543, %v549
      %v553 = vmul.f32 %v544, %v549
      %v554 = vmul.f32 %v545, %v549
      %v555 = vmul.f32 %v546, %v549
      %v556 = vmul.f32 %v547, %v549
      %v557 = vmul.f32 %v548, %v549
      %v558 = vperm.slane %v533, 0
      %v559 = vadd.f32 %v550, %v558
      %v560 = vadd.f32 %v551, %v558
      %v561 = vadd.f32 %v552, %v558
      %v562 = vadd.f32 %v553, %v558
      %v563 = vadd.f32 %v554, %v558
      %v564 = vadd.f32 %v555, %v558
      %v565 = vadd.f32 %v556, %v558
      %v566 = vadd.f32 %v557, %v558
      %v567 = vmax.f32 %v559, 0.0
      %v568 = vmax.f32 %v560, 0.0
      %v569 = vmax.f32 %v561, 0.0
      %v570 = vmax.f32 %v562, 0.0
      %v571 = vmax.f32 %v563, 0.0
      %v572 = vmax.f32 %v564, 0.0
      %v573 = vmax.f32 %v565, 0.0
      %v574 = vmax.f32 %v566, 0.0
      %v575 = vpack.c.bf16 %v568, %v567
      %v576 = vpack.c.bf16 %v570, %v569
      %v577 = vpack.c.bf16 %v572, %v571
      %v578 = vpack.c.bf16 %v574, %v573
      %579 = vst [vmem:[%s536] sm:$0xff] %v575
      %580 = vst [vmem:[%s536 + $0x8] sm:$0xff] %v576
      %581 = vst [vmem:[%s536 + $0x10] sm:$0xff] %v577
      %582 = vst [vmem:[%s536 + $0x18] sm:$0xff] %v578
    $region37: #{netg_forward.5} parent=1 // pred_fallthru
      _
    // Predicated region
    $region38: #{netg_forward.5} parent=1 // pred_check
      _
    $region39: #{netg_forward.5} parent=1 // pred_check_branch
      %584 = sbr.rel (0) target = $region41
    $region40: #{netg_forward.5} parent=1 // pred_region
      _
    $region41: #{netg_forward.5} parent=1 // pred_fallthru
      _
    // Predicated region
    $region42: #{netg_forward.5} parent=1 // pred_check
      _
    $region43: #{netg_forward.5} parent=1 // pred_check_branch
      %586 = sbr.rel (0) target = $region45
    $region44: #{netg_forward.5} parent=1 // pred_region
      _
    $region45: #{netg_forward.5} parent=1 // pred_fallthru
      _
    %587 = vsyncpa [#allocation5], 1
    %588 = vsyncpa [#allocation7], 1

// kernel: netg_forward.6
$region0: #{netg_forward.6}
  #allocation0 [shape = 'u32[]', space=smem, size = 0x4, offset = 0x4, fixed_abs, tag = 'smem constant byte address 0x4 - core index']
  #allocation1 [shape = 'u32[72,128]{1,0:T(1,128)}', space=vmem, size = 0x9000, scoped, tag = 'internal scratch']
  #allocation2 [shape = 'f32[1,128]{1,0:T(1,128)}', space=vmem, size = 0x200, scoped, tag = 'scratch operand']
  #allocation3 [shape = 'f32[1,128]{1,0:T(1,128)}', space=vmem, size = 0x200, scoped, tag = 'scratch operand']
  %s0 = inlined_call_operand.vmem [shape: bf16[32,576], index: 0, kind: input, shape index: {}]
  %s1 = inlined_call_operand.hbm [shape: bf16[576,128], index: 1, kind: input, shape index: {}]
  %s2 = inlined_call_operand.hbm [shape: f32[1,32], index: 2, kind: input, shape index: {}]
  %s3 = inlined_call_operand.hbm [shape: f32[1,32], index: 3, kind: input, shape index: {}]
  %s4 = inlined_call_operand.vmem [shape: bf16[32,128], index: 4, kind: output, shape index: {}]
  %s5 = sld [smem:[#allocation0]]
  $region46: #{netg_forward.6} parent=0
    _
  %s7 = ssub.s32 1, %s5
  %s8 = scalar_select 0, %s7, %s5
  $region1: #{netg_forward.6} parent=0
    #allocation4 [shape = 'u8[147456]{0}', space=vmem, size = 0x24000, scoped, tag = 'input window, operand 1, single buffered']
    #allocation5 [shape = 's32[1]{0}', space=sflag, size = 0x4, scoped, tag = 'scoped memory for netg_forward.6']
    #allocation6 [shape = 'u8[512]{0}', space=vmem, size = 0x400, scoped, tag = 'input window, operand 2, single buffered']
    #allocation7 [shape = 's32[1]{0}', space=sflag, size = 0x4, scoped, tag = 'scoped memory for netg_forward.6']
    #allocation8 [shape = 'u8[512]{0}', space=vmem, size = 0x400, scoped, tag = 'input window, operand 3, single buffered']
    %9 = vsyncpa [#allocation5], 0
    %10 = vsyncpa [#allocation7], 0
    // Predicated region
    $region2: #{netg_forward.6} parent=1 // pred_check
      _
    $region3: #{netg_forward.6} parent=1 // pred_check_branch
      %12 = sbr.rel (0) target = $region5
    $region4: #{netg_forward.6} parent=1 // pred_region
      _
    $region5: #{netg_forward.6} parent=1 // pred_fallthru
      _
    // Predicated region
    $region6: #{netg_forward.6} parent=1 // pred_check
      _
    $region7: #{netg_forward.6} parent=1 // pred_check_branch
      %14 = sbr.rel (0) target = $region9
    $region8: #{netg_forward.6} parent=1 // pred_region
      %16 = vsyncadd [#allocation5], 0
      %s17 = sshll.u32 %s1, 4
      %s18 = int_to_ptr.hbm [resolvable:$true] %s17
      %s19 = sshll.u32 [#allocation4], 4
      %s20 = int_to_ptr.vmem [resolvable:$true] %s19
      %25 = dma.hbm_to_vmem [thread:$0]  %s18, 4608, %s20, [#allocation5], 64, 64, 4
    $region9: #{netg_forward.6} parent=1 // pred_fallthru
      _
    // Predicated region
    $region10: #{netg_forward.6} parent=1 // pred_check
      _
    $region11: #{netg_forward.6} parent=1 // pred_check_branch
      %27 = sbr.rel (0) target = $region13
    $region12: #{netg_forward.6} parent=1 // pred_region
      %29 = vsyncadd [#allocation7], 0
      %s31 = sshll.u32 %s2, 4
      %s32 = int_to_ptr.hbm [resolvable:$true] %s31
      %s33 = sshll.u32 [#allocation6], 4
      %s34 = int_to_ptr.vmem [resolvable:$true] %s33
      %36 = dma.hbm_to_vmem [thread:$0]  %s32, 16, %s34, [#allocation7]
    $region13: #{netg_forward.6} parent=1 // pred_fallthru
      _
    // Predicated region
    $region14: #{netg_forward.6} parent=1 // pred_check
      _
    $region15: #{netg_forward.6} parent=1 // pred_check_branch
      %38 = sbr.rel (0) target = $region17
    $region16: #{netg_forward.6} parent=1 // pred_region
      %40 = vsyncadd [#allocation7], 0
      %s42 = sshll.u32 %s3, 4
      %s43 = int_to_ptr.hbm [resolvable:$true] %s42
      %s44 = sshll.u32 [#allocation8], 4
      %s45 = int_to_ptr.vmem [resolvable:$true] %s44
      %47 = dma.hbm_to_vmem [thread:$0]  %s43, 16, %s45, [#allocation7]
    $region17: #{netg_forward.6} parent=1 // pred_fallthru
      _
    // Predicated region
    $region18: #{netg_forward.6} parent=1 // pred_check
      _
    $region19: #{netg_forward.6} parent=1 // pred_check_branch
      %49 = sbr.rel (0) target = $region21
    $region20: #{netg_forward.6} parent=1 // pred_region
      %51 = dma.done [#allocation5], 4608
    $region21: #{netg_forward.6} parent=1 // pred_fallthru
      _
    // Predicated region
    $region22: #{netg_forward.6} parent=1 // pred_check
      _
    $region23: #{netg_forward.6} parent=1 // pred_check_branch
      %53 = sbr.rel (0) target = $region25
    $region24: #{netg_forward.6} parent=1 // pred_region
      %55 = dma.done [#allocation7], 16
    $region25: #{netg_forward.6} parent=1 // pred_fallthru
      _
    // Predicated region
    $region26: #{netg_forward.6} parent=1 // pred_check
      _
    $region27: #{netg_forward.6} parent=1 // pred_check_branch
      %57 = sbr.rel (0) target = $region29
    $region28: #{netg_forward.6} parent=1 // pred_region
      %59 = dma.done [#allocation7], 16
    $region29: #{netg_forward.6} parent=1 // pred_fallthru
      _
    %p61 = scmp.eq.s32.totalorder 0, 0
    // Predicated region
    $region30: #{netg_forward.6} parent=1 // pred_check
      %p62 = pneg %p61
    $region31: #{netg_forward.6} parent=1 // pred_check_branch
      %64 = sbr.rel (%p62) target = $region33
    $region32: #{netg_forward.6} parent=1 // pred_region
      %65 = vst [vmem:[#allocation2] sm:$0x1] 0.0
      %66 = vst [vmem:[#allocation3] sm:$0x1] 0.0
    $region33: #{netg_forward.6} parent=1 // pred_fallthru
      _
    %v67 = vld [vmem:[%s0] sm:$0xff]
    %v68 = vld [vmem:[%s0 + $0x8] sm:$0xff]
    %v69 = vld [vmem:[%s0 + $0x10] sm:$0xf]
    %v70 = vld [vmem:[%s0 + $0x14] sm:$0xff]
    %v71 = vld [vmem:[%s0 + $0x1c] sm:$0xff]
    %v72 = vld [vmem:[%s0 + $0x24] sm:$0xf]
    %v73 = vld [vmem:[%s0 + $0x28] sm:$0xff]
    %v74 = vld [vmem:[%s0 + $0x30] sm:$0xff]
    %v75 = vld [vmem:[%s0 + $0x38] sm:$0xf]
    %v76 = vld [vmem:[%s0 + $0x3c] sm:$0xff]
    %v77 = vld [vmem:[%s0 + $0x44] sm:$0xff]
    %v78 = vld [vmem:[%s0 + $0x4c] sm:$0xf]
    %v79 = vld [vmem:[#allocation4] sm:$0xf]
    %v80 = vld [vmem:[#allocation4 + $0x4] sm:$0xf]
    %v81 = vld [vmem:[#allocation4 + $0x8] sm:$0xf]
    %v82 = vld [vmem:[#allocation4 + $0xc] sm:$0xf]
    %v83 = vld [vmem:[#allocation4 + $0x10] sm:$0xf]
    %v84 = vld [vmem:[#allocation4 + $0x14] sm:$0xf]
    %v85 = vld [vmem:[#allocation4 + $0x18] sm:$0xf]
    %v86 = vld [vmem:[#allocation4 + $0x1c] sm:$0xf]
    %v87 = vld [vmem:[#allocation4 + $0x20] sm:$0xf]
    %v88 = vld [vmem:[#allocation4 + $0x24] sm:$0xf]
    %v89 = vld [vmem:[#allocation4 + $0x28] sm:$0xf]
    %v90 = vld [vmem:[#allocation4 + $0x2c] sm:$0xf]
    %v91 = vld [vmem:[#allocation4 + $0x30] sm:$0xf]
    %v92 = vld [vmem:[#allocation4 + $0x34] sm:$0xf]
    %v93 = vld [vmem:[#allocation4 + $0x38] sm:$0xf]
    %v94 = vld [vmem:[#allocation4 + $0x3c] sm:$0xf]
    %v95 = vld [vmem:[#allocation4 + $0x40] sm:$0xf]
    %v96 = vld [vmem:[#allocation4 + $0x44] sm:$0xf]
    %v97 = vld [vmem:[#allocation4 + $0x48] sm:$0xf]
    %v98 = vld [vmem:[#allocation4 + $0x4c] sm:$0xf]
    %v99 = vld [vmem:[#allocation4 + $0x50] sm:$0xf]
    %v100 = vld [vmem:[#allocation4 + $0x54] sm:$0xf]
    %v101 = vld [vmem:[#allocation4 + $0x58] sm:$0xf]
    %v102 = vld [vmem:[#allocation4 + $0x5c] sm:$0xf]
    %v103 = vld [vmem:[#allocation4 + $0x60] sm:$0xf]
    %v104 = vld [vmem:[#allocation4 + $0x64] sm:$0xf]
    %v105 = vld [vmem:[#allocation4 + $0x68] sm:$0xf]
    %v106 = vld [vmem:[#allocation4 + $0x6c] sm:$0xf]
    %v107 = vld [vmem:[#allocation4 + $0x70] sm:$0xf]
    %v108 = vld [vmem:[#allocation4 + $0x74] sm:$0xf]
    %v109 = vld [vmem:[#allocation4 + $0x78] sm:$0xf]
    %v110 = vld [vmem:[#allocation4 + $0x7c] sm:$0xf]
    %v111 = vld [vmem:[#allocation4 + $0x80] sm:$0xf]
    %v112 = vld [vmem:[#allocation4 + $0x84] sm:$0xf]
    %v113 = vld [vmem:[#allocation4 + $0x88] sm:$0xf]
    %v114 = vld [vmem:[#allocation4 + $0x8c] sm:$0xf]
    %v115 = vld [vmem:[#allocation4 + $0x90] sm:$0xf]
    %v116 = vld [vmem:[#allocation4 + $0x94] sm:$0xf]
    %v117 = vld [vmem:[#allocation4 + $0x98] sm:$0xf]
    %v118 = vld [vmem:[#allocation4 + $0x9c] sm:$0xf]
    %v119 = vld [vmem:[#allocation4 + $0xa0] sm:$0xf]
    %v120 = vld [vmem:[#allocation4 + $0xa4] sm:$0xf]
    %v121 = vld [vmem:[#allocation4 + $0xa8] sm:$0xf]
    %v122 = vld [vmem:[#allocation4 + $0xac] sm:$0xf]
    %v123 = vld [vmem:[#allocation4 + $0xb0] sm:$0xf]
    %v124 = vld [vmem:[#allocation4 + $0xb4] sm:$0xf]
    %v125 = vld [vmem:[#allocation4 + $0xb8] sm:$0xf]
    %v126 = vld [vmem:[#allocation4 + $0xbc] sm:$0xf]
    %v127 = vld [vmem:[#allocation4 + $0xc0] sm:$0xf]
    %v128 = vld [vmem:[#allocation4 + $0xc4] sm:$0xf]
    %v129 = vld [vmem:[#allocation4 + $0xc8] sm:$0xf]
    %v130 = vld [vmem:[#allocation4 + $0xcc] sm:$0xf]
    %v131 = vld [vmem:[#allocation4 + $0xd0] sm:$0xf]
    %v132 = vld [vmem:[#allocation4 + $0xd4] sm:$0xf]
    %v133 = vld [vmem:[#allocation4 + $0xd8] sm:$0xf]
    %v134 = vld [vmem:[#allocation4 + $0xdc] sm:$0xf]
    %v135 = vld [vmem:[#allocation4 + $0xe0] sm:$0xf]
    %v136 = vld [vmem:[#allocation4 + $0xe4] sm:$0xf]
    %v137 = vld [vmem:[#allocation4 + $0xe8] sm:$0xf]
    %v138 = vld [vmem:[#allocation4 + $0xec] sm:$0xf]
    %v139 = vld [vmem:[#allocation4 + $0xf0] sm:$0xf]
    %v140 = vld [vmem:[#allocation4 + $0xf4] sm:$0xf]
    %v141 = vld [vmem:[#allocation4 + $0xf8] sm:$0xf]
    %v142 = vld [vmem:[#allocation4 + $0xfc] sm:$0xf]
    %v143 = vld [vmem:[#allocation4 + $0x100] sm:$0xf]
    %v144 = vld [vmem:[#allocation4 + $0x104] sm:$0xf]
    %v145 = vld [vmem:[#allocation4 + $0x108] sm:$0xf]
    %v146 = vld [vmem:[#allocation4 + $0x10c] sm:$0xf]
    %v147 = vld [vmem:[#allocation4 + $0x110] sm:$0xf]
    %v148 = vld [vmem:[#allocation4 + $0x114] sm:$0xf]
    %v149 = vld [vmem:[#allocation4 + $0x118] sm:$0xf]
    %v150 = vld [vmem:[#allocation4 + $0x11c] sm:$0xf]
    %v163 = vunpack.c.l.b16 %v67
    %v164 = vunpack.c.h.b16 %v67
    %v165 = vunpack.c.l.b16 %v68
    %v166 = vunpack.c.h.b16 %v68
    %v167 = vunpack.c.l.b16 %v69
    %v168 = vunpack.c.l.b16 %v70
    %v169 = vunpack.c.h.b16 %v70
    %v170 = vunpack.c.l.b16 %v71
    %v171 = vunpack.c.h.b16 %v71
    %v172 = vunpack.c.l.b16 %v72
    %v173 = vunpack.c.l.b16 %v73
    %v174 = vunpack.c.h.b16 %v73
    %v175 = vunpack.c.l.b16 %v74
    %v176 = vunpack.c.h.b16 %v74
    %v177 = vunpack.c.l.b16 %v75
    %v178 = vunpack.c.l.b16 %v76
    %v179 = vunpack.c.h.b16 %v76
    %v180 = vunpack.c.l.b16 %v77
    %v181 = vunpack.c.h.b16 %v77
    %v182 = vunpack.c.l.b16 %v78
    %v183 = vpack.c.b16 %v168, %v163
    %v184 = vpack.c.b16 %v169, %v164
    %v185 = vpack.c.b16 %v170, %v165
    %v186 = vpack.c.b16 %v171, %v166
    %v187 = vpack.c.b16 %v172, %v167
    %v188 = vpack.c.b16 %v178, %v173
    %v189 = vpack.c.b16 %v179, %v174
    %v190 = vpack.c.b16 %v180, %v175
    %v191 = vpack.c.b16 %v181, %v176
    %v192 = vpack.c.b16 %v182, %v177
    %v273 = vunpack.c.l.b16 %v79
    %v274 = vunpack.c.l.b16 %v80
    %v275 = vunpack.c.l.b16 %v81
    %v276 = vunpack.c.l.b16 %v82
    %v277 = vunpack.c.l.b16 %v83
    %v278 = vunpack.c.l.b16 %v84
    %v279 = vunpack.c.l.b16 %v85
    %v280 = vunpack.c.l.b16 %v86
    %v281 = vunpack.c.l.b16 %v87
    %v282 = vunpack.c.l.b16 %v88
    %v283 = vunpack.c.l.b16 %v89
    %v284 = vunpack.c.l.b16 %v90
    %v285 = vunpack.c.l.b16 %v91
    %v286 = vunpack.c.l.b16 %v92
    %v287 = vunpack.c.l.b16 %v93
    %v288 = vunpack.c.l.b16 %v94
    %v289 = vunpack.c.l.b16 %v95
    %v290 = vunpack.c.l.b16 %v96
    %v291 = vunpack.c.l.b16 %v97
    %v292 = vunpack.c.l.b16 %v98
    %v293 = vunpack.c.l.b16 %v99
    %v294 = vunpack.c.l.b16 %v100
    %v295 = vunpack.c.l.b16 %v101
    %v296 = vunpack.c.l.b16 %v102
    %v297 = vunpack.c.l.b16 %v103
    %v298 = vunpack.c.l.b16 %v104
    %v299 = vunpack.c.l.b16 %v105
    %v300 = vunpack.c.l.b16 %v106
    %v301 = vunpack.c.l.b16 %v107
    %v302 = vunpack.c.l.b16 %v108
    %v303 = vunpack.c.l.b16 %v109
    %v304 = vunpack.c.l.b16 %v110
    %v305 = vunpack.c.l.b16 %v111
    %v306 = vunpack.c.l.b16 %v112
    %v307 = vunpack.c.l.b16 %v113
    %v308 = vunpack.c.l.b16 %v114
    %v309 = vunpack.c.l.b16 %v115
    %v310 = vunpack.c.l.b16 %v116
    %v311 = vunpack.c.l.b16 %v117
    %v312 = vunpack.c.l.b16 %v118
    %v313 = vunpack.c.l.b16 %v119
    %v314 = vunpack.c.l.b16 %v120
    %v315 = vunpack.c.l.b16 %v121
    %v316 = vunpack.c.l.b16 %v122
    %v317 = vunpack.c.l.b16 %v123
    %v318 = vunpack.c.l.b16 %v124
    %v319 = vunpack.c.l.b16 %v125
    %v320 = vunpack.c.l.b16 %v126
    %v321 = vunpack.c.l.b16 %v127
    %v322 = vunpack.c.l.b16 %v128
    %v323 = vunpack.c.l.b16 %v129
    %v324 = vunpack.c.l.b16 %v130
    %v325 = vunpack.c.l.b16 %v131
    %v326 = vunpack.c.l.b16 %v132
    %v327 = vunpack.c.l.b16 %v133
    %v328 = vunpack.c.l.b16 %v134
    %v329 = vunpack.c.l.b16 %v135
    %v330 = vunpack.c.l.b16 %v136
    %v331 = vunpack.c.l.b16 %v137
    %v332 = vunpack.c.l.b16 %v138
    %v333 = vunpack.c.l.b16 %v139
    %v334 = vunpack.c.l.b16 %v140
    %v335 = vunpack.c.l.b16 %v141
    %v336 = vunpack.c.l.b16 %v142
    %v337 = vunpack.c.l.b16 %v143
    %v338 = vunpack.c.l.b16 %v144
    %v339 = vunpack.c.l.b16 %v145
    %v340 = vunpack.c.l.b16 %v146
    %v341 = vunpack.c.l.b16 %v147
    %v342 = vunpack.c.l.b16 %v148
    %v343 = vunpack.c.l.b16 %v149
    %v344 = vunpack.c.l.b16 %v150
    %v345 = vpack.c.b16 %v274, %v273
    %v346 = vpack.c.b16 %v276, %v275
    %v347 = vpack.c.b16 %v278, %v277
    %v348 = vpack.c.b16 %v280, %v279
    %v349 = vpack.c.b16 %v282, %v281
    %v350 = vpack.c.b16 %v284, %v283
    %v351 = vpack.c.b16 %v286, %v285
    %v352 = vpack.c.b16 %v288, %v287
    %v353 = vpack.c.b16 %v290, %v289
    %v354 = vpack.c.b16 %v292, %v291
    %v355 = vpack.c.b16 %v294, %v293
    %v356 = vpack.c.b16 %v296, %v295
    %v357 = vpack.c.b16 %v298, %v297
    %v358 = vpack.c.b16 %v300, %v299
    %v359 = vpack.c.b16 %v302, %v301
    %v360 = vpack.c.b16 %v304, %v303
    %v361 = vpack.c.b16 %v306, %v305
    %v362 = vpack.c.b16 %v308, %v307
    %v363 = vpack.c.b16 %v310, %v309
    %v364 = vpack.c.b16 %v312, %v311
    %v365 = vpack.c.b16 %v314, %v313
    %v366 = vpack.c.b16 %v316, %v315
    %v367 = vpack.c.b16 %v318, %v317
    %v368 = vpack.c.b16 %v320, %v319
    %v369 = vpack.c.b16 %v322, %v321
    %v370 = vpack.c.b16 %v324, %v323
    %v371 = vpack.c.b16 %v326, %v325
    %v372 = vpack.c.b16 %v328, %v327
    %v373 = vpack.c.b16 %v330, %v329
    %v374 = vpack.c.b16 %v332, %v331
    %v375 = vpack.c.b16 %v334, %v333
    %v376 = vpack.c.b16 %v336, %v335
    %v377 = vpack.c.b16 %v338, %v337
    %v378 = vpack.c.b16 %v340, %v339
    %v379 = vpack.c.b16 %v342, %v341
    %v380 = vpack.c.b16 %v344, %v343
    %vm417 = vcmask 523264
    %v419 = vsel %vm417, %v187, 0
    %v422 = vsel %vm417, %v192, 0
    %424 = vmatpush.bf16.msra.mxu0 %v352
    %425 = vmatpush.bf16.msra.mxu0 %v351
    %426 = vmatpush.bf16.msra.mxu0 %v350
    %427 = vmatpush.bf16.msra.mxu0 %v349
    %428 = vmatpush.bf16.msra.mxu0 %v348
    %429 = vmatpush.bf16.msra.mxu0 %v347
    %430 = vmatpush.bf16.msra.mxu0 %v346
    %431 = vmatpush.bf16.msra.mxu0 %v345
    %432 = vmatmul.bf16.gmra.mxu0 %v183
    %v433 = vpop.f32.mrf.mxu0
    %v434 = vadd.f32 0.0, %v433
    %v435 = vpop.f32.mrf.mxu0
    %v436 = vadd.f32 0.0, %v435
    %437 = vmatmul.bf16.gmra.mxu0 %v188
    %v438 = vpop.f32.mrf.mxu0
    %v439 = vadd.f32 0.0, %v438
    %v440 = vpop.f32.mrf.mxu0
    %v441 = vadd.f32 0.0, %v440
    %442 = vdwg.mxu0
    %443 = vmatpush.bf16.msra.mxu0 %v360
    %444 = vmatpush.bf16.msra.mxu0 %v359
    %445 = vmatpush.bf16.msra.mxu0 %v358
    %446 = vmatpush.bf16.msra.mxu0 %v357
    %447 = vmatpush.bf16.msra.mxu0 %v356
    %448 = vmatpush.bf16.msra.mxu0 %v355
    %449 = vmatpush.bf16.msra.mxu0 %v354
    %450 = vmatpush.bf16.msra.mxu0 %v353
    %451 = vmatmul.bf16.gmra.mxu0 %v184
    %v452 = vpop.f32.mrf.mxu0
    %v453 = vadd.f32 %v434, %v452
    %v454 = vpop.f32.mrf.mxu0
    %v455 = vadd.f32 %v436, %v454
    %456 = vmatmul.bf16.gmra.mxu0 %v189
    %v457 = vpop.f32.mrf.mxu0
    %v458 = vadd.f32 %v439, %v457
    %v459 = vpop.f32.mrf.mxu0
    %v460 = vadd.f32 %v441, %v459
    %461 = vdwg.mxu0
    %462 = vmatpush.bf16.msra.mxu0 %v368
    %463 = vmatpush.bf16.msra.mxu0 %v367
    %464 = vmatpush.bf16.msra.mxu0 %v366
    %465 = vmatpush.bf16.msra.mxu0 %v365
    %466 = vmatpush.bf16.msra.mxu0 %v364
    %467 = vmatpush.bf16.msra.mxu0 %v363
    %468 = vmatpush.bf16.msra.mxu0 %v362
    %469 = vmatpush.bf16.msra.mxu0 %v361
    %470 = vmatmul.bf16.gmra.mxu0 %v185
    %v471 = vpop.f32.mrf.mxu0
    %v472 = vadd.f32 %v453, %v471
    %v473 = vpop.f32.mrf.mxu0
    %v474 = vadd.f32 %v455, %v473
    %475 = vmatmul.bf16.gmra.mxu0 %v190
    %v476 = vpop.f32.mrf.mxu0
    %v477 = vadd.f32 %v458, %v476
    %v478 = vpop.f32.mrf.mxu0
    %v479 = vadd.f32 %v460, %v478
    %480 = vdwg.mxu0
    %481 = vmatpush.bf16.msra.mxu0 %v376
    %482 = vmatpush.bf16.msra.mxu0 %v375
    %483 = vmatpush.bf16.msra.mxu0 %v374
    %484 = vmatpush.bf16.msra.mxu0 %v373
    %485 = vmatpush.bf16.msra.mxu0 %v372
    %486 = vmatpush.bf16.msra.mxu0 %v371
    %487 = vmatpush.bf16.msra.mxu0 %v370
    %488 = vmatpush.bf16.msra.mxu0 %v369
    %489 = vmatmul.bf16.gmra.mxu0 %v186
    %v490 = vpop.f32.mrf.mxu0
    %v491 = vadd.f32 %v472, %v490
    %v492 = vpop.f32.mrf.mxu0
    %v493 = vadd.f32 %v474, %v492
    %494 = vmatmul.bf16.gmra.mxu0 %v191
    %v495 = vpop.f32.mrf.mxu0
    %v496 = vadd.f32 %v477, %v495
    %v497 = vpop.f32.mrf.mxu0
    %v498 = vadd.f32 %v479, %v497
    %499 = vdwg.mxu0
    %500 = vmatpush.bf16.msra.mxu0 0
    %501 = vmatpush.bf16.msra.mxu0 0
    %502 = vmatpush.bf16.msra.mxu0 0
    %503 = vmatpush.bf16.msra.mxu0 0
    %504 = vmatpush.bf16.msra.mxu0 %v380
    %505 = vmatpush.bf16.msra.mxu0 %v379
    %506 = vmatpush.bf16.msra.mxu0 %v378
    %507 = vmatpush.bf16.msra.mxu0 %v377
    %508 = vmatmul.bf16.gmra.mxu0 %v419
    %v509 = vpop.f32.mrf.mxu0
    %v510 = vadd.f32 %v491, %v509
    %v511 = vpop.f32.mrf.mxu0
    %v512 = vadd.f32 %v493, %v511
    %513 = vmatmul.bf16.gmra.mxu0 %v422
    %v514 = vpop.f32.mrf.mxu0
    %v515 = vadd.f32 %v496, %v514
    %v516 = vpop.f32.mrf.mxu0
    %v517 = vadd.f32 %v498, %v516
    %518 = vdwg.mxu0
    %s519 = smul.u32 0, 32
    %v520 = vpack.c.bf16 %v510, %v510
    %v521 = vpack.c.bf16 %v512, %v512
    %v522 = vpack.c.bf16 %v515, %v515
    %v523 = vpack.c.bf16 %v517, %v517
    %s524 = sshra.s32 %s519, 3
    %s525 = sand.u32 %s519, 7
    %s526 = smul.addr %s524, 4
    %s527 = scalar_lea.vmem %s4, %s526
    %528 = vst [vmem:[%s527] sm:$0xf] %v520
    %529 = vst [vmem:[%s527 + $0x4] sm:$0xf] %v521
    %530 = vst [vmem:[%s527 + $0x8] sm:$0xf] %v522
    %531 = vst [vmem:[%s527 + $0xc] sm:$0xf] %v523
    %v532 = vld [vmem:[#allocation2] sm:$0x1]
    %v533 = vadd.f32 %v510, %v512
    %v534 = vadd.f32 %v533, %v515
    %v535 = vadd.f32 %v534, %v517
    %v536 = vrot.slane %v535, 4
    %v537 = vadd.f32 %v535, %v536
    %v538 = vrot.slane %v537, 2
    %v539 = vadd.f32 %v537, %v538
    %v540 = vrot.slane %v539, 1
    %v541 = vadd.f32 %v539, %v540
    %v542 = vadd.f32 %v532, %v541
    %543 = vst [vmem:[#allocation2] sm:$0x1] %v542
    %v544 = vld [vmem:[#allocation3] sm:$0x1]
    %v545 = vmul.f32 %v510, %v510
    %v546 = vmul.f32 %v512, %v512
    %v547 = vmul.f32 %v515, %v515
    %v548 = vmul.f32 %v517, %v517
    %v549 = vadd.f32 %v545, %v546
    %v550 = vadd.f32 %v549, %v547
    %v551 = vadd.f32 %v550, %v548
    %v552 = vrot.slane %v551, 4
    %v553 = vadd.f32 %v551, %v552
    %v554 = vrot.slane %v553, 2
    %v555 = vadd.f32 %v553, %v554
    %v556 = vrot.slane %v555, 1
    %v557 = vadd.f32 %v555, %v556
    %v558 = vadd.f32 %v544, %v557
    %559 = vst [vmem:[#allocation3] sm:$0x1] %v558
    // Predicated region
    $region34: #{netg_forward.6} parent=1 // pred_check
      %p560 = pneg %p61
    $region35: #{netg_forward.6} parent=1 // pred_check_branch
      %562 = sbr.rel (%p560) target = $region37
    $region36: #{netg_forward.6} parent=1 // pred_region
      %v563 = vld [vmem:[#allocation2] sm:$0x1]
      %v564 = vld [vmem:[#allocation3] sm:$0x1]
      %v565 = vld [vmem:[#allocation6] sm:$0x1]
      %v566 = vld [vmem:[#allocation8] sm:$0x1]
      %568 = vrot.lane.b32.xlu0 %v563, 96
      %v569 = vpop.permute.xlu0 %568
      %v571 = vadd.f32 %v563, %v569
      %573 = vrot.lane.b32.xlu0 %v564, 96
      %v574 = vpop.permute.xlu0 %573
      %v576 = vadd.f32 %v564, %v574
      %577 = vrot.lane.b32.xlu0 %v563, 64
      %v578 = vpop.permute.xlu0 %577
      %v580 = vadd.f32 %v571, %v578
      %581 = vrot.lane.b32.xlu0 %v564, 64
      %v582 = vpop.permute.xlu0 %581
      %v584 = vadd.f32 %v576, %v582
      %585 = vrot.lane.b32.xlu0 %v563, 32
      %v586 = vpop.permute.xlu0 %585
      %v588 = vadd.f32 %v580, %v586
      %589 = vrot.lane.b32.xlu0 %v564, 32
      %v590 = vpop.permute.xlu0 %589
      %v592 = vadd.f32 %v584, %v590
      %v593 = vmul.f32 %v588, 0.0078125
      %v594 = vmul.f32 %v592, 0.0078125
      %v595 = vmul.f32 %v593, %v593
      %v596 = vsub.f32 %v594, %v595
      %v597 = vmax.f32 %v596, 0.0
      %v598 = vadd.f32 %v597, 1e-05
      %v599 = vrsqrt.pop %v598
      %v600 = vmul.f32 %v599, %v598
      %v601 = vmul.f32 %v600, %v599
      %v602 = vmul.f32 0.5, %v601
      %v603 = vsub.f32 1.5, %v602
      %v604 = vmul.f32 %v599, %v603
      %vm605 = vweird.f32 %v598
      %vm606 = vweird.f32 %v599
      %vm607 = vmor %vm605, %vm606
      %v608 = vsel %vm607, %v599, %v604
      %v609 = vmul.f32 %v565, %v608
      %v610 = vmul.f32 %v593, %v609
      %v611 = vsub.f32 %v566, %v610
      %v613 = vperm.slane %v609, 0
      %614 = vrot.lane.b32.xlu0 %v613, 32
      %v615 = vpop.permute.xlu0 %614
      %617 = vrot.lane.b32.xlu0 %v613, 64
      %v618 = vpop.permute.xlu0 %617
      %620 = vrot.lane.b32.xlu0 %v613, 96
      %v621 = vpop.permute.xlu0 %620
      %vm623 = vcmask 261120
      %v624 = vsel %vm623, %v609, %v615
      %v625 = vsel %vm417, %v624, %v618
      %vm626 = vcmask 785408
      %v627 = vsel %vm626, %v625, %v621
      %v629 = vperm.slane %v611, 0
      %630 = vrot.lane.b32.xlu0 %v629, 32
      %v631 = vpop.permute.xlu0 %630
      %633 = vrot.lane.b32.xlu0 %v629, 64
      %v634 = vpop.permute.xlu0 %633
      %636 = vrot.lane.b32.xlu0 %v629, 96
      %v637 = vpop.permute.xlu0 %636
      %v639 = vsel %vm623, %v611, %v631
      %v640 = vsel %vm417, %v639, %v634
      %v641 = vsel %vm626, %v640, %v637
      %v642 = vld [vmem:[%s4] sm:$0xf]
      %v643 = vld [vmem:[%s4 + $0x4] sm:$0xf]
      %v644 = vld [vmem:[%s4 + $0x8] sm:$0xf]
      %v645 = vld [vmem:[%s4 + $0xc] sm:$0xf]
      %v646 = vunpack.c.l.bf16 %v642
      %v647 = vunpack.c.l.bf16 %v643
      %v648 = vunpack.c.l.bf16 %v644
      %v649 = vunpack.c.l.bf16 %v645
      %v650 = vperm.slane %v627, 0
      %v651 = vmul.f32 %v646, %v650
      %v652 = vmul.f32 %v647, %v650
      %v653 = vmul.f32 %v648, %v650
      %v654 = vmul.f32 %v649, %v650
      %v655 = vperm.slane %v641, 0
      %v656 = vadd.f32 %v651, %v655
      %v657 = vadd.f32 %v652, %v655
      %v658 = vadd.f32 %v653, %v655
      %v659 = vadd.f32 %v654, %v655
      %v660 = vmax.f32 %v656, 0.0
      %v661 = vmax.f32 %v657, 0.0
      %v662 = vmax.f32 %v658, 0.0
      %v663 = vmax.f32 %v659, 0.0
      %v664 = vpack.c.bf16 %v660, %v660
      %v665 = vpack.c.bf16 %v661, %v661
      %v666 = vpack.c.bf16 %v662, %v662
      %v667 = vpack.c.bf16 %v663, %v663
      %668 = vst [vmem:[%s4] sm:$0xf] %v664
      %669 = vst [vmem:[%s4 + $0x4] sm:$0xf] %v665
      %670 = vst [vmem:[%s4 + $0x8] sm:$0xf] %v666
      %671 = vst [vmem:[%s4 + $0xc] sm:$0xf] %v667
    $region37: #{netg_forward.6} parent=1 // pred_fallthru
      _
    // Predicated region
    $region38: #{netg_forward.6} parent=1 // pred_check
      _
    $region39: #{netg_forward.6} parent=1 // pred_check_branch
      %673 = sbr.rel (0) target = $region41
    $region40: #{netg_forward.6} parent=1 // pred_region
      _
    $region41: #{netg_forward.6} parent=1 // pred_fallthru
      _
    // Predicated region
    $region42: #{netg_forward.6} parent=1 // pred_check
      _
    $region43: #{netg_forward.6} parent=1 // pred_check_branch
      %675 = sbr.rel (0) target = $region45
    $region44: #{netg_forward.6} parent=1 // pred_region
      _
    $region45: #{netg_forward.6} parent=1 // pred_fallthru
      _
    %676 = vsyncpa [#allocation5], 1
    %677 = vsyncpa [#allocation7], 1

// kernel: netg_forward.7
$region0: #{netg_forward.7}
  #allocation0 [shape = 'u32[]', space=smem, size = 0x4, offset = 0x4, fixed_abs, tag = 'smem constant byte address 0x4 - core index']
  #allocation1 [shape = 'u32[72,128]{1,0:T(1,128)}', space=vmem, size = 0x9000, scoped, tag = 'internal scratch']
  #allocation2 [shape = 'f32[1,64]{1,0:T(1,128)}', space=vmem, size = 0x200, scoped, tag = 'scratch operand']
  #allocation3 [shape = 'f32[1,64]{1,0:T(1,128)}', space=vmem, size = 0x200, scoped, tag = 'scratch operand']
  %s0 = inlined_call_operand.vmem [shape: bf16[128,288], index: 0, kind: input, shape index: {}]
  %s1 = inlined_call_operand.vmem [shape: bf16[288,64], index: 1, kind: input, shape index: {}]
  %s2 = inlined_call_operand.hbm [shape: f32[1,16], index: 2, kind: input, shape index: {}]
  %s3 = inlined_call_operand.hbm [shape: f32[1,16], index: 3, kind: input, shape index: {}]
  %s4 = inlined_call_operand.vmem [shape: bf16[128,64], index: 4, kind: output, shape index: {}]
  %s5 = sld [smem:[#allocation0]]
  $region42: #{netg_forward.7} parent=0
    _
  %s7 = ssub.s32 1, %s5
  %s8 = scalar_select 0, %s7, %s5
  $region1: #{netg_forward.7} parent=0
    #allocation4 [shape = 'u8[512]{0}', space=vmem, size = 0x400, scoped, tag = 'input window, operand 2, single buffered']
    #allocation5 [shape = 's32[1]{0}', space=sflag, size = 0x4, scoped, tag = 'scoped memory for netg_forward.7']
    #allocation6 [shape = 'u8[512]{0}', space=vmem, size = 0x400, scoped, tag = 'input window, operand 3, single buffered']
    #allocation7 [shape = 's32[1]{0}', space=sflag, size = 0x4, scoped, tag = 'scoped memory for netg_forward.7']
    %9 = vsyncpa [#allocation5], 0
    %10 = vsyncpa [#allocation7], 0
    // Predicated region
    $region2: #{netg_forward.7} parent=1 // pred_check
      _
    $region3: #{netg_forward.7} parent=1 // pred_check_branch
      %12 = sbr.rel (0) target = $region5
    $region4: #{netg_forward.7} parent=1 // pred_region
      _
    $region5: #{netg_forward.7} parent=1 // pred_fallthru
      _
    // Predicated region
    $region6: #{netg_forward.7} parent=1 // pred_check
      _
    $region7: #{netg_forward.7} parent=1 // pred_check_branch
      %14 = sbr.rel (0) target = $region9
    $region8: #{netg_forward.7} parent=1 // pred_region
      _
    $region9: #{netg_forward.7} parent=1 // pred_fallthru
      _
    // Predicated region
    $region10: #{netg_forward.7} parent=1 // pred_check
      _
    $region11: #{netg_forward.7} parent=1 // pred_check_branch
      %16 = sbr.rel (0) target = $region13
    $region12: #{netg_forward.7} parent=1 // pred_region
      %18 = vsyncadd [#allocation5], 0
      %s20 = sshll.u32 %s2, 4
      %s21 = int_to_ptr.hbm [resolvable:$true] %s20
      %s22 = sshll.u32 [#allocation4], 4
      %s23 = int_to_ptr.vmem [resolvable:$true] %s22
      %25 = dma.hbm_to_vmem [thread:$0]  %s21, 16, %s23, [#allocation5]
    $region13: #{netg_forward.7} parent=1 // pred_fallthru
      _
    // Predicated region
    $region14: #{netg_forward.7} parent=1 // pred_check
      _
    $region15: #{netg_forward.7} parent=1 // pred_check_branch
      %27 = sbr.rel (0) target = $region17
    $region16: #{netg_forward.7} parent=1 // pred_region
      %29 = vsyncadd [#allocation7], 0
      %s31 = sshll.u32 %s3, 4
      %s32 = int_to_ptr.hbm [resolvable:$true] %s31
      %s33 = sshll.u32 [#allocation6], 4
      %s34 = int_to_ptr.vmem [resolvable:$true] %s33
      %36 = dma.hbm_to_vmem [thread:$0]  %s32, 16, %s34, [#allocation7]
    $region17: #{netg_forward.7} parent=1 // pred_fallthru
      _
    // Predicated region
    $region18: #{netg_forward.7} parent=1 // pred_check
      _
    $region19: #{netg_forward.7} parent=1 // pred_check_branch
      %38 = sbr.rel (0) target = $region21
    $region20: #{netg_forward.7} parent=1 // pred_region
      %40 = dma.done [#allocation5], 16
    $region21: #{netg_forward.7} parent=1 // pred_fallthru
      _
    // Predicated region
    $region22: #{netg_forward.7} parent=1 // pred_check
      _
    $region23: #{netg_forward.7} parent=1 // pred_check_branch
      %42 = sbr.rel (0) target = $region25
    $region24: #{netg_forward.7} parent=1 // pred_region
      %44 = dma.done [#allocation7], 16
    $region25: #{netg_forward.7} parent=1 // pred_fallthru
      _
    %p46 = scmp.eq.s32.totalorder 0, 0
    // Predicated region
    $region26: #{netg_forward.7} parent=1 // pred_check
      %p47 = pneg %p46
    $region27: #{netg_forward.7} parent=1 // pred_check_branch
      %49 = sbr.rel (%p47) target = $region29
    $region28: #{netg_forward.7} parent=1 // pred_region
      %vm50 = vcmask 516096
      %51 = vst.msk [vmem:[#allocation2] sm:$0x1] %vm50, 0.0
      %52 = vst.msk [vmem:[#allocation3] sm:$0x1] %vm50, 0.0
    $region29: #{netg_forward.7} parent=1 // pred_fallthru
      _
    %v53 = vld [vmem:[%s0] sm:$0xff]
    %v54 = vld [vmem:[%s0 + $0x8] sm:$0xf]
    %v55 = vld [vmem:[%s0 + $0xc] sm:$0xff]
    %v56 = vld [vmem:[%s0 + $0x14] sm:$0xf]
    %v57 = vld [vmem:[%s0 + $0x18] sm:$0xff]
    %v58 = vld [vmem:[%s0 + $0x20] sm:$0xf]
    %v59 = vld [vmem:[%s0 + $0x24] sm:$0xff]
    %v60 = vld [vmem:[%s0 + $0x2c] sm:$0xf]
    %v61 = vld [vmem:[%s0 + $0x30] sm:$0xff]
    %v62 = vld [vmem:[%s0 + $0x38] sm:$0xf]
    %v63 = vld [vmem:[%s0 + $0x3c] sm:$0xff]
    %v64 = vld [vmem:[%s0 + $0x44] sm:$0xf]
    %v65 = vld [vmem:[%s0 + $0x48] sm:$0xff]
    %v66 = vld [vmem:[%s0 + $0x50] sm:$0xf]
    %v67 = vld [vmem:[%s0 + $0x54] sm:$0xff]
    %v68 = vld [vmem:[%s0 + $0x5c] sm:$0xf]
    %v69 = vld [vmem:[%s0 + $0x60] sm:$0xff]
    %v70 = vld [vmem:[%s0 + $0x68] sm:$0xf]
    %v71 = vld [vmem:[%s0 + $0x6c] sm:$0xff]
    %v72 = vld [vmem:[%s0 + $0x74] sm:$0xf]
    %v73 = vld [vmem:[%s0 + $0x78] sm:$0xff]
    %v74 = vld [vmem:[%s0 + $0x80] sm:$0xf]
    %v75 = vld [vmem:[%s0 + $0x84] sm:$0xff]
    %v76 = vld [vmem:[%s0 + $0x8c] sm:$0xf]
    %v77 = vld [vmem:[%s0 + $0x90] sm:$0xff]
    %v78 = vld [vmem:[%s0 + $0x98] sm:$0xf]
    %v79 = vld [vmem:[%s0 + $0x9c] sm:$0xff]
    %v80 = vld [vmem:[%s0 + $0xa4] sm:$0xf]
    %v81 = vld [vmem:[%s0 + $0xa8] sm:$0xff]
    %v82 = vld [vmem:[%s0 + $0xb0] sm:$0xf]
    %v83 = vld [vmem:[%s0 + $0xb4] sm:$0xff]
    %v84 = vld [vmem:[%s0 + $0xbc] sm:$0xf]
    %v85 = vld [vmem:[%s1] sm:$0xf]
    %v86 = vld [vmem:[%s1 + $0x4] sm:$0xf]
    %v87 = vld [vmem:[%s1 + $0x8] sm:$0xf]
    %v88 = vld [vmem:[%s1 + $0xc] sm:$0xf]
    %v89 = vld [vmem:[%s1 + $0x10] sm:$0xf]
    %v90 = vld [vmem:[%s1 + $0x14] sm:$0xf]
    %v91 = vld [vmem:[%s1 + $0x18] sm:$0xf]
    %v92 = vld [vmem:[%s1 + $0x1c] sm:$0xf]
    %v93 = vld [vmem:[%s1 + $0x20] sm:$0xf]
    %v94 = vld [vmem:[%s1 + $0x24] sm:$0xf]
    %v95 = vld [vmem:[%s1 + $0x28] sm:$0xf]
    %v96 = vld [vmem:[%s1 + $0x2c] sm:$0xf]
    %v97 = vld [vmem:[%s1 + $0x30] sm:$0xf]
    %v98 = vld [vmem:[%s1 + $0x34] sm:$0xf]
    %v99 = vld [vmem:[%s1 + $0x38] sm:$0xf]
    %v100 = vld [vmem:[%s1 + $0x3c] sm:$0xf]
    %v101 = vld [vmem:[%s1 + $0x40] sm:$0xf]
    %v102 = vld [vmem:[%s1 + $0x44] sm:$0xf]
    %v103 = vld [vmem:[%s1 + $0x48] sm:$0xf]
    %v104 = vld [vmem:[%s1 + $0x4c] sm:$0xf]
    %v105 = vld [vmem:[%s1 + $0x50] sm:$0xf]
    %v106 = vld [vmem:[%s1 + $0x54] sm:$0xf]
    %v107 = vld [vmem:[%s1 + $0x58] sm:$0xf]
    %v108 = vld [vmem:[%s1 + $0x5c] sm:$0xf]
    %v109 = vld [vmem:[%s1 + $0x60] sm:$0xf]
    %v110 = vld [vmem:[%s1 + $0x64] sm:$0xf]
    %v111 = vld [vmem:[%s1 + $0x68] sm:$0xf]
    %v112 = vld [vmem:[%s1 + $0x6c] sm:$0xf]
    %v113 = vld [vmem:[%s1 + $0x70] sm:$0xf]
    %v114 = vld [vmem:[%s1 + $0x74] sm:$0xf]
    %v115 = vld [vmem:[%s1 + $0x78] sm:$0xf]
    %v116 = vld [vmem:[%s1 + $0x7c] sm:$0xf]
    %v117 = vld [vmem:[%s1 + $0x80] sm:$0xf]
    %v118 = vld [vmem:[%s1 + $0x84] sm:$0xf]
    %v119 = vld [vmem:[%s1 + $0x88] sm:$0xf]
    %v120 = vld [vmem:[%s1 + $0x8c] sm:$0xf]
    %v153 = vunpack.c.l.b16 %v53
    %v154 = vunpack.c.h.b16 %v53
    %v155 = vunpack.c.l.b16 %v54
    %v156 = vunpack.c.l.b16 %v55
    %v157 = vunpack.c.h.b16 %v55
    %v158 = vunpack.c.l.b16 %v56
    %v159 = vunpack.c.l.b16 %v57
    %v160 = vunpack.c.h.b16 %v57
    %v161 = vunpack.c.l.b16 %v58
    %v162 = vunpack.c.l.b16 %v59
    %v163 = vunpack.c.h.b16 %v59
    %v164 = vunpack.c.l.b16 %v60
    %v165 = vunpack.c.l.b16 %v61
    %v166 = vunpack.c.h.b16 %v61
    %v167 = vunpack.c.l.b16 %v62
    %v168 = vunpack.c.l.b16 %v63
    %v169 = vunpack.c.h.b16 %v63
    %v170 = vunpack.c.l.b16 %v64
    %v171 = vunpack.c.l.b16 %v65
    %v172 = vunpack.c.h.b16 %v65
    %v173 = vunpack.c.l.b16 %v66
    %v174 = vunpack.c.l.b16 %v67
    %v175 = vunpack.c.h.b16 %v67
    %v176 = vunpack.c.l.b16 %v68
    %v177 = vunpack.c.l.b16 %v69
    %v178 = vunpack.c.h.b16 %v69
    %v179 = vunpack.c.l.b16 %v70
    %v180 = vunpack.c.l.b16 %v71
    %v181 = vunpack.c.h.b16 %v71
    %v182 = vunpack.c.l.b16 %v72
    %v183 = vunpack.c.l.b16 %v73
    %v184 = vunpack.c.h.b16 %v73
    %v185 = vunpack.c.l.b16 %v74
    %v186 = vunpack.c.l.b16 %v75
    %v187 = vunpack.c.h.b16 %v75
    %v188 = vunpack.c.l.b16 %v76
    %v189 = vunpack.c.l.b16 %v77
    %v190 = vunpack.c.h.b16 %v77
    %v191 = vunpack.c.l.b16 %v78
    %v192 = vunpack.c.l.b16 %v79
    %v193 = vunpack.c.h.b16 %v79
    %v194 = vunpack.c.l.b16 %v80
    %v195 = vunpack.c.l.b16 %v81
    %v196 = vunpack.c.h.b16 %v81
    %v197 = vunpack.c.l.b16 %v82
    %v198 = vunpack.c.l.b16 %v83
    %v199 = vunpack.c.h.b16 %v83
    %v200 = vunpack.c.l.b16 %v84
    %v201 = vpack.c.b16 %v156, %v153
    %v202 = vpack.c.b16 %v157, %v154
    %v203 = vpack.c.b16 %v158, %v155
    %v204 = vpack.c.b16 %v162, %v159
    %v205 = vpack.c.b16 %v163, %v160
    %v206 = vpack.c.b16 %v164, %v161
    %v207 = vpack.c.b16 %v168, %v165
    %v208 = vpack.c.b16 %v169, %v166
    %v209 = vpack.c.b16 %v170, %v167
    %v210 = vpack.c.b16 %v174, %v171
    %v211 = vpack.c.b16 %v175, %v172
    %v212 = vpack.c.b16 %v176, %v173
    %v213 = vpack.c.b16 %v180, %v177
    %v214 = vpack.c.b16 %v181, %v178
    %v215 = vpack.c.b16 %v182, %v179
    %v216 = vpack.c.b16 %v186, %v183
    %v217 = vpack.c.b16 %v187, %v184
    %v218 = vpack.c.b16 %v188, %v185
    %v219 = vpack.c.b16 %v192, %v189
    %v220 = vpack.c.b16 %v193, %v190
    %v221 = vpack.c.b16 %v194, %v191
    %v222 = vpack.c.b16 %v198, %v195
    %v223 = vpack.c.b16 %v199, %v196
    %v224 = vpack.c.b16 %v200, %v197
    %v277 = vunpack.c.l.b16 %v85
    %v278 = vunpack.c.l.b16 %v86
    %v279 = vunpack.c.l.b16 %v87
    %v280 = vunpack.c.l.b16 %v88
    %v281 = vunpack.c.l.b16 %v89
    %v282 = vunpack.c.l.b16 %v90
    %v283 = vunpack.c.l.b16 %v91
    %v284 = vunpack.c.l.b16 %v92
    %v285 = vunpack.c.l.b16 %v93
    %v286 = vunpack.c.l.b16 %v94
    %v287 = vunpack.c.l.b16 %v95
    %v288 = vunpack.c.l.b16 %v96
    %v289 = vunpack.c.l.b16 %v97
    %v290 = vunpack.c.l.b16 %v98
    %v291 = vunpack.c.l.b16 %v99
    %v292 = vunpack.c.l.b16 %v100
    %v293 = vunpack.c.l.b16 %v101
    %v294 = vunpack.c.l.b16 %v102
    %v295 = vunpack.c.l.b16 %v103
    %v296 = vunpack.c.l.b16 %v104
    %v297 = vunpack.c.l.b16 %v105
    %v298 = vunpack.c.l.b16 %v106
    %v299 = vunpack.c.l.b16 %v107
    %v300 = vunpack.c.l.b16 %v108
    %v301 = vunpack.c.l.b16 %v109
    %v302 = vunpack.c.l.b16 %v110
    %v303 = vunpack.c.l.b16 %v111
    %v304 = vunpack.c.l.b16 %v112
    %v305 = vunpack.c.l.b16 %v113
    %v306 = vunpack.c.l.b16 %v114
    %v307 = vunpack.c.l.b16 %v115
    %v308 = vunpack.c.l.b16 %v116
    %v309 = vunpack.c.l.b16 %v117
    %v310 = vunpack.c.l.b16 %v118
    %v311 = vunpack.c.l.b16 %v119
    %v312 = vunpack.c.l.b16 %v120
    %v313 = vpack.c.b16 %v278, %v277
    %v314 = vpack.c.b16 %v280, %v279
    %v315 = vpack.c.b16 %v282, %v281
    %v316 = vpack.c.b16 %v284, %v283
    %v317 = vpack.c.b16 %v286, %v285
    %v318 = vpack.c.b16 %v288, %v287
    %v319 = vpack.c.b16 %v290, %v289
    %v320 = vpack.c.b16 %v292, %v291
    %v321 = vpack.c.b16 %v294, %v293
    %v322 = vpack.c.b16 %v296, %v295
    %v323 = vpack.c.b16 %v298, %v297
    %v324 = vpack.c.b16 %v300, %v299
    %v325 = vpack.c.b16 %v302, %v301
    %v326 = vpack.c.b16 %v304, %v303
    %v327 = vpack.c.b16 %v306, %v305
    %v328 = vpack.c.b16 %v308, %v307
    %v329 = vpack.c.b16 %v310, %v309
    %v330 = vpack.c.b16 %v312, %v311
    %vm349 = vcmask 261120
    %v351 = vsel %vm349, %v203, 0
    %v354 = vsel %vm349, %v206, 0
    %v357 = vsel %vm349, %v209, 0
    %v360 = vsel %vm349, %v212, 0
    %v363 = vsel %vm349, %v215, 0
    %v366 = vsel %vm349, %v218, 0
    %v369 = vsel %vm349, %v221, 0
    %v372 = vsel %vm349, %v224, 0
    %374 = vmatpush.bf16.msra.mxu0 %v320
    %375 = vmatpush.bf16.msra.mxu0 %v319
    %376 = vmatpush.bf16.msra.mxu0 %v318
    %377 = vmatpush.bf16.msra.mxu0 %v317
    %378 = vmatpush.bf16.msra.mxu0 %v316
    %379 = vmatpush.bf16.msra.mxu0 %v315
    %380 = vmatpush.bf16.msra.mxu0 %v314
    %381 = vmatpush.bf16.msra.mxu0 %v313
    %382 = vmatmul.bf16.gmra.mxu0 %v201
    %v383 = vpop.f32.mrf.mxu0
    %v384 = vadd.f32 0.0, %v383
    %v385 = vpop.f32.mrf.mxu0
    %v386 = vadd.f32 0.0, %v385
    %387 = vmatmul.bf16.gmra.mxu0 %v204
    %v388 = vpop.f32.mrf.mxu0
    %v389 = vadd.f32 0.0, %v388
    %v390 = vpop.f32.mrf.mxu0
    %v391 = vadd.f32 0.0, %v390
    %392 = vmatmul.bf16.gmra.mxu0 %v207
    %v393 = vpop.f32.mrf.mxu0
    %v394 = vadd.f32 0.0, %v393
    %v395 = vpop.f32.mrf.mxu0
    %v396 = vadd.f32 0.0, %v395
    %397 = vmatmul.bf16.gmra.mxu0 %v210
    %v398 = vpop.f32.mrf.mxu0
    %v399 = vadd.f32 0.0, %v398
    %v400 = vpop.f32.mrf.mxu0
    %v401 = vadd.f32 0.0, %v400
    %402 = vmatmul.bf16.gmra.mxu0 %v213
    %v403 = vpop.f32.mrf.mxu0
    %v404 = vadd.f32 0.0, %v403
    %v405 = vpop.f32.mrf.mxu0
    %v406 = vadd.f32 0.0, %v405
    %407 = vmatmul.bf16.gmra.mxu0 %v216
    %v408 = vpop.f32.mrf.mxu0
    %v409 = vadd.f32 0.0, %v408
    %v410 = vpop.f32.mrf.mxu0
    %v411 = vadd.f32 0.0, %v410
    %412 = vmatmul.bf16.gmra.mxu0 %v219
    %v413 = vpop.f32.mrf.mxu0
    %v414 = vadd.f32 0.0, %v413
    %v415 = vpop.f32.mrf.mxu0
    %v416 = vadd.f32 0.0, %v415
    %417 = vmatmul.bf16.gmra.mxu0 %v222
    %v418 = vpop.f32.mrf.mxu0
    %v419 = vadd.f32 0.0, %v418
    %v420 = vpop.f32.mrf.mxu0
    %v421 = vadd.f32 0.0, %v420
    %422 = vdwg.mxu0
    %423 = vmatpush.bf16.msra.mxu0 %v328
    %424 = vmatpush.bf16.msra.mxu0 %v327
    %425 = vmatpush.bf16.msra.mxu0 %v326
    %426 = vmatpush.bf16.msra.mxu0 %v325
    %427 = vmatpush.bf16.msra.mxu0 %v324
    %428 = vmatpush.bf16.msra.mxu0 %v323
    %429 = vmatpush.bf16.msra.mxu0 %v322
    %430 = vmatpush.bf16.msra.mxu0 %v321
    %431 = vmatmul.bf16.gmra.mxu0 %v202
    %v432 = vpop.f32.mrf.mxu0
    %v433 = vadd.f32 %v384, %v432
    %v434 = vpop.f32.mrf.mxu0
    %v435 = vadd.f32 %v386, %v434
    %436 = vmatmul.bf16.gmra.mxu0 %v205
    %v437 = vpop.f32.mrf.mxu0
    %v438 = vadd.f32 %v389, %v437
    %v439 = vpop.f32.mrf.mxu0
    %v440 = vadd.f32 %v391, %v439
    %441 = vmatmul.bf16.gmra.mxu0 %v208
    %v442 = vpop.f32.mrf.mxu0
    %v443 = vadd.f32 %v394, %v442
    %v444 = vpop.f32.mrf.mxu0
    %v445 = vadd.f32 %v396, %v444
    %446 = vmatmul.bf16.gmra.mxu0 %v211
    %v447 = vpop.f32.mrf.mxu0
    %v448 = vadd.f32 %v399, %v447
    %v449 = vpop.f32.mrf.mxu0
    %v450 = vadd.f32 %v401, %v449
    %451 = vmatmul.bf16.gmra.mxu0 %v214
    %v452 = vpop.f32.mrf.mxu0
    %v453 = vadd.f32 %v404, %v452
    %v454 = vpop.f32.mrf.mxu0
    %v455 = vadd.f32 %v406, %v454
    %456 = vmatmul.bf16.gmra.mxu0 %v217
    %v457 = vpop.f32.mrf.mxu0
    %v458 = vadd.f32 %v409, %v457
    %v459 = vpop.f32.mrf.mxu0
    %v460 = vadd.f32 %v411, %v459
    %461 = vmatmul.bf16.gmra.mxu0 %v220
    %v462 = vpop.f32.mrf.mxu0
    %v463 = vadd.f32 %v414, %v462
    %v464 = vpop.f32.mrf.mxu0
    %v465 = vadd.f32 %v416, %v464
    %466 = vmatmul.bf16.gmra.mxu0 %v223
    %v467 = vpop.f32.mrf.mxu0
    %v468 = vadd.f32 %v419, %v467
    %v469 = vpop.f32.mrf.mxu0
    %v470 = vadd.f32 %v421, %v469
    %471 = vdwg.mxu0
    %472 = vmatpush.bf16.msra.mxu0 0
    %473 = vmatpush.bf16.msra.mxu0 0
    %474 = vmatpush.bf16.msra.mxu0 0
    %475 = vmatpush.bf16.msra.mxu0 0
    %476 = vmatpush.bf16.msra.mxu0 0
    %477 = vmatpush.bf16.msra.mxu0 0
    %478 = vmatpush.bf16.msra.mxu0 %v330
    %479 = vmatpush.bf16.msra.mxu0 %v329
    %480 = vmatmul.bf16.gmra.mxu0 %v351
    %v481 = vpop.f32.mrf.mxu0
    %v482 = vadd.f32 %v433, %v481
    %v483 = vpop.f32.mrf.mxu0
    %v484 = vadd.f32 %v435, %v483
    %485 = vmatmul.bf16.gmra.mxu0 %v354
    %v486 = vpop.f32.mrf.mxu0
    %v487 = vadd.f32 %v438, %v486
    %v488 = vpop.f32.mrf.mxu0
    %v489 = vadd.f32 %v440, %v488
    %490 = vmatmul.bf16.gmra.mxu0 %v357
    %v491 = vpop.f32.mrf.mxu0
    %v492 = vadd.f32 %v443, %v491
    %v493 = vpop.f32.mrf.mxu0
    %v494 = vadd.f32 %v445, %v493
    %495 = vmatmul.bf16.gmra.mxu0 %v360
    %v496 = vpop.f32.mrf.mxu0
    %v497 = vadd.f32 %v448, %v496
    %v498 = vpop.f32.mrf.mxu0
    %v499 = vadd.f32 %v450, %v498
    %500 = vmatmul.bf16.gmra.mxu0 %v363
    %v501 = vpop.f32.mrf.mxu0
    %v502 = vadd.f32 %v453, %v501
    %v503 = vpop.f32.mrf.mxu0
    %v504 = vadd.f32 %v455, %v503
    %505 = vmatmul.bf16.gmra.mxu0 %v366
    %v506 = vpop.f32.mrf.mxu0
    %v507 = vadd.f32 %v458, %v506
    %v508 = vpop.f32.mrf.mxu0
    %v509 = vadd.f32 %v460, %v508
    %510 = vmatmul.bf16.gmra.mxu0 %v369
    %v511 = vpop.f32.mrf.mxu0
    %v512 = vadd.f32 %v463, %v511
    %v513 = vpop.f32.mrf.mxu0
    %v514 = vadd.f32 %v465, %v513
    %515 = vmatmul.bf16.gmra.mxu0 %v372
    %v516 = vpop.f32.mrf.mxu0
    %v517 = vadd.f32 %v468, %v516
    %v518 = vpop.f32.mrf.mxu0
    %v519 = vadd.f32 %v470, %v518
    %520 = vdwg.mxu0
    %s521 = smul.u32 0, 128
    %v522 = vpack.c.bf16 %v482, %v482
    %v523 = vpack.c.bf16 %v484, %v484
    %v524 = vpack.c.bf16 %v487, %v487
    %v525 = vpack.c.bf16 %v489, %v489
    %v526 = vpack.c.bf16 %v492, %v492
    %v527 = vpack.c.bf16 %v494, %v494
    %v528 = vpack.c.bf16 %v497, %v497
    %v529 = vpack.c.bf16 %v499, %v499
    %v530 = vpack.c.bf16 %v502, %v502
    %v531 = vpack.c.bf16 %v504, %v504
    %v532 = vpack.c.bf16 %v507, %v507
    %v533 = vpack.c.bf16 %v509, %v509
    %v534 = vpack.c.bf16 %v512, %v512
    %v535 = vpack.c.bf16 %v514, %v514
    %v536 = vpack.c.bf16 %v517, %v517
    %v537 = vpack.c.bf16 %v519, %v519
    %s538 = sshra.s32 %s521, 3
    %s539 = sand.u32 %s521, 7
    %s540 = smul.addr %s538, 4
    %s541 = scalar_lea.vmem %s4, %s540
    %vm542 = vcmask 519168
    %543 = vst.msk [vmem:[%s541] sm:$0xf] %vm542, %v522
    %544 = vst.msk [vmem:[%s541 + $0x4] sm:$0xf] %vm542, %v523
    %545 = vst.msk [vmem:[%s541 + $0x8] sm:$0xf] %vm542, %v524
    %546 = vst.msk [vmem:[%s541 + $0xc] sm:$0xf] %vm542, %v525
    %547 = vst.msk [vmem:[%s541 + $0x10] sm:$0xf] %vm542, %v526
    %548 = vst.msk [vmem:[%s541 + $0x14] sm:$0xf] %vm542, %v527
    %549 = vst.msk [vmem:[%s541 + $0x18] sm:$0xf] %vm542, %v528
    %550 = vst.msk [vmem:[%s541 + $0x1c] sm:$0xf] %vm542, %v529
    %551 = vst.msk [vmem:[%s541 + $0x20] sm:$0xf] %vm542, %v530
    %552 = vst.msk [vmem:[%s541 + $0x24] sm:$0xf] %vm542, %v531
    %553 = vst.msk [vmem:[%s541 + $0x28] sm:$0xf] %vm542, %v532
    %554 = vst.msk [vmem:[%s541 + $0x2c] sm:$0xf] %vm542, %v533
    %555 = vst.msk [vmem:[%s541 + $0x30] sm:$0xf] %vm542, %v534
    %556 = vst.msk [vmem:[%s541 + $0x34] sm:$0xf] %vm542, %v535
    %557 = vst.msk [vmem:[%s541 + $0x38] sm:$0xf] %vm542, %v536
    %558 = vst.msk [vmem:[%s541 + $0x3c] sm:$0xf] %vm542, %v537
    %v559 = vld [vmem:[#allocation2] sm:$0x1]
    %vm560 = vcmask 523264
    %v561 = vsel %vm560, %v482, 0.0
    %v562 = vsel %vm560, %v484, 0.0
    %v563 = vadd.f32 %v561, %v562
    %v564 = vsel %vm560, %v487, 0.0
    %v565 = vadd.f32 %v563, %v564
    %v566 = vsel %vm560, %v489, 0.0
    %v567 = vadd.f32 %v565, %v566
    %v568 = vsel %vm560, %v492, 0.0
    %v569 = vadd.f32 %v567, %v568
    %v570 = vsel %vm560, %v494, 0.0
    %v571 = vadd.f32 %v569, %v570
    %v572 = vsel %vm560, %v497, 0.0
    %v573 = vadd.f32 %v571, %v572
    %v574 = vsel %vm560, %v499, 0.0
    %v575 = vadd.f32 %v573, %v574
    %v576 = vsel %vm560, %v502, 0.0
    %v577 = vadd.f32 %v575, %v576
    %v578 = vsel %vm560, %v504, 0.0
    %v579 = vadd.f32 %v577, %v578
    %v580 = vsel %vm560, %v507, 0.0
    %v581 = vadd.f32 %v579, %v580
    %v582 = vsel %vm560, %v509, 0.0
    %v583 = vadd.f32 %v581, %v582
    %v584 = vsel %vm560, %v512, 0.0
    %v585 = vadd.f32 %v583, %v584
    %v586 = vsel %vm560, %v514, 0.0
    %v587 = vadd.f32 %v585, %v586
    %v588 = vsel %vm560, %v517, 0.0
    %v589 = vadd.f32 %v587, %v588
    %v590 = vsel %vm560, %v519, 0.0
    %v591 = vadd.f32 %v589, %v590
    %v592 = vrot.slane %v591, 4
    %v593 = vadd.f32 %v591, %v592
    %v594 = vrot.slane %v593, 2
    %v595 = vadd.f32 %v593, %v594
    %v596 = vrot.slane %v595, 1
    %v597 = vadd.f32 %v595, %v596
    %v598 = vadd.f32 %v559, %v597
    %vm599 = vcmask 516096
    %600 = vst.msk [vmem:[#allocation2] sm:$0x1] %vm599, %v598
    %v601 = vld [vmem:[#allocation3] sm:$0x1]
    %v602 = vmul.f32 %v482, %v482
    %v603 = vmul.f32 %v484, %v484
    %v604 = vmul.f32 %v487, %v487
    %v605 = vmul.f32 %v489, %v489
    %v606 = vmul.f32 %v492, %v492
    %v607 = vmul.f32 %v494, %v494
    %v608 = vmul.f32 %v497, %v497
    %v609 = vmul.f32 %v499, %v499
    %v610 = vmul.f32 %v502, %v502
    %v611 = vmul.f32 %v504, %v504
    %v612 = vmul.f32 %v507, %v507
    %v613 = vmul.f32 %v509, %v509
    %v614 = vmul.f32 %v512, %v512
    %v615 = vmul.f32 %v514, %v514
    %v616 = vmul.f32 %v517, %v517
    %v617 = vmul.f32 %v519, %v519
    %v618 = vsel %vm560, %v602, 0.0
    %v619 = vsel %vm560, %v603, 0.0
    %v620 = vadd.f32 %v618, %v619
    %v621 = vsel %vm560, %v604, 0.0
    %v622 = vadd.f32 %v620, %v621
    %v623 = vsel %vm560, %v605, 0.0
    %v624 = vadd.f32 %v622, %v623
    %v625 = vsel %vm560, %v606, 0.0
    %v626 = vadd.f32 %v624, %v625
    %v627 = vsel %vm560, %v607, 0.0
    %v628 = vadd.f32 %v626, %v627
    %v629 = vsel %vm560, %v608, 0.0
    %v630 = vadd.f32 %v628, %v629
    %v631 = vsel %vm560, %v609, 0.0
    %v632 = vadd.f32 %v630, %v631
    %v633 = vsel %vm560, %v610, 0.0
    %v634 = vadd.f32 %v632, %v633
    %v635 = vsel %vm560, %v611, 0.0
    %v636 = vadd.f32 %v634, %v635
    %v637 = vsel %vm560, %v612, 0.0
    %v638 = vadd.f32 %v636, %v637
    %v639 = vsel %vm560, %v613, 0.0
    %v640 = vadd.f32 %v638, %v639
    %v641 = vsel %vm560, %v614, 0.0
    %v642 = vadd.f32 %v640, %v641
    %v643 = vsel %vm560, %v615, 0.0
    %v644 = vadd.f32 %v642, %v643
    %v645 = vsel %vm560, %v616, 0.0
    %v646 = vadd.f32 %v644, %v645
    %v647 = vsel %vm560, %v617, 0.0
    %v648 = vadd.f32 %v646, %v647
    %v649 = vrot.slane %v648, 4
    %v650 = vadd.f32 %v648, %v649
    %v651 = vrot.slane %v650, 2
    %v652 = vadd.f32 %v650, %v651
    %v653 = vrot.slane %v652, 1
    %v654 = vadd.f32 %v652, %v653
    %v655 = vadd.f32 %v601, %v654
    %656 = vst.msk [vmem:[#allocation3] sm:$0x1] %vm599, %v655
    // Predicated region
    $region30: #{netg_forward.7} parent=1 // pred_check
      %p657 = pneg %p46
    $region31: #{netg_forward.7} parent=1 // pred_check_branch
      %659 = sbr.rel (%p657) target = $region33
    $region32: #{netg_forward.7} parent=1 // pred_region
      %v660 = vld [vmem:[#allocation2] sm:$0x1]
      %v661 = vld [vmem:[#allocation3] sm:$0x1]
      %v662 = vld [vmem:[#allocation4] sm:$0x1]
      %v663 = vld [vmem:[#allocation6] sm:$0x1]
      %665 = vrot.lane.b32.xlu0 %v660, 112
      %v666 = vpop.permute.xlu0 %665
      %v668 = vadd.f32 %v660, %v666
      %670 = vrot.lane.b32.xlu0 %v661, 112
      %v671 = vpop.permute.xlu0 %670
      %v673 = vadd.f32 %v661, %v671
      %674 = vrot.lane.b32.xlu0 %v660, 96
      %v675 = vpop.permute.xlu0 %674
      %v677 = vadd.f32 %v668, %v675
      %678 = vrot.lane.b32.xlu0 %v661, 96
      %v679 = vpop.permute.xlu0 %678
      %v681 = vadd.f32 %v673, %v679
      %682 = vrot.lane.b32.xlu0 %v660, 80
      %v683 = vpop.permute.xlu0 %682
      %v685 = vadd.f32 %v677, %v683
      %686 = vrot.lane.b32.xlu0 %v661, 80
      %v687 = vpop.permute.xlu0 %686
      %v689 = vadd.f32 %v681, %v687
      %v690 = vmul.f32 %v685, 0.001953125
      %v691 = vmul.f32 %v689, 0.001953125
      %v692 = vmul.f32 %v690, %v690
      %v693 = vsub.f32 %v691, %v692
      %v694 = vmax.f32 %v693, 0.0
      %v695 = vadd.f32 %v694, 1e-05
      %v696 = vrsqrt.pop %v695
      %v697 = vmul.f32 %v696, %v695
      %v698 = vmul.f32 %v697, %v696
      %v699 = vmul.f32 0.5, %v698
      %v700 = vsub.f32 1.5, %v699
      %v701 = vmul.f32 %v696, %v700
      %vm702 = vweird.f32 %v695
      %vm703 = vweird.f32 %v696
      %vm704 = vmor %vm702, %vm703
      %v705 = vsel %vm704, %v696, %v701
      %v706 = vmul.f32 %v662, %v705
      %v707 = vmul.f32 %v690, %v706
      %v708 = vsub.f32 %v663, %v707
      %v710 = vperm.slane %v706, 0
      %711 = vrot.lane.b32.xlu0 %v710, 16
      %v712 = vpop.permute.xlu0 %711
      %714 = vrot.lane.b32.xlu0 %v710, 32
      %v715 = vpop.permute.xlu0 %714
      %717 = vrot.lane.b32.xlu0 %v710, 48
      %v718 = vpop.permute.xlu0 %717
      %vm720 = vcmask 130048
      %v721 = vsel %vm720, %v706, %v712
      %v722 = vsel %vm349, %v721, %v715
      %vm723 = vcmask 392192
      %v724 = vsel %vm723, %v722, %v718
      %v726 = vperm.slane %v708, 0
      %727 = vrot.lane.b32.xlu0 %v726, 16
      %v728 = vpop.permute.xlu0 %727
      %730 = vrot.lane.b32.xlu0 %v726, 32
      %v731 = vpop.permute.xlu0 %730
      %733 = vrot.lane.b32.xlu0 %v726, 48
      %v734 = vpop.permute.xlu0 %733
      %v736 = vsel %vm720, %v708, %v728
      %v737 = vsel %vm349, %v736, %v731
      %v738 = vsel %vm723, %v737, %v734
      %v739 = vld [vmem:[%s4] sm:$0xf]
      %v740 = vld [vmem:[%s4 + $0x4] sm:$0xf]
      %v741 = vld [vmem:[%s4 + $0x8] sm:$0xf]
      %v742 = vld [vmem:[%s4 + $0xc] sm:$0xf]
      %v743 = vld [vmem:[%s4 + $0x10] sm:$0xf]
      %v744 = vld [vmem:[%s4 + $0x14] sm:$0xf]
      %v745 = vld [vmem:[%s4 + $0x18] sm:$0xf]
      %v746 = vld [vmem:[%s4 + $0x1c] sm:$0xf]
      %v747 = vld [vmem:[%s4 + $0x20] sm:$0xf]
      %v748 = vld [vmem:[%s4 + $0x24] sm:$0xf]
      %v749 = vld [vmem:[%s4 + $0x28] sm:$0xf]
      %v750 = vld [vmem:[%s4 + $0x2c] sm:$0xf]
      %v751 = vld [vmem:[%s4 + $0x30] sm:$0xf]
      %v752 = vld [vmem:[%s4 + $0x34] sm:$0xf]
      %v753 = vld [vmem:[%s4 + $0x38] sm:$0xf]
      %v754 = vld [vmem:[%s4 + $0x3c] sm:$0xf]
      %v755 = vunpack.c.l.bf16 %v739
      %v756 = vunpack.c.l.bf16 %v740
      %v757 = vunpack.c.l.bf16 %v741
      %v758 = vunpack.c.l.bf16 %v742
      %v759 = vunpack.c.l.bf16 %v743
      %v760 = vunpack.c.l.bf16 %v744
      %v761 = vunpack.c.l.bf16 %v745
      %v762 = vunpack.c.l.bf16 %v746
      %v763 = vunpack.c.l.bf16 %v747
      %v764 = vunpack.c.l.bf16 %v748
      %v765 = vunpack.c.l.bf16 %v749
      %v766 = vunpack.c.l.bf16 %v750
      %v767 = vunpack.c.l.bf16 %v751
      %v768 = vunpack.c.l.bf16 %v752
      %v769 = vunpack.c.l.bf16 %v753
      %v770 = vunpack.c.l.bf16 %v754
      %v771 = vperm.slane %v724, 0
      %v772 = vmul.f32 %v755, %v771
      %v773 = vmul.f32 %v756, %v771
      %v774 = vmul.f32 %v757, %v771
      %v775 = vmul.f32 %v758, %v771
      %v776 = vmul.f32 %v759, %v771
      %v777 = vmul.f32 %v760, %v771
      %v778 = vmul.f32 %v761, %v771
      %v779 = vmul.f32 %v762, %v771
      %v780 = vmul.f32 %v763, %v771
      %v781 = vmul.f32 %v764, %v771
      %v782 = vmul.f32 %v765, %v771
      %v783 = vmul.f32 %v766, %v771
      %v784 = vmul.f32 %v767, %v771
      %v785 = vmul.f32 %v768, %v771
      %v786 = vmul.f32 %v769, %v771
      %v787 = vmul.f32 %v770, %v771
      %v788 = vperm.slane %v738, 0
      %v789 = vadd.f32 %v772, %v788
      %v790 = vadd.f32 %v773, %v788
      %v791 = vadd.f32 %v774, %v788
      %v792 = vadd.f32 %v775, %v788
      %v793 = vadd.f32 %v776, %v788
      %v794 = vadd.f32 %v777, %v788
      %v795 = vadd.f32 %v778, %v788
      %v796 = vadd.f32 %v779, %v788
      %v797 = vadd.f32 %v780, %v788
      %v798 = vadd.f32 %v781, %v788
      %v799 = vadd.f32 %v782, %v788
      %v800 = vadd.f32 %v783, %v788
      %v801 = vadd.f32 %v784, %v788
      %v802 = vadd.f32 %v785, %v788
      %v803 = vadd.f32 %v786, %v788
      %v804 = vadd.f32 %v787, %v788
      %v805 = vmax.f32 %v789, 0.0
      %v806 = vmax.f32 %v790, 0.0
      %v807 = vmax.f32 %v791, 0.0
      %v808 = vmax.f32 %v792, 0.0
      %v809 = vmax.f32 %v793, 0.0
      %v810 = vmax.f32 %v794, 0.0
      %v811 = vmax.f32 %v795, 0.0
      %v812 = vmax.f32 %v796, 0.0
      %v813 = vmax.f32 %v797, 0.0
      %v814 = vmax.f32 %v798, 0.0
      %v815 = vmax.f32 %v799, 0.0
      %v816 = vmax.f32 %v800, 0.0
      %v817 = vmax.f32 %v801, 0.0
      %v818 = vmax.f32 %v802, 0.0
      %v819 = vmax.f32 %v803, 0.0
      %v820 = vmax.f32 %v804, 0.0
      %v821 = vpack.c.bf16 %v805, %v805
      %v822 = vpack.c.bf16 %v806, %v806
      %v823 = vpack.c.bf16 %v807, %v807
      %v824 = vpack.c.bf16 %v808, %v808
      %v825 = vpack.c.bf16 %v809, %v809
      %v826 = vpack.c.bf16 %v810, %v810
      %v827 = vpack.c.bf16 %v811, %v811
      %v828 = vpack.c.bf16 %v812, %v812
      %v829 = vpack.c.bf16 %v813, %v813
      %v830 = vpack.c.bf16 %v814, %v814
      %v831 = vpack.c.bf16 %v815, %v815
      %v832 = vpack.c.bf16 %v816, %v816
      %v833 = vpack.c.bf16 %v817, %v817
      %v834 = vpack.c.bf16 %v818, %v818
      %v835 = vpack.c.bf16 %v819, %v819
      %v836 = vpack.c.bf16 %v820, %v820
      %837 = vst.msk [vmem:[%s4] sm:$0xf] %vm542, %v821
      %838 = vst.msk [vmem:[%s4 + $0x4] sm:$0xf] %vm542, %v822
      %839 = vst.msk [vmem:[%s4 + $0x8] sm:$0xf] %vm542, %v823
      %840 = vst.msk [vmem:[%s4 + $0xc] sm:$0xf] %vm542, %v824
      %841 = vst.msk [vmem:[%s4 + $0x10] sm:$0xf] %vm542, %v825
      %842 = vst.msk [vmem:[%s4 + $0x14] sm:$0xf] %vm542, %v826
      %843 = vst.msk [vmem:[%s4 + $0x18] sm:$0xf] %vm542, %v827
      %844 = vst.msk [vmem:[%s4 + $0x1c] sm:$0xf] %vm542, %v828
      %845 = vst.msk [vmem:[%s4 + $0x20] sm:$0xf] %vm542, %v829
      %846 = vst.msk [vmem:[%s4 + $0x24] sm:$0xf] %vm542, %v830
      %847 = vst.msk [vmem:[%s4 + $0x28] sm:$0xf] %vm542, %v831
      %848 = vst.msk [vmem:[%s4 + $0x2c] sm:$0xf] %vm542, %v832
      %849 = vst.msk [vmem:[%s4 + $0x30] sm:$0xf] %vm542, %v833
      %850 = vst.msk [vmem:[%s4 + $0x34] sm:$0xf] %vm542, %v834
      %851 = vst.msk [vmem:[%s4 + $0x38] sm:$0xf] %vm542, %v835
      %852 = vst.msk [vmem:[%s4 + $0x3c] sm:$0xf] %vm542, %v836
    $region33: #{netg_forward.7} parent=1 // pred_fallthru
      _
    // Predicated region
    $region34: #{netg_forward.7} parent=1 // pred_check
      _
    $region35: #{netg_forward.7} parent=1 // pred_check_branch
      %854 = sbr.rel (0) target = $region37
    $region36: #{netg_forward.7} parent=1 // pred_region
      _
    $region37: #{netg_forward.7} parent=1 // pred_fallthru
      _
    // Predicated region
    $region38: #{netg_forward.7} parent=1 // pred_check
      _
    $region39: #{netg_forward.7} parent=1 // pred_check_branch
      %856 = sbr.rel (0) target = $region41
    $region40: #{netg_forward.7} parent=1 // pred_region
      _
    $region41: #{netg_forward.7} parent=1 // pred_fallthru
      _
    %857 = vsyncpa [#allocation5], 1
    %858 = vsyncpa [#allocation7], 1

// kernel: netg_forward.8
$region0: #{netg_forward.8}
  #allocation0 [shape = 'u32[]', space=smem, size = 0x4, offset = 0x4, fixed_abs, tag = 'smem constant byte address 0x4 - core index']
  #allocation1 [shape = 'u32[72,128]{1,0:T(1,128)}', space=vmem, size = 0x9000, scoped, tag = 'internal scratch']
  #allocation2 [shape = 'f32[1,32]{1,0:T(1,128)}', space=vmem, size = 0x200, scoped, tag = 'scratch operand']
  #allocation3 [shape = 'f32[1,32]{1,0:T(1,128)}', space=vmem, size = 0x200, scoped, tag = 'scratch operand']
  %s0 = inlined_call_operand.vmem [shape: bf16[512,144], index: 0, kind: input, shape index: {}]
  %s1 = inlined_call_operand.vmem [shape: bf16[144,32], index: 1, kind: input, shape index: {}]
  %s2 = inlined_call_operand.hbm [shape: f32[1,8], index: 2, kind: input, shape index: {}]
  %s3 = inlined_call_operand.hbm [shape: f32[1,8], index: 3, kind: input, shape index: {}]
  %s4 = inlined_call_operand.vmem [shape: bf16[512,32], index: 4, kind: output, shape index: {}]
  %s5 = sld [smem:[#allocation0]]
  $region42: #{netg_forward.8} parent=0
    _
  %s7 = ssub.s32 1, %s5
  %s8 = scalar_select 0, %s7, %s5
  $region1: #{netg_forward.8} parent=0
    #allocation4 [shape = 'u8[512]{0}', space=vmem, size = 0x400, scoped, tag = 'input window, operand 2, single buffered']
    #allocation5 [shape = 's32[1]{0}', space=sflag, size = 0x4, scoped, tag = 'scoped memory for netg_forward.8']
    #allocation6 [shape = 'u8[512]{0}', space=vmem, size = 0x400, scoped, tag = 'input window, operand 3, single buffered']
    #allocation7 [shape = 's32[1]{0}', space=sflag, size = 0x4, scoped, tag = 'scoped memory for netg_forward.8']
    %9 = vsyncpa [#allocation5], 0
    %10 = vsyncpa [#allocation7], 0
    // Predicated region
    $region2: #{netg_forward.8} parent=1 // pred_check
      _
    $region3: #{netg_forward.8} parent=1 // pred_check_branch
      %12 = sbr.rel (0) target = $region5
    $region4: #{netg_forward.8} parent=1 // pred_region
      _
    $region5: #{netg_forward.8} parent=1 // pred_fallthru
      _
    // Predicated region
    $region6: #{netg_forward.8} parent=1 // pred_check
      _
    $region7: #{netg_forward.8} parent=1 // pred_check_branch
      %14 = sbr.rel (0) target = $region9
    $region8: #{netg_forward.8} parent=1 // pred_region
      _
    $region9: #{netg_forward.8} parent=1 // pred_fallthru
      _
    // Predicated region
    $region10: #{netg_forward.8} parent=1 // pred_check
      _
    $region11: #{netg_forward.8} parent=1 // pred_check_branch
      %16 = sbr.rel (0) target = $region13
    $region12: #{netg_forward.8} parent=1 // pred_region
      %18 = vsyncadd [#allocation5], 0
      %s20 = sshll.u32 %s2, 4
      %s21 = int_to_ptr.hbm [resolvable:$true] %s20
      %s22 = sshll.u32 [#allocation4], 4
      %s23 = int_to_ptr.vmem [resolvable:$true] %s22
      %25 = dma.hbm_to_vmem [thread:$0]  %s21, 16, %s23, [#allocation5]
    $region13: #{netg_forward.8} parent=1 // pred_fallthru
      _
    // Predicated region
    $region14: #{netg_forward.8} parent=1 // pred_check
      _
    $region15: #{netg_forward.8} parent=1 // pred_check_branch
      %27 = sbr.rel (0) target = $region17
    $region16: #{netg_forward.8} parent=1 // pred_region
      %29 = vsyncadd [#allocation7], 0
      %s31 = sshll.u32 %s3, 4
      %s32 = int_to_ptr.hbm [resolvable:$true] %s31
      %s33 = sshll.u32 [#allocation6], 4
      %s34 = int_to_ptr.vmem [resolvable:$true] %s33
      %36 = dma.hbm_to_vmem [thread:$0]  %s32, 16, %s34, [#allocation7]
    $region17: #{netg_forward.8} parent=1 // pred_fallthru
      _
    // Predicated region
    $region18: #{netg_forward.8} parent=1 // pred_check
      _
    $region19: #{netg_forward.8} parent=1 // pred_check_branch
      %38 = sbr.rel (0) target = $region21
    $region20: #{netg_forward.8} parent=1 // pred_region
      %40 = dma.done [#allocation5], 16
    $region21: #{netg_forward.8} parent=1 // pred_fallthru
      _
    // Predicated region
    $region22: #{netg_forward.8} parent=1 // pred_check
      _
    $region23: #{netg_forward.8} parent=1 // pred_check_branch
      %42 = sbr.rel (0) target = $region25
    $region24: #{netg_forward.8} parent=1 // pred_region
      %44 = dma.done [#allocation7], 16
    $region25: #{netg_forward.8} parent=1 // pred_fallthru
      _
    %p46 = scmp.eq.s32.totalorder 0, 0
    // Predicated region
    $region26: #{netg_forward.8} parent=1 // pred_check
      %p47 = pneg %p46
    $region27: #{netg_forward.8} parent=1 // pred_check_branch
      %49 = sbr.rel (%p47) target = $region29
    $region28: #{netg_forward.8} parent=1 // pred_region
      %vm50 = vcmask 253952
      %51 = vst.msk [vmem:[#allocation2] sm:$0x1] %vm50, 0.0
      %52 = vst.msk [vmem:[#allocation3] sm:$0x1] %vm50, 0.0
    $region29: #{netg_forward.8} parent=1 // pred_fallthru
      _
    %v53 = vld [vmem:[%s0] sm:$0xff]
    %v54 = vld [vmem:[%s0 + $0x8] sm:$0xff]
    %v55 = vld [vmem:[%s0 + $0x10] sm:$0xff]
    %v56 = vld [vmem:[%s0 + $0x18] sm:$0xff]
    %v57 = vld [vmem:[%s0 + $0x20] sm:$0xff]
    %v58 = vld [vmem:[%s0 + $0x28] sm:$0xff]
    %v59 = vld [vmem:[%s0 + $0x30] sm:$0xff]
    %v60 = vld [vmem:[%s0 + $0x38] sm:$0xff]
    %v61 = vld [vmem:[%s0 + $0x40] sm:$0xff]
    %v62 = vld [vmem:[%s0 + $0x48] sm:$0xff]
    %v63 = vld [vmem:[%s0 + $0x50] sm:$0xff]
    %v64 = vld [vmem:[%s0 + $0x58] sm:$0xff]
    %v65 = vld [vmem:[%s0 + $0x60] sm:$0xff]
    %v66 = vld [vmem:[%s0 + $0x68] sm:$0xff]
    %v67 = vld [vmem:[%s0 + $0x70] sm:$0xff]
    %v68 = vld [vmem:[%s0 + $0x78] sm:$0xff]
    %v69 = vld [vmem:[%s0 + $0x80] sm:$0xff]
    %v70 = vld [vmem:[%s0 + $0x88] sm:$0xff]
    %v71 = vld [vmem:[%s0 + $0x90] sm:$0xff]
    %v72 = vld [vmem:[%s0 + $0x98] sm:$0xff]
    %v73 = vld [vmem:[%s0 + $0xa0] sm:$0xff]
    %v74 = vld [vmem:[%s0 + $0xa8] sm:$0xff]
    %v75 = vld [vmem:[%s0 + $0xb0] sm:$0xff]
    %v76 = vld [vmem:[%s0 + $0xb8] sm:$0xff]
    %v77 = vld [vmem:[%s0 + $0xc0] sm:$0xff]
    %v78 = vld [vmem:[%s0 + $0xc8] sm:$0xff]
    %v79 = vld [vmem:[%s0 + $0xd0] sm:$0xff]
    %v80 = vld [vmem:[%s0 + $0xd8] sm:$0xff]
    %v81 = vld [vmem:[%s0 + $0xe0] sm:$0xff]
    %v82 = vld [vmem:[%s0 + $0xe8] sm:$0xff]
    %v83 = vld [vmem:[%s0 + $0xf0] sm:$0xff]
    %v84 = vld [vmem:[%s0 + $0xf8] sm:$0xff]
    %v85 = vld [vmem:[%s0 + $0x100] sm:$0xff]
    %v86 = vld [vmem:[%s0 + $0x108] sm:$0xff]
    %v87 = vld [vmem:[%s0 + $0x110] sm:$0xff]
    %v88 = vld [vmem:[%s0 + $0x118] sm:$0xff]
    %v89 = vld [vmem:[%s0 + $0x120] sm:$0xff]
    %v90 = vld [vmem:[%s0 + $0x128] sm:$0xff]
    %v91 = vld [vmem:[%s0 + $0x130] sm:$0xff]
    %v92 = vld [vmem:[%s0 + $0x138] sm:$0xff]
    %v93 = vld [vmem:[%s0 + $0x140] sm:$0xff]
    %v94 = vld [vmem:[%s0 + $0x148] sm:$0xff]
    %v95 = vld [vmem:[%s0 + $0x150] sm:$0xff]
    %v96 = vld [vmem:[%s0 + $0x158] sm:$0xff]
    %v97 = vld [vmem:[%s0 + $0x160] sm:$0xff]
    %v98 = vld [vmem:[%s0 + $0x168] sm:$0xff]
    %v99 = vld [vmem:[%s0 + $0x170] sm:$0xff]
    %v100 = vld [vmem:[%s0 + $0x178] sm:$0xff]
    %v101 = vld [vmem:[%s0 + $0x180] sm:$0xff]
    %v102 = vld [vmem:[%s0 + $0x188] sm:$0xff]
    %v103 = vld [vmem:[%s0 + $0x190] sm:$0xff]
    %v104 = vld [vmem:[%s0 + $0x198] sm:$0xff]
    %v105 = vld [vmem:[%s0 + $0x1a0] sm:$0xff]
    %v106 = vld [vmem:[%s0 + $0x1a8] sm:$0xff]
    %v107 = vld [vmem:[%s0 + $0x1b0] sm:$0xff]
    %v108 = vld [vmem:[%s0 + $0x1b8] sm:$0xff]
    %v109 = vld [vmem:[%s0 + $0x1c0] sm:$0xff]
    %v110 = vld [vmem:[%s0 + $0x1c8] sm:$0xff]
    %v111 = vld [vmem:[%s0 + $0x1d0] sm:$0xff]
    %v112 = vld [vmem:[%s0 + $0x1d8] sm:$0xff]
    %v113 = vld [vmem:[%s0 + $0x1e0] sm:$0xff]
    %v114 = vld [vmem:[%s0 + $0x1e8] sm:$0xff]
    %v115 = vld [vmem:[%s0 + $0x1f0] sm:$0xff]
    %v116 = vld [vmem:[%s0 + $0x1f8] sm:$0xff]
    %v117 = vld [vmem:[%s1] sm:$0xf]
    %v118 = vld [vmem:[%s1 + $0x4] sm:$0xf]
    %v119 = vld [vmem:[%s1 + $0x8] sm:$0xf]
    %v120 = vld [vmem:[%s1 + $0xc] sm:$0xf]
    %v121 = vld [vmem:[%s1 + $0x10] sm:$0xf]
    %v122 = vld [vmem:[%s1 + $0x14] sm:$0xf]
    %v123 = vld [vmem:[%s1 + $0x18] sm:$0xf]
    %v124 = vld [vmem:[%s1 + $0x1c] sm:$0xf]
    %v125 = vld [vmem:[%s1 + $0x20] sm:$0xf]
    %v126 = vld [vmem:[%s1 + $0x24] sm:$0xf]
    %v127 = vld [vmem:[%s1 + $0x28] sm:$0xf]
    %v128 = vld [vmem:[%s1 + $0x2c] sm:$0xf]
    %v129 = vld [vmem:[%s1 + $0x30] sm:$0xf]
    %v130 = vld [vmem:[%s1 + $0x34] sm:$0xf]
    %v131 = vld [vmem:[%s1 + $0x38] sm:$0xf]
    %v132 = vld [vmem:[%s1 + $0x3c] sm:$0xf]
    %v133 = vld [vmem:[%s1 + $0x40] sm:$0xf]
    %v134 = vld [vmem:[%s1 + $0x44] sm:$0xf]
    %v199 = vunpack.c.l.b16 %v53
    %v200 = vunpack.c.h.b16 %v53
    %v201 = vunpack.c.l.b16 %v54
    %v202 = vunpack.c.h.b16 %v54
    %v203 = vunpack.c.l.b16 %v55
    %v204 = vunpack.c.h.b16 %v55
    %v205 = vunpack.c.l.b16 %v56
    %v206 = vunpack.c.h.b16 %v56
    %v207 = vunpack.c.l.b16 %v57
    %v208 = vunpack.c.h.b16 %v57
    %v209 = vunpack.c.l.b16 %v58
    %v210 = vunpack.c.h.b16 %v58
    %v211 = vunpack.c.l.b16 %v59
    %v212 = vunpack.c.h.b16 %v59
    %v213 = vunpack.c.l.b16 %v60
    %v214 = vunpack.c.h.b16 %v60
    %v215 = vunpack.c.l.b16 %v61
    %v216 = vunpack.c.h.b16 %v61
    %v217 = vunpack.c.l.b16 %v62
    %v218 = vunpack.c.h.b16 %v62
    %v219 = vunpack.c.l.b16 %v63
    %v220 = vunpack.c.h.b16 %v63
    %v221 = vunpack.c.l.b16 %v64
    %v222 = vunpack.c.h.b16 %v64
    %v223 = vunpack.c.l.b16 %v65
    %v224 = vunpack.c.h.b16 %v65
    %v225 = vunpack.c.l.b16 %v66
    %v226 = vunpack.c.h.b16 %v66
    %v227 = vunpack.c.l.b16 %v67
    %v228 = vunpack.c.h.b16 %v67
    %v229 = vunpack.c.l.b16 %v68
    %v230 = vunpack.c.h.b16 %v68
    %v231 = vunpack.c.l.b16 %v69
    %v232 = vunpack.c.h.b16 %v69
    %v233 = vunpack.c.l.b16 %v70
    %v234 = vunpack.c.h.b16 %v70
    %v235 = vunpack.c.l.b16 %v71
    %v236 = vunpack.c.h.b16 %v71
    %v237 = vunpack.c.l.b16 %v72
    %v238 = vunpack.c.h.b16 %v72
    %v239 = vunpack.c.l.b16 %v73
    %v240 = vunpack.c.h.b16 %v73
    %v241 = vunpack.c.l.b16 %v74
    %v242 = vunpack.c.h.b16 %v74
    %v243 = vunpack.c.l.b16 %v75
    %v244 = vunpack.c.h.b16 %v75
    %v245 = vunpack.c.l.b16 %v76
    %v246 = vunpack.c.h.b16 %v76
    %v247 = vunpack.c.l.b16 %v77
    %v248 = vunpack.c.h.b16 %v77
    %v249 = vunpack.c.l.b16 %v78
    %v250 = vunpack.c.h.b16 %v78
    %v251 = vunpack.c.l.b16 %v79
    %v252 = vunpack.c.h.b16 %v79
    %v253 = vunpack.c.l.b16 %v80
    %v254 = vunpack.c.h.b16 %v80
    %v255 = vunpack.c.l.b16 %v81
    %v256 = vunpack.c.h.b16 %v81
    %v257 = vunpack.c.l.b16 %v82
    %v258 = vunpack.c.h.b16 %v82
    %v259 = vunpack.c.l.b16 %v83
    %v260 = vunpack.c.h.b16 %v83
    %v261 = vunpack.c.l.b16 %v84
    %v262 = vunpack.c.h.b16 %v84
    %v263 = vunpack.c.l.b16 %v85
    %v264 = vunpack.c.h.b16 %v85
    %v265 = vunpack.c.l.b16 %v86
    %v266 = vunpack.c.h.b16 %v86
    %v267 = vunpack.c.l.b16 %v87
    %v268 = vunpack.c.h.b16 %v87
    %v269 = vunpack.c.l.b16 %v88
    %v270 = vunpack.c.h.b16 %v88
    %v271 = vunpack.c.l.b16 %v89
    %v272 = vunpack.c.h.b16 %v89
    %v273 = vunpack.c.l.b16 %v90
    %v274 = vunpack.c.h.b16 %v90
    %v275 = vunpack.c.l.b16 %v91
    %v276 = vunpack.c.h.b16 %v91
    %v277 = vunpack.c.l.b16 %v92
    %v278 = vunpack.c.h.b16 %v92
    %v279 = vunpack.c.l.b16 %v93
    %v280 = vunpack.c.h.b16 %v93
    %v281 = vunpack.c.l.b16 %v94
    %v282 = vunpack.c.h.b16 %v94
    %v283 = vunpack.c.l.b16 %v95
    %v284 = vunpack.c.h.b16 %v95
    %v285 = vunpack.c.l.b16 %v96
    %v286 = vunpack.c.h.b16 %v96
    %v287 = vunpack.c.l.b16 %v97
    %v288 = vunpack.c.h.b16 %v97
    %v289 = vunpack.c.l.b16 %v98
    %v290 = vunpack.c.h.b16 %v98
    %v291 = vunpack.c.l.b16 %v99
    %v292 = vunpack.c.h.b16 %v99
    %v293 = vunpack.c.l.b16 %v100
    %v294 = vunpack.c.h.b16 %v100
    %v295 = vunpack.c.l.b16 %v101
    %v296 = vunpack.c.h.b16 %v101
    %v297 = vunpack.c.l.b16 %v102
    %v298 = vunpack.c.h.b16 %v102
    %v299 = vunpack.c.l.b16 %v103
    %v300 = vunpack.c.h.b16 %v103
    %v301 = vunpack.c.l.b16 %v104
    %v302 = vunpack.c.h.b16 %v104
    %v303 = vunpack.c.l.b16 %v105
    %v304 = vunpack.c.h.b16 %v105
    %v305 = vunpack.c.l.b16 %v106
    %v306 = vunpack.c.h.b16 %v106
    %v307 = vunpack.c.l.b16 %v107
    %v308 = vunpack.c.h.b16 %v107
    %v309 = vunpack.c.l.b16 %v108
    %v310 = vunpack.c.h.b16 %v108
    %v311 = vunpack.c.l.b16 %v109
    %v312 = vunpack.c.h.b16 %v109
    %v313 = vunpack.c.l.b16 %v110
    %v314 = vunpack.c.h.b16 %v110
    %v315 = vunpack.c.l.b16 %v111
    %v316 = vunpack.c.h.b16 %v111
    %v317 = vunpack.c.l.b16 %v112
    %v318 = vunpack.c.h.b16 %v112
    %v319 = vunpack.c.l.b16 %v113
    %v320 = vunpack.c.h.b16 %v113
    %v321 = vunpack.c.l.b16 %v114
    %v322 = vunpack.c.h.b16 %v114
    %v323 = vunpack.c.l.b16 %v115
    %v324 = vunpack.c.h.b16 %v115
    %v325 = vunpack.c.l.b16 %v116
    %v326 = vunpack.c.h.b16 %v116
    %v327 = vpack.c.b16 %v201, %v199
    %v328 = vpack.c.b16 %v202, %v200
    %v329 = vpack.c.b16 %v205, %v203
    %v330 = vpack.c.b16 %v206, %v204
    %v331 = vpack.c.b16 %v209, %v207
    %v332 = vpack.c.b16 %v210, %v208
    %v333 = vpack.c.b16 %v213, %v211
    %v334 = vpack.c.b16 %v214, %v212
    %v335 = vpack.c.b16 %v217, %v215
    %v336 = vpack.c.b16 %v218, %v216
    %v337 = vpack.c.b16 %v221, %v219
    %v338 = vpack.c.b16 %v222, %v220
    %v339 = vpack.c.b16 %v225, %v223
    %v340 = vpack.c.b16 %v226, %v224
    %v341 = vpack.c.b16 %v229, %v227
    %v342 = vpack.c.b16 %v230, %v228
    %v343 = vpack.c.b16 %v233, %v231
    %v344 = vpack.c.b16 %v234, %v232
    %v345 = vpack.c.b16 %v237, %v235
    %v346 = vpack.c.b16 %v238, %v236
    %v347 = vpack.c.b16 %v241, %v239
    %v348 = vpack.c.b16 %v242, %v240
    %v349 = vpack.c.b16 %v245, %v243
    %v350 = vpack.c.b16 %v246, %v244
    %v351 = vpack.c.b16 %v249, %v247
    %v352 = vpack.c.b16 %v250, %v248
    %v353 = vpack.c.b16 %v253, %v251
    %v354 = vpack.c.b16 %v254, %v252
    %v355 = vpack.c.b16 %v257, %v255
    %v356 = vpack.c.b16 %v258, %v256
    %v357 = vpack.c.b16 %v261, %v259
    %v358 = vpack.c.b16 %v262, %v260
    %v359 = vpack.c.b16 %v265, %v263
    %v360 = vpack.c.b16 %v266, %v264
    %v361 = vpack.c.b16 %v269, %v267
    %v362 = vpack.c.b16 %v270, %v268
    %v363 = vpack.c.b16 %v273, %v271
    %v364 = vpack.c.b16 %v274, %v272
    %v365 = vpack.c.b16 %v277, %v275
    %v366 = vpack.c.b16 %v278, %v276
    %v367 = vpack.c.b16 %v281, %v279
    %v368 = vpack.c.b16 %v282, %v280
    %v369 = vpack.c.b16 %v285, %v283
    %v370 = vpack.c.b16 %v286, %v284
    %v371 = vpack.c.b16 %v289, %v287
    %v372 = vpack.c.b16 %v290, %v288
    %v373 = vpack.c.b16 %v293, %v291
    %v374 = vpack.c.b16 %v294, %v292
    %v375 = vpack.c.b16 %v297, %v295
    %v376 = vpack.c.b16 %v298, %v296
    %v377 = vpack.c.b16 %v301, %v299
    %v378 = vpack.c.b16 %v302, %v300
    %v379 = vpack.c.b16 %v305, %v303
    %v380 = vpack.c.b16 %v306, %v304
    %v381 = vpack.c.b16 %v309, %v307
    %v382 = vpack.c.b16 %v310, %v308
    %v383 = vpack.c.b16 %v313, %v311
    %v384 = vpack.c.b16 %v314, %v312
    %v385 = vpack.c.b16 %v317, %v315
    %v386 = vpack.c.b16 %v318, %v316
    %v387 = vpack.c.b16 %v321, %v319
    %v388 = vpack.c.b16 %v322, %v320
    %v389 = vpack.c.b16 %v325, %v323
    %v390 = vpack.c.b16 %v326, %v324
    %v441 = vunpack.c.l.b16 %v117
    %v442 = vunpack.c.l.b16 %v118
    %v443 = vunpack.c.l.b16 %v119
    %v444 = vunpack.c.l.b16 %v120
    %v445 = vunpack.c.l.b16 %v121
    %v446 = vunpack.c.l.b16 %v122
    %v447 = vunpack.c.l.b16 %v123
    %v448 = vunpack.c.l.b16 %v124
    %v449 = vunpack.c.l.b16 %v125
    %v450 = vunpack.c.l.b16 %v126
    %v451 = vunpack.c.l.b16 %v127
    %v452 = vunpack.c.l.b16 %v128
    %v453 = vunpack.c.l.b16 %v129
    %v454 = vunpack.c.l.b16 %v130
    %v455 = vunpack.c.l.b16 %v131
    %v456 = vunpack.c.l.b16 %v132
    %v457 = vunpack.c.l.b16 %v133
    %v458 = vunpack.c.l.b16 %v134
    %v459 = vpack.c.b16 %v442, %v441
    %v460 = vpack.c.b16 %v444, %v443
    %v461 = vpack.c.b16 %v446, %v445
    %v462 = vpack.c.b16 %v448, %v447
    %v463 = vpack.c.b16 %v450, %v449
    %v464 = vpack.c.b16 %v452, %v451
    %v465 = vpack.c.b16 %v454, %v453
    %v466 = vpack.c.b16 %v456, %v455
    %v467 = vpack.c.b16 %v458, %v457
    %vm477 = vcmask 130048
    %v479 = vsel %vm477, %v328, 0
    %v482 = vsel %vm477, %v330, 0
    %v485 = vsel %vm477, %v332, 0
    %v488 = vsel %vm477, %v334, 0
    %v491 = vsel %vm477, %v336, 0
    %v494 = vsel %vm477, %v338, 0
    %v497 = vsel %vm477, %v340, 0
    %v500 = vsel %vm477, %v342, 0
    %v503 = vsel %vm477, %v344, 0
    %v506 = vsel %vm477, %v346, 0
    %v509 = vsel %vm477, %v348, 0
    %v512 = vsel %vm477, %v350, 0
    %v515 = vsel %vm477, %v352, 0
    %v518 = vsel %vm477, %v354, 0
    %v521 = vsel %vm477, %v356, 0
    %v524 = vsel %vm477, %v358, 0
    %v527 = vsel %vm477, %v360, 0
    %v530 = vsel %vm477, %v362, 0
    %v533 = vsel %vm477, %v364, 0
    %v536 = vsel %vm477, %v366, 0
    %v539 = vsel %vm477, %v368, 0
    %v542 = vsel %vm477, %v370, 0
    %v545 = vsel %vm477, %v372, 0
    %v548 = vsel %vm477, %v374, 0
    %v551 = vsel %vm477, %v376, 0
    %v554 = vsel %vm477, %v378, 0
    %v557 = vsel %vm477, %v380, 0
    %v560 = vsel %vm477, %v382, 0
    %v563 = vsel %vm477, %v384, 0
    %v566 = vsel %vm477, %v386, 0
    %v569 = vsel %vm477, %v388, 0
    %v572 = vsel %vm477, %v390, 0
    %574 = vmatpush.bf16.msra.mxu0 %v466
    %575 = vmatpush.bf16.msra.mxu0 %v465
    %576 = vmatpush.bf16.msra.mxu0 %v464
    %577 = vmatpush.bf16.msra.mxu0 %v463
    %578 = vmatpush.bf16.msra.mxu0 %v462
    %579 = vmatpush.bf16.msra.mxu0 %v461
    %580 = vmatpush.bf16.msra.mxu0 %v460
    %581 = vmatpush.bf16.msra.mxu0 %v459
    %582 = vmatmul.bf16.gmra.mxu0 %v327
    %v583 = vpop.f32.mrf.mxu0
    %v584 = vadd.f32 0.0, %v583
    %v585 = vpop.f32.mrf.mxu0
    %v586 = vadd.f32 0.0, %v585
    %587 = vmatmul.bf16.gmra.mxu0 %v329
    %v588 = vpop.f32.mrf.mxu0
    %v589 = vadd.f32 0.0, %v588
    %v590 = vpop.f32.mrf.mxu0
    %v591 = vadd.f32 0.0, %v590
    %592 = vmatmul.bf16.gmra.mxu0 %v331
    %v593 = vpop.f32.mrf.mxu0
    %v594 = vadd.f32 0.0, %v593
    %v595 = vpop.f32.mrf.mxu0
    %v596 = vadd.f32 0.0, %v595
    %597 = vmatmul.bf16.gmra.mxu0 %v333
    %v598 = vpop.f32.mrf.mxu0
    %v599 = vadd.f32 0.0, %v598
    %v600 = vpop.f32.mrf.mxu0
    %v601 = vadd.f32 0.0, %v600
    %602 = vmatmul.bf16.gmra.mxu0 %v335
    %v603 = vpop.f32.mrf.mxu0
    %v604 = vadd.f32 0.0, %v603
    %v605 = vpop.f32.mrf.mxu0
    %v606 = vadd.f32 0.0, %v605
    %607 = vmatmul.bf16.gmra.mxu0 %v337
    %v608 = vpop.f32.mrf.mxu0
    %v609 = vadd.f32 0.0, %v608
    %v610 = vpop.f32.mrf.mxu0
    %v611 = vadd.f32 0.0, %v610
    %612 = vmatmul.bf16.gmra.mxu0 %v339
    %v613 = vpop.f32.mrf.mxu0
    %v614 = vadd.f32 0.0, %v613
    %v615 = vpop.f32.mrf.mxu0
    %v616 = vadd.f32 0.0, %v615
    %617 = vmatmul.bf16.gmra.mxu0 %v341
    %v618 = vpop.f32.mrf.mxu0
    %v619 = vadd.f32 0.0, %v618
    %v620 = vpop.f32.mrf.mxu0
    %v621 = vadd.f32 0.0, %v620
    %622 = vmatmul.bf16.gmra.mxu0 %v343
    %v623 = vpop.f32.mrf.mxu0
    %v624 = vadd.f32 0.0, %v623
    %v625 = vpop.f32.mrf.mxu0
    %v626 = vadd.f32 0.0, %v625
    %627 = vmatmul.bf16.gmra.mxu0 %v345
    %v628 = vpop.f32.mrf.mxu0
    %v629 = vadd.f32 0.0, %v628
    %v630 = vpop.f32.mrf.mxu0
    %v631 = vadd.f32 0.0, %v630
    %632 = vmatmul.bf16.gmra.mxu0 %v347
    %v633 = vpop.f32.mrf.mxu0
    %v634 = vadd.f32 0.0, %v633
    %v635 = vpop.f32.mrf.mxu0
    %v636 = vadd.f32 0.0, %v635
    %637 = vmatmul.bf16.gmra.mxu0 %v349
    %v638 = vpop.f32.mrf.mxu0
    %v639 = vadd.f32 0.0, %v638
    %v640 = vpop.f32.mrf.mxu0
    %v641 = vadd.f32 0.0, %v640
    %642 = vmatmul.bf16.gmra.mxu0 %v351
    %v643 = vpop.f32.mrf.mxu0
    %v644 = vadd.f32 0.0, %v643
    %v645 = vpop.f32.mrf.mxu0
    %v646 = vadd.f32 0.0, %v645
    %647 = vmatmul.bf16.gmra.mxu0 %v353
    %v648 = vpop.f32.mrf.mxu0
    %v649 = vadd.f32 0.0, %v648
    %v650 = vpop.f32.mrf.mxu0
    %v651 = vadd.f32 0.0, %v650
    %652 = vmatmul.bf16.gmra.mxu0 %v355
    %v653 = vpop.f32.mrf.mxu0
    %v654 = vadd.f32 0.0, %v653
    %v655 = vpop.f32.mrf.mxu0
    %v656 = vadd.f32 0.0, %v655
    %657 = vmatmul.bf16.gmra.mxu0 %v357
    %v658 = vpop.f32.mrf.mxu0
    %v659 = vadd.f32 0.0, %v658
    %v660 = vpop.f32.mrf.mxu0
    %v661 = vadd.f32 0.0, %v660
    %662 = vmatmul.bf16.gmra.mxu0 %v359
    %v663 = vpop.f32.mrf.mxu0
    %v664 = vadd.f32 0.0, %v663
    %v665 = vpop.f32.mrf.mxu0
    %v666 = vadd.f32 0.0, %v665
    %667 = vmatmul.bf16.gmra.mxu0 %v361
    %v668 = vpop.f32.mrf.mxu0
    %v669 = vadd.f32 0.0, %v668
    %v670 = vpop.f32.mrf.mxu0
    %v671 = vadd.f32 0.0, %v670
    %672 = vmatmul.bf16.gmra.mxu0 %v363
    %v673 = vpop.f32.mrf.mxu0
    %v674 = vadd.f32 0.0, %v673
    %v675 = vpop.f32.mrf.mxu0
    %v676 = vadd.f32 0.0, %v675
    %677 = vmatmul.bf16.gmra.mxu0 %v365
    %v678 = vpop.f32.mrf.mxu0
    %v679 = vadd.f32 0.0, %v678
    %v680 = vpop.f32.mrf.mxu0
    %v681 = vadd.f32 0.0, %v680
    %682 = vmatmul.bf16.gmra.mxu0 %v367
    %v683 = vpop.f32.mrf.mxu0
    %v684 = vadd.f32 0.0, %v683
    %v685 = vpop.f32.mrf.mxu0
    %v686 = vadd.f32 0.0, %v685
    %687 = vmatmul.bf16.gmra.mxu0 %v369
    %v688 = vpop.f32.mrf.mxu0
    %v689 = vadd.f32 0.0, %v688
    %v690 = vpop.f32.mrf.mxu0
    %v691 = vadd.f32 0.0, %v690
    %692 = vmatmul.bf16.gmra.mxu0 %v371
    %v693 = vpop.f32.mrf.mxu0
    %v694 = vadd.f32 0.0, %v693
    %v695 = vpop.f32.mrf.mxu0
    %v696 = vadd.f32 0.0, %v695
    %697 = vmatmul.bf16.gmra.mxu0 %v373
    %v698 = vpop.f32.mrf.mxu0
    %v699 = vadd.f32 0.0, %v698
    %v700 = vpop.f32.mrf.mxu0
    %v701 = vadd.f32 0.0, %v700
    %702 = vmatmul.bf16.gmra.mxu0 %v375
    %v703 = vpop.f32.mrf.mxu0
    %v704 = vadd.f32 0.0, %v703
    %v705 = vpop.f32.mrf.mxu0
    %v706 = vadd.f32 0.0, %v705
    %707 = vmatmul.bf16.gmra.mxu0 %v377
    %v708 = vpop.f32.mrf.mxu0
    %v709 = vadd.f32 0.0, %v708
    %v710 = vpop.f32.mrf.mxu0
    %v711 = vadd.f32 0.0, %v710
    %712 = vmatmul.bf16.gmra.mxu0 %v379
    %v713 = vpop.f32.mrf.mxu0
    %v714 = vadd.f32 0.0, %v713
    %v715 = vpop.f32.mrf.mxu0
    %v716 = vadd.f32 0.0, %v715
    %717 = vmatmul.bf16.gmra.mxu0 %v381
    %v718 = vpop.f32.mrf.mxu0
    %v719 = vadd.f32 0.0, %v718
    %v720 = vpop.f32.mrf.mxu0
    %v721 = vadd.f32 0.0, %v720
    %722 = vmatmul.bf16.gmra.mxu0 %v383
    %v723 = vpop.f32.mrf.mxu0
    %v724 = vadd.f32 0.0, %v723
    %v725 = vpop.f32.mrf.mxu0
    %v726 = vadd.f32 0.0, %v725
    %727 = vmatmul.bf16.gmra.mxu0 %v385
    %v728 = vpop.f32.mrf.mxu0
    %v729 = vadd.f32 0.0, %v728
    %v730 = vpop.f32.mrf.mxu0
    %v731 = vadd.f32 0.0, %v730
    %732 = vmatmul.bf16.gmra.mxu0 %v387
    %v733 = vpop.f32.mrf.mxu0
    %v734 = vadd.f32 0.0, %v733
    %v735 = vpop.f32.mrf.mxu0
    %v736 = vadd.f32 0.0, %v735
    %737 = vmatmul.bf16.gmra.mxu0 %v389
    %v738 = vpop.f32.mrf.mxu0
    %v739 = vadd.f32 0.0, %v738
    %v740 = vpop.f32.mrf.mxu0
    %v741 = vadd.f32 0.0, %v740
    %742 = vdwg.mxu0
    %743 = vmatpush.bf16.msra.mxu0 0
    %744 = vmatpush.bf16.msra.mxu0 0
    %745 = vmatpush.bf16.msra.mxu0 0
    %746 = vmatpush.bf16.msra.mxu0 0
    %747 = vmatpush.bf16.msra.mxu0 0
    %748 = vmatpush.bf16.msra.mxu0 0
    %749 = vmatpush.bf16.msra.mxu0 0
    %750 = vmatpush.bf16.msra.mxu0 %v467
    %751 = vmatmul.bf16.gmra.mxu0 %v479
    %v752 = vpop.f32.mrf.mxu0
    %v753 = vadd.f32 %v584, %v752
    %v754 = vpop.f32.mrf.mxu0
    %v755 = vadd.f32 %v586, %v754
    %756 = vmatmul.bf16.gmra.mxu0 %v482
    %v757 = vpop.f32.mrf.mxu0
    %v758 = vadd.f32 %v589, %v757
    %v759 = vpop.f32.mrf.mxu0
    %v760 = vadd.f32 %v591, %v759
    %761 = vmatmul.bf16.gmra.mxu0 %v485
    %v762 = vpop.f32.mrf.mxu0
    %v763 = vadd.f32 %v594, %v762
    %v764 = vpop.f32.mrf.mxu0
    %v765 = vadd.f32 %v596, %v764
    %766 = vmatmul.bf16.gmra.mxu0 %v488
    %v767 = vpop.f32.mrf.mxu0
    %v768 = vadd.f32 %v599, %v767
    %v769 = vpop.f32.mrf.mxu0
    %v770 = vadd.f32 %v601, %v769
    %771 = vmatmul.bf16.gmra.mxu0 %v491
    %v772 = vpop.f32.mrf.mxu0
    %v773 = vadd.f32 %v604, %v772
    %v774 = vpop.f32.mrf.mxu0
    %v775 = vadd.f32 %v606, %v774
    %776 = vmatmul.bf16.gmra.mxu0 %v494
    %v777 = vpop.f32.mrf.mxu0
    %v778 = vadd.f32 %v609, %v777
    %v779 = vpop.f32.mrf.mxu0
    %v780 = vadd.f32 %v611, %v779
    %781 = vmatmul.bf16.gmra.mxu0 %v497
    %v782 = vpop.f32.mrf.mxu0
    %v783 = vadd.f32 %v614, %v782
    %v784 = vpop.f32.mrf.mxu0
    %v785 = vadd.f32 %v616, %v784
    %786 = vmatmul.bf16.gmra.mxu0 %v500
    %v787 = vpop.f32.mrf.mxu0
    %v788 = vadd.f32 %v619, %v787
    %v789 = vpop.f32.mrf.mxu0
    %v790 = vadd.f32 %v621, %v789
    %791 = vmatmul.bf16.gmra.mxu0 %v503
    %v792 = vpop.f32.mrf.mxu0
    %v793 = vadd.f32 %v624, %v792
    %v794 = vpop.f32.mrf.mxu0
    %v795 = vadd.f32 %v626, %v794
    %796 = vmatmul.bf16.gmra.mxu0 %v506
    %v797 = vpop.f32.mrf.mxu0
    %v798 = vadd.f32 %v629, %v797
    %v799 = vpop.f32.mrf.mxu0
    %v800 = vadd.f32 %v631, %v799
    %801 = vmatmul.bf16.gmra.mxu0 %v509
    %v802 = vpop.f32.mrf.mxu0
    %v803 = vadd.f32 %v634, %v802
    %v804 = vpop.f32.mrf.mxu0
    %v805 = vadd.f32 %v636, %v804
    %806 = vmatmul.bf16.gmra.mxu0 %v512
    %v807 = vpop.f32.mrf.mxu0
    %v808 = vadd.f32 %v639, %v807
    %v809 = vpop.f32.mrf.mxu0
    %v810 = vadd.f32 %v641, %v809
    %811 = vmatmul.bf16.gmra.mxu0 %v515
    %v812 = vpop.f32.mrf.mxu0
    %v813 = vadd.f32 %v644, %v812
    %v814 = vpop.f32.mrf.mxu0
    %v815 = vadd.f32 %v646, %v814
    %816 = vmatmul.bf16.gmra.mxu0 %v518
    %v817 = vpop.f32.mrf.mxu0
    %v818 = vadd.f32 %v649, %v817
    %v819 = vpop.f32.mrf.mxu0
    %v820 = vadd.f32 %v651, %v819
    %821 = vmatmul.bf16.gmra.mxu0 %v521
    %v822 = vpop.f32.mrf.mxu0
    %v823 = vadd.f32 %v654, %v822
    %v824 = vpop.f32.mrf.mxu0
    %v825 = vadd.f32 %v656, %v824
    %826 = vmatmul.bf16.gmra.mxu0 %v524
    %v827 = vpop.f32.mrf.mxu0
    %v828 = vadd.f32 %v659, %v827
    %v829 = vpop.f32.mrf.mxu0
    %v830 = vadd.f32 %v661, %v829
    %831 = vmatmul.bf16.gmra.mxu0 %v527
    %v832 = vpop.f32.mrf.mxu0
    %v833 = vadd.f32 %v664, %v832
    %v834 = vpop.f32.mrf.mxu0
    %v835 = vadd.f32 %v666, %v834
    %836 = vmatmul.bf16.gmra.mxu0 %v530
    %v837 = vpop.f32.mrf.mxu0
    %v838 = vadd.f32 %v669, %v837
    %v839 = vpop.f32.mrf.mxu0
    %v840 = vadd.f32 %v671, %v839
    %841 = vmatmul.bf16.gmra.mxu0 %v533
    %v842 = vpop.f32.mrf.mxu0
    %v843 = vadd.f32 %v674, %v842
    %v844 = vpop.f32.mrf.mxu0
    %v845 = vadd.f32 %v676, %v844
    %846 = vmatmul.bf16.gmra.mxu0 %v536
    %v847 = vpop.f32.mrf.mxu0
    %v848 = vadd.f32 %v679, %v847
    %v849 = vpop.f32.mrf.mxu0
    %v850 = vadd.f32 %v681, %v849
    %851 = vmatmul.bf16.gmra.mxu0 %v539
    %v852 = vpop.f32.mrf.mxu0
    %v853 = vadd.f32 %v684, %v852
    %v854 = vpop.f32.mrf.mxu0
    %v855 = vadd.f32 %v686, %v854
    %856 = vmatmul.bf16.gmra.mxu0 %v542
    %v857 = vpop.f32.mrf.mxu0
    %v858 = vadd.f32 %v689, %v857
    %v859 = vpop.f32.mrf.mxu0
    %v860 = vadd.f32 %v691, %v859
    %861 = vmatmul.bf16.gmra.mxu0 %v545
    %v862 = vpop.f32.mrf.mxu0
    %v863 = vadd.f32 %v694, %v862
    %v864 = vpop.f32.mrf.mxu0
    %v865 = vadd.f32 %v696, %v864
    %866 = vmatmul.bf16.gmra.mxu0 %v548
    %v867 = vpop.f32.mrf.mxu0
    %v868 = vadd.f32 %v699, %v867
    %v869 = vpop.f32.mrf.mxu0
    %v870 = vadd.f32 %v701, %v869
    %871 = vmatmul.bf16.gmra.mxu0 %v551
    %v872 = vpop.f32.mrf.mxu0
    %v873 = vadd.f32 %v704, %v872
    %v874 = vpop.f32.mrf.mxu0
    %v875 = vadd.f32 %v706, %v874
    %876 = vmatmul.bf16.gmra.mxu0 %v554
    %v877 = vpop.f32.mrf.mxu0
    %v878 = vadd.f32 %v709, %v877
    %v879 = vpop.f32.mrf.mxu0
    %v880 = vadd.f32 %v711, %v879
    %881 = vmatmul.bf16.gmra.mxu0 %v557
    %v882 = vpop.f32.mrf.mxu0
    %v883 = vadd.f32 %v714, %v882
    %v884 = vpop.f32.mrf.mxu0
    %v885 = vadd.f32 %v716, %v884
    %886 = vmatmul.bf16.gmra.mxu0 %v560
    %v887 = vpop.f32.mrf.mxu0
    %v888 = vadd.f32 %v719, %v887
    %v889 = vpop.f32.mrf.mxu0
    %v890 = vadd.f32 %v721, %v889
    %891 = vmatmul.bf16.gmra.mxu0 %v563
    %v892 = vpop.f32.mrf.mxu0
    %v893 = vadd.f32 %v724, %v892
    %v894 = vpop.f32.mrf.mxu0
    %v895 = vadd.f32 %v726, %v894
    %896 = vmatmul.bf16.gmra.mxu0 %v566
    %v897 = vpop.f32.mrf.mxu0
    %v898 = vadd.f32 %v729, %v897
    %v899 = vpop.f32.mrf.mxu0
    %v900 = vadd.f32 %v731, %v899
    %901 = vmatmul.bf16.gmra.mxu0 %v569
    %v902 = vpop.f32.mrf.mxu0
    %v903 = vadd.f32 %v734, %v902
    %v904 = vpop.f32.mrf.mxu0
    %v905 = vadd.f32 %v736, %v904
    %906 = vmatmul.bf16.gmra.mxu0 %v572
    %v907 = vpop.f32.mrf.mxu0
    %v908 = vadd.f32 %v739, %v907
    %v909 = vpop.f32.mrf.mxu0
    %v910 = vadd.f32 %v741, %v909
    %911 = vdwg.mxu0
    %s912 = smul.u32 0, 512
    %v913 = vpack.c.bf16 %v753, %v753
    %v914 = vpack.c.bf16 %v755, %v755
    %v915 = vpack.c.bf16 %v758, %v758
    %v916 = vpack.c.bf16 %v760, %v760
    %v917 = vpack.c.bf16 %v763, %v763
    %v918 = vpack.c.bf16 %v765, %v765
    %v919 = vpack.c.bf16 %v768, %v768
    %v920 = vpack.c.bf16 %v770, %v770
    %v921 = vpack.c.bf16 %v773, %v773
    %v922 = vpack.c.bf16 %v775, %v775
    %v923 = vpack.c.bf16 %v778, %v778
    %v924 = vpack.c.bf16 %v780, %v780
    %v925 = vpack.c.bf16 %v783, %v783
    %v926 = vpack.c.bf16 %v785, %v785
    %v927 = vpack.c.bf16 %v788, %v788
    %v928 = vpack.c.bf16 %v790, %v790
    %v929 = vpack.c.bf16 %v793, %v793
    %v930 = vpack.c.bf16 %v795, %v795
    %v931 = vpack.c.bf16 %v798, %v798
    %v932 = vpack.c.bf16 %v800, %v800
    %v933 = vpack.c.bf16 %v803, %v803
    %v934 = vpack.c.bf16 %v805, %v805
    %v935 = vpack.c.bf16 %v808, %v808
    %v936 = vpack.c.bf16 %v810, %v810
    %v937 = vpack.c.bf16 %v813, %v813
    %v938 = vpack.c.bf16 %v815, %v815
    %v939 = vpack.c.bf16 %v818, %v818
    %v940 = vpack.c.bf16 %v820, %v820
    %v941 = vpack.c.bf16 %v823, %v823
    %v942 = vpack.c.bf16 %v825, %v825
    %v943 = vpack.c.bf16 %v828, %v828
    %v944 = vpack.c.bf16 %v830, %v830
    %v945 = vpack.c.bf16 %v833, %v833
    %v946 = vpack.c.bf16 %v835, %v835
    %v947 = vpack.c.bf16 %v838, %v838
    %v948 = vpack.c.bf16 %v840, %v840
    %v949 = vpack.c.bf16 %v843, %v843
    %v950 = vpack.c.bf16 %v845, %v845
    %v951 = vpack.c.bf16 %v848, %v848
    %v952 = vpack.c.bf16 %v850, %v850
    %v953 = vpack.c.bf16 %v853, %v853
    %v954 = vpack.c.bf16 %v855, %v855
    %v955 = vpack.c.bf16 %v858, %v858
    %v956 = vpack.c.bf16 %v860, %v860
    %v957 = vpack.c.bf16 %v863, %v863
    %v958 = vpack.c.bf16 %v865, %v865
    %v959 = vpack.c.bf16 %v868, %v868
    %v960 = vpack.c.bf16 %v870, %v870
    %v961 = vpack.c.bf16 %v873, %v873
    %v962 = vpack.c.bf16 %v875, %v875
    %v963 = vpack.c.bf16 %v878, %v878
    %v964 = vpack.c.bf16 %v880, %v880
    %v965 = vpack.c.bf16 %v883, %v883
    %v966 = vpack.c.bf16 %v885, %v885
    %v967 = vpack.c.bf16 %v888, %v888
    %v968 = vpack.c.bf16 %v890, %v890
    %v969 = vpack.c.bf16 %v893, %v893
    %v970 = vpack.c.bf16 %v895, %v895
    %v971 = vpack.c.bf16 %v898, %v898
    %v972 = vpack.c.bf16 %v900, %v900
    %v973 = vpack.c.bf16 %v903, %v903
    %v974 = vpack.c.bf16 %v905, %v905
    %v975 = vpack.c.bf16 %v908, %v908
    %v976 = vpack.c.bf16 %v910, %v910
    %s977 = sshra.s32 %s912, 3
    %s978 = sand.u32 %s912, 7
    %s979 = smul.addr %s977, 4
    %s980 = scalar_lea.vmem %s4, %s979
    %vm981 = vcmask 257024
    %982 = vst.msk [vmem:[%s980] sm:$0xf] %vm981, %v913
    %983 = vst.msk [vmem:[%s980 + $0x4] sm:$0xf] %vm981, %v914
    %984 = vst.msk [vmem:[%s980 + $0x8] sm:$0xf] %vm981, %v915
    %985 = vst.msk [vmem:[%s980 + $0xc] sm:$0xf] %vm981, %v916
    %986 = vst.msk [vmem:[%s980 + $0x10] sm:$0xf] %vm981, %v917
    %987 = vst.msk [vmem:[%s980 + $0x14] sm:$0xf] %vm981, %v918
    %988 = vst.msk [vmem:[%s980 + $0x18] sm:$0xf] %vm981, %v919
    %989 = vst.msk [vmem:[%s980 + $0x1c] sm:$0xf] %vm981, %v920
    %990 = vst.msk [vmem:[%s980 + $0x20] sm:$0xf] %vm981, %v921
    %991 = vst.msk [vmem:[%s980 + $0x24] sm:$0xf] %vm981, %v922
    %992 = vst.msk [vmem:[%s980 + $0x28] sm:$0xf] %vm981, %v923
    %993 = vst.msk [vmem:[%s980 + $0x2c] sm:$0xf] %vm981, %v924
    %994 = vst.msk [vmem:[%s980 + $0x30] sm:$0xf] %vm981, %v925
    %995 = vst.msk [vmem:[%s980 + $0x34] sm:$0xf] %vm981, %v926
    %996 = vst.msk [vmem:[%s980 + $0x38] sm:$0xf] %vm981, %v927
    %997 = vst.msk [vmem:[%s980 + $0x3c] sm:$0xf] %vm981, %v928
    %998 = vst.msk [vmem:[%s980 + $0x40] sm:$0xf] %vm981, %v929
    %999 = vst.msk [vmem:[%s980 + $0x44] sm:$0xf] %vm981, %v930
    %1000 = vst.msk [vmem:[%s980 + $0x48] sm:$0xf] %vm981, %v931
    %1001 = vst.msk [vmem:[%s980 + $0x4c] sm:$0xf] %vm981, %v932
    %1002 = vst.msk [vmem:[%s980 + $0x50] sm:$0xf] %vm981, %v933
    %1003 = vst.msk [vmem:[%s980 + $0x54] sm:$0xf] %vm981, %v934
    %1004 = vst.msk [vmem:[%s980 + $0x58] sm:$0xf] %vm981, %v935
    %1005 = vst.msk [vmem:[%s980 + $0x5c] sm:$0xf] %vm981, %v936
    %1006 = vst.msk [vmem:[%s980 + $0x60] sm:$0xf] %vm981, %v937
    %1007 = vst.msk [vmem:[%s980 + $0x64] sm:$0xf] %vm981, %v938
    %1008 = vst.msk [vmem:[%s980 + $0x68] sm:$0xf] %vm981, %v939
    %1009 = vst.msk [vmem:[%s980 + $0x6c] sm:$0xf] %vm981, %v940
    %1010 = vst.msk [vmem:[%s980 + $0x70] sm:$0xf] %vm981, %v941
    %1011 = vst.msk [vmem:[%s980 + $0x74] sm:$0xf] %vm981, %v942
    %1012 = vst.msk [vmem:[%s980 + $0x78] sm:$0xf] %vm981, %v943
    %1013 = vst.msk [vmem:[%s980 + $0x7c] sm:$0xf] %vm981, %v944
    %1014 = vst.msk [vmem:[%s980 + $0x80] sm:$0xf] %vm981, %v945
    %1015 = vst.msk [vmem:[%s980 + $0x84] sm:$0xf] %vm981, %v946
    %1016 = vst.msk [vmem:[%s980 + $0x88] sm:$0xf] %vm981, %v947
    %1017 = vst.msk [vmem:[%s980 + $0x8c] sm:$0xf] %vm981, %v948
    %1018 = vst.msk [vmem:[%s980 + $0x90] sm:$0xf] %vm981, %v949
    %1019 = vst.msk [vmem:[%s980 + $0x94] sm:$0xf] %vm981, %v950
    %1020 = vst.msk [vmem:[%s980 + $0x98] sm:$0xf] %vm981, %v951
    %1021 = vst.msk [vmem:[%s980 + $0x9c] sm:$0xf] %vm981, %v952
    %1022 = vst.msk [vmem:[%s980 + $0xa0] sm:$0xf] %vm981, %v953
    %1023 = vst.msk [vmem:[%s980 + $0xa4] sm:$0xf] %vm981, %v954
    %1024 = vst.msk [vmem:[%s980 + $0xa8] sm:$0xf] %vm981, %v955
    %1025 = vst.msk [vmem:[%s980 + $0xac] sm:$0xf] %vm981, %v956
    %1026 = vst.msk [vmem:[%s980 + $0xb0] sm:$0xf] %vm981, %v957
    %1027 = vst.msk [vmem:[%s980 + $0xb4] sm:$0xf] %vm981, %v958
    %1028 = vst.msk [vmem:[%s980 + $0xb8] sm:$0xf] %vm981, %v959
    %1029 = vst.msk [vmem:[%s980 + $0xbc] sm:$0xf] %vm981, %v960
    %1030 = vst.msk [vmem:[%s980 + $0xc0] sm:$0xf] %vm981, %v961
    %1031 = vst.msk [vmem:[%s980 + $0xc4] sm:$0xf] %vm981, %v962
    %1032 = vst.msk [vmem:[%s980 + $0xc8] sm:$0xf] %vm981, %v963
    %1033 = vst.msk [vmem:[%s980 + $0xcc] sm:$0xf] %vm981, %v964
    %1034 = vst.msk [vmem:[%s980 + $0xd0] sm:$0xf] %vm981, %v965
    %1035 = vst.msk [vmem:[%s980 + $0xd4] sm:$0xf] %vm981, %v966
    %1036 = vst.msk [vmem:[%s980 + $0xd8] sm:$0xf] %vm981, %v967
    %1037 = vst.msk [vmem:[%s980 + $0xdc] sm:$0xf] %vm981, %v968
    %1038 = vst.msk [vmem:[%s980 + $0xe0] sm:$0xf] %vm981, %v969
    %1039 = vst.msk [vmem:[%s980 + $0xe4] sm:$0xf] %vm981, %v970
    %1040 = vst.msk [vmem:[%s980 + $0xe8] sm:$0xf] %vm981, %v971
    %1041 = vst.msk [vmem:[%s980 + $0xec] sm:$0xf] %vm981, %v972
    %1042 = vst.msk [vmem:[%s980 + $0xf0] sm:$0xf] %vm981, %v973
    %1043 = vst.msk [vmem:[%s980 + $0xf4] sm:$0xf] %vm981, %v974
    %1044 = vst.msk [vmem:[%s980 + $0xf8] sm:$0xf] %vm981, %v975
    %1045 = vst.msk [vmem:[%s980 + $0xfc] sm:$0xf] %vm981, %v976
    %v1046 = vld [vmem:[#allocation2] sm:$0x1]
    %vm1047 = vcmask 261120
    %v1048 = vsel %vm1047, %v753, 0.0
    %v1049 = vsel %vm1047, %v755, 0.0
    %v1050 = vadd.f32 %v1048, %v1049
    %v1051 = vsel %vm1047, %v758, 0.0
    %v1052 = vadd.f32 %v1050, %v1051
    %v1053 = vsel %vm1047, %v760, 0.0
    %v1054 = vadd.f32 %v1052, %v1053
    %v1055 = vsel %vm1047, %v763, 0.0
    %v1056 = vadd.f32 %v1054, %v1055
    %v1057 = vsel %vm1047, %v765, 0.0
    %v1058 = vadd.f32 %v1056, %v1057
    %v1059 = vsel %vm1047, %v768, 0.0
    %v1060 = vadd.f32 %v1058, %v1059
    %v1061 = vsel %vm1047, %v770, 0.0
    %v1062 = vadd.f32 %v1060, %v1061
    %v1063 = vsel %vm1047, %v773, 0.0
    %v1064 = vadd.f32 %v1062, %v1063
    %v1065 = vsel %vm1047, %v775, 0.0
    %v1066 = vadd.f32 %v1064, %v1065
    %v1067 = vsel %vm1047, %v778, 0.0
    %v1068 = vadd.f32 %v1066, %v1067
    %v1069 = vsel %vm1047, %v780, 0.0
    %v1070 = vadd.f32 %v1068, %v1069
    %v1071 = vsel %vm1047, %v783, 0.0
    %v1072 = vadd.f32 %v1070, %v1071
    %v1073 = vsel %vm1047, %v785, 0.0
    %v1074 = vadd.f32 %v1072, %v1073
    %v1075 = vsel %vm1047, %v788, 0.0
    %v1076 = vadd.f32 %v1074, %v1075
    %v1077 = vsel %vm1047, %v790, 0.0
    %v1078 = vadd.f32 %v1076, %v1077
    %v1079 = vsel %vm1047, %v793, 0.0
    %v1080 = vadd.f32 %v1078, %v1079
    %v1081 = vsel %vm1047, %v795, 0.0
    %v1082 = vadd.f32 %v1080, %v1081
    %v1083 = vsel %vm1047, %v798, 0.0
    %v1084 = vadd.f32 %v1082, %v1083
    %v1085 = vsel %vm1047, %v800, 0.0
    %v1086 = vadd.f32 %v1084, %v1085
    %v1087 = vsel %vm1047, %v803, 0.0
    %v1088 = vadd.f32 %v1086, %v1087
    %v1089 = vsel %vm1047, %v805, 0.0
    %v1090 = vadd.f32 %v1088, %v1089
    %v1091 = vsel %vm1047, %v808, 0.0
    %v1092 = vadd.f32 %v1090, %v1091
    %v1093 = vsel %vm1047, %v810, 0.0
    %v1094 = vadd.f32 %v1092, %v1093
    %v1095 = vsel %vm1047, %v813, 0.0
    %v1096 = vadd.f32 %v1094, %v1095
    %v1097 = vsel %vm1047, %v815, 0.0
    %v1098 = vadd.f32 %v1096, %v1097
    %v1099 = vsel %vm1047, %v818, 0.0
    %v1100 = vadd.f32 %v1098, %v1099
    %v1101 = vsel %vm1047, %v820, 0.0
    %v1102 = vadd.f32 %v1100, %v1101
    %v1103 = vsel %vm1047, %v823, 0.0
    %v1104 = vadd.f32 %v1102, %v1103
    %v1105 = vsel %vm1047, %v825, 0.0
    %v1106 = vadd.f32 %v1104, %v1105
    %v1107 = vsel %vm1047, %v828, 0.0
    %v1108 = vadd.f32 %v1106, %v1107
    %v1109 = vsel %vm1047, %v830, 0.0
    %v1110 = vadd.f32 %v1108, %v1109
    %v1111 = vsel %vm1047, %v833, 0.0
    %v1112 = vadd.f32 %v1110, %v1111
    %v1113 = vsel %vm1047, %v835, 0.0
    %v1114 = vadd.f32 %v1112, %v1113
    %v1115 = vsel %vm1047, %v838, 0.0
    %v1116 = vadd.f32 %v1114, %v1115
    %v1117 = vsel %vm1047, %v840, 0.0
    %v1118 = vadd.f32 %v1116, %v1117
    %v1119 = vsel %vm1047, %v843, 0.0
    %v1120 = vadd.f32 %v1118, %v1119
    %v1121 = vsel %vm1047, %v845, 0.0
    %v1122 = vadd.f32 %v1120, %v1121
    %v1123 = vsel %vm1047, %v848, 0.0
    %v1124 = vadd.f32 %v1122, %v1123
    %v1125 = vsel %vm1047, %v850, 0.0
    %v1126 = vadd.f32 %v1124, %v1125
    %v1127 = vsel %vm1047, %v853, 0.0
    %v1128 = vadd.f32 %v1126, %v1127
    %v1129 = vsel %vm1047, %v855, 0.0
    %v1130 = vadd.f32 %v1128, %v1129
    %v1131 = vsel %vm1047, %v858, 0.0
    %v1132 = vadd.f32 %v1130, %v1131
    %v1133 = vsel %vm1047, %v860, 0.0
    %v1134 = vadd.f32 %v1132, %v1133
    %v1135 = vsel %vm1047, %v863, 0.0
    %v1136 = vadd.f32 %v1134, %v1135
    %v1137 = vsel %vm1047, %v865, 0.0
    %v1138 = vadd.f32 %v1136, %v1137
    %v1139 = vsel %vm1047, %v868, 0.0
    %v1140 = vadd.f32 %v1138, %v1139
    %v1141 = vsel %vm1047, %v870, 0.0
    %v1142 = vadd.f32 %v1140, %v1141
    %v1143 = vsel %vm1047, %v873, 0.0
    %v1144 = vadd.f32 %v1142, %v1143
    %v1145 = vsel %vm1047, %v875, 0.0
    %v1146 = vadd.f32 %v1144, %v1145
    %v1147 = vsel %vm1047, %v878, 0.0
    %v1148 = vadd.f32 %v1146, %v1147
    %v1149 = vsel %vm1047, %v880, 0.0
    %v1150 = vadd.f32 %v1148, %v1149
    %v1151 = vsel %vm1047, %v883, 0.0
    %v1152 = vadd.f32 %v1150, %v1151
    %v1153 = vsel %vm1047, %v885, 0.0
    %v1154 = vadd.f32 %v1152, %v1153
    %v1155 = vsel %vm1047, %v888, 0.0
    %v1156 = vadd.f32 %v1154, %v1155
    %v1157 = vsel %vm1047, %v890, 0.0
    %v1158 = vadd.f32 %v1156, %v1157
    %v1159 = vsel %vm1047, %v893, 0.0
    %v1160 = vadd.f32 %v1158, %v1159
    %v1161 = vsel %vm1047, %v895, 0.0
    %v1162 = vadd.f32 %v1160, %v1161
    %v1163 = vsel %vm1047, %v898, 0.0
    %v1164 = vadd.f32 %v1162, %v1163
    %v1165 = vsel %vm1047, %v900, 0.0
    %v1166 = vadd.f32 %v1164, %v1165
    %v1167 = vsel %vm1047, %v903, 0.0
    %v1168 = vadd.f32 %v1166, %v1167
    %v1169 = vsel %vm1047, %v905, 0.0
    %v1170 = vadd.f32 %v1168, %v1169
    %v1171 = vsel %vm1047, %v908, 0.0
    %v1172 = vadd.f32 %v1170, %v1171
    %v1173 = vsel %vm1047, %v910, 0.0
    %v1174 = vadd.f32 %v1172, %v1173
    %v1175 = vrot.slane %v1174, 4
    %v1176 = vadd.f32 %v1174, %v1175
    %v1177 = vrot.slane %v1176, 2
    %v1178 = vadd.f32 %v1176, %v1177
    %v1179 = vrot.slane %v1178, 1
    %v1180 = vadd.f32 %v1178, %v1179
    %v1181 = vadd.f32 %v1046, %v1180
    %vm1182 = vcmask 253952
    %1183 = vst.msk [vmem:[#allocation2] sm:$0x1] %vm1182, %v1181
    %v1184 = vld [vmem:[#allocation3] sm:$0x1]
    %v1185 = vmul.f32 %v753, %v753
    %v1186 = vmul.f32 %v755, %v755
    %v1187 = vmul.f32 %v758, %v758
    %v1188 = vmul.f32 %v760, %v760
    %v1189 = vmul.f32 %v763, %v763
    %v1190 = vmul.f32 %v765, %v765
    %v1191 = vmul.f32 %v768, %v768
    %v1192 = vmul.f32 %v770, %v770
    %v1193 = vmul.f32 %v773, %v773
    %v1194 = vmul.f32 %v775, %v775
    %v1195 = vmul.f32 %v778, %v778
    %v1196 = vmul.f32 %v780, %v780
    %v1197 = vmul.f32 %v783, %v783
    %v1198 = vmul.f32 %v785, %v785
    %v1199 = vmul.f32 %v788, %v788
    %v1200 = vmul.f32 %v790, %v790
    %v1201 = vmul.f32 %v793, %v793
    %v1202 = vmul.f32 %v795, %v795
    %v1203 = vmul.f32 %v798, %v798
    %v1204 = vmul.f32 %v800, %v800
    %v1205 = vmul.f32 %v803, %v803
    %v1206 = vmul.f32 %v805, %v805
    %v1207 = vmul.f32 %v808, %v808
    %v1208 = vmul.f32 %v810, %v810
    %v1209 = vmul.f32 %v813, %v813
    %v1210 = vmul.f32 %v815, %v815
    %v1211 = vmul.f32 %v818, %v818
    %v1212 = vmul.f32 %v820, %v820
    %v1213 = vmul.f32 %v823, %v823
    %v1214 = vmul.f32 %v825, %v825
    %v1215 = vmul.f32 %v828, %v828
    %v1216 = vmul.f32 %v830, %v830
    %v1217 = vmul.f32 %v833, %v833
    %v1218 = vmul.f32 %v835, %v835
    %v1219 = vmul.f32 %v838, %v838
    %v1220 = vmul.f32 %v840, %v840
    %v1221 = vmul.f32 %v843, %v843
    %v1222 = vmul.f32 %v845, %v845
    %v1223 = vmul.f32 %v848, %v848
    %v1224 = vmul.f32 %v850, %v850
    %v1225 = vmul.f32 %v853, %v853
    %v1226 = vmul.f32 %v855, %v855
    %v1227 = vmul.f32 %v858, %v858
    %v1228 = vmul.f32 %v860, %v860
    %v1229 = vmul.f32 %v863, %v863
    %v1230 = vmul.f32 %v865, %v865
    %v1231 = vmul.f32 %v868, %v868
    %v1232 = vmul.f32 %v870, %v870
    %v1233 = vmul.f32 %v873, %v873
    %v1234 = vmul.f32 %v875, %v875
    %v1235 = vmul.f32 %v878, %v878
    %v1236 = vmul.f32 %v880, %v880
    %v1237 = vmul.f32 %v883, %v883
    %v1238 = vmul.f32 %v885, %v885
    %v1239 = vmul.f32 %v888, %v888
    %v1240 = vmul.f32 %v890, %v890
    %v1241 = vmul.f32 %v893, %v893
    %v1242 = vmul.f32 %v895, %v895
    %v1243 = vmul.f32 %v898, %v898
    %v1244 = vmul.f32 %v900, %v900
    %v1245 = vmul.f32 %v903, %v903
    %v1246 = vmul.f32 %v905, %v905
    %v1247 = vmul.f32 %v908, %v908
    %v1248 = vmul.f32 %v910, %v910
    %v1249 = vsel %vm1047, %v1185, 0.0
    %v1250 = vsel %vm1047, %v1186, 0.0
    %v1251 = vadd.f32 %v1249, %v1250
    %v1252 = vsel %vm1047, %v1187, 0.0
    %v1253 = vadd.f32 %v1251, %v1252
    %v1254 = vsel %vm1047, %v1188, 0.0
    %v1255 = vadd.f32 %v1253, %v1254
    %v1256 = vsel %vm1047, %v1189, 0.0
    %v1257 = vadd.f32 %v1255, %v1256
    %v1258 = vsel %vm1047, %v1190, 0.0
    %v1259 = vadd.f32 %v1257, %v1258
    %v1260 = vsel %vm1047, %v1191, 0.0
    %v1261 = vadd.f32 %v1259, %v1260
    %v1262 = vsel %vm1047, %v1192, 0.0
    %v1263 = vadd.f32 %v1261, %v1262
    %v1264 = vsel %vm1047, %v1193, 0.0
    %v1265 = vadd.f32 %v1263, %v1264
    %v1266 = vsel %vm1047, %v1194, 0.0
    %v1267 = vadd.f32 %v1265, %v1266
    %v1268 = vsel %vm1047, %v1195, 0.0
    %v1269 = vadd.f32 %v1267, %v1268
    %v1270 = vsel %vm1047, %v1196, 0.0
    %v1271 = vadd.f32 %v1269, %v1270
    %v1272 = vsel %vm1047, %v1197, 0.0
    %v1273 = vadd.f32 %v1271, %v1272
    %v1274 = vsel %vm1047, %v1198, 0.0
    %v1275 = vadd.f32 %v1273, %v1274
    %v1276 = vsel %vm1047, %v1199, 0.0
    %v1277 = vadd.f32 %v1275, %v1276
    %v1278 = vsel %vm1047, %v1200, 0.0
    %v1279 = vadd.f32 %v1277, %v1278
    %v1280 = vsel %vm1047, %v1201, 0.0
    %v1281 = vadd.f32 %v1279, %v1280
    %v1282 = vsel %vm1047, %v1202, 0.0
    %v1283 = vadd.f32 %v1281, %v1282
    %v1284 = vsel %vm1047, %v1203, 0.0
    %v1285 = vadd.f32 %v1283, %v1284
    %v1286 = vsel %vm1047, %v1204, 0.0
    %v1287 = vadd.f32 %v1285, %v1286
    %v1288 = vsel %vm1047, %v1205, 0.0
    %v1289 = vadd.f32 %v1287, %v1288
    %v1290 = vsel %vm1047, %v1206, 0.0
    %v1291 = vadd.f32 %v1289, %v1290
    %v1292 = vsel %vm1047, %v1207, 0.0
    %v1293 = vadd.f32 %v1291, %v1292
    %v1294 = vsel %vm1047, %v1208, 0.0
    %v1295 = vadd.f32 %v1293, %v1294
    %v1296 = vsel %vm1047, %v1209, 0.0
    %v1297 = vadd.f32 %v1295, %v1296
    %v1298 = vsel %vm1047, %v1210, 0.0
    %v1299 = vadd.f32 %v1297, %v1298
    %v1300 = vsel %vm1047, %v1211, 0.0
    %v1301 = vadd.f32 %v1299, %v1300
    %v1302 = vsel %vm1047, %v1212, 0.0
    %v1303 = vadd.f32 %v1301, %v1302
    %v1304 = vsel %vm1047, %v1213, 0.0
    %v1305 = vadd.f32 %v1303, %v1304
    %v1306 = vsel %vm1047, %v1214, 0.0
    %v1307 = vadd.f32 %v1305, %v1306
    %v1308 = vsel %vm1047, %v1215, 0.0
    %v1309 = vadd.f32 %v1307, %v1308
    %v1310 = vsel %vm1047, %v1216, 0.0
    %v1311 = vadd.f32 %v1309, %v1310
    %v1312 = vsel %vm1047, %v1217, 0.0
    %v1313 = vadd.f32 %v1311, %v1312
    %v1314 = vsel %vm1047, %v1218, 0.0
    %v1315 = vadd.f32 %v1313, %v1314
    %v1316 = vsel %vm1047, %v1219, 0.0
    %v1317 = vadd.f32 %v1315, %v1316
    %v1318 = vsel %vm1047, %v1220, 0.0
    %v1319 = vadd.f32 %v1317, %v1318
    %v1320 = vsel %vm1047, %v1221, 0.0
    %v1321 = vadd.f32 %v1319, %v1320
    %v1322 = vsel %vm1047, %v1222, 0.0
    %v1323 = vadd.f32 %v1321, %v1322
    %v1324 = vsel %vm1047, %v1223, 0.0
    %v1325 = vadd.f32 %v1323, %v1324
    %v1326 = vsel %vm1047, %v1224, 0.0
    %v1327 = vadd.f32 %v1325, %v1326
    %v1328 = vsel %vm1047, %v1225, 0.0
    %v1329 = vadd.f32 %v1327, %v1328
    %v1330 = vsel %vm1047, %v1226, 0.0
    %v1331 = vadd.f32 %v1329, %v1330
    %v1332 = vsel %vm1047, %v1227, 0.0
    %v1333 = vadd.f32 %v1331, %v1332
    %v1334 = vsel %vm1047, %v1228, 0.0
    %v1335 = vadd.f32 %v1333, %v1334
    %v1336 = vsel %vm1047, %v1229, 0.0
    %v1337 = vadd.f32 %v1335, %v1336
    %v1338 = vsel %vm1047, %v1230, 0.0
    %v1339 = vadd.f32 %v1337, %v1338
    %v1340 = vsel %vm1047, %v1231, 0.0
    %v1341 = vadd.f32 %v1339, %v1340
    %v1342 = vsel %vm1047, %v1232, 0.0
    %v1343 = vadd.f32 %v1341, %v1342
    %v1344 = vsel %vm1047, %v1233, 0.0
    %v1345 = vadd.f32 %v1343, %v1344
    %v1346 = vsel %vm1047, %v1234, 0.0
    %v1347 = vadd.f32 %v1345, %v1346
    %v1348 = vsel %vm1047, %v1235, 0.0
    %v1349 = vadd.f32 %v1347, %v1348
    %v1350 = vsel %vm1047, %v1236, 0.0
    %v1351 = vadd.f32 %v1349, %v1350
    %v1352 = vsel %vm1047, %v1237, 0.0
    %v1353 = vadd.f32 %v1351, %v1352
    %v1354 = vsel %vm1047, %v1238, 0.0
    %v1355 = vadd.f32 %v1353, %v1354
    %v1356 = vsel %vm1047, %v1239, 0.0
    %v1357 = vadd.f32 %v1355, %v1356
    %v1358 = vsel %vm1047, %v1240, 0.0
    %v1359 = vadd.f32 %v1357, %v1358
    %v1360 = vsel %vm1047, %v1241, 0.0
    %v1361 = vadd.f32 %v1359, %v1360
    %v1362 = vsel %vm1047, %v1242, 0.0
    %v1363 = vadd.f32 %v1361, %v1362
    %v1364 = vsel %vm1047, %v1243, 0.0
    %v1365 = vadd.f32 %v1363, %v1364
    %v1366 = vsel %vm1047, %v1244, 0.0
    %v1367 = vadd.f32 %v1365, %v1366
    %v1368 = vsel %vm1047, %v1245, 0.0
    %v1369 = vadd.f32 %v1367, %v1368
    %v1370 = vsel %vm1047, %v1246, 0.0
    %v1371 = vadd.f32 %v1369, %v1370
    %v1372 = vsel %vm1047, %v1247, 0.0
    %v1373 = vadd.f32 %v1371, %v1372
    %v1374 = vsel %vm1047, %v1248, 0.0
    %v1375 = vadd.f32 %v1373, %v1374
    %v1376 = vrot.slane %v1375, 4
    %v1377 = vadd.f32 %v1375, %v1376
    %v1378 = vrot.slane %v1377, 2
    %v1379 = vadd.f32 %v1377, %v1378
    %v1380 = vrot.slane %v1379, 1
    %v1381 = vadd.f32 %v1379, %v1380
    %v1382 = vadd.f32 %v1184, %v1381
    %1383 = vst.msk [vmem:[#allocation3] sm:$0x1] %vm1182, %v1382
    // Predicated region
    $region30: #{netg_forward.8} parent=1 // pred_check
      %p1384 = pneg %p46
    $region31: #{netg_forward.8} parent=1 // pred_check_branch
      %1386 = sbr.rel (%p1384) target = $region33
    $region32: #{netg_forward.8} parent=1 // pred_region
      %v1387 = vld [vmem:[#allocation2] sm:$0x1]
      %v1388 = vld [vmem:[#allocation3] sm:$0x1]
      %v1389 = vld [vmem:[#allocation4] sm:$0x1]
      %v1390 = vld [vmem:[#allocation6] sm:$0x1]
      %1392 = vrot.lane.b32.xlu0 %v1387, 120
      %v1393 = vpop.permute.xlu0 %1392
      %v1395 = vadd.f32 %v1387, %v1393
      %1397 = vrot.lane.b32.xlu0 %v1388, 120
      %v1398 = vpop.permute.xlu0 %1397
      %v1400 = vadd.f32 %v1388, %v1398
      %1401 = vrot.lane.b32.xlu0 %v1387, 112
      %v1402 = vpop.permute.xlu0 %1401
      %v1404 = vadd.f32 %v1395, %v1402
      %1405 = vrot.lane.b32.xlu0 %v1388, 112
      %v1406 = vpop.permute.xlu0 %1405
      %v1408 = vadd.f32 %v1400, %v1406
      %1409 = vrot.lane.b32.xlu0 %v1387, 104
      %v1410 = vpop.permute.xlu0 %1409
      %v1412 = vadd.f32 %v1404, %v1410
      %1413 = vrot.lane.b32.xlu0 %v1388, 104
      %v1414 = vpop.permute.xlu0 %1413
      %v1416 = vadd.f32 %v1408, %v1414
      %v1417 = vmul.f32 %v1412, 0.00048828125
      %v1418 = vmul.f32 %v1416, 0.00048828125
      %v1419 = vmul.f32 %v1417, %v1417
      %v1420 = vsub.f32 %v1418, %v1419
      %v1421 = vmax.f32 %v1420, 0.0
      %v1422 = vadd.f32 %v1421, 1e-05
      %v1423 = vrsqrt.pop %v1422
      %v1424 = vmul.f32 %v1423, %v1422
      %v1425 = vmul.f32 %v1424, %v1423
      %v1426 = vmul.f32 0.5, %v1425
      %v1427 = vsub.f32 1.5, %v1426
      %v1428 = vmul.f32 %v1423, %v1427
      %vm1429 = vweird.f32 %v1422
      %vm1430 = vweird.f32 %v1423
      %vm1431 = vmor %vm1429, %vm1430
      %v1432 = vsel %vm1431, %v1423, %v1428
      %v1433 = vmul.f32 %v1389, %v1432
      %v1434 = vmul.f32 %v1417, %v1433
      %v1435 = vsub.f32 %v1390, %v1434
      %v1437 = vperm.slane %v1433, 0
      %1438 = vrot.lane.b32.xlu0 %v1437, 8
      %v1439 = vpop.permute.xlu0 %1438
      %1441 = vrot.lane.b32.xlu0 %v1437, 16
      %v1442 = vpop.permute.xlu0 %1441
      %1444 = vrot.lane.b32.xlu0 %v1437, 24
      %v1445 = vpop.permute.xlu0 %1444
      %vm1447 = vcmask 64512
      %v1448 = vsel %vm1447, %v1433, %v1439
      %v1449 = vsel %vm477, %v1448, %v1442
      %vm1450 = vcmask 195584
      %v1451 = vsel %vm1450, %v1449, %v1445
      %v1453 = vperm.slane %v1435, 0
      %1454 = vrot.lane.b32.xlu0 %v1453, 8
      %v1455 = vpop.permute.xlu0 %1454
      %1457 = vrot.lane.b32.xlu0 %v1453, 16
      %v1458 = vpop.permute.xlu0 %1457
      %1460 = vrot.lane.b32.xlu0 %v1453, 24
      %v1461 = vpop.permute.xlu0 %1460
      %v1463 = vsel %vm1447, %v1435, %v1455
      %v1464 = vsel %vm477, %v1463, %v1458
      %v1465 = vsel %vm1450, %v1464, %v1461
      %v1466 = vld [vmem:[%s4] sm:$0xf]
      %v1467 = vld [vmem:[%s4 + $0x4] sm:$0xf]
      %v1468 = vld [vmem:[%s4 + $0x8] sm:$0xf]
      %v1469 = vld [vmem:[%s4 + $0xc] sm:$0xf]
      %v1470 = vld [vmem:[%s4 + $0x10] sm:$0xf]
      %v1471 = vld [vmem:[%s4 + $0x14] sm:$0xf]
      %v1472 = vld [vmem:[%s4 + $0x18] sm:$0xf]
      %v1473 = vld [vmem:[%s4 + $0x1c] sm:$0xf]
      %v1474 = vld [vmem:[%s4 + $0x20] sm:$0xf]
      %v1475 = vld [vmem:[%s4 + $0x24] sm:$0xf]
      %v1476 = vld [vmem:[%s4 + $0x28] sm:$0xf]
      %v1477 = vld [vmem:[%s4 + $0x2c] sm:$0xf]
      %v1478 = vld [vmem:[%s4 + $0x30] sm:$0xf]
      %v1479 = vld [vmem:[%s4 + $0x34] sm:$0xf]
      %v1480 = vld [vmem:[%s4 + $0x38] sm:$0xf]
      %v1481 = vld [vmem:[%s4 + $0x3c] sm:$0xf]
      %v1482 = vld [vmem:[%s4 + $0x40] sm:$0xf]
      %v1483 = vld [vmem:[%s4 + $0x44] sm:$0xf]
      %v1484 = vld [vmem:[%s4 + $0x48] sm:$0xf]
      %v1485 = vld [vmem:[%s4 + $0x4c] sm:$0xf]
      %v1486 = vld [vmem:[%s4 + $0x50] sm:$0xf]
      %v1487 = vld [vmem:[%s4 + $0x54] sm:$0xf]
      %v1488 = vld [vmem:[%s4 + $0x58] sm:$0xf]
      %v1489 = vld [vmem:[%s4 + $0x5c] sm:$0xf]
      %v1490 = vld [vmem:[%s4 + $0x60] sm:$0xf]
      %v1491 = vld [vmem:[%s4 + $0x64] sm:$0xf]
      %v1492 = vld [vmem:[%s4 + $0x68] sm:$0xf]
      %v1493 = vld [vmem:[%s4 + $0x6c] sm:$0xf]
      %v1494 = vld [vmem:[%s4 + $0x70] sm:$0xf]
      %v1495 = vld [vmem:[%s4 + $0x74] sm:$0xf]
      %v1496 = vld [vmem:[%s4 + $0x78] sm:$0xf]
      %v1497 = vld [vmem:[%s4 + $0x7c] sm:$0xf]
      %v1498 = vld [vmem:[%s4 + $0x80] sm:$0xf]
      %v1499 = vld [vmem:[%s4 + $0x84] sm:$0xf]
      %v1500 = vld [vmem:[%s4 + $0x88] sm:$0xf]
      %v1501 = vld [vmem:[%s4 + $0x8c] sm:$0xf]
      %v1502 = vld [vmem:[%s4 + $0x90] sm:$0xf]
      %v1503 = vld [vmem:[%s4 + $0x94] sm:$0xf]
      %v1504 = vld [vmem:[%s4 + $0x98] sm:$0xf]
      %v1505 = vld [vmem:[%s4 + $0x9c] sm:$0xf]
      %v1506 = vld [vmem:[%s4 + $0xa0] sm:$0xf]
      %v1507 = vld [vmem:[%s4 + $0xa4] sm:$0xf]
      %v1508 = vld [vmem:[%s4 + $0xa8] sm:$0xf]
      %v1509 = vld [vmem:[%s4 + $0xac] sm:$0xf]
      %v1510 = vld [vmem:[%s4 + $0xb0] sm:$0xf]
      %v1511 = vld [vmem:[%s4 + $0xb4] sm:$0xf]
      %v1512 = vld [vmem:[%s4 + $0xb8] sm:$0xf]
      %v1513 = vld [vmem:[%s4 + $0xbc] sm:$0xf]
      %v1514 = vld [vmem:[%s4 + $0xc0] sm:$0xf]
      %v1515 = vld [vmem:[%s4 + $0xc4] sm:$0xf]
      %v1516 = vld [vmem:[%s4 + $0xc8] sm:$0xf]
      %v1517 = vld [vmem:[%s4 + $0xcc] sm:$0xf]
      %v1518 = vld [vmem:[%s4 + $0xd0] sm:$0xf]
      %v1519 = vld [vmem:[%s4 + $0xd4] sm:$0xf]
      %v1520 = vld [vmem:[%s4 + $0xd8] sm:$0xf]
      %v1521 = vld [vmem:[%s4 + $0xdc] sm:$0xf]
      %v1522 = vld [vmem:[%s4 + $0xe0] sm:$0xf]
      %v1523 = vld [vmem:[%s4 + $0xe4] sm:$0xf]
      %v1524 = vld [vmem:[%s4 + $0xe8] sm:$0xf]
      %v1525 = vld [vmem:[%s4 + $0xec] sm:$0xf]
      %v1526 = vld [vmem:[%s4 + $0xf0] sm:$0xf]
      %v1527 = vld [vmem:[%s4 + $0xf4] sm:$0xf]
      %v1528 = vld [vmem:[%s4 + $0xf8] sm:$0xf]
      %v1529 = vld [vmem:[%s4 + $0xfc] sm:$0xf]
      %v1530 = vunpack.c.l.bf16 %v1466
      %v1531 = vunpack.c.l.bf16 %v1467
      %v1532 = vunpack.c.l.bf16 %v1468
      %v1533 = vunpack.c.l.bf16 %v1469
      %v1534 = vunpack.c.l.bf16 %v1470
      %v1535 = vunpack.c.l.bf16 %v1471
      %v1536 = vunpack.c.l.bf16 %v1472
      %v1537 = vunpack.c.l.bf16 %v1473
      %v1538 = vunpack.c.l.bf16 %v1474
      %v1539 = vunpack.c.l.bf16 %v1475
      %v1540 = vunpack.c.l.bf16 %v1476
      %v1541 = vunpack.c.l.bf16 %v1477
      %v1542 = vunpack.c.l.bf16 %v1478
      %v1543 = vunpack.c.l.bf16 %v1479
      %v1544 = vunpack.c.l.bf16 %v1480
      %v1545 = vunpack.c.l.bf16 %v1481
      %v1546 = vunpack.c.l.bf16 %v1482
      %v1547 = vunpack.c.l.bf16 %v1483
      %v1548 = vunpack.c.l.bf16 %v1484
      %v1549 = vunpack.c.l.bf16 %v1485
      %v1550 = vunpack.c.l.bf16 %v1486
      %v1551 = vunpack.c.l.bf16 %v1487
      %v1552 = vunpack.c.l.bf16 %v1488
      %v1553 = vunpack.c.l.bf16 %v1489
      %v1554 = vunpack.c.l.bf16 %v1490
      %v1555 = vunpack.c.l.bf16 %v1491
      %v1556 = vunpack.c.l.bf16 %v1492
      %v1557 = vunpack.c.l.bf16 %v1493
      %v1558 = vunpack.c.l.bf16 %v1494
      %v1559 = vunpack.c.l.bf16 %v1495
      %v1560 = vunpack.c.l.bf16 %v1496
      %v1561 = vunpack.c.l.bf16 %v1497
      %v1562 = vunpack.c.l.bf16 %v1498
      %v1563 = vunpack.c.l.bf16 %v1499
      %v1564 = vunpack.c.l.bf16 %v1500
      %v1565 = vunpack.c.l.bf16 %v1501
      %v1566 = vunpack.c.l.bf16 %v1502
      %v1567 = vunpack.c.l.bf16 %v1503
      %v1568 = vunpack.c.l.bf16 %v1504
      %v1569 = vunpack.c.l.bf16 %v1505
      %v1570 = vunpack.c.l.bf16 %v1506
      %v1571 = vunpack.c.l.bf16 %v1507
      %v1572 = vunpack.c.l.bf16 %v1508
      %v1573 = vunpack.c.l.bf16 %v1509
      %v1574 = vunpack.c.l.bf16 %v1510
      %v1575 = vunpack.c.l.bf16 %v1511
      %v1576 = vunpack.c.l.bf16 %v1512
      %v1577 = vunpack.c.l.bf16 %v1513
      %v1578 = vunpack.c.l.bf16 %v1514
      %v1579 = vunpack.c.l.bf16 %v1515
      %v1580 = vunpack.c.l.bf16 %v1516
      %v1581 = vunpack.c.l.bf16 %v1517
      %v1582 = vunpack.c.l.bf16 %v1518
      %v1583 = vunpack.c.l.bf16 %v1519
      %v1584 = vunpack.c.l.bf16 %v1520
      %v1585 = vunpack.c.l.bf16 %v1521
      %v1586 = vunpack.c.l.bf16 %v1522
      %v1587 = vunpack.c.l.bf16 %v1523
      %v1588 = vunpack.c.l.bf16 %v1524
      %v1589 = vunpack.c.l.bf16 %v1525
      %v1590 = vunpack.c.l.bf16 %v1526
      %v1591 = vunpack.c.l.bf16 %v1527
      %v1592 = vunpack.c.l.bf16 %v1528
      %v1593 = vunpack.c.l.bf16 %v1529
      %v1594 = vperm.slane %v1451, 0
      %v1595 = vmul.f32 %v1530, %v1594
      %v1596 = vmul.f32 %v1531, %v1594
      %v1597 = vmul.f32 %v1532, %v1594
      %v1598 = vmul.f32 %v1533, %v1594
      %v1599 = vmul.f32 %v1534, %v1594
      %v1600 = vmul.f32 %v1535, %v1594
      %v1601 = vmul.f32 %v1536, %v1594
      %v1602 = vmul.f32 %v1537, %v1594
      %v1603 = vmul.f32 %v1538, %v1594
      %v1604 = vmul.f32 %v1539, %v1594
      %v1605 = vmul.f32 %v1540, %v1594
      %v1606 = vmul.f32 %v1541, %v1594
      %v1607 = vmul.f32 %v1542, %v1594
      %v1608 = vmul.f32 %v1543, %v1594
      %v1609 = vmul.f32 %v1544, %v1594
      %v1610 = vmul.f32 %v1545, %v1594
      %v1611 = vmul.f32 %v1546, %v1594
      %v1612 = vmul.f32 %v1547, %v1594
      %v1613 = vmul.f32 %v1548, %v1594
      %v1614 = vmul.f32 %v1549, %v1594
      %v1615 = vmul.f32 %v1550, %v1594
      %v1616 = vmul.f32 %v1551, %v1594
      %v1617 = vmul.f32 %v1552, %v1594
      %v1618 = vmul.f32 %v1553, %v1594
      %v1619 = vmul.f32 %v1554, %v1594
      %v1620 = vmul.f32 %v1555, %v1594
      %v1621 = vmul.f32 %v1556, %v1594
      %v1622 = vmul.f32 %v1557, %v1594
      %v1623 = vmul.f32 %v1558, %v1594
      %v1624 = vmul.f32 %v1559, %v1594
      %v1625 = vmul.f32 %v1560, %v1594
      %v1626 = vmul.f32 %v1561, %v1594
      %v1627 = vmul.f32 %v1562, %v1594
      %v1628 = vmul.f32 %v1563, %v1594
      %v1629 = vmul.f32 %v1564, %v1594
      %v1630 = vmul.f32 %v1565, %v1594
      %v1631 = vmul.f32 %v1566, %v1594
      %v1632 = vmul.f32 %v1567, %v1594
      %v1633 = vmul.f32 %v1568, %v1594
      %v1634 = vmul.f32 %v1569, %v1594
      %v1635 = vmul.f32 %v1570, %v1594
      %v1636 = vmul.f32 %v1571, %v1594
      %v1637 = vmul.f32 %v1572, %v1594
      %v1638 = vmul.f32 %v1573, %v1594
      %v1639 = vmul.f32 %v1574, %v1594
      %v1640 = vmul.f32 %v1575, %v1594
      %v1641 = vmul.f32 %v1576, %v1594
      %v1642 = vmul.f32 %v1577, %v1594
      %v1643 = vmul.f32 %v1578, %v1594
      %v1644 = vmul.f32 %v1579, %v1594
      %v1645 = vmul.f32 %v1580, %v1594
      %v1646 = vmul.f32 %v1581, %v1594
      %v1647 = vmul.f32 %v1582, %v1594
      %v1648 = vmul.f32 %v1583, %v1594
      %v1649 = vmul.f32 %v1584, %v1594
      %v1650 = vmul.f32 %v1585, %v1594
      %v1651 = vmul.f32 %v1586, %v1594
      %v1652 = vmul.f32 %v1587, %v1594
      %v1653 = vmul.f32 %v1588, %v1594
      %v1654 = vmul.f32 %v1589, %v1594
      %v1655 = vmul.f32 %v1590, %v1594
      %v1656 = vmul.f32 %v1591, %v1594
      %v1657 = vmul.f32 %v1592, %v1594
      %v1658 = vmul.f32 %v1593, %v1594
      %v1659 = vperm.slane %v1465, 0
      %v1660 = vadd.f32 %v1595, %v1659
      %v1661 = vadd.f32 %v1596, %v1659
      %v1662 = vadd.f32 %v1597, %v1659
      %v1663 = vadd.f32 %v1598, %v1659
      %v1664 = vadd.f32 %v1599, %v1659
      %v1665 = vadd.f32 %v1600, %v1659
      %v1666 = vadd.f32 %v1601, %v1659
      %v1667 = vadd.f32 %v1602, %v1659
      %v1668 = vadd.f32 %v1603, %v1659
      %v1669 = vadd.f32 %v1604, %v1659
      %v1670 = vadd.f32 %v1605, %v1659
      %v1671 = vadd.f32 %v1606, %v1659
      %v1672 = vadd.f32 %v1607, %v1659
      %v1673 = vadd.f32 %v1608, %v1659
      %v1674 = vadd.f32 %v1609, %v1659
      %v1675 = vadd.f32 %v1610, %v1659
      %v1676 = vadd.f32 %v1611, %v1659
      %v1677 = vadd.f32 %v1612, %v1659
      %v1678 = vadd.f32 %v1613, %v1659
      %v1679 = vadd.f32 %v1614, %v1659
      %v1680 = vadd.f32 %v1615, %v1659
      %v1681 = vadd.f32 %v1616, %v1659
      %v1682 = vadd.f32 %v1617, %v1659
      %v1683 = vadd.f32 %v1618, %v1659
      %v1684 = vadd.f32 %v1619, %v1659
      %v1685 = vadd.f32 %v1620, %v1659
      %v1686 = vadd.f32 %v1621, %v1659
      %v1687 = vadd.f32 %v1622, %v1659
      %v1688 = vadd.f32 %v1623, %v1659
      %v1689 = vadd.f32 %v1624, %v1659
      %v1690 = vadd.f32 %v1625, %v1659
      %v1691 = vadd.f32 %v1626, %v1659
      %v1692 = vadd.f32 %v1627, %v1659
      %v1693 = vadd.f32 %v1628, %v1659
      %v1694 = vadd.f32 %v1629, %v1659
      %v1695 = vadd.f32 %v1630, %v1659
      %v1696 = vadd.f32 %v1631, %v1659
      %v1697 = vadd.f32 %v1632, %v1659
      %v1698 = vadd.f32 %v1633, %v1659
      %v1699 = vadd.f32 %v1634, %v1659
      %v1700 = vadd.f32 %v1635, %v1659
      %v1701 = vadd.f32 %v1636, %v1659
      %v1702 = vadd.f32 %v1637, %v1659
      %v1703 = vadd.f32 %v1638, %v1659
      %v1704 = vadd.f32 %v1639, %v1659
      %v1705 = vadd.f32 %v1640, %v1659
      %v1706 = vadd.f32 %v1641, %v1659
      %v1707 = vadd.f32 %v1642, %v1659
      %v1708 = vadd.f32 %v1643, %v1659
      %v1709 = vadd.f32 %v1644, %v1659
      %v1710 = vadd.f32 %v1645, %v1659
      %v1711 = vadd.f32 %v1646, %v1659
      %v1712 = vadd.f32 %v1647, %v1659
      %v1713 = vadd.f32 %v1648, %v1659
      %v1714 = vadd.f32 %v1649, %v1659
      %v1715 = vadd.f32 %v1650, %v1659
      %v1716 = vadd.f32 %v1651, %v1659
      %v1717 = vadd.f32 %v1652, %v1659
      %v1718 = vadd.f32 %v1653, %v1659
      %v1719 = vadd.f32 %v1654, %v1659
      %v1720 = vadd.f32 %v1655, %v1659
      %v1721 = vadd.f32 %v1656, %v1659
      %v1722 = vadd.f32 %v1657, %v1659
      %v1723 = vadd.f32 %v1658, %v1659
      %v1724 = vmax.f32 %v1660, 0.0
      %v1725 = vmax.f32 %v1661, 0.0
      %v1726 = vmax.f32 %v1662, 0.0
      %v1727 = vmax.f32 %v1663, 0.0
      %v1728 = vmax.f32 %v1664, 0.0
      %v1729 = vmax.f32 %v1665, 0.0
      %v1730 = vmax.f32 %v1666, 0.0
      %v1731 = vmax.f32 %v1667, 0.0
      %v1732 = vmax.f32 %v1668, 0.0
      %v1733 = vmax.f32 %v1669, 0.0
      %v1734 = vmax.f32 %v1670, 0.0
      %v1735 = vmax.f32 %v1671, 0.0
      %v1736 = vmax.f32 %v1672, 0.0
      %v1737 = vmax.f32 %v1673, 0.0
      %v1738 = vmax.f32 %v1674, 0.0
      %v1739 = vmax.f32 %v1675, 0.0
      %v1740 = vmax.f32 %v1676, 0.0
      %v1741 = vmax.f32 %v1677, 0.0
      %v1742 = vmax.f32 %v1678, 0.0
      %v1743 = vmax.f32 %v1679, 0.0
      %v1744 = vmax.f32 %v1680, 0.0
      %v1745 = vmax.f32 %v1681, 0.0
      %v1746 = vmax.f32 %v1682, 0.0
      %v1747 = vmax.f32 %v1683, 0.0
      %v1748 = vmax.f32 %v1684, 0.0
      %v1749 = vmax.f32 %v1685, 0.0
      %v1750 = vmax.f32 %v1686, 0.0
      %v1751 = vmax.f32 %v1687, 0.0
      %v1752 = vmax.f32 %v1688, 0.0
      %v1753 = vmax.f32 %v1689, 0.0
      %v1754 = vmax.f32 %v1690, 0.0
      %v1755 = vmax.f32 %v1691, 0.0
      %v1756 = vmax.f32 %v1692, 0.0
      %v1757 = vmax.f32 %v1693, 0.0
      %v1758 = vmax.f32 %v1694, 0.0
      %v1759 = vmax.f32 %v1695, 0.0
      %v1760 = vmax.f32 %v1696, 0.0
      %v1761 = vmax.f32 %v1697, 0.0
      %v1762 = vmax.f32 %v1698, 0.0
      %v1763 = vmax.f32 %v1699, 0.0
      %v1764 = vmax.f32 %v1700, 0.0
      %v1765 = vmax.f32 %v1701, 0.0
      %v1766 = vmax.f32 %v1702, 0.0
      %v1767 = vmax.f32 %v1703, 0.0
      %v1768 = vmax.f32 %v1704, 0.0
      %v1769 = vmax.f32 %v1705, 0.0
      %v1770 = vmax.f32 %v1706, 0.0
      %v1771 = vmax.f32 %v1707, 0.0
      %v1772 = vmax.f32 %v1708, 0.0
      %v1773 = vmax.f32 %v1709, 0.0
      %v1774 = vmax.f32 %v1710, 0.0
      %v1775 = vmax.f32 %v1711, 0.0
      %v1776 = vmax.f32 %v1712, 0.0
      %v1777 = vmax.f32 %v1713, 0.0
      %v1778 = vmax.f32 %v1714, 0.0
      %v1779 = vmax.f32 %v1715, 0.0
      %v1780 = vmax.f32 %v1716, 0.0
      %v1781 = vmax.f32 %v1717, 0.0
      %v1782 = vmax.f32 %v1718, 0.0
      %v1783 = vmax.f32 %v1719, 0.0
      %v1784 = vmax.f32 %v1720, 0.0
      %v1785 = vmax.f32 %v1721, 0.0
      %v1786 = vmax.f32 %v1722, 0.0
      %v1787 = vmax.f32 %v1723, 0.0
      %v1788 = vpack.c.bf16 %v1724, %v1724
      %v1789 = vpack.c.bf16 %v1725, %v1725
      %v1790 = vpack.c.bf16 %v1726, %v1726
      %v1791 = vpack.c.bf16 %v1727, %v1727
      %v1792 = vpack.c.bf16 %v1728, %v1728
      %v1793 = vpack.c.bf16 %v1729, %v1729
      %v1794 = vpack.c.bf16 %v1730, %v1730
      %v1795 = vpack.c.bf16 %v1731, %v1731
      %v1796 = vpack.c.bf16 %v1732, %v1732
      %v1797 = vpack.c.bf16 %v1733, %v1733
      %v1798 = vpack.c.bf16 %v1734, %v1734
      %v1799 = vpack.c.bf16 %v1735, %v1735
      %v1800 = vpack.c.bf16 %v1736, %v1736
      %v1801 = vpack.c.bf16 %v1737, %v1737
      %v1802 = vpack.c.bf16 %v1738, %v1738
      %v1803 = vpack.c.bf16 %v1739, %v1739
      %v1804 = vpack.c.bf16 %v1740, %v1740
      %v1805 = vpack.c.bf16 %v1741, %v1741
      %v1806 = vpack.c.bf16 %v1742, %v1742
      %v1807 = vpack.c.bf16 %v1743, %v1743
      %v1808 = vpack.c.bf16 %v1744, %v1744
      %v1809 = vpack.c.bf16 %v1745, %v1745
      %v1810 = vpack.c.bf16 %v1746, %v1746
      %v1811 = vpack.c.bf16 %v1747, %v1747
      %v1812 = vpack.c.bf16 %v1748, %v1748
      %v1813 = vpack.c.bf16 %v1749, %v1749
      %v1814 = vpack.c.bf16 %v1750, %v1750
      %v1815 = vpack.c.bf16 %v1751, %v1751
      %v1816 = vpack.c.bf16 %v1752, %v1752
      %v1817 = vpack.c.bf16 %v1753, %v1753
      %v1818 = vpack.c.bf16 %v1754, %v1754
      %v1819 = vpack.c.bf16 %v1755, %v1755
      %v1820 = vpack.c.bf16 %v1756, %v1756
      %v1821 = vpack.c.bf16 %v1757, %v1757
      %v1822 = vpack.c.bf16 %v1758, %v1758
      %v1823 = vpack.c.bf16 %v1759, %v1759
      %v1824 = vpack.c.bf16 %v1760, %v1760
      %v1825 = vpack.c.bf16 %v1761, %v1761
      %v1826 = vpack.c.bf16 %v1762, %v1762
      %v1827 = vpack.c.bf16 %v1763, %v1763
      %v1828 = vpack.c.bf16 %v1764, %v1764
      %v1829 = vpack.c.bf16 %v1765, %v1765
      %v1830 = vpack.c.bf16 %v1766, %v1766
      %v1831 = vpack.c.bf16 %v1767, %v1767
      %v1832 = vpack.c.bf16 %v1768, %v1768
      %v1833 = vpack.c.bf16 %v1769, %v1769
      %v1834 = vpack.c.bf16 %v1770, %v1770
      %v1835 = vpack.c.bf16 %v1771, %v1771
      %v1836 = vpack.c.bf16 %v1772, %v1772
      %v1837 = vpack.c.bf16 %v1773, %v1773
      %v1838 = vpack.c.bf16 %v1774, %v1774
      %v1839 = vpack.c.bf16 %v1775, %v1775
      %v1840 = vpack.c.bf16 %v1776, %v1776
      %v1841 = vpack.c.bf16 %v1777, %v1777
      %v1842 = vpack.c.bf16 %v1778, %v1778
      %v1843 = vpack.c.bf16 %v1779, %v1779
      %v1844 = vpack.c.bf16 %v1780, %v1780
      %v1845 = vpack.c.bf16 %v1781, %v1781
      %v1846 = vpack.c.bf16 %v1782, %v1782
      %v1847 = vpack.c.bf16 %v1783, %v1783
      %v1848 = vpack.c.bf16 %v1784, %v1784
      %v1849 = vpack.c.bf16 %v1785, %v1785
      %v1850 = vpack.c.bf16 %v1786, %v1786
      %v1851 = vpack.c.bf16 %v1787, %v1787
      %1852 = vst.msk [vmem:[%s4] sm:$0xf] %vm981, %v1788
      %1853 = vst.msk [vmem:[%s4 + $0x4] sm:$0xf] %vm981, %v1789
      %1854 = vst.msk [vmem:[%s4 + $0x8] sm:$0xf] %vm981, %v1790
      %1855 = vst.msk [vmem:[%s4 + $0xc] sm:$0xf] %vm981, %v1791
      %1856 = vst.msk [vmem:[%s4 + $0x10] sm:$0xf] %vm981, %v1792
      %1857 = vst.msk [vmem:[%s4 + $0x14] sm:$0xf] %vm981, %v1793
      %1858 = vst.msk [vmem:[%s4 + $0x18] sm:$0xf] %vm981, %v1794
      %1859 = vst.msk [vmem:[%s4 + $0x1c] sm:$0xf] %vm981, %v1795
      %1860 = vst.msk [vmem:[%s4 + $0x20] sm:$0xf] %vm981, %v1796
      %1861 = vst.msk [vmem:[%s4 + $0x24] sm:$0xf] %vm981, %v1797
      %1862 = vst.msk [vmem:[%s4 + $0x28] sm:$0xf] %vm981, %v1798
      %1863 = vst.msk [vmem:[%s4 + $0x2c] sm:$0xf] %vm981, %v1799
      %1864 = vst.msk [vmem:[%s4 + $0x30] sm:$0xf] %vm981, %v1800
      %1865 = vst.msk [vmem:[%s4 + $0x34] sm:$0xf] %vm981, %v1801
      %1866 = vst.msk [vmem:[%s4 + $0x38] sm:$0xf] %vm981, %v1802
      %1867 = vst.msk [vmem:[%s4 + $0x3c] sm:$0xf] %vm981, %v1803
      %1868 = vst.msk [vmem:[%s4 + $0x40] sm:$0xf] %vm981, %v1804
      %1869 = vst.msk [vmem:[%s4 + $0x44] sm:$0xf] %vm981, %v1805
      %1870 = vst.msk [vmem:[%s4 + $0x48] sm:$0xf] %vm981, %v1806
      %1871 = vst.msk [vmem:[%s4 + $0x4c] sm:$0xf] %vm981, %v1807
      %1872 = vst.msk [vmem:[%s4 + $0x50] sm:$0xf] %vm981, %v1808
      %1873 = vst.msk [vmem:[%s4 + $0x54] sm:$0xf] %vm981, %v1809
      %1874 = vst.msk [vmem:[%s4 + $0x58] sm:$0xf] %vm981, %v1810
      %1875 = vst.msk [vmem:[%s4 + $0x5c] sm:$0xf] %vm981, %v1811
      %1876 = vst.msk [vmem:[%s4 + $0x60] sm:$0xf] %vm981, %v1812
      %1877 = vst.msk [vmem:[%s4 + $0x64] sm:$0xf] %vm981, %v1813
      %1878 = vst.msk [vmem:[%s4 + $0x68] sm:$0xf] %vm981, %v1814
      %1879 = vst.msk [vmem:[%s4 + $0x6c] sm:$0xf] %vm981, %v1815
      %1880 = vst.msk [vmem:[%s4 + $0x70] sm:$0xf] %vm981, %v1816
      %1881 = vst.msk [vmem:[%s4 + $0x74] sm:$0xf] %vm981, %v1817
      %1882 = vst.msk [vmem:[%s4 + $0x78] sm:$0xf] %vm981, %v1818
      %1883 = vst.msk [vmem:[%s4 + $0x7c] sm:$0xf] %vm981, %v1819
      %1884 = vst.msk [vmem:[%s4 + $0x80] sm:$0xf] %vm981, %v1820
      %1885 = vst.msk [vmem:[%s4 + $0x84] sm:$0xf] %vm981, %v1821
      %1886 = vst.msk [vmem:[%s4 + $0x88] sm:$0xf] %vm981, %v1822
      %1887 = vst.msk [vmem:[%s4 + $0x8c] sm:$0xf] %vm981, %v1823
      %1888 = vst.msk [vmem:[%s4 + $0x90] sm:$0xf] %vm981, %v1824
      %1889 = vst.msk [vmem:[%s4 + $0x94] sm:$0xf] %vm981, %v1825
      %1890 = vst.msk [vmem:[%s4 + $0x98] sm:$0xf] %vm981, %v1826
      %1891 = vst.msk [vmem:[%s4 + $0x9c] sm:$0xf] %vm981, %v1827
      %1892 = vst.msk [vmem:[%s4 + $0xa0] sm:$0xf] %vm981, %v1828
      %1893 = vst.msk [vmem:[%s4 + $0xa4] sm:$0xf] %vm981, %v1829
      %1894 = vst.msk [vmem:[%s4 + $0xa8] sm:$0xf] %vm981, %v1830
      %1895 = vst.msk [vmem:[%s4 + $0xac] sm:$0xf] %vm981, %v1831
      %1896 = vst.msk [vmem:[%s4 + $0xb0] sm:$0xf] %vm981, %v1832
      %1897 = vst.msk [vmem:[%s4 + $0xb4] sm:$0xf] %vm981, %v1833
      %1898 = vst.msk [vmem:[%s4 + $0xb8] sm:$0xf] %vm981, %v1834
      %1899 = vst.msk [vmem:[%s4 + $0xbc] sm:$0xf] %vm981, %v1835
      %1900 = vst.msk [vmem:[%s4 + $0xc0] sm:$0xf] %vm981, %v1836
      %1901 = vst.msk [vmem:[%s4 + $0xc4] sm:$0xf] %vm981, %v1837
      %1902 = vst.msk [vmem:[%s4 + $0xc8] sm:$0xf] %vm981, %v1838
      %1903 = vst.msk [vmem:[%s4 + $0xcc] sm:$0xf] %vm981, %v1839
      %1904 = vst.msk [vmem:[%s4 + $0xd0] sm:$0xf] %vm981, %v1840
      %1905 = vst.msk [vmem:[%s4 + $0xd4] sm:$0xf] %vm981, %v1841
      %1906 = vst.msk [vmem:[%s4 + $0xd8] sm:$0xf] %vm981, %v1842
      %1907 = vst.msk [vmem:[%s4 + $0xdc] sm:$0xf] %vm981, %v1843
      %1908 = vst.msk [vmem:[%s4 + $0xe0] sm:$0xf] %vm981, %v1844
      %1909 = vst.msk [vmem:[%s4 + $0xe4] sm:$0xf] %vm981, %v1845
      %1910 = vst.msk [vmem:[%s4 + $0xe8] sm:$0xf] %vm981, %v1846
      %1911 = vst.msk [vmem:[%s4 + $0xec] sm:$0xf] %vm981, %v1847
      %1912 = vst.msk [vmem:[%s4 + $0xf0] sm:$0xf] %vm981, %v1848
      %1913 = vst.msk [vmem:[%s4 + $0xf4] sm:$0xf] %vm981, %v1849
      %1914 = vst.msk [vmem:[%s4 + $0xf8] sm:$0xf] %vm981, %v1850
      %1915 = vst.msk [vmem:[%s4 + $0xfc] sm:$0xf] %vm981, %v1851
    $region33: #{netg_forward.8} parent=1 // pred_fallthru
      _
    // Predicated region
    $region34: #{netg_forward.8} parent=1 // pred_check
      _
    $region35: #{netg_forward.8} parent=1 // pred_check_branch
      %1917 = sbr.rel (0) target = $region37
    $region36: #{netg_forward.8} parent=1 // pred_region
      _
    $region37: #{netg_forward.8} parent=1 // pred_fallthru
      _
    // Predicated region
    $region38: #{netg_forward.8} parent=1 // pred_check
      _
    $region39: #{netg_forward.8} parent=1 // pred_check_branch
      %1919 = sbr.rel (0) target = $region41
    $region40: #{netg_forward.8} parent=1 // pred_region
      _
    $region41: #{netg_forward.8} parent=1 // pred_fallthru
      _
    %1920 = vsyncpa [#allocation5], 1
    %1921 = vsyncpa [#allocation7], 1

// kernel: netg_forward.9
$region0: #{netg_forward.9}
  #allocation0 [shape = 'u32[]', space=smem, size = 0x4, offset = 0x4, fixed_abs, tag = 'smem constant byte address 0x4 - core index']
  #allocation1 [shape = 'u32[72,128]{1,0:T(1,128)}', space=vmem, size = 0x9000, scoped, tag = 'internal scratch']
  %s0 = inlined_call_operand.vmem [shape: bf16[2048,72], index: 0, kind: input, shape index: {}]
  %s1 = inlined_call_operand.vmem [shape: bf16[72,12], index: 1, kind: input, shape index: {}]
  %s2 = inlined_call_operand.vmem [shape: f32[2048,12], index: 2, kind: output, shape index: {}]
  %s3 = sld [smem:[#allocation0]]
  $region18: #{netg_forward.9} parent=0
    _
  %s5 = ssub.s32 1, %s3
  %s6 = scalar_select 0, %s5, %s3
  // Predicated region
  $region2: #{netg_forward.9} parent=0 // pred_check
    _
  $region3: #{netg_forward.9} parent=0 // pred_check_branch
    %8 = sbr.rel (0) target = $region5
  $region4: #{netg_forward.9} parent=0 // pred_region
    _
  $region5: #{netg_forward.9} parent=0 // pred_fallthru
    _
  // Predicated region
  $region6: #{netg_forward.9} parent=0 // pred_check
    _
  $region7: #{netg_forward.9} parent=0 // pred_check_branch
    %10 = sbr.rel (0) target = $region9
  $region8: #{netg_forward.9} parent=0 // pred_region
    _
  $region9: #{netg_forward.9} parent=0 // pred_fallthru
    _
  %v12 = vld [vmem:[%s0] sm:$0xf]
  %v13 = vld [vmem:[%s0 + $0x4] sm:$0xf]
  %v14 = vld [vmem:[%s0 + $0x8] sm:$0xf]
  %v15 = vld [vmem:[%s0 + $0xc] sm:$0xf]
  %v16 = vld [vmem:[%s0 + $0x10] sm:$0xf]
  %v17 = vld [vmem:[%s0 + $0x14] sm:$0xf]
  %v18 = vld [vmem:[%s0 + $0x18] sm:$0xf]
  %v19 = vld [vmem:[%s0 + $0x1c] sm:$0xf]
  %v20 = vld [vmem:[%s0 + $0x20] sm:$0xf]
  %v21 = vld [vmem:[%s0 + $0x24] sm:$0xf]
  %v22 = vld [vmem:[%s0 + $0x28] sm:$0xf]
  %v23 = vld [vmem:[%s0 + $0x2c] sm:$0xf]
  %v24 = vld [vmem:[%s0 + $0x30] sm:$0xf]
  %v25 = vld [vmem:[%s0 + $0x34] sm:$0xf]
  %v26 = vld [vmem:[%s0 + $0x38] sm:$0xf]
  %v27 = vld [vmem:[%s0 + $0x3c] sm:$0xf]
  %v28 = vld [vmem:[%s0 + $0x40] sm:$0xf]
  %v29 = vld [vmem:[%s0 + $0x44] sm:$0xf]
  %v30 = vld [vmem:[%s0 + $0x48] sm:$0xf]
  %v31 = vld [vmem:[%s0 + $0x4c] sm:$0xf]
  %v32 = vld [vmem:[%s0 + $0x50] sm:$0xf]
  %v33 = vld [vmem:[%s0 + $0x54] sm:$0xf]
  %v34 = vld [vmem:[%s0 + $0x58] sm:$0xf]
  %v35 = vld [vmem:[%s0 + $0x5c] sm:$0xf]
  %v36 = vld [vmem:[%s0 + $0x60] sm:$0xf]
  %v37 = vld [vmem:[%s0 + $0x64] sm:$0xf]
  %v38 = vld [vmem:[%s0 + $0x68] sm:$0xf]
  %v39 = vld [vmem:[%s0 + $0x6c] sm:$0xf]
  %v40 = vld [vmem:[%s0 + $0x70] sm:$0xf]
  %v41 = vld [vmem:[%s0 + $0x74] sm:$0xf]
  %v42 = vld [vmem:[%s0 + $0x78] sm:$0xf]
  %v43 = vld [vmem:[%s0 + $0x7c] sm:$0xf]
  %v44 = vld [vmem:[%s0 + $0x80] sm:$0xf]
  %v45 = vld [vmem:[%s0 + $0x84] sm:$0xf]
  %v46 = vld [vmem:[%s0 + $0x88] sm:$0xf]
  %v47 = vld [vmem:[%s0 + $0x8c] sm:$0xf]
  %v48 = vld [vmem:[%s0 + $0x90] sm:$0xf]
  %v49 = vld [vmem:[%s0 + $0x94] sm:$0xf]
  %v50 = vld [vmem:[%s0 + $0x98] sm:$0xf]
  %v51 = vld [vmem:[%s0 + $0x9c] sm:$0xf]
  %v52 = vld [vmem:[%s0 + $0xa0] sm:$0xf]
  %v53 = vld [vmem:[%s0 + $0xa4] sm:$0xf]
  %v54 = vld [vmem:[%s0 + $0xa8] sm:$0xf]
  %v55 = vld [vmem:[%s0 + $0xac] sm:$0xf]
  %v56 = vld [vmem:[%s0 + $0xb0] sm:$0xf]
  %v57 = vld [vmem:[%s0 + $0xb4] sm:$0xf]
  %v58 = vld [vmem:[%s0 + $0xb8] sm:$0xf]
  %v59 = vld [vmem:[%s0 + $0xbc] sm:$0xf]
  %v60 = vld [vmem:[%s0 + $0xc0] sm:$0xf]
  %v61 = vld [vmem:[%s0 + $0xc4] sm:$0xf]
  %v62 = vld [vmem:[%s0 + $0xc8] sm:$0xf]
  %v63 = vld [vmem:[%s0 + $0xcc] sm:$0xf]
  %v64 = vld [vmem:[%s0 + $0xd0] sm:$0xf]
  %v65 = vld [vmem:[%s0 + $0xd4] sm:$0xf]
  %v66 = vld [vmem:[%s0 + $0xd8] sm:$0xf]
  %v67 = vld [vmem:[%s0 + $0xdc] sm:$0xf]
  %v68 = vld [vmem:[%s0 + $0xe0] sm:$0xf]
  %v69 = vld [vmem:[%s0 + $0xe4] sm:$0xf]
  %v70 = vld [vmem:[%s0 + $0xe8] sm:$0xf]
  %v71 = vld [vmem:[%s0 + $0xec] sm:$0xf]
  %v72 = vld [vmem:[%s0 + $0xf0] sm:$0xf]
  %v73 = vld [vmem:[%s0 + $0xf4] sm:$0xf]
  %v74 = vld [vmem:[%s0 + $0xf8] sm:$0xf]
  %v75 = vld [vmem:[%s0 + $0xfc] sm:$0xf]
  %v76 = vld [vmem:[%s0 + $0x100] sm:$0xf]
  %v77 = vld [vmem:[%s0 + $0x104] sm:$0xf]
  %v78 = vld [vmem:[%s0 + $0x108] sm:$0xf]
  %v79 = vld [vmem:[%s0 + $0x10c] sm:$0xf]
  %v80 = vld [vmem:[%s0 + $0x110] sm:$0xf]
  %v81 = vld [vmem:[%s0 + $0x114] sm:$0xf]
  %v82 = vld [vmem:[%s0 + $0x118] sm:$0xf]
  %v83 = vld [vmem:[%s0 + $0x11c] sm:$0xf]
  %v84 = vld [vmem:[%s0 + $0x120] sm:$0xf]
  %v85 = vld [vmem:[%s0 + $0x124] sm:$0xf]
  %v86 = vld [vmem:[%s0 + $0x128] sm:$0xf]
  %v87 = vld [vmem:[%s0 + $0x12c] sm:$0xf]
  %v88 = vld [vmem:[%s0 + $0x130] sm:$0xf]
  %v89 = vld [vmem:[%s0 + $0x134] sm:$0xf]
  %v90 = vld [vmem:[%s0 + $0x138] sm:$0xf]
  %v91 = vld [vmem:[%s0 + $0x13c] sm:$0xf]
  %v92 = vld [vmem:[%s0 + $0x140] sm:$0xf]
  %v93 = vld [vmem:[%s0 + $0x144] sm:$0xf]
  %v94 = vld [vmem:[%s0 + $0x148] sm:$0xf]
  %v95 = vld [vmem:[%s0 + $0x14c] sm:$0xf]
  %v96 = vld [vmem:[%s0 + $0x150] sm:$0xf]
  %v97 = vld [vmem:[%s0 + $0x154] sm:$0xf]
  %v98 = vld [vmem:[%s0 + $0x158] sm:$0xf]
  %v99 = vld [vmem:[%s0 + $0x15c] sm:$0xf]
  %v100 = vld [vmem:[%s0 + $0x160] sm:$0xf]
  %v101 = vld [vmem:[%s0 + $0x164] sm:$0xf]
  %v102 = vld [vmem:[%s0 + $0x168] sm:$0xf]
  %v103 = vld [vmem:[%s0 + $0x16c] sm:$0xf]
  %v104 = vld [vmem:[%s0 + $0x170] sm:$0xf]
  %v105 = vld [vmem:[%s0 + $0x174] sm:$0xf]
  %v106 = vld [vmem:[%s0 + $0x178] sm:$0xf]
  %v107 = vld [vmem:[%s0 + $0x17c] sm:$0xf]
  %v108 = vld [vmem:[%s0 + $0x180] sm:$0xf]
  %v109 = vld [vmem:[%s0 + $0x184] sm:$0xf]
  %v110 = vld [vmem:[%s0 + $0x188] sm:$0xf]
  %v111 = vld [vmem:[%s0 + $0x18c] sm:$0xf]
  %v112 = vld [vmem:[%s0 + $0x190] sm:$0xf]
  %v113 = vld [vmem:[%s0 + $0x194] sm:$0xf]
  %v114 = vld [vmem:[%s0 + $0x198] sm:$0xf]
  %v115 = vld [vmem:[%s0 + $0x19c] sm:$0xf]
  %v116 = vld [vmem:[%s0 + $0x1a0] sm:$0xf]
  %v117 = vld [vmem:[%s0 + $0x1a4] sm:$0xf]
  %v118 = vld [vmem:[%s0 + $0x1a8] sm:$0xf]
  %v119 = vld [vmem:[%s0 + $0x1ac] sm:$0xf]
  %v120 = vld [vmem:[%s0 + $0x1b0] sm:$0xf]
  %v121 = vld [vmem:[%s0 + $0x1b4] sm:$0xf]
  %v122 = vld [vmem:[%s0 + $0x1b8] sm:$0xf]
  %v123 = vld [vmem:[%s0 + $0x1bc] sm:$0xf]
  %v124 = vld [vmem:[%s0 + $0x1c0] sm:$0xf]
  %v125 = vld [vmem:[%s0 + $0x1c4] sm:$0xf]
  %v126 = vld [vmem:[%s0 + $0x1c8] sm:$0xf]
  %v127 = vld [vmem:[%s0 + $0x1cc] sm:$0xf]
  %v128 = vld [vmem:[%s0 + $0x1d0] sm:$0xf]
  %v129 = vld [vmem:[%s0 + $0x1d4] sm:$0xf]
  %v130 = vld [vmem:[%s0 + $0x1d8] sm:$0xf]
  %v131 = vld [vmem:[%s0 + $0x1dc] sm:$0xf]
  %v132 = vld [vmem:[%s0 + $0x1e0] sm:$0xf]
  %v133 = vld [vmem:[%s0 + $0x1e4] sm:$0xf]
  %v134 = vld [vmem:[%s0 + $0x1e8] sm:$0xf]
  %v135 = vld [vmem:[%s0 + $0x1ec] sm:$0xf]
  %v136 = vld [vmem:[%s0 + $0x1f0] sm:$0xf]
  %v137 = vld [vmem:[%s0 + $0x1f4] sm:$0xf]
  %v138 = vld [vmem:[%s0 + $0x1f8] sm:$0xf]
  %v139 = vld [vmem:[%s0 + $0x1fc] sm:$0xf]
  %v140 = vld [vmem:[%s0 + $0x200] sm:$0xf]
  %v141 = vld [vmem:[%s0 + $0x204] sm:$0xf]
  %v142 = vld [vmem:[%s0 + $0x208] sm:$0xf]
  %v143 = vld [vmem:[%s0 + $0x20c] sm:$0xf]
  %v144 = vld [vmem:[%s0 + $0x210] sm:$0xf]
  %v145 = vld [vmem:[%s0 + $0x214] sm:$0xf]
  %v146 = vld [vmem:[%s0 + $0x218] sm:$0xf]
  %v147 = vld [vmem:[%s0 + $0x21c] sm:$0xf]
  %v148 = vld [vmem:[%s0 + $0x220] sm:$0xf]
  %v149 = vld [vmem:[%s0 + $0x224] sm:$0xf]
  %v150 = vld [vmem:[%s0 + $0x228] sm:$0xf]
  %v151 = vld [vmem:[%s0 + $0x22c] sm:$0xf]
  %v152 = vld [vmem:[%s0 + $0x230] sm:$0xf]
  %v153 = vld [vmem:[%s0 + $0x234] sm:$0xf]
  %v154 = vld [vmem:[%s0 + $0x238] sm:$0xf]
  %v155 = vld [vmem:[%s0 + $0x23c] sm:$0xf]
  %v156 = vld [vmem:[%s0 + $0x240] sm:$0xf]
  %v157 = vld [vmem:[%s0 + $0x244] sm:$0xf]
  %v158 = vld [vmem:[%s0 + $0x248] sm:$0xf]
  %v159 = vld [vmem:[%s0 + $0x24c] sm:$0xf]
  %v160 = vld [vmem:[%s0 + $0x250] sm:$0xf]
  %v161 = vld [vmem:[%s0 + $0x254] sm:$0xf]
  %v162 = vld [vmem:[%s0 + $0x258] sm:$0xf]
  %v163 = vld [vmem:[%s0 + $0x25c] sm:$0xf]
  %v164 = vld [vmem:[%s0 + $0x260] sm:$0xf]
  %v165 = vld [vmem:[%s0 + $0x264] sm:$0xf]
  %v166 = vld [vmem:[%s0 + $0x268] sm:$0xf]
  %v167 = vld [vmem:[%s0 + $0x26c] sm:$0xf]
  %v168 = vld [vmem:[%s0 + $0x270] sm:$0xf]
  %v169 = vld [vmem:[%s0 + $0x274] sm:$0xf]
  %v170 = vld [vmem:[%s0 + $0x278] sm:$0xf]
  %v171 = vld [vmem:[%s0 + $0x27c] sm:$0xf]
  %v172 = vld [vmem:[%s0 + $0x280] sm:$0xf]
  %v173 = vld [vmem:[%s0 + $0x284] sm:$0xf]
  %v174 = vld [vmem:[%s0 + $0x288] sm:$0xf]
  %v175 = vld [vmem:[%s0 + $0x28c] sm:$0xf]
  %v176 = vld [vmem:[%s0 + $0x290] sm:$0xf]
  %v177 = vld [vmem:[%s0 + $0x294] sm:$0xf]
  %v178 = vld [vmem:[%s0 + $0x298] sm:$0xf]
  %v179 = vld [vmem:[%s0 + $0x29c] sm:$0xf]
  %v180 = vld [vmem:[%s0 + $0x2a0] sm:$0xf]
  %v181 = vld [vmem:[%s0 + $0x2a4] sm:$0xf]
  %v182 = vld [vmem:[%s0 + $0x2a8] sm:$0xf]
  %v183 = vld [vmem:[%s0 + $0x2ac] sm:$0xf]
  %v184 = vld [vmem:[%s0 + $0x2b0] sm:$0xf]
  %v185 = vld [vmem:[%s0 + $0x2b4] sm:$0xf]
  %v186 = vld [vmem:[%s0 + $0x2b8] sm:$0xf]
  %v187 = vld [vmem:[%s0 + $0x2bc] sm:$0xf]
  %v188 = vld [vmem:[%s0 + $0x2c0] sm:$0xf]
  %v189 = vld [vmem:[%s0 + $0x2c4] sm:$0xf]
  %v190 = vld [vmem:[%s0 + $0x2c8] sm:$0xf]
  %v191 = vld [vmem:[%s0 + $0x2cc] sm:$0xf]
  %v192 = vld [vmem:[%s0 + $0x2d0] sm:$0xf]
  %v193 = vld [vmem:[%s0 + $0x2d4] sm:$0xf]
  %v194 = vld [vmem:[%s0 + $0x2d8] sm:$0xf]
  %v195 = vld [vmem:[%s0 + $0x2dc] sm:$0xf]
  %v196 = vld [vmem:[%s0 + $0x2e0] sm:$0xf]
  %v197 = vld [vmem:[%s0 + $0x2e4] sm:$0xf]
  %v198 = vld [vmem:[%s0 + $0x2e8] sm:$0xf]
  %v199 = vld [vmem:[%s0 + $0x2ec] sm:$0xf]
  %v200 = vld [vmem:[%s0 + $0x2f0] sm:$0xf]
  %v201 = vld [vmem:[%s0 + $0x2f4] sm:$0xf]
  %v202 = vld [vmem:[%s0 + $0x2f8] sm:$0xf]
  %v203 = vld [vmem:[%s0 + $0x2fc] sm:$0xf]
  %v204 = vld [vmem:[%s0 + $0x300] sm:$0xf]
  %v205 = vld [vmem:[%s0 + $0x304] sm:$0xf]
  %v206 = vld [vmem:[%s0 + $0x308] sm:$0xf]
  %v207 = vld [vmem:[%s0 + $0x30c] sm:$0xf]
  %v208 = vld [vmem:[%s0 + $0x310] sm:$0xf]
  %v209 = vld [vmem:[%s0 + $0x314] sm:$0xf]
  %v210 = vld [vmem:[%s0 + $0x318] sm:$0xf]
  %v211 = vld [vmem:[%s0 + $0x31c] sm:$0xf]
  %v212 = vld [vmem:[%s0 + $0x320] sm:$0xf]
  %v213 = vld [vmem:[%s0 + $0x324] sm:$0xf]
  %v214 = vld [vmem:[%s0 + $0x328] sm:$0xf]
  %v215 = vld [vmem:[%s0 + $0x32c] sm:$0xf]
  %v216 = vld [vmem:[%s0 + $0x330] sm:$0xf]
  %v217 = vld [vmem:[%s0 + $0x334] sm:$0xf]
  %v218 = vld [vmem:[%s0 + $0x338] sm:$0xf]
  %v219 = vld [vmem:[%s0 + $0x33c] sm:$0xf]
  %v220 = vld [vmem:[%s0 + $0x340] sm:$0xf]
  %v221 = vld [vmem:[%s0 + $0x344] sm:$0xf]
  %v222 = vld [vmem:[%s0 + $0x348] sm:$0xf]
  %v223 = vld [vmem:[%s0 + $0x34c] sm:$0xf]
  %v224 = vld [vmem:[%s0 + $0x350] sm:$0xf]
  %v225 = vld [vmem:[%s0 + $0x354] sm:$0xf]
  %v226 = vld [vmem:[%s0 + $0x358] sm:$0xf]
  %v227 = vld [vmem:[%s0 + $0x35c] sm:$0xf]
  %v228 = vld [vmem:[%s0 + $0x360] sm:$0xf]
  %v229 = vld [vmem:[%s0 + $0x364] sm:$0xf]
  %v230 = vld [vmem:[%s0 + $0x368] sm:$0xf]
  %v231 = vld [vmem:[%s0 + $0x36c] sm:$0xf]
  %v232 = vld [vmem:[%s0 + $0x370] sm:$0xf]
  %v233 = vld [vmem:[%s0 + $0x374] sm:$0xf]
  %v234 = vld [vmem:[%s0 + $0x378] sm:$0xf]
  %v235 = vld [vmem:[%s0 + $0x37c] sm:$0xf]
  %v236 = vld [vmem:[%s0 + $0x380] sm:$0xf]
  %v237 = vld [vmem:[%s0 + $0x384] sm:$0xf]
  %v238 = vld [vmem:[%s0 + $0x388] sm:$0xf]
  %v239 = vld [vmem:[%s0 + $0x38c] sm:$0xf]
  %v240 = vld [vmem:[%s0 + $0x390] sm:$0xf]
  %v241 = vld [vmem:[%s0 + $0x394] sm:$0xf]
  %v242 = vld [vmem:[%s0 + $0x398] sm:$0xf]
  %v243 = vld [vmem:[%s0 + $0x39c] sm:$0xf]
  %v244 = vld [vmem:[%s0 + $0x3a0] sm:$0xf]
  %v245 = vld [vmem:[%s0 + $0x3a4] sm:$0xf]
  %v246 = vld [vmem:[%s0 + $0x3a8] sm:$0xf]
  %v247 = vld [vmem:[%s0 + $0x3ac] sm:$0xf]
  %v248 = vld [vmem:[%s0 + $0x3b0] sm:$0xf]
  %v249 = vld [vmem:[%s0 + $0x3b4] sm:$0xf]
  %v250 = vld [vmem:[%s0 + $0x3b8] sm:$0xf]
  %v251 = vld [vmem:[%s0 + $0x3bc] sm:$0xf]
  %v252 = vld [vmem:[%s0 + $0x3c0] sm:$0xf]
  %v253 = vld [vmem:[%s0 + $0x3c4] sm:$0xf]
  %v254 = vld [vmem:[%s0 + $0x3c8] sm:$0xf]
  %v255 = vld [vmem:[%s0 + $0x3cc] sm:$0xf]
  %v256 = vld [vmem:[%s0 + $0x3d0] sm:$0xf]
  %v257 = vld [vmem:[%s0 + $0x3d4] sm:$0xf]
  %v258 = vld [vmem:[%s0 + $0x3d8] sm:$0xf]
  %v259 = vld [vmem:[%s0 + $0x3dc] sm:$0xf]
  %v260 = vld [vmem:[%s0 + $0x3e0] sm:$0xf]
  %v261 = vld [vmem:[%s0 + $0x3e4] sm:$0xf]
  %v262 = vld [vmem:[%s0 + $0x3e8] sm:$0xf]
  %v263 = vld [vmem:[%s0 + $0x3ec] sm:$0xf]
  %v264 = vld [vmem:[%s0 + $0x3f0] sm:$0xf]
  %v265 = vld [vmem:[%s0 + $0x3f4] sm:$0xf]
  %v266 = vld [vmem:[%s0 + $0x3f8] sm:$0xf]
  %v267 = vld [vmem:[%s0 + $0x3fc] sm:$0xf]
  %v268 = vld [vmem:[%s1] sm:$0xf]
  %v269 = vld [vmem:[%s1 + $0x4] sm:$0xf]
  %v270 = vld [vmem:[%s1 + $0x8] sm:$0xf]
  %v271 = vld [vmem:[%s1 + $0xc] sm:$0xf]
  %v272 = vld [vmem:[%s1 + $0x10] sm:$0xf]
  %v273 = vld [vmem:[%s1 + $0x14] sm:$0xf]
  %v274 = vld [vmem:[%s1 + $0x18] sm:$0xf]
  %v275 = vld [vmem:[%s1 + $0x1c] sm:$0xf]
  %v276 = vld [vmem:[%s1 + $0x20] sm:$0xf]
  %v533 = vunpack.c.l.b16 %v12
  %v534 = vunpack.c.l.b16 %v13
  %v535 = vunpack.c.l.b16 %v14
  %v536 = vunpack.c.l.b16 %v15
  %v537 = vunpack.c.l.b16 %v16
  %v538 = vunpack.c.l.b16 %v17
  %v539 = vunpack.c.l.b16 %v18
  %v540 = vunpack.c.l.b16 %v19
  %v541 = vunpack.c.l.b16 %v20
  %v542 = vunpack.c.l.b16 %v21
  %v543 = vunpack.c.l.b16 %v22
  %v544 = vunpack.c.l.b16 %v23
  %v545 = vunpack.c.l.b16 %v24
  %v546 = vunpack.c.l.b16 %v25
  %v547 = vunpack.c.l.b16 %v26
  %v548 = vunpack.c.l.b16 %v27
  %v549 = vunpack.c.l.b16 %v28
  %v550 = vunpack.c.l.b16 %v29
  %v551 = vunpack.c.l.b16 %v30
  %v552 = vunpack.c.l.b16 %v31
  %v553 = vunpack.c.l.b16 %v32
  %v554 = vunpack.c.l.b16 %v33
  %v555 = vunpack.c.l.b16 %v34
  %v556 = vunpack.c.l.b16 %v35
  %v557 = vunpack.c.l.b16 %v36
  %v558 = vunpack.c.l.b16 %v37
  %v559 = vunpack.c.l.b16 %v38
  %v560 = vunpack.c.l.b16 %v39
  %v561 = vunpack.c.l.b16 %v40
  %v562 = vunpack.c.l.b16 %v41
  %v563 = vunpack.c.l.b16 %v42
  %v564 = vunpack.c.l.b16 %v43
  %v565 = vunpack.c.l.b16 %v44
  %v566 = vunpack.c.l.b16 %v45
  %v567 = vunpack.c.l.b16 %v46
  %v568 = vunpack.c.l.b16 %v47
  %v569 = vunpack.c.l.b16 %v48
  %v570 = vunpack.c.l.b16 %v49
  %v571 = vunpack.c.l.b16 %v50
  %v572 = vunpack.c.l.b16 %v51
  %v573 = vunpack.c.l.b16 %v52
  %v574 = vunpack.c.l.b16 %v53
  %v575 = vunpack.c.l.b16 %v54
  %v576 = vunpack.c.l.b16 %v55
  %v577 = vunpack.c.l.b16 %v56
  %v578 = vunpack.c.l.b16 %v57
  %v579 = vunpack.c.l.b16 %v58
  %v580 = vunpack.c.l.b16 %v59
  %v581 = vunpack.c.l.b16 %v60
  %v582 = vunpack.c.l.b16 %v61
  %v583 = vunpack.c.l.b16 %v62
  %v584 = vunpack.c.l.b16 %v63
  %v585 = vunpack.c.l.b16 %v64
  %v586 = vunpack.c.l.b16 %v65
  %v587 = vunpack.c.l.b16 %v66
  %v588 = vunpack.c.l.b16 %v67
  %v589 = vunpack.c.l.b16 %v68
  %v590 = vunpack.c.l.b16 %v69
  %v591 = vunpack.c.l.b16 %v70
  %v592 = vunpack.c.l.b16 %v71
  %v593 = vunpack.c.l.b16 %v72
  %v594 = vunpack.c.l.b16 %v73
  %v595 = vunpack.c.l.b16 %v74
  %v596 = vunpack.c.l.b16 %v75
  %v597 = vunpack.c.l.b16 %v76
  %v598 = vunpack.c.l.b16 %v77
  %v599 = vunpack.c.l.b16 %v78
  %v600 = vunpack.c.l.b16 %v79
  %v601 = vunpack.c.l.b16 %v80
  %v602 = vunpack.c.l.b16 %v81
  %v603 = vunpack.c.l.b16 %v82
  %v604 = vunpack.c.l.b16 %v83
  %v605 = vunpack.c.l.b16 %v84
  %v606 = vunpack.c.l.b16 %v85
  %v607 = vunpack.c.l.b16 %v86
  %v608 = vunpack.c.l.b16 %v87
  %v609 = vunpack.c.l.b16 %v88
  %v610 = vunpack.c.l.b16 %v89
  %v611 = vunpack.c.l.b16 %v90
  %v612 = vunpack.c.l.b16 %v91
  %v613 = vunpack.c.l.b16 %v92
  %v614 = vunpack.c.l.b16 %v93
  %v615 = vunpack.c.l.b16 %v94
  %v616 = vunpack.c.l.b16 %v95
  %v617 = vunpack.c.l.b16 %v96
  %v618 = vunpack.c.l.b16 %v97
  %v619 = vunpack.c.l.b16 %v98
  %v620 = vunpack.c.l.b16 %v99
  %v621 = vunpack.c.l.b16 %v100
  %v622 = vunpack.c.l.b16 %v101
  %v623 = vunpack.c.l.b16 %v102
  %v624 = vunpack.c.l.b16 %v103
  %v625 = vunpack.c.l.b16 %v104
  %v626 = vunpack.c.l.b16 %v105
  %v627 = vunpack.c.l.b16 %v106
  %v628 = vunpack.c.l.b16 %v107
  %v629 = vunpack.c.l.b16 %v108
  %v630 = vunpack.c.l.b16 %v109
  %v631 = vunpack.c.l.b16 %v110
  %v632 = vunpack.c.l.b16 %v111
  %v633 = vunpack.c.l.b16 %v112
  %v634 = vunpack.c.l.b16 %v113
  %v635 = vunpack.c.l.b16 %v114
  %v636 = vunpack.c.l.b16 %v115
  %v637 = vunpack.c.l.b16 %v116
  %v638 = vunpack.c.l.b16 %v117
  %v639 = vunpack.c.l.b16 %v118
  %v640 = vunpack.c.l.b16 %v119
  %v641 = vunpack.c.l.b16 %v120
  %v642 = vunpack.c.l.b16 %v121
  %v643 = vunpack.c.l.b16 %v122
  %v644 = vunpack.c.l.b16 %v123
  %v645 = vunpack.c.l.b16 %v124
  %v646 = vunpack.c.l.b16 %v125
  %v647 = vunpack.c.l.b16 %v126
  %v648 = vunpack.c.l.b16 %v127
  %v649 = vunpack.c.l.b16 %v128
  %v650 = vunpack.c.l.b16 %v129
  %v651 = vunpack.c.l.b16 %v130
  %v652 = vunpack.c.l.b16 %v131
  %v653 = vunpack.c.l.b16 %v132
  %v654 = vunpack.c.l.b16 %v133
  %v655 = vunpack.c.l.b16 %v134
  %v656 = vunpack.c.l.b16 %v135
  %v657 = vunpack.c.l.b16 %v136
  %v658 = vunpack.c.l.b16 %v137
  %v659 = vunpack.c.l.b16 %v138
  %v660 = vunpack.c.l.b16 %v139
  %v661 = vunpack.c.l.b16 %v140
  %v662 = vunpack.c.l.b16 %v141
  %v663 = vunpack.c.l.b16 %v142
  %v664 = vunpack.c.l.b16 %v143
  %v665 = vunpack.c.l.b16 %v144
  %v666 = vunpack.c.l.b16 %v145
  %v667 = vunpack.c.l.b16 %v146
  %v668 = vunpack.c.l.b16 %v147
  %v669 = vunpack.c.l.b16 %v148
  %v670 = vunpack.c.l.b16 %v149
  %v671 = vunpack.c.l.b16 %v150
  %v672 = vunpack.c.l.b16 %v151
  %v673 = vunpack.c.l.b16 %v152
  %v674 = vunpack.c.l.b16 %v153
  %v675 = vunpack.c.l.b16 %v154
  %v676 = vunpack.c.l.b16 %v155
  %v677 = vunpack.c.l.b16 %v156
  %v678 = vunpack.c.l.b16 %v157
  %v679 = vunpack.c.l.b16 %v158
  %v680 = vunpack.c.l.b16 %v159
  %v681 = vunpack.c.l.b16 %v160
  %v682 = vunpack.c.l.b16 %v161
  %v683 = vunpack.c.l.b16 %v162
  %v684 = vunpack.c.l.b16 %v163
  %v685 = vunpack.c.l.b16 %v164
  %v686 = vunpack.c.l.b16 %v165
  %v687 = vunpack.c.l.b16 %v166
  %v688 = vunpack.c.l.b16 %v167
  %v689 = vunpack.c.l.b16 %v168
  %v690 = vunpack.c.l.b16 %v169
  %v691 = vunpack.c.l.b16 %v170
  %v692 = vunpack.c.l.b16 %v171
  %v693 = vunpack.c.l.b16 %v172
  %v694 = vunpack.c.l.b16 %v173
  %v695 = vunpack.c.l.b16 %v174
  %v696 = vunpack.c.l.b16 %v175
  %v697 = vunpack.c.l.b16 %v176
  %v698 = vunpack.c.l.b16 %v177
  %v699 = vunpack.c.l.b16 %v178
  %v700 = vunpack.c.l.b16 %v179
  %v701 = vunpack.c.l.b16 %v180
  %v702 = vunpack.c.l.b16 %v181
  %v703 = vunpack.c.l.b16 %v182
  %v704 = vunpack.c.l.b16 %v183
  %v705 = vunpack.c.l.b16 %v184
  %v706 = vunpack.c.l.b16 %v185
  %v707 = vunpack.c.l.b16 %v186
  %v708 = vunpack.c.l.b16 %v187
  %v709 = vunpack.c.l.b16 %v188
  %v710 = vunpack.c.l.b16 %v189
  %v711 = vunpack.c.l.b16 %v190
  %v712 = vunpack.c.l.b16 %v191
  %v713 = vunpack.c.l.b16 %v192
  %v714 = vunpack.c.l.b16 %v193
  %v715 = vunpack.c.l.b16 %v194
  %v716 = vunpack.c.l.b16 %v195
  %v717 = vunpack.c.l.b16 %v196
  %v718 = vunpack.c.l.b16 %v197
  %v719 = vunpack.c.l.b16 %v198
  %v720 = vunpack.c.l.b16 %v199
  %v721 = vunpack.c.l.b16 %v200
  %v722 = vunpack.c.l.b16 %v201
  %v723 = vunpack.c.l.b16 %v202
  %v724 = vunpack.c.l.b16 %v203
  %v725 = vunpack.c.l.b16 %v204
  %v726 = vunpack.c.l.b16 %v205
  %v727 = vunpack.c.l.b16 %v206
  %v728 = vunpack.c.l.b16 %v207
  %v729 = vunpack.c.l.b16 %v208
  %v730 = vunpack.c.l.b16 %v209
  %v731 = vunpack.c.l.b16 %v210
  %v732 = vunpack.c.l.b16 %v211
  %v733 = vunpack.c.l.b16 %v212
  %v734 = vunpack.c.l.b16 %v213
  %v735 = vunpack.c.l.b16 %v214
  %v736 = vunpack.c.l.b16 %v215
  %v737 = vunpack.c.l.b16 %v216
  %v738 = vunpack.c.l.b16 %v217
  %v739 = vunpack.c.l.b16 %v218
  %v740 = vunpack.c.l.b16 %v219
  %v741 = vunpack.c.l.b16 %v220
  %v742 = vunpack.c.l.b16 %v221
  %v743 = vunpack.c.l.b16 %v222
  %v744 = vunpack.c.l.b16 %v223
  %v745 = vunpack.c.l.b16 %v224
  %v746 = vunpack.c.l.b16 %v225
  %v747 = vunpack.c.l.b16 %v226
  %v748 = vunpack.c.l.b16 %v227
  %v749 = vunpack.c.l.b16 %v228
  %v750 = vunpack.c.l.b16 %v229
  %v751 = vunpack.c.l.b16 %v230
  %v752 = vunpack.c.l.b16 %v231
  %v753 = vunpack.c.l.b16 %v232
  %v754 = vunpack.c.l.b16 %v233
  %v755 = vunpack.c.l.b16 %v234
  %v756 = vunpack.c.l.b16 %v235
  %v757 = vunpack.c.l.b16 %v236
  %v758 = vunpack.c.l.b16 %v237
  %v759 = vunpack.c.l.b16 %v238
  %v760 = vunpack.c.l.b16 %v239
  %v761 = vunpack.c.l.b16 %v240
  %v762 = vunpack.c.l.b16 %v241
  %v763 = vunpack.c.l.b16 %v242
  %v764 = vunpack.c.l.b16 %v243
  %v765 = vunpack.c.l.b16 %v244
  %v766 = vunpack.c.l.b16 %v245
  %v767 = vunpack.c.l.b16 %v246
  %v768 = vunpack.c.l.b16 %v247
  %v769 = vunpack.c.l.b16 %v248
  %v770 = vunpack.c.l.b16 %v249
  %v771 = vunpack.c.l.b16 %v250
  %v772 = vunpack.c.l.b16 %v251
  %v773 = vunpack.c.l.b16 %v252
  %v774 = vunpack.c.l.b16 %v253
  %v775 = vunpack.c.l.b16 %v254
  %v776 = vunpack.c.l.b16 %v255
  %v777 = vunpack.c.l.b16 %v256
  %v778 = vunpack.c.l.b16 %v257
  %v779 = vunpack.c.l.b16 %v258
  %v780 = vunpack.c.l.b16 %v259
  %v781 = vunpack.c.l.b16 %v260
  %v782 = vunpack.c.l.b16 %v261
  %v783 = vunpack.c.l.b16 %v262
  %v784 = vunpack.c.l.b16 %v263
  %v785 = vunpack.c.l.b16 %v264
  %v786 = vunpack.c.l.b16 %v265
  %v787 = vunpack.c.l.b16 %v266
  %v788 = vunpack.c.l.b16 %v267
  %v789 = vpack.c.b16 %v534, %v533
  %v790 = vpack.c.b16 %v536, %v535
  %v791 = vpack.c.b16 %v538, %v537
  %v792 = vpack.c.b16 %v540, %v539
  %v793 = vpack.c.b16 %v542, %v541
  %v794 = vpack.c.b16 %v544, %v543
  %v795 = vpack.c.b16 %v546, %v545
  %v796 = vpack.c.b16 %v548, %v547
  %v797 = vpack.c.b16 %v550, %v549
  %v798 = vpack.c.b16 %v552, %v551
  %v799 = vpack.c.b16 %v554, %v553
  %v800 = vpack.c.b16 %v556, %v555
  %v801 = vpack.c.b16 %v558, %v557
  %v802 = vpack.c.b16 %v560, %v559
  %v803 = vpack.c.b16 %v562, %v561
  %v804 = vpack.c.b16 %v564, %v563
  %v805 = vpack.c.b16 %v566, %v565
  %v806 = vpack.c.b16 %v568, %v567
  %v807 = vpack.c.b16 %v570, %v569
  %v808 = vpack.c.b16 %v572, %v571
  %v809 = vpack.c.b16 %v574, %v573
  %v810 = vpack.c.b16 %v576, %v575
  %v811 = vpack.c.b16 %v578, %v577
  %v812 = vpack.c.b16 %v580, %v579
  %v813 = vpack.c.b16 %v582, %v581
  %v814 = vpack.c.b16 %v584, %v583
  %v815 = vpack.c.b16 %v586, %v585
  %v816 = vpack.c.b16 %v588, %v587
  %v817 = vpack.c.b16 %v590, %v589
  %v818 = vpack.c.b16 %v592, %v591
  %v819 = vpack.c.b16 %v594, %v593
  %v820 = vpack.c.b16 %v596, %v595
  %v821 = vpack.c.b16 %v598, %v597
  %v822 = vpack.c.b16 %v600, %v599
  %v823 = vpack.c.b16 %v602, %v601
  %v824 = vpack.c.b16 %v604, %v603
  %v825 = vpack.c.b16 %v606, %v605
  %v826 = vpack.c.b16 %v608, %v607
  %v827 = vpack.c.b16 %v610, %v609
  %v828 = vpack.c.b16 %v612, %v611
  %v829 = vpack.c.b16 %v614, %v613
  %v830 = vpack.c.b16 %v616, %v615
  %v831 = vpack.c.b16 %v618, %v617
  %v832 = vpack.c.b16 %v620, %v619
  %v833 = vpack.c.b16 %v622, %v621
  %v834 = vpack.c.b16 %v624, %v623
  %v835 = vpack.c.b16 %v626, %v625
  %v836 = vpack.c.b16 %v628, %v627
  %v837 = vpack.c.b16 %v630, %v629
  %v838 = vpack.c.b16 %v632, %v631
  %v839 = vpack.c.b16 %v634, %v633
  %v840 = vpack.c.b16 %v636, %v635
  %v841 = vpack.c.b16 %v638, %v637
  %v842 = vpack.c.b16 %v640, %v639
  %v843 = vpack.c.b16 %v642, %v641
  %v844 = vpack.c.b16 %v644, %v643
  %v845 = vpack.c.b16 %v646, %v645
  %v846 = vpack.c.b16 %v648, %v647
  %v847 = vpack.c.b16 %v650, %v649
  %v848 = vpack.c.b16 %v652, %v651
  %v849 = vpack.c.b16 %v654, %v653
  %v850 = vpack.c.b16 %v656, %v655
  %v851 = vpack.c.b16 %v658, %v657
  %v852 = vpack.c.b16 %v660, %v659
  %v853 = vpack.c.b16 %v662, %v661
  %v854 = vpack.c.b16 %v664, %v663
  %v855 = vpack.c.b16 %v666, %v665
  %v856 = vpack.c.b16 %v668, %v667
  %v857 = vpack.c.b16 %v670, %v669
  %v858 = vpack.c.b16 %v672, %v671
  %v859 = vpack.c.b16 %v674, %v673
  %v860 = vpack.c.b16 %v676, %v675
  %v861 = vpack.c.b16 %v678, %v677
  %v862 = vpack.c.b16 %v680, %v679
  %v863 = vpack.c.b16 %v682, %v681
  %v864 = vpack.c.b16 %v684, %v683
  %v865 = vpack.c.b16 %v686, %v685
  %v866 = vpack.c.b16 %v688, %v687
  %v867 = vpack.c.b16 %v690, %v689
  %v868 = vpack.c.b16 %v692, %v691
  %v869 = vpack.c.b16 %v694, %v693
  %v870 = vpack.c.b16 %v696, %v695
  %v871 = vpack.c.b16 %v698, %v697
  %v872 = vpack.c.b16 %v700, %v699
  %v873 = vpack.c.b16 %v702, %v701
  %v874 = vpack.c.b16 %v704, %v703
  %v875 = vpack.c.b16 %v706, %v705
  %v876 = vpack.c.b16 %v708, %v707
  %v877 = vpack.c.b16 %v710, %v709
  %v878 = vpack.c.b16 %v712, %v711
  %v879 = vpack.c.b16 %v714, %v713
  %v880 = vpack.c.b16 %v716, %v715
  %v881 = vpack.c.b16 %v718, %v717
  %v882 = vpack.c.b16 %v720, %v719
  %v883 = vpack.c.b16 %v722, %v721
  %v884 = vpack.c.b16 %v724, %v723
  %v885 = vpack.c.b16 %v726, %v725
  %v886 = vpack.c.b16 %v728, %v727
  %v887 = vpack.c.b16 %v730, %v729
  %v888 = vpack.c.b16 %v732, %v731
  %v889 = vpack.c.b16 %v734, %v733
  %v890 = vpack.c.b16 %v736, %v735
  %v891 = vpack.c.b16 %v738, %v737
  %v892 = vpack.c.b16 %v740, %v739
  %v893 = vpack.c.b16 %v742, %v741
  %v894 = vpack.c.b16 %v744, %v743
  %v895 = vpack.c.b16 %v746, %v745
  %v896 = vpack.c.b16 %v748, %v747
  %v897 = vpack.c.b16 %v750, %v749
  %v898 = vpack.c.b16 %v752, %v751
  %v899 = vpack.c.b16 %v754, %v753
  %v900 = vpack.c.b16 %v756, %v755
  %v901 = vpack.c.b16 %v758, %v757
  %v902 = vpack.c.b16 %v760, %v759
  %v903 = vpack.c.b16 %v762, %v761
  %v904 = vpack.c.b16 %v764, %v763
  %v905 = vpack.c.b16 %v766, %v765
  %v906 = vpack.c.b16 %v768, %v767
  %v907 = vpack.c.b16 %v770, %v769
  %v908 = vpack.c.b16 %v772, %v771
  %v909 = vpack.c.b16 %v774, %v773
  %v910 = vpack.c.b16 %v776, %v775
  %v911 = vpack.c.b16 %v778, %v777
  %v912 = vpack.c.b16 %v780, %v779
  %v913 = vpack.c.b16 %v782, %v781
  %v914 = vpack.c.b16 %v784, %v783
  %v915 = vpack.c.b16 %v786, %v785
  %v916 = vpack.c.b16 %v788, %v787
  %v926 = vunpack.c.l.b16 %v268
  %v927 = vunpack.c.l.b16 %v269
  %v928 = vunpack.c.l.b16 %v270
  %v929 = vunpack.c.l.b16 %v271
  %v930 = vunpack.c.l.b16 %v272
  %v931 = vunpack.c.l.b16 %v273
  %v932 = vunpack.c.l.b16 %v274
  %v933 = vunpack.c.l.b16 %v275
  %v934 = vunpack.c.l.b16 %v276
  %v935 = vpack.c.b16 %v927, %v926
  %v936 = vpack.c.b16 %v929, %v928
  %v937 = vpack.c.b16 %v931, %v930
  %v938 = vpack.c.b16 %v933, %v932
  %v939 = vpack.c.b16 %v934, %v934
  %vm944 = vcmask 588800
  %v946 = vsel %vm944, %v789, 0
  %v949 = vsel %vm944, %v790, 0
  %v952 = vsel %vm944, %v791, 0
  %v955 = vsel %vm944, %v792, 0
  %v958 = vsel %vm944, %v793, 0
  %v961 = vsel %vm944, %v794, 0
  %v964 = vsel %vm944, %v795, 0
  %v967 = vsel %vm944, %v796, 0
  %v970 = vsel %vm944, %v797, 0
  %v973 = vsel %vm944, %v798, 0
  %v976 = vsel %vm944, %v799, 0
  %v979 = vsel %vm944, %v800, 0
  %v982 = vsel %vm944, %v801, 0
  %v985 = vsel %vm944, %v802, 0
  %v988 = vsel %vm944, %v803, 0
  %v991 = vsel %vm944, %v804, 0
  %v994 = vsel %vm944, %v805, 0
  %v997 = vsel %vm944, %v806, 0
  %v1000 = vsel %vm944, %v807, 0
  %v1003 = vsel %vm944, %v808, 0
  %v1006 = vsel %vm944, %v809, 0
  %v1009 = vsel %vm944, %v810, 0
  %v1012 = vsel %vm944, %v811, 0
  %v1015 = vsel %vm944, %v812, 0
  %v1018 = vsel %vm944, %v813, 0
  %v1021 = vsel %vm944, %v814, 0
  %v1024 = vsel %vm944, %v815, 0
  %v1027 = vsel %vm944, %v816, 0
  %v1030 = vsel %vm944, %v817, 0
  %v1033 = vsel %vm944, %v818, 0
  %v1036 = vsel %vm944, %v819, 0
  %v1039 = vsel %vm944, %v820, 0
  %v1042 = vsel %vm944, %v821, 0
  %v1045 = vsel %vm944, %v822, 0
  %v1048 = vsel %vm944, %v823, 0
  %v1051 = vsel %vm944, %v824, 0
  %v1054 = vsel %vm944, %v825, 0
  %v1057 = vsel %vm944, %v826, 0
  %v1060 = vsel %vm944, %v827, 0
  %v1063 = vsel %vm944, %v828, 0
  %v1066 = vsel %vm944, %v829, 0
  %v1069 = vsel %vm944, %v830, 0
  %v1072 = vsel %vm944, %v831, 0
  %v1075 = vsel %vm944, %v832, 0
  %v1078 = vsel %vm944, %v833, 0
  %v1081 = vsel %vm944, %v834, 0
  %v1084 = vsel %vm944, %v835, 0
  %v1087 = vsel %vm944, %v836, 0
  %v1090 = vsel %vm944, %v837, 0
  %v1093 = vsel %vm944, %v838, 0
  %v1096 = vsel %vm944, %v839, 0
  %v1099 = vsel %vm944, %v840, 0
  %v1102 = vsel %vm944, %v841, 0
  %v1105 = vsel %vm944, %v842, 0
  %v1108 = vsel %vm944, %v843, 0
  %v1111 = vsel %vm944, %v844, 0
  %v1114 = vsel %vm944, %v845, 0
  %v1117 = vsel %vm944, %v846, 0
  %v1120 = vsel %vm944, %v847, 0
  %v1123 = vsel %vm944, %v848, 0
  %v1126 = vsel %vm944, %v849, 0
  %v1129 = vsel %vm944, %v850, 0
  %v1132 = vsel %vm944, %v851, 0
  %v1135 = vsel %vm944, %v852, 0
  %v1138 = vsel %vm944, %v853, 0
  %v1141 = vsel %vm944, %v854, 0
  %v1144 = vsel %vm944, %v855, 0
  %v1147 = vsel %vm944, %v856, 0
  %v1150 = vsel %vm944, %v857, 0
  %v1153 = vsel %vm944, %v858, 0
  %v1156 = vsel %vm944, %v859, 0
  %v1159 = vsel %vm944, %v860, 0
  %v1162 = vsel %vm944, %v861, 0
  %v1165 = vsel %vm944, %v862, 0
  %v1168 = vsel %vm944, %v863, 0
  %v1171 = vsel %vm944, %v864, 0
  %v1174 = vsel %vm944, %v865, 0
  %v1177 = vsel %vm944, %v866, 0
  %v1180 = vsel %vm944, %v867, 0
  %v1183 = vsel %vm944, %v868, 0
  %v1186 = vsel %vm944, %v869, 0
  %v1189 = vsel %vm944, %v870, 0
  %v1192 = vsel %vm944, %v871, 0
  %v1195 = vsel %vm944, %v872, 0
  %v1198 = vsel %vm944, %v873, 0
  %v1201 = vsel %vm944, %v874, 0
  %v1204 = vsel %vm944, %v875, 0
  %v1207 = vsel %vm944, %v876, 0
  %v1210 = vsel %vm944, %v877, 0
  %v1213 = vsel %vm944, %v878, 0
  %v1216 = vsel %vm944, %v879, 0
  %v1219 = vsel %vm944, %v880, 0
  %v1222 = vsel %vm944, %v881, 0
  %v1225 = vsel %vm944, %v882, 0
  %v1228 = vsel %vm944, %v883, 0
  %v1231 = vsel %vm944, %v884, 0
  %v1234 = vsel %vm944, %v885, 0
  %v1237 = vsel %vm944, %v886, 0
  %v1240 = vsel %vm944, %v887, 0
  %v1243 = vsel %vm944, %v888, 0
  %v1246 = vsel %vm944, %v889, 0
  %v1249 = vsel %vm944, %v890, 0
  %v1252 = vsel %vm944, %v891, 0
  %v1255 = vsel %vm944, %v892, 0
  %v1258 = vsel %vm944, %v893, 0
  %v1261 = vsel %vm944, %v894, 0
  %v1264 = vsel %vm944, %v895, 0
  %v1267 = vsel %vm944, %v896, 0
  %v1270 = vsel %vm944, %v897, 0
  %v1273 = vsel %vm944, %v898, 0
  %v1276 = vsel %vm944, %v899, 0
  %v1279 = vsel %vm944, %v900, 0
  %v1282 = vsel %vm944, %v901, 0
  %v1285 = vsel %vm944, %v902, 0
  %v1288 = vsel %vm944, %v903, 0
  %v1291 = vsel %vm944, %v904, 0
  %v1294 = vsel %vm944, %v905, 0
  %v1297 = vsel %vm944, %v906, 0
  %v1300 = vsel %vm944, %v907, 0
  %v1303 = vsel %vm944, %v908, 0
  %v1306 = vsel %vm944, %v909, 0
  %v1309 = vsel %vm944, %v910, 0
  %v1312 = vsel %vm944, %v911, 0
  %v1315 = vsel %vm944, %v912, 0
  %v1318 = vsel %vm944, %v913, 0
  %v1321 = vsel %vm944, %v914, 0
  %v1324 = vsel %vm944, %v915, 0
  %v1327 = vsel %vm944, %v916, 0
  %vm1329 = vcmask 1043456
  %v1331 = vsel %vm1329, %v939, 0
  %1333 = vmatpush.bf16.msra.mxu0 0
  %1334 = vmatpush.bf16.msra.mxu0 0
  %1335 = vmatpush.bf16.msra.mxu0 0
  %1336 = vmatpush.bf16.msra.mxu0 %v1331
  %1337 = vmatpush.bf16.msra.mxu0 %v938
  %1338 = vmatpush.bf16.msra.mxu0 %v937
  %1339 = vmatpush.bf16.msra.mxu0 %v936
  %1340 = vmatpush.bf16.msra.mxu0 %v935
  %1341 = vmatmul.bf16.gmra.mxu0 %v946
  %v1342 = vpop.f32.mrf.mxu0
  %v1343 = vadd.f32 0.0, %v1342
  %v1344 = vpop.f32.mrf.mxu0
  %v1345 = vadd.f32 0.0, %v1344
  %1346 = vmatmul.bf16.gmra.mxu0 %v949
  %v1347 = vpop.f32.mrf.mxu0
  %v1348 = vadd.f32 0.0, %v1347
  %v1349 = vpop.f32.mrf.mxu0
  %v1350 = vadd.f32 0.0, %v1349
  %1351 = vmatmul.bf16.gmra.mxu0 %v952
  %v1352 = vpop.f32.mrf.mxu0
  %v1353 = vadd.f32 0.0, %v1352
  %v1354 = vpop.f32.mrf.mxu0
  %v1355 = vadd.f32 0.0, %v1354
  %1356 = vmatmul.bf16.gmra.mxu0 %v955
  %v1357 = vpop.f32.mrf.mxu0
  %v1358 = vadd.f32 0.0, %v1357
  %v1359 = vpop.f32.mrf.mxu0
  %v1360 = vadd.f32 0.0, %v1359
  %1361 = vmatmul.bf16.gmra.mxu0 %v958
  %v1362 = vpop.f32.mrf.mxu0
  %v1363 = vadd.f32 0.0, %v1362
  %v1364 = vpop.f32.mrf.mxu0
  %v1365 = vadd.f32 0.0, %v1364
  %1366 = vmatmul.bf16.gmra.mxu0 %v961
  %v1367 = vpop.f32.mrf.mxu0
  %v1368 = vadd.f32 0.0, %v1367
  %v1369 = vpop.f32.mrf.mxu0
  %v1370 = vadd.f32 0.0, %v1369
  %1371 = vmatmul.bf16.gmra.mxu0 %v964
  %v1372 = vpop.f32.mrf.mxu0
  %v1373 = vadd.f32 0.0, %v1372
  %v1374 = vpop.f32.mrf.mxu0
  %v1375 = vadd.f32 0.0, %v1374
  %1376 = vmatmul.bf16.gmra.mxu0 %v967
  %v1377 = vpop.f32.mrf.mxu0
  %v1378 = vadd.f32 0.0, %v1377
  %v1379 = vpop.f32.mrf.mxu0
  %v1380 = vadd.f32 0.0, %v1379
  %1381 = vmatmul.bf16.gmra.mxu0 %v970
  %v1382 = vpop.f32.mrf.mxu0
  %v1383 = vadd.f32 0.0, %v1382
  %v1384 = vpop.f32.mrf.mxu0
  %v1385 = vadd.f32 0.0, %v1384
  %1386 = vmatmul.bf16.gmra.mxu0 %v973
  %v1387 = vpop.f32.mrf.mxu0
  %v1388 = vadd.f32 0.0, %v1387
  %v1389 = vpop.f32.mrf.mxu0
  %v1390 = vadd.f32 0.0, %v1389
  %1391 = vmatmul.bf16.gmra.mxu0 %v976
  %v1392 = vpop.f32.mrf.mxu0
  %v1393 = vadd.f32 0.0, %v1392
  %v1394 = vpop.f32.mrf.mxu0
  %v1395 = vadd.f32 0.0, %v1394
  %1396 = vmatmul.bf16.gmra.mxu0 %v979
  %v1397 = vpop.f32.mrf.mxu0
  %v1398 = vadd.f32 0.0, %v1397
  %v1399 = vpop.f32.mrf.mxu0
  %v1400 = vadd.f32 0.0, %v1399
  %1401 = vmatmul.bf16.gmra.mxu0 %v982
  %v1402 = vpop.f32.mrf.mxu0
  %v1403 = vadd.f32 0.0, %v1402
  %v1404 = vpop.f32.mrf.mxu0
  %v1405 = vadd.f32 0.0, %v1404
  %1406 = vmatmul.bf16.gmra.mxu0 %v985
  %v1407 = vpop.f32.mrf.mxu0
  %v1408 = vadd.f32 0.0, %v1407
  %v1409 = vpop.f32.mrf.mxu0
  %v1410 = vadd.f32 0.0, %v1409
  %1411 = vmatmul.bf16.gmra.mxu0 %v988
  %v1412 = vpop.f32.mrf.mxu0
  %v1413 = vadd.f32 0.0, %v1412
  %v1414 = vpop.f32.mrf.mxu0
  %v1415 = vadd.f32 0.0, %v1414
  %1416 = vmatmul.bf16.gmra.mxu0 %v991
  %v1417 = vpop.f32.mrf.mxu0
  %v1418 = vadd.f32 0.0, %v1417
  %v1419 = vpop.f32.mrf.mxu0
  %v1420 = vadd.f32 0.0, %v1419
  %1421 = vmatmul.bf16.gmra.mxu0 %v994
  %v1422 = vpop.f32.mrf.mxu0
  %v1423 = vadd.f32 0.0, %v1422
  %v1424 = vpop.f32.mrf.mxu0
  %v1425 = vadd.f32 0.0, %v1424
  %1426 = vmatmul.bf16.gmra.mxu0 %v997
  %v1427 = vpop.f32.mrf.mxu0
  %v1428 = vadd.f32 0.0, %v1427
  %v1429 = vpop.f32.mrf.mxu0
  %v1430 = vadd.f32 0.0, %v1429
  %1431 = vmatmul.bf16.gmra.mxu0 %v1000
  %v1432 = vpop.f32.mrf.mxu0
  %v1433 = vadd.f32 0.0, %v1432
  %v1434 = vpop.f32.mrf.mxu0
  %v1435 = vadd.f32 0.0, %v1434
  %1436 = vmatmul.bf16.gmra.mxu0 %v1003
  %v1437 = vpop.f32.mrf.mxu0
  %v1438 = vadd.f32 0.0, %v1437
  %v1439 = vpop.f32.mrf.mxu0
  %v1440 = vadd.f32 0.0, %v1439
  %1441 = vmatmul.bf16.gmra.mxu0 %v1006
  %v1442 = vpop.f32.mrf.mxu0
  %v1443 = vadd.f32 0.0, %v1442
  %v1444 = vpop.f32.mrf.mxu0
  %v1445 = vadd.f32 0.0, %v1444
  %1446 = vmatmul.bf16.gmra.mxu0 %v1009
  %v1447 = vpop.f32.mrf.mxu0
  %v1448 = vadd.f32 0.0, %v1447
  %v1449 = vpop.f32.mrf.mxu0
  %v1450 = vadd.f32 0.0, %v1449
  %1451 = vmatmul.bf16.gmra.mxu0 %v1012
  %v1452 = vpop.f32.mrf.mxu0
  %v1453 = vadd.f32 0.0, %v1452
  %v1454 = vpop.f32.mrf.mxu0
  %v1455 = vadd.f32 0.0, %v1454
  %1456 = vmatmul.bf16.gmra.mxu0 %v1015
  %v1457 = vpop.f32.mrf.mxu0
  %v1458 = vadd.f32 0.0, %v1457
  %v1459 = vpop.f32.mrf.mxu0
  %v1460 = vadd.f32 0.0, %v1459
  %1461 = vmatmul.bf16.gmra.mxu0 %v1018
  %v1462 = vpop.f32.mrf.mxu0
  %v1463 = vadd.f32 0.0, %v1462
  %v1464 = vpop.f32.mrf.mxu0
  %v1465 = vadd.f32 0.0, %v1464
  %1466 = vmatmul.bf16.gmra.mxu0 %v1021
  %v1467 = vpop.f32.mrf.mxu0
  %v1468 = vadd.f32 0.0, %v1467
  %v1469 = vpop.f32.mrf.mxu0
  %v1470 = vadd.f32 0.0, %v1469
  %1471 = vmatmul.bf16.gmra.mxu0 %v1024
  %v1472 = vpop.f32.mrf.mxu0
  %v1473 = vadd.f32 0.0, %v1472
  %v1474 = vpop.f32.mrf.mxu0
  %v1475 = vadd.f32 0.0, %v1474
  %1476 = vmatmul.bf16.gmra.mxu0 %v1027
  %v1477 = vpop.f32.mrf.mxu0
  %v1478 = vadd.f32 0.0, %v1477
  %v1479 = vpop.f32.mrf.mxu0
  %v1480 = vadd.f32 0.0, %v1479
  %1481 = vmatmul.bf16.gmra.mxu0 %v1030
  %v1482 = vpop.f32.mrf.mxu0
  %v1483 = vadd.f32 0.0, %v1482
  %v1484 = vpop.f32.mrf.mxu0
  %v1485 = vadd.f32 0.0, %v1484
  %1486 = vmatmul.bf16.gmra.mxu0 %v1033
  %v1487 = vpop.f32.mrf.mxu0
  %v1488 = vadd.f32 0.0, %v1487
  %v1489 = vpop.f32.mrf.mxu0
  %v1490 = vadd.f32 0.0, %v1489
  %1491 = vmatmul.bf16.gmra.mxu0 %v1036
  %v1492 = vpop.f32.mrf.mxu0
  %v1493 = vadd.f32 0.0, %v1492
  %v1494 = vpop.f32.mrf.mxu0
  %v1495 = vadd.f32 0.0, %v1494
  %1496 = vmatmul.bf16.gmra.mxu0 %v1039
  %v1497 = vpop.f32.mrf.mxu0
  %v1498 = vadd.f32 0.0, %v1497
  %v1499 = vpop.f32.mrf.mxu0
  %v1500 = vadd.f32 0.0, %v1499
  %1501 = vmatmul.bf16.gmra.mxu0 %v1042
  %v1502 = vpop.f32.mrf.mxu0
  %v1503 = vadd.f32 0.0, %v1502
  %v1504 = vpop.f32.mrf.mxu0
  %v1505 = vadd.f32 0.0, %v1504
  %1506 = vmatmul.bf16.gmra.mxu0 %v1045
  %v1507 = vpop.f32.mrf.mxu0
  %v1508 = vadd.f32 0.0, %v1507
  %v1509 = vpop.f32.mrf.mxu0
  %v1510 = vadd.f32 0.0, %v1509
  %1511 = vmatmul.bf16.gmra.mxu0 %v1048
  %v1512 = vpop.f32.mrf.mxu0
  %v1513 = vadd.f32 0.0, %v1512
  %v1514 = vpop.f32.mrf.mxu0
  %v1515 = vadd.f32 0.0, %v1514
  %1516 = vmatmul.bf16.gmra.mxu0 %v1051
  %v1517 = vpop.f32.mrf.mxu0
  %v1518 = vadd.f32 0.0, %v1517
  %v1519 = vpop.f32.mrf.mxu0
  %v1520 = vadd.f32 0.0, %v1519
  %1521 = vmatmul.bf16.gmra.mxu0 %v1054
  %v1522 = vpop.f32.mrf.mxu0
  %v1523 = vadd.f32 0.0, %v1522
  %v1524 = vpop.f32.mrf.mxu0
  %v1525 = vadd.f32 0.0, %v1524
  %1526 = vmatmul.bf16.gmra.mxu0 %v1057
  %v1527 = vpop.f32.mrf.mxu0
  %v1528 = vadd.f32 0.0, %v1527
  %v1529 = vpop.f32.mrf.mxu0
  %v1530 = vadd.f32 0.0, %v1529
  %1531 = vmatmul.bf16.gmra.mxu0 %v1060
  %v1532 = vpop.f32.mrf.mxu0
  %v1533 = vadd.f32 0.0, %v1532
  %v1534 = vpop.f32.mrf.mxu0
  %v1535 = vadd.f32 0.0, %v1534
  %1536 = vmatmul.bf16.gmra.mxu0 %v1063
  %v1537 = vpop.f32.mrf.mxu0
  %v1538 = vadd.f32 0.0, %v1537
  %v1539 = vpop.f32.mrf.mxu0
  %v1540 = vadd.f32 0.0, %v1539
  %1541 = vmatmul.bf16.gmra.mxu0 %v1066
  %v1542 = vpop.f32.mrf.mxu0
  %v1543 = vadd.f32 0.0, %v1542
  %v1544 = vpop.f32.mrf.mxu0
  %v1545 = vadd.f32 0.0, %v1544
  %1546 = vmatmul.bf16.gmra.mxu0 %v1069
  %v1547 = vpop.f32.mrf.mxu0
  %v1548 = vadd.f32 0.0, %v1547
  %v1549 = vpop.f32.mrf.mxu0
  %v1550 = vadd.f32 0.0, %v1549
  %1551 = vmatmul.bf16.gmra.mxu0 %v1072
  %v1552 = vpop.f32.mrf.mxu0
  %v1553 = vadd.f32 0.0, %v1552
  %v1554 = vpop.f32.mrf.mxu0
  %v1555 = vadd.f32 0.0, %v1554
  %1556 = vmatmul.bf16.gmra.mxu0 %v1075
  %v1557 = vpop.f32.mrf.mxu0
  %v1558 = vadd.f32 0.0, %v1557
  %v1559 = vpop.f32.mrf.mxu0
  %v1560 = vadd.f32 0.0, %v1559
  %1561 = vmatmul.bf16.gmra.mxu0 %v1078
  %v1562 = vpop.f32.mrf.mxu0
  %v1563 = vadd.f32 0.0, %v1562
  %v1564 = vpop.f32.mrf.mxu0
  %v1565 = vadd.f32 0.0, %v1564
  %1566 = vmatmul.bf16.gmra.mxu0 %v1081
  %v1567 = vpop.f32.mrf.mxu0
  %v1568 = vadd.f32 0.0, %v1567
  %v1569 = vpop.f32.mrf.mxu0
  %v1570 = vadd.f32 0.0, %v1569
  %1571 = vmatmul.bf16.gmra.mxu0 %v1084
  %v1572 = vpop.f32.mrf.mxu0
  %v1573 = vadd.f32 0.0, %v1572
  %v1574 = vpop.f32.mrf.mxu0
  %v1575 = vadd.f32 0.0, %v1574
  %1576 = vmatmul.bf16.gmra.mxu0 %v1087
  %v1577 = vpop.f32.mrf.mxu0
  %v1578 = vadd.f32 0.0, %v1577
  %v1579 = vpop.f32.mrf.mxu0
  %v1580 = vadd.f32 0.0, %v1579
  %1581 = vmatmul.bf16.gmra.mxu0 %v1090
  %v1582 = vpop.f32.mrf.mxu0
  %v1583 = vadd.f32 0.0, %v1582
  %v1584 = vpop.f32.mrf.mxu0
  %v1585 = vadd.f32 0.0, %v1584
  %1586 = vmatmul.bf16.gmra.mxu0 %v1093
  %v1587 = vpop.f32.mrf.mxu0
  %v1588 = vadd.f32 0.0, %v1587
  %v1589 = vpop.f32.mrf.mxu0
  %v1590 = vadd.f32 0.0, %v1589
  %1591 = vmatmul.bf16.gmra.mxu0 %v1096
  %v1592 = vpop.f32.mrf.mxu0
  %v1593 = vadd.f32 0.0, %v1592
  %v1594 = vpop.f32.mrf.mxu0
  %v1595 = vadd.f32 0.0, %v1594
  %1596 = vmatmul.bf16.gmra.mxu0 %v1099
  %v1597 = vpop.f32.mrf.mxu0
  %v1598 = vadd.f32 0.0, %v1597
  %v1599 = vpop.f32.mrf.mxu0
  %v1600 = vadd.f32 0.0, %v1599
  %1601 = vmatmul.bf16.gmra.mxu0 %v1102
  %v1602 = vpop.f32.mrf.mxu0
  %v1603 = vadd.f32 0.0, %v1602
  %v1604 = vpop.f32.mrf.mxu0
  %v1605 = vadd.f32 0.0, %v1604
  %1606 = vmatmul.bf16.gmra.mxu0 %v1105
  %v1607 = vpop.f32.mrf.mxu0
  %v1608 = vadd.f32 0.0, %v1607
  %v1609 = vpop.f32.mrf.mxu0
  %v1610 = vadd.f32 0.0, %v1609
  %1611 = vmatmul.bf16.gmra.mxu0 %v1108
  %v1612 = vpop.f32.mrf.mxu0
  %v1613 = vadd.f32 0.0, %v1612
  %v1614 = vpop.f32.mrf.mxu0
  %v1615 = vadd.f32 0.0, %v1614
  %1616 = vmatmul.bf16.gmra.mxu0 %v1111
  %v1617 = vpop.f32.mrf.mxu0
  %v1618 = vadd.f32 0.0, %v1617
  %v1619 = vpop.f32.mrf.mxu0
  %v1620 = vadd.f32 0.0, %v1619
  %1621 = vmatmul.bf16.gmra.mxu0 %v1114
  %v1622 = vpop.f32.mrf.mxu0
  %v1623 = vadd.f32 0.0, %v1622
  %v1624 = vpop.f32.mrf.mxu0
  %v1625 = vadd.f32 0.0, %v1624
  %1626 = vmatmul.bf16.gmra.mxu0 %v1117
  %v1627 = vpop.f32.mrf.mxu0
  %v1628 = vadd.f32 0.0, %v1627
  %v1629 = vpop.f32.mrf.mxu0
  %v1630 = vadd.f32 0.0, %v1629
  %1631 = vmatmul.bf16.gmra.mxu0 %v1120
  %v1632 = vpop.f32.mrf.mxu0
  %v1633 = vadd.f32 0.0, %v1632
  %v1634 = vpop.f32.mrf.mxu0
  %v1635 = vadd.f32 0.0, %v1634
  %1636 = vmatmul.bf16.gmra.mxu0 %v1123
  %v1637 = vpop.f32.mrf.mxu0
  %v1638 = vadd.f32 0.0, %v1637
  %v1639 = vpop.f32.mrf.mxu0
  %v1640 = vadd.f32 0.0, %v1639
  %1641 = vmatmul.bf16.gmra.mxu0 %v1126
  %v1642 = vpop.f32.mrf.mxu0
  %v1643 = vadd.f32 0.0, %v1642
  %v1644 = vpop.f32.mrf.mxu0
  %v1645 = vadd.f32 0.0, %v1644
  %1646 = vmatmul.bf16.gmra.mxu0 %v1129
  %v1647 = vpop.f32.mrf.mxu0
  %v1648 = vadd.f32 0.0, %v1647
  %v1649 = vpop.f32.mrf.mxu0
  %v1650 = vadd.f32 0.0, %v1649
  %1651 = vmatmul.bf16.gmra.mxu0 %v1132
  %v1652 = vpop.f32.mrf.mxu0
  %v1653 = vadd.f32 0.0, %v1652
  %v1654 = vpop.f32.mrf.mxu0
  %v1655 = vadd.f32 0.0, %v1654
  %1656 = vmatmul.bf16.gmra.mxu0 %v1135
  %v1657 = vpop.f32.mrf.mxu0
  %v1658 = vadd.f32 0.0, %v1657
  %v1659 = vpop.f32.mrf.mxu0
  %v1660 = vadd.f32 0.0, %v1659
  %1661 = vmatmul.bf16.gmra.mxu0 %v1138
  %v1662 = vpop.f32.mrf.mxu0
  %v1663 = vadd.f32 0.0, %v1662
  %v1664 = vpop.f32.mrf.mxu0
  %v1665 = vadd.f32 0.0, %v1664
  %1666 = vmatmul.bf16.gmra.mxu0 %v1141
  %v1667 = vpop.f32.mrf.mxu0
  %v1668 = vadd.f32 0.0, %v1667
  %v1669 = vpop.f32.mrf.mxu0
  %v1670 = vadd.f32 0.0, %v1669
  %1671 = vmatmul.bf16.gmra.mxu0 %v1144
  %v1672 = vpop.f32.mrf.mxu0
  %v1673 = vadd.f32 0.0, %v1672
  %v1674 = vpop.f32.mrf.mxu0
  %v1675 = vadd.f32 0.0, %v1674
  %1676 = vmatmul.bf16.gmra.mxu0 %v1147
  %v1677 = vpop.f32.mrf.mxu0
  %v1678 = vadd.f32 0.0, %v1677
  %v1679 = vpop.f32.mrf.mxu0
  %v1680 = vadd.f32 0.0, %v1679
  %1681 = vmatmul.bf16.gmra.mxu0 %v1150
  %v1682 = vpop.f32.mrf.mxu0
  %v1683 = vadd.f32 0.0, %v1682
  %v1684 = vpop.f32.mrf.mxu0
  %v1685 = vadd.f32 0.0, %v1684
  %1686 = vmatmul.bf16.gmra.mxu0 %v1153
  %v1687 = vpop.f32.mrf.mxu0
  %v1688 = vadd.f32 0.0, %v1687
  %v1689 = vpop.f32.mrf.mxu0
  %v1690 = vadd.f32 0.0, %v1689
  %1691 = vmatmul.bf16.gmra.mxu0 %v1156
  %v1692 = vpop.f32.mrf.mxu0
  %v1693 = vadd.f32 0.0, %v1692
  %v1694 = vpop.f32.mrf.mxu0
  %v1695 = vadd.f32 0.0, %v1694
  %1696 = vmatmul.bf16.gmra.mxu0 %v1159
  %v1697 = vpop.f32.mrf.mxu0
  %v1698 = vadd.f32 0.0, %v1697
  %v1699 = vpop.f32.mrf.mxu0
  %v1700 = vadd.f32 0.0, %v1699
  %1701 = vmatmul.bf16.gmra.mxu0 %v1162
  %v1702 = vpop.f32.mrf.mxu0
  %v1703 = vadd.f32 0.0, %v1702
  %v1704 = vpop.f32.mrf.mxu0
  %v1705 = vadd.f32 0.0, %v1704
  %1706 = vmatmul.bf16.gmra.mxu0 %v1165
  %v1707 = vpop.f32.mrf.mxu0
  %v1708 = vadd.f32 0.0, %v1707
  %v1709 = vpop.f32.mrf.mxu0
  %v1710 = vadd.f32 0.0, %v1709
  %1711 = vmatmul.bf16.gmra.mxu0 %v1168
  %v1712 = vpop.f32.mrf.mxu0
  %v1713 = vadd.f32 0.0, %v1712
  %v1714 = vpop.f32.mrf.mxu0
  %v1715 = vadd.f32 0.0, %v1714
  %1716 = vmatmul.bf16.gmra.mxu0 %v1171
  %v1717 = vpop.f32.mrf.mxu0
  %v1718 = vadd.f32 0.0, %v1717
  %v1719 = vpop.f32.mrf.mxu0
  %v1720 = vadd.f32 0.0, %v1719
  %1721 = vmatmul.bf16.gmra.mxu0 %v1174
  %v1722 = vpop.f32.mrf.mxu0
  %v1723 = vadd.f32 0.0, %v1722
  %v1724 = vpop.f32.mrf.mxu0
  %v1725 = vadd.f32 0.0, %v1724
  %1726 = vmatmul.bf16.gmra.mxu0 %v1177
  %v1727 = vpop.f32.mrf.mxu0
  %v1728 = vadd.f32 0.0, %v1727
  %v1729 = vpop.f32.mrf.mxu0
  %v1730 = vadd.f32 0.0, %v1729
  %1731 = vmatmul.bf16.gmra.mxu0 %v1180
  %v1732 = vpop.f32.mrf.mxu0
  %v1733 = vadd.f32 0.0, %v1732
  %v1734 = vpop.f32.mrf.mxu0
  %v1735 = vadd.f32 0.0, %v1734
  %1736 = vmatmul.bf16.gmra.mxu0 %v1183
  %v1737 = vpop.f32.mrf.mxu0
  %v1738 = vadd.f32 0.0, %v1737
  %v1739 = vpop.f32.mrf.mxu0
  %v1740 = vadd.f32 0.0, %v1739
  %1741 = vmatmul.bf16.gmra.mxu0 %v1186
  %v1742 = vpop.f32.mrf.mxu0
  %v1743 = vadd.f32 0.0, %v1742
  %v1744 = vpop.f32.mrf.mxu0
  %v1745 = vadd.f32 0.0, %v1744
  %1746 = vmatmul.bf16.gmra.mxu0 %v1189
  %v1747 = vpop.f32.mrf.mxu0
  %v1748 = vadd.f32 0.0, %v1747
  %v1749 = vpop.f32.mrf.mxu0
  %v1750 = vadd.f32 0.0, %v1749
  %1751 = vmatmul.bf16.gmra.mxu0 %v1192
  %v1752 = vpop.f32.mrf.mxu0
  %v1753 = vadd.f32 0.0, %v1752
  %v1754 = vpop.f32.mrf.mxu0
  %v1755 = vadd.f32 0.0, %v1754
  %1756 = vmatmul.bf16.gmra.mxu0 %v1195
  %v1757 = vpop.f32.mrf.mxu0
  %v1758 = vadd.f32 0.0, %v1757
  %v1759 = vpop.f32.mrf.mxu0
  %v1760 = vadd.f32 0.0, %v1759
  %1761 = vmatmul.bf16.gmra.mxu0 %v1198
  %v1762 = vpop.f32.mrf.mxu0
  %v1763 = vadd.f32 0.0, %v1762
  %v1764 = vpop.f32.mrf.mxu0
  %v1765 = vadd.f32 0.0, %v1764
  %1766 = vmatmul.bf16.gmra.mxu0 %v1201
  %v1767 = vpop.f32.mrf.mxu0
  %v1768 = vadd.f32 0.0, %v1767
  %v1769 = vpop.f32.mrf.mxu0
  %v1770 = vadd.f32 0.0, %v1769
  %1771 = vmatmul.bf16.gmra.mxu0 %v1204
  %v1772 = vpop.f32.mrf.mxu0
  %v1773 = vadd.f32 0.0, %v1772
  %v1774 = vpop.f32.mrf.mxu0
  %v1775 = vadd.f32 0.0, %v1774
  %1776 = vmatmul.bf16.gmra.mxu0 %v1207
  %v1777 = vpop.f32.mrf.mxu0
  %v1778 = vadd.f32 0.0, %v1777
  %v1779 = vpop.f32.mrf.mxu0
  %v1780 = vadd.f32 0.0, %v1779
  %1781 = vmatmul.bf16.gmra.mxu0 %v1210
  %v1782 = vpop.f32.mrf.mxu0
  %v1783 = vadd.f32 0.0, %v1782
  %v1784 = vpop.f32.mrf.mxu0
  %v1785 = vadd.f32 0.0, %v1784
  %1786 = vmatmul.bf16.gmra.mxu0 %v1213
  %v1787 = vpop.f32.mrf.mxu0
  %v1788 = vadd.f32 0.0, %v1787
  %v1789 = vpop.f32.mrf.mxu0
  %v1790 = vadd.f32 0.0, %v1789
  %1791 = vmatmul.bf16.gmra.mxu0 %v1216
  %v1792 = vpop.f32.mrf.mxu0
  %v1793 = vadd.f32 0.0, %v1792
  %v1794 = vpop.f32.mrf.mxu0
  %v1795 = vadd.f32 0.0, %v1794
  %1796 = vmatmul.bf16.gmra.mxu0 %v1219
  %v1797 = vpop.f32.mrf.mxu0
  %v1798 = vadd.f32 0.0, %v1797
  %v1799 = vpop.f32.mrf.mxu0
  %v1800 = vadd.f32 0.0, %v1799
  %1801 = vmatmul.bf16.gmra.mxu0 %v1222
  %v1802 = vpop.f32.mrf.mxu0
  %v1803 = vadd.f32 0.0, %v1802
  %v1804 = vpop.f32.mrf.mxu0
  %v1805 = vadd.f32 0.0, %v1804
  %1806 = vmatmul.bf16.gmra.mxu0 %v1225
  %v1807 = vpop.f32.mrf.mxu0
  %v1808 = vadd.f32 0.0, %v1807
  %v1809 = vpop.f32.mrf.mxu0
  %v1810 = vadd.f32 0.0, %v1809
  %1811 = vmatmul.bf16.gmra.mxu0 %v1228
  %v1812 = vpop.f32.mrf.mxu0
  %v1813 = vadd.f32 0.0, %v1812
  %v1814 = vpop.f32.mrf.mxu0
  %v1815 = vadd.f32 0.0, %v1814
  %1816 = vmatmul.bf16.gmra.mxu0 %v1231
  %v1817 = vpop.f32.mrf.mxu0
  %v1818 = vadd.f32 0.0, %v1817
  %v1819 = vpop.f32.mrf.mxu0
  %v1820 = vadd.f32 0.0, %v1819
  %1821 = vmatmul.bf16.gmra.mxu0 %v1234
  %v1822 = vpop.f32.mrf.mxu0
  %v1823 = vadd.f32 0.0, %v1822
  %v1824 = vpop.f32.mrf.mxu0
  %v1825 = vadd.f32 0.0, %v1824
  %1826 = vmatmul.bf16.gmra.mxu0 %v1237
  %v1827 = vpop.f32.mrf.mxu0
  %v1828 = vadd.f32 0.0, %v1827
  %v1829 = vpop.f32.mrf.mxu0
  %v1830 = vadd.f32 0.0, %v1829
  %1831 = vmatmul.bf16.gmra.mxu0 %v1240
  %v1832 = vpop.f32.mrf.mxu0
  %v1833 = vadd.f32 0.0, %v1832
  %v1834 = vpop.f32.mrf.mxu0
  %v1835 = vadd.f32 0.0, %v1834
  %1836 = vmatmul.bf16.gmra.mxu0 %v1243
  %v1837 = vpop.f32.mrf.mxu0
  %v1838 = vadd.f32 0.0, %v1837
  %v1839 = vpop.f32.mrf.mxu0
  %v1840 = vadd.f32 0.0, %v1839
  %1841 = vmatmul.bf16.gmra.mxu0 %v1246
  %v1842 = vpop.f32.mrf.mxu0
  %v1843 = vadd.f32 0.0, %v1842
  %v1844 = vpop.f32.mrf.mxu0
  %v1845 = vadd.f32 0.0, %v1844
  %1846 = vmatmul.bf16.gmra.mxu0 %v1249
  %v1847 = vpop.f32.mrf.mxu0
  %v1848 = vadd.f32 0.0, %v1847
  %v1849 = vpop.f32.mrf.mxu0
  %v1850 = vadd.f32 0.0, %v1849
  %1851 = vmatmul.bf16.gmra.mxu0 %v1252
  %v1852 = vpop.f32.mrf.mxu0
  %v1853 = vadd.f32 0.0, %v1852
  %v1854 = vpop.f32.mrf.mxu0
  %v1855 = vadd.f32 0.0, %v1854
  %1856 = vmatmul.bf16.gmra.mxu0 %v1255
  %v1857 = vpop.f32.mrf.mxu0
  %v1858 = vadd.f32 0.0, %v1857
  %v1859 = vpop.f32.mrf.mxu0
  %v1860 = vadd.f32 0.0, %v1859
  %1861 = vmatmul.bf16.gmra.mxu0 %v1258
  %v1862 = vpop.f32.mrf.mxu0
  %v1863 = vadd.f32 0.0, %v1862
  %v1864 = vpop.f32.mrf.mxu0
  %v1865 = vadd.f32 0.0, %v1864
  %1866 = vmatmul.bf16.gmra.mxu0 %v1261
  %v1867 = vpop.f32.mrf.mxu0
  %v1868 = vadd.f32 0.0, %v1867
  %v1869 = vpop.f32.mrf.mxu0
  %v1870 = vadd.f32 0.0, %v1869
  %1871 = vmatmul.bf16.gmra.mxu0 %v1264
  %v1872 = vpop.f32.mrf.mxu0
  %v1873 = vadd.f32 0.0, %v1872
  %v1874 = vpop.f32.mrf.mxu0
  %v1875 = vadd.f32 0.0, %v1874
  %1876 = vmatmul.bf16.gmra.mxu0 %v1267
  %v1877 = vpop.f32.mrf.mxu0
  %v1878 = vadd.f32 0.0, %v1877
  %v1879 = vpop.f32.mrf.mxu0
  %v1880 = vadd.f32 0.0, %v1879
  %1881 = vmatmul.bf16.gmra.mxu0 %v1270
  %v1882 = vpop.f32.mrf.mxu0
  %v1883 = vadd.f32 0.0, %v1882
  %v1884 = vpop.f32.mrf.mxu0
  %v1885 = vadd.f32 0.0, %v1884
  %1886 = vmatmul.bf16.gmra.mxu0 %v1273
  %v1887 = vpop.f32.mrf.mxu0
  %v1888 = vadd.f32 0.0, %v1887
  %v1889 = vpop.f32.mrf.mxu0
  %v1890 = vadd.f32 0.0, %v1889
  %1891 = vmatmul.bf16.gmra.mxu0 %v1276
  %v1892 = vpop.f32.mrf.mxu0
  %v1893 = vadd.f32 0.0, %v1892
  %v1894 = vpop.f32.mrf.mxu0
  %v1895 = vadd.f32 0.0, %v1894
  %1896 = vmatmul.bf16.gmra.mxu0 %v1279
  %v1897 = vpop.f32.mrf.mxu0
  %v1898 = vadd.f32 0.0, %v1897
  %v1899 = vpop.f32.mrf.mxu0
  %v1900 = vadd.f32 0.0, %v1899
  %1901 = vmatmul.bf16.gmra.mxu0 %v1282
  %v1902 = vpop.f32.mrf.mxu0
  %v1903 = vadd.f32 0.0, %v1902
  %v1904 = vpop.f32.mrf.mxu0
  %v1905 = vadd.f32 0.0, %v1904
  %1906 = vmatmul.bf16.gmra.mxu0 %v1285
  %v1907 = vpop.f32.mrf.mxu0
  %v1908 = vadd.f32 0.0, %v1907
  %v1909 = vpop.f32.mrf.mxu0
  %v1910 = vadd.f32 0.0, %v1909
  %1911 = vmatmul.bf16.gmra.mxu0 %v1288
  %v1912 = vpop.f32.mrf.mxu0
  %v1913 = vadd.f32 0.0, %v1912
  %v1914 = vpop.f32.mrf.mxu0
  %v1915 = vadd.f32 0.0, %v1914
  %1916 = vmatmul.bf16.gmra.mxu0 %v1291
  %v1917 = vpop.f32.mrf.mxu0
  %v1918 = vadd.f32 0.0, %v1917
  %v1919 = vpop.f32.mrf.mxu0
  %v1920 = vadd.f32 0.0, %v1919
  %1921 = vmatmul.bf16.gmra.mxu0 %v1294
  %v1922 = vpop.f32.mrf.mxu0
  %v1923 = vadd.f32 0.0, %v1922
  %v1924 = vpop.f32.mrf.mxu0
  %v1925 = vadd.f32 0.0, %v1924
  %1926 = vmatmul.bf16.gmra.mxu0 %v1297
  %v1927 = vpop.f32.mrf.mxu0
  %v1928 = vadd.f32 0.0, %v1927
  %v1929 = vpop.f32.mrf.mxu0
  %v1930 = vadd.f32 0.0, %v1929
  %1931 = vmatmul.bf16.gmra.mxu0 %v1300
  %v1932 = vpop.f32.mrf.mxu0
  %v1933 = vadd.f32 0.0, %v1932
  %v1934 = vpop.f32.mrf.mxu0
  %v1935 = vadd.f32 0.0, %v1934
  %1936 = vmatmul.bf16.gmra.mxu0 %v1303
  %v1937 = vpop.f32.mrf.mxu0
  %v1938 = vadd.f32 0.0, %v1937
  %v1939 = vpop.f32.mrf.mxu0
  %v1940 = vadd.f32 0.0, %v1939
  %1941 = vmatmul.bf16.gmra.mxu0 %v1306
  %v1942 = vpop.f32.mrf.mxu0
  %v1943 = vadd.f32 0.0, %v1942
  %v1944 = vpop.f32.mrf.mxu0
  %v1945 = vadd.f32 0.0, %v1944
  %1946 = vmatmul.bf16.gmra.mxu0 %v1309
  %v1947 = vpop.f32.mrf.mxu0
  %v1948 = vadd.f32 0.0, %v1947
  %v1949 = vpop.f32.mrf.mxu0
  %v1950 = vadd.f32 0.0, %v1949
  %1951 = vmatmul.bf16.gmra.mxu0 %v1312
  %v1952 = vpop.f32.mrf.mxu0
  %v1953 = vadd.f32 0.0, %v1952
  %v1954 = vpop.f32.mrf.mxu0
  %v1955 = vadd.f32 0.0, %v1954
  %1956 = vmatmul.bf16.gmra.mxu0 %v1315
  %v1957 = vpop.f32.mrf.mxu0
  %v1958 = vadd.f32 0.0, %v1957
  %v1959 = vpop.f32.mrf.mxu0
  %v1960 = vadd.f32 0.0, %v1959
  %1961 = vmatmul.bf16.gmra.mxu0 %v1318
  %v1962 = vpop.f32.mrf.mxu0
  %v1963 = vadd.f32 0.0, %v1962
  %v1964 = vpop.f32.mrf.mxu0
  %v1965 = vadd.f32 0.0, %v1964
  %1966 = vmatmul.bf16.gmra.mxu0 %v1321
  %v1967 = vpop.f32.mrf.mxu0
  %v1968 = vadd.f32 0.0, %v1967
  %v1969 = vpop.f32.mrf.mxu0
  %v1970 = vadd.f32 0.0, %v1969
  %1971 = vmatmul.bf16.gmra.mxu0 %v1324
  %v1972 = vpop.f32.mrf.mxu0
  %v1973 = vadd.f32 0.0, %v1972
  %v1974 = vpop.f32.mrf.mxu0
  %v1975 = vadd.f32 0.0, %v1974
  %1976 = vmatmul.bf16.gmra.mxu0 %v1327
  %v1977 = vpop.f32.mrf.mxu0
  %v1978 = vadd.f32 0.0, %v1977
  %v1979 = vpop.f32.mrf.mxu0
  %v1980 = vadd.f32 0.0, %v1979
  %1981 = vdwg.mxu0
  %v1982 = vtanh.pop %v1343
  %v1983 = vtanh.pop %v1345
  %v1984 = vtanh.pop %v1348
  %v1985 = vtanh.pop %v1350
  %v1986 = vtanh.pop %v1353
  %v1987 = vtanh.pop %v1355
  %v1988 = vtanh.pop %v1358
  %v1989 = vtanh.pop %v1360
  %v1990 = vtanh.pop %v1363
  %v1991 = vtanh.pop %v1365
  %v1992 = vtanh.pop %v1368
  %v1993 = vtanh.pop %v1370
  %v1994 = vtanh.pop %v1373
  %v1995 = vtanh.pop %v1375
  %v1996 = vtanh.pop %v1378
  %v1997 = vtanh.pop %v1380
  %v1998 = vtanh.pop %v1383
  %v1999 = vtanh.pop %v1385
  %v2000 = vtanh.pop %v1388
  %v2001 = vtanh.pop %v1390
  %v2002 = vtanh.pop %v1393
  %v2003 = vtanh.pop %v1395
  %v2004 = vtanh.pop %v1398
  %v2005 = vtanh.pop %v1400
  %v2006 = vtanh.pop %v1403
  %v2007 = vtanh.pop %v1405
  %v2008 = vtanh.pop %v1408
  %v2009 = vtanh.pop %v1410
  %v2010 = vtanh.pop %v1413
  %v2011 = vtanh.pop %v1415
  %v2012 = vtanh.pop %v1418
  %v2013 = vtanh.pop %v1420
  %v2014 = vtanh.pop %v1423
  %v2015 = vtanh.pop %v1425
  %v2016 = vtanh.pop %v1428
  %v2017 = vtanh.pop %v1430
  %v2018 = vtanh.pop %v1433
  %v2019 = vtanh.pop %v1435
  %v2020 = vtanh.pop %v1438
  %v2021 = vtanh.pop %v1440
  %v2022 = vtanh.pop %v1443
  %v2023 = vtanh.pop %v1445
  %v2024 = vtanh.pop %v1448
  %v2025 = vtanh.pop %v1450
  %v2026 = vtanh.pop %v1453
  %v2027 = vtanh.pop %v1455
  %v2028 = vtanh.pop %v1458
  %v2029 = vtanh.pop %v1460
  %v2030 = vtanh.pop %v1463
  %v2031 = vtanh.pop %v1465
  %v2032 = vtanh.pop %v1468
  %v2033 = vtanh.pop %v1470
  %v2034 = vtanh.pop %v1473
  %v2035 = vtanh.pop %v1475
  %v2036 = vtanh.pop %v1478
  %v2037 = vtanh.pop %v1480
  %v2038 = vtanh.pop %v1483
  %v2039 = vtanh.pop %v1485
  %v2040 = vtanh.pop %v1488
  %v2041 = vtanh.pop %v1490
  %v2042 = vtanh.pop %v1493
  %v2043 = vtanh.pop %v1495
  %v2044 = vtanh.pop %v1498
  %v2045 = vtanh.pop %v1500
  %v2046 = vtanh.pop %v1503
  %v2047 = vtanh.pop %v1505
  %v2048 = vtanh.pop %v1508
  %v2049 = vtanh.pop %v1510
  %v2050 = vtanh.pop %v1513
  %v2051 = vtanh.pop %v1515
  %v2052 = vtanh.pop %v1518
  %v2053 = vtanh.pop %v1520
  %v2054 = vtanh.pop %v1523
  %v2055 = vtanh.pop %v1525
  %v2056 = vtanh.pop %v1528
  %v2057 = vtanh.pop %v1530
  %v2058 = vtanh.pop %v1533
  %v2059 = vtanh.pop %v1535
  %v2060 = vtanh.pop %v1538
  %v2061 = vtanh.pop %v1540
  %v2062 = vtanh.pop %v1543
  %v2063 = vtanh.pop %v1545
  %v2064 = vtanh.pop %v1548
  %v2065 = vtanh.pop %v1550
  %v2066 = vtanh.pop %v1553
  %v2067 = vtanh.pop %v1555
  %v2068 = vtanh.pop %v1558
  %v2069 = vtanh.pop %v1560
  %v2070 = vtanh.pop %v1563
  %v2071 = vtanh.pop %v1565
  %v2072 = vtanh.pop %v1568
  %v2073 = vtanh.pop %v1570
  %v2074 = vtanh.pop %v1573
  %v2075 = vtanh.pop %v1575
  %v2076 = vtanh.pop %v1578
  %v2077 = vtanh.pop %v1580
  %v2078 = vtanh.pop %v1583
  %v2079 = vtanh.pop %v1585
  %v2080 = vtanh.pop %v1588
  %v2081 = vtanh.pop %v1590
  %v2082 = vtanh.pop %v1593
  %v2083 = vtanh.pop %v1595
  %v2084 = vtanh.pop %v1598
  %v2085 = vtanh.pop %v1600
  %v2086 = vtanh.pop %v1603
  %v2087 = vtanh.pop %v1605
  %v2088 = vtanh.pop %v1608
  %v2089 = vtanh.pop %v1610
  %v2090 = vtanh.pop %v1613
  %v2091 = vtanh.pop %v1615
  %v2092 = vtanh.pop %v1618
  %v2093 = vtanh.pop %v1620
  %v2094 = vtanh.pop %v1623
  %v2095 = vtanh.pop %v1625
  %v2096 = vtanh.pop %v1628
  %v2097 = vtanh.pop %v1630
  %v2098 = vtanh.pop %v1633
  %v2099 = vtanh.pop %v1635
  %v2100 = vtanh.pop %v1638
  %v2101 = vtanh.pop %v1640
  %v2102 = vtanh.pop %v1643
  %v2103 = vtanh.pop %v1645
  %v2104 = vtanh.pop %v1648
  %v2105 = vtanh.pop %v1650
  %v2106 = vtanh.pop %v1653
  %v2107 = vtanh.pop %v1655
  %v2108 = vtanh.pop %v1658
  %v2109 = vtanh.pop %v1660
  %v2110 = vtanh.pop %v1663
  %v2111 = vtanh.pop %v1665
  %v2112 = vtanh.pop %v1668
  %v2113 = vtanh.pop %v1670
  %v2114 = vtanh.pop %v1673
  %v2115 = vtanh.pop %v1675
  %v2116 = vtanh.pop %v1678
  %v2117 = vtanh.pop %v1680
  %v2118 = vtanh.pop %v1683
  %v2119 = vtanh.pop %v1685
  %v2120 = vtanh.pop %v1688
  %v2121 = vtanh.pop %v1690
  %v2122 = vtanh.pop %v1693
  %v2123 = vtanh.pop %v1695
  %v2124 = vtanh.pop %v1698
  %v2125 = vtanh.pop %v1700
  %v2126 = vtanh.pop %v1703
  %v2127 = vtanh.pop %v1705
  %v2128 = vtanh.pop %v1708
  %v2129 = vtanh.pop %v1710
  %v2130 = vtanh.pop %v1713
  %v2131 = vtanh.pop %v1715
  %v2132 = vtanh.pop %v1718
  %v2133 = vtanh.pop %v1720
  %v2134 = vtanh.pop %v1723
  %v2135 = vtanh.pop %v1725
  %v2136 = vtanh.pop %v1728
  %v2137 = vtanh.pop %v1730
  %v2138 = vtanh.pop %v1733
  %v2139 = vtanh.pop %v1735
  %v2140 = vtanh.pop %v1738
  %v2141 = vtanh.pop %v1740
  %v2142 = vtanh.pop %v1743
  %v2143 = vtanh.pop %v1745
  %v2144 = vtanh.pop %v1748
  %v2145 = vtanh.pop %v1750
  %v2146 = vtanh.pop %v1753
  %v2147 = vtanh.pop %v1755
  %v2148 = vtanh.pop %v1758
  %v2149 = vtanh.pop %v1760
  %v2150 = vtanh.pop %v1763
  %v2151 = vtanh.pop %v1765
  %v2152 = vtanh.pop %v1768
  %v2153 = vtanh.pop %v1770
  %v2154 = vtanh.pop %v1773
  %v2155 = vtanh.pop %v1775
  %v2156 = vtanh.pop %v1778
  %v2157 = vtanh.pop %v1780
  %v2158 = vtanh.pop %v1783
  %v2159 = vtanh.pop %v1785
  %v2160 = vtanh.pop %v1788
  %v2161 = vtanh.pop %v1790
  %v2162 = vtanh.pop %v1793
  %v2163 = vtanh.pop %v1795
  %v2164 = vtanh.pop %v1798
  %v2165 = vtanh.pop %v1800
  %v2166 = vtanh.pop %v1803
  %v2167 = vtanh.pop %v1805
  %v2168 = vtanh.pop %v1808
  %v2169 = vtanh.pop %v1810
  %v2170 = vtanh.pop %v1813
  %v2171 = vtanh.pop %v1815
  %v2172 = vtanh.pop %v1818
  %v2173 = vtanh.pop %v1820
  %v2174 = vtanh.pop %v1823
  %v2175 = vtanh.pop %v1825
  %v2176 = vtanh.pop %v1828
  %v2177 = vtanh.pop %v1830
  %v2178 = vtanh.pop %v1833
  %v2179 = vtanh.pop %v1835
  %v2180 = vtanh.pop %v1838
  %v2181 = vtanh.pop %v1840
  %v2182 = vtanh.pop %v1843
  %v2183 = vtanh.pop %v1845
  %v2184 = vtanh.pop %v1848
  %v2185 = vtanh.pop %v1850
  %v2186 = vtanh.pop %v1853
  %v2187 = vtanh.pop %v1855
  %v2188 = vtanh.pop %v1858
  %v2189 = vtanh.pop %v1860
  %v2190 = vtanh.pop %v1863
  %v2191 = vtanh.pop %v1865
  %v2192 = vtanh.pop %v1868
  %v2193 = vtanh.pop %v1870
  %v2194 = vtanh.pop %v1873
  %v2195 = vtanh.pop %v1875
  %v2196 = vtanh.pop %v1878
  %v2197 = vtanh.pop %v1880
  %v2198 = vtanh.pop %v1883
  %v2199 = vtanh.pop %v1885
  %v2200 = vtanh.pop %v1888
  %v2201 = vtanh.pop %v1890
  %v2202 = vtanh.pop %v1893
  %v2203 = vtanh.pop %v1895
  %v2204 = vtanh.pop %v1898
  %v2205 = vtanh.pop %v1900
  %v2206 = vtanh.pop %v1903
  %v2207 = vtanh.pop %v1905
  %v2208 = vtanh.pop %v1908
  %v2209 = vtanh.pop %v1910
  %v2210 = vtanh.pop %v1913
  %v2211 = vtanh.pop %v1915
  %v2212 = vtanh.pop %v1918
  %v2213 = vtanh.pop %v1920
  %v2214 = vtanh.pop %v1923
  %v2215 = vtanh.pop %v1925
  %v2216 = vtanh.pop %v1928
  %v2217 = vtanh.pop %v1930
  %v2218 = vtanh.pop %v1933
  %v2219 = vtanh.pop %v1935
  %v2220 = vtanh.pop %v1938
  %v2221 = vtanh.pop %v1940
  %v2222 = vtanh.pop %v1943
  %v2223 = vtanh.pop %v1945
  %v2224 = vtanh.pop %v1948
  %v2225 = vtanh.pop %v1950
  %v2226 = vtanh.pop %v1953
  %v2227 = vtanh.pop %v1955
  %v2228 = vtanh.pop %v1958
  %v2229 = vtanh.pop %v1960
  %v2230 = vtanh.pop %v1963
  %v2231 = vtanh.pop %v1965
  %v2232 = vtanh.pop %v1968
  %v2233 = vtanh.pop %v1970
  %v2234 = vtanh.pop %v1973
  %v2235 = vtanh.pop %v1975
  %v2236 = vtanh.pop %v1978
  %v2237 = vtanh.pop %v1980
  %vm2238 = vcmask 97280
  %2239 = vst.msk [vmem:[%s2] sm:$0xff] %vm2238, %v1982
  %2240 = vst.msk [vmem:[%s2 + $0x8] sm:$0xff] %vm2238, %v1983
  %2241 = vst.msk [vmem:[%s2 + $0x10] sm:$0xff] %vm2238, %v1984
  %2242 = vst.msk [vmem:[%s2 + $0x18] sm:$0xff] %vm2238, %v1985
  %2243 = vst.msk [vmem:[%s2 + $0x20] sm:$0xff] %vm2238, %v1986
  %2244 = vst.msk [vmem:[%s2 + $0x28] sm:$0xff] %vm2238, %v1987
  %2245 = vst.msk [vmem:[%s2 + $0x30] sm:$0xff] %vm2238, %v1988
  %2246 = vst.msk [vmem:[%s2 + $0x38] sm:$0xff] %vm2238, %v1989
  %2247 = vst.msk [vmem:[%s2 + $0x40] sm:$0xff] %vm2238, %v1990
  %2248 = vst.msk [vmem:[%s2 + $0x48] sm:$0xff] %vm2238, %v1991
  %2249 = vst.msk [vmem:[%s2 + $0x50] sm:$0xff] %vm2238, %v1992
  %2250 = vst.msk [vmem:[%s2 + $0x58] sm:$0xff] %vm2238, %v1993
  %2251 = vst.msk [vmem:[%s2 + $0x60] sm:$0xff] %vm2238, %v1994
  %2252 = vst.msk [vmem:[%s2 + $0x68] sm:$0xff] %vm2238, %v1995
  %2253 = vst.msk [vmem:[%s2 + $0x70] sm:$0xff] %vm2238, %v1996
  %2254 = vst.msk [vmem:[%s2 + $0x78] sm:$0xff] %vm2238, %v1997
  %2255 = vst.msk [vmem:[%s2 + $0x80] sm:$0xff] %vm2238, %v1998
  %2256 = vst.msk [vmem:[%s2 + $0x88] sm:$0xff] %vm2238, %v1999
  %2257 = vst.msk [vmem:[%s2 + $0x90] sm:$0xff] %vm2238, %v2000
  %2258 = vst.msk [vmem:[%s2 + $0x98] sm:$0xff] %vm2238, %v2001
  %2259 = vst.msk [vmem:[%s2 + $0xa0] sm:$0xff] %vm2238, %v2002
  %2260 = vst.msk [vmem:[%s2 + $0xa8] sm:$0xff] %vm2238, %v2003
  %2261 = vst.msk [vmem:[%s2 + $0xb0] sm:$0xff] %vm2238, %v2004
  %2262 = vst.msk [vmem:[%s2 + $0xb8] sm:$0xff] %vm2238, %v2005
  %2263 = vst.msk [vmem:[%s2 + $0xc0] sm:$0xff] %vm2238, %v2006
  %2264 = vst.msk [vmem:[%s2 + $0xc8] sm:$0xff] %vm2238, %v2007
  %2265 = vst.msk [vmem:[%s2 + $0xd0] sm:$0xff] %vm2238, %v2008
  %2266 = vst.msk [vmem:[%s2 + $0xd8] sm:$0xff] %vm2238, %v2009
  %2267 = vst.msk [vmem:[%s2 + $0xe0] sm:$0xff] %vm2238, %v2010
  %2268 = vst.msk [vmem:[%s2 + $0xe8] sm:$0xff] %vm2238, %v2011
  %2269 = vst.msk [vmem:[%s2 + $0xf0] sm:$0xff] %vm2238, %v2012
  %2270 = vst.msk [vmem:[%s2 + $0xf8] sm:$0xff] %vm2238, %v2013
  %2271 = vst.msk [vmem:[%s2 + $0x100] sm:$0xff] %vm2238, %v2014
  %2272 = vst.msk [vmem:[%s2 + $0x108] sm:$0xff] %vm2238, %v2015
  %2273 = vst.msk [vmem:[%s2 + $0x110] sm:$0xff] %vm2238, %v2016
  %2274 = vst.msk [vmem:[%s2 + $0x118] sm:$0xff] %vm2238, %v2017
  %2275 = vst.msk [vmem:[%s2 + $0x120] sm:$0xff] %vm2238, %v2018
  %2276 = vst.msk [vmem:[%s2 + $0x128] sm:$0xff] %vm2238, %v2019
  %2277 = vst.msk [vmem:[%s2 + $0x130] sm:$0xff] %vm2238, %v2020
  %2278 = vst.msk [vmem:[%s2 + $0x138] sm:$0xff] %vm2238, %v2021
  %2279 = vst.msk [vmem:[%s2 + $0x140] sm:$0xff] %vm2238, %v2022
  %2280 = vst.msk [vmem:[%s2 + $0x148] sm:$0xff] %vm2238, %v2023
  %2281 = vst.msk [vmem:[%s2 + $0x150] sm:$0xff] %vm2238, %v2024
  %2282 = vst.msk [vmem:[%s2 + $0x158] sm:$0xff] %vm2238, %v2025
  %2283 = vst.msk [vmem:[%s2 + $0x160] sm:$0xff] %vm2238, %v2026
  %2284 = vst.msk [vmem:[%s2 + $0x168] sm:$0xff] %vm2238, %v2027
  %2285 = vst.msk [vmem:[%s2 + $0x170] sm:$0xff] %vm2238, %v2028
  %2286 = vst.msk [vmem:[%s2 + $0x178] sm:$0xff] %vm2238, %v2029
  %2287 = vst.msk [vmem:[%s2 + $0x180] sm:$0xff] %vm2238, %v2030
  %2288 = vst.msk [vmem:[%s2 + $0x188] sm:$0xff] %vm2238, %v2031
  %2289 = vst.msk [vmem:[%s2 + $0x190] sm:$0xff] %vm2238, %v2032
  %2290 = vst.msk [vmem:[%s2 + $0x198] sm:$0xff] %vm2238, %v2033
  %2291 = vst.msk [vmem:[%s2 + $0x1a0] sm:$0xff] %vm2238, %v2034
  %2292 = vst.msk [vmem:[%s2 + $0x1a8] sm:$0xff] %vm2238, %v2035
  %2293 = vst.msk [vmem:[%s2 + $0x1b0] sm:$0xff] %vm2238, %v2036
  %2294 = vst.msk [vmem:[%s2 + $0x1b8] sm:$0xff] %vm2238, %v2037
  %2295 = vst.msk [vmem:[%s2 + $0x1c0] sm:$0xff] %vm2238, %v2038
  %2296 = vst.msk [vmem:[%s2 + $0x1c8] sm:$0xff] %vm2238, %v2039
  %2297 = vst.msk [vmem:[%s2 + $0x1d0] sm:$0xff] %vm2238, %v2040
  %2298 = vst.msk [vmem:[%s2 + $0x1d8] sm:$0xff] %vm2238, %v2041
  %2299 = vst.msk [vmem:[%s2 + $0x1e0] sm:$0xff] %vm2238, %v2042
  %2300 = vst.msk [vmem:[%s2 + $0x1e8] sm:$0xff] %vm2238, %v2043
  %2301 = vst.msk [vmem:[%s2 + $0x1f0] sm:$0xff] %vm2238, %v2044
  %2302 = vst.msk [vmem:[%s2 + $0x1f8] sm:$0xff] %vm2238, %v2045
  %2303 = vst.msk [vmem:[%s2 + $0x200] sm:$0xff] %vm2238, %v2046
  %2304 = vst.msk [vmem:[%s2 + $0x208] sm:$0xff] %vm2238, %v2047
  %2305 = vst.msk [vmem:[%s2 + $0x210] sm:$0xff] %vm2238, %v2048
  %2306 = vst.msk [vmem:[%s2 + $0x218] sm:$0xff] %vm2238, %v2049
  %2307 = vst.msk [vmem:[%s2 + $0x220] sm:$0xff] %vm2238, %v2050
  %2308 = vst.msk [vmem:[%s2 + $0x228] sm:$0xff] %vm2238, %v2051
  %2309 = vst.msk [vmem:[%s2 + $0x230] sm:$0xff] %vm2238, %v2052
  %2310 = vst.msk [vmem:[%s2 + $0x238] sm:$0xff] %vm2238, %v2053
  %2311 = vst.msk [vmem:[%s2 + $0x240] sm:$0xff] %vm2238, %v2054
  %2312 = vst.msk [vmem:[%s2 + $0x248] sm:$0xff] %vm2238, %v2055
  %2313 = vst.msk [vmem:[%s2 + $0x250] sm:$0xff] %vm2238, %v2056
  %2314 = vst.msk [vmem:[%s2 + $0x258] sm:$0xff] %vm2238, %v2057
  %2315 = vst.msk [vmem:[%s2 + $0x260] sm:$0xff] %vm2238, %v2058
  %2316 = vst.msk [vmem:[%s2 + $0x268] sm:$0xff] %vm2238, %v2059
  %2317 = vst.msk [vmem:[%s2 + $0x270] sm:$0xff] %vm2238, %v2060
  %2318 = vst.msk [vmem:[%s2 + $0x278] sm:$0xff] %vm2238, %v2061
  %2319 = vst.msk [vmem:[%s2 + $0x280] sm:$0xff] %vm2238, %v2062
  %2320 = vst.msk [vmem:[%s2 + $0x288] sm:$0xff] %vm2238, %v2063
  %2321 = vst.msk [vmem:[%s2 + $0x290] sm:$0xff] %vm2238, %v2064
  %2322 = vst.msk [vmem:[%s2 + $0x298] sm:$0xff] %vm2238, %v2065
  %2323 = vst.msk [vmem:[%s2 + $0x2a0] sm:$0xff] %vm2238, %v2066
  %2324 = vst.msk [vmem:[%s2 + $0x2a8] sm:$0xff] %vm2238, %v2067
  %2325 = vst.msk [vmem:[%s2 + $0x2b0] sm:$0xff] %vm2238, %v2068
  %2326 = vst.msk [vmem:[%s2 + $0x2b8] sm:$0xff] %vm2238, %v2069
  %2327 = vst.msk [vmem:[%s2 + $0x2c0] sm:$0xff] %vm2238, %v2070
  %2328 = vst.msk [vmem:[%s2 + $0x2c8] sm:$0xff] %vm2238, %v2071
  %2329 = vst.msk [vmem:[%s2 + $0x2d0] sm:$0xff] %vm2238, %v2072
  %2330 = vst.msk [vmem:[%s2 + $0x2d8] sm:$0xff] %vm2238, %v2073
  %2331 = vst.msk [vmem:[%s2 + $0x2e0] sm:$0xff] %vm2238, %v2074
  %2332 = vst.msk [vmem:[%s2 + $0x2e8] sm:$0xff] %vm2238, %v2075
  %2333 = vst.msk [vmem:[%s2 + $0x2f0] sm:$0xff] %vm2238, %v2076
  %2334 = vst.msk [vmem:[%s2 + $0x2f8] sm:$0xff] %vm2238, %v2077
  %2335 = vst.msk [vmem:[%s2 + $0x300] sm:$0xff] %vm2238, %v2078
  %2336 = vst.msk [vmem:[%s2 + $0x308] sm:$0xff] %vm2238, %v2079
  %2337 = vst.msk [vmem:[%s2 + $0x310] sm:$0xff] %vm2238, %v2080
  %2338 = vst.msk [vmem:[%s2 + $0x318] sm:$0xff] %vm2238, %v2081
  %2339 = vst.msk [vmem:[%s2 + $0x320] sm:$0xff] %vm2238, %v2082
  %2340 = vst.msk [vmem:[%s2 + $0x328] sm:$0xff] %vm2238, %v2083
  %2341 = vst.msk [vmem:[%s2 + $0x330] sm:$0xff] %vm2238, %v2084
  %2342 = vst.msk [vmem:[%s2 + $0x338] sm:$0xff] %vm2238, %v2085
  %2343 = vst.msk [vmem:[%s2 + $0x340] sm:$0xff] %vm2238, %v2086
  %2344 = vst.msk [vmem:[%s2 + $0x348] sm:$0xff] %vm2238, %v2087
  %2345 = vst.msk [vmem:[%s2 + $0x350] sm:$0xff] %vm2238, %v2088
  %2346 = vst.msk [vmem:[%s2 + $0x358] sm:$0xff] %vm2238, %v2089
  %2347 = vst.msk [vmem:[%s2 + $0x360] sm:$0xff] %vm2238, %v2090
  %2348 = vst.msk [vmem:[%s2 + $0x368] sm:$0xff] %vm2238, %v2091
  %2349 = vst.msk [vmem:[%s2 + $0x370] sm:$0xff] %vm2238, %v2092
  %2350 = vst.msk [vmem:[%s2 + $0x378] sm:$0xff] %vm2238, %v2093
  %2351 = vst.msk [vmem:[%s2 + $0x380] sm:$0xff] %vm2238, %v2094
  %2352 = vst.msk [vmem:[%s2 + $0x388] sm:$0xff] %vm2238, %v2095
  %2353 = vst.msk [vmem:[%s2 + $0x390] sm:$0xff] %vm2238, %v2096
  %2354 = vst.msk [vmem:[%s2 + $0x398] sm:$0xff] %vm2238, %v2097
  %2355 = vst.msk [vmem:[%s2 + $0x3a0] sm:$0xff] %vm2238, %v2098
  %2356 = vst.msk [vmem:[%s2 + $0x3a8] sm:$0xff] %vm2238, %v2099
  %2357 = vst.msk [vmem:[%s2 + $0x3b0] sm:$0xff] %vm2238, %v2100
  %2358 = vst.msk [vmem:[%s2 + $0x3b8] sm:$0xff] %vm2238, %v2101
  %2359 = vst.msk [vmem:[%s2 + $0x3c0] sm:$0xff] %vm2238, %v2102
  %2360 = vst.msk [vmem:[%s2 + $0x3c8] sm:$0xff] %vm2238, %v2103
  %2361 = vst.msk [vmem:[%s2 + $0x3d0] sm:$0xff] %vm2238, %v2104
  %2362 = vst.msk [vmem:[%s2 + $0x3d8] sm:$0xff] %vm2238, %v2105
  %2363 = vst.msk [vmem:[%s2 + $0x3e0] sm:$0xff] %vm2238, %v2106
  %2364 = vst.msk [vmem:[%s2 + $0x3e8] sm:$0xff] %vm2238, %v2107
  %2365 = vst.msk [vmem:[%s2 + $0x3f0] sm:$0xff] %vm2238, %v2108
  %2366 = vst.msk [vmem:[%s2 + $0x3f8] sm:$0xff] %vm2238, %v2109
  %2367 = vst.msk [vmem:[%s2 + $0x400] sm:$0xff] %vm2238, %v2110
  %2368 = vst.msk [vmem:[%s2 + $0x408] sm:$0xff] %vm2238, %v2111
  %2369 = vst.msk [vmem:[%s2 + $0x410] sm:$0xff] %vm2238, %v2112
  %2370 = vst.msk [vmem:[%s2 + $0x418] sm:$0xff] %vm2238, %v2113
  %2371 = vst.msk [vmem:[%s2 + $0x420] sm:$0xff] %vm2238, %v2114
  %2372 = vst.msk [vmem:[%s2 + $0x428] sm:$0xff] %vm2238, %v2115
  %2373 = vst.msk [vmem:[%s2 + $0x430] sm:$0xff] %vm2238, %v2116
  %2374 = vst.msk [vmem:[%s2 + $0x438] sm:$0xff] %vm2238, %v2117
  %2375 = vst.msk [vmem:[%s2 + $0x440] sm:$0xff] %vm2238, %v2118
  %2376 = vst.msk [vmem:[%s2 + $0x448] sm:$0xff] %vm2238, %v2119
  %2377 = vst.msk [vmem:[%s2 + $0x450] sm:$0xff] %vm2238, %v2120
  %2378 = vst.msk [vmem:[%s2 + $0x458] sm:$0xff] %vm2238, %v2121
  %2379 = vst.msk [vmem:[%s2 + $0x460] sm:$0xff] %vm2238, %v2122
  %2380 = vst.msk [vmem:[%s2 + $0x468] sm:$0xff] %vm2238, %v2123
  %2381 = vst.msk [vmem:[%s2 + $0x470] sm:$0xff] %vm2238, %v2124
  %2382 = vst.msk [vmem:[%s2 + $0x478] sm:$0xff] %vm2238, %v2125
  %2383 = vst.msk [vmem:[%s2 + $0x480] sm:$0xff] %vm2238, %v2126
  %2384 = vst.msk [vmem:[%s2 + $0x488] sm:$0xff] %vm2238, %v2127
  %2385 = vst.msk [vmem:[%s2 + $0x490] sm:$0xff] %vm2238, %v2128
  %2386 = vst.msk [vmem:[%s2 + $0x498] sm:$0xff] %vm2238, %v2129
  %2387 = vst.msk [vmem:[%s2 + $0x4a0] sm:$0xff] %vm2238, %v2130
  %2388 = vst.msk [vmem:[%s2 + $0x4a8] sm:$0xff] %vm2238, %v2131
  %2389 = vst.msk [vmem:[%s2 + $0x4b0] sm:$0xff] %vm2238, %v2132
  %2390 = vst.msk [vmem:[%s2 + $0x4b8] sm:$0xff] %vm2238, %v2133
  %2391 = vst.msk [vmem:[%s2 + $0x4c0] sm:$0xff] %vm2238, %v2134
  %2392 = vst.msk [vmem:[%s2 + $0x4c8] sm:$0xff] %vm2238, %v2135
  %2393 = vst.msk [vmem:[%s2 + $0x4d0] sm:$0xff] %vm2238, %v2136
  %2394 = vst.msk [vmem:[%s2 + $0x4d8] sm:$0xff] %vm2238, %v2137
  %2395 = vst.msk [vmem:[%s2 + $0x4e0] sm:$0xff] %vm2238, %v2138
  %2396 = vst.msk [vmem:[%s2 + $0x4e8] sm:$0xff] %vm2238, %v2139
  %2397 = vst.msk [vmem:[%s2 + $0x4f0] sm:$0xff] %vm2238, %v2140
  %2398 = vst.msk [vmem:[%s2 + $0x4f8] sm:$0xff] %vm2238, %v2141
  %2399 = vst.msk [vmem:[%s2 + $0x500] sm:$0xff] %vm2238, %v2142
  %2400 = vst.msk [vmem:[%s2 + $0x508] sm:$0xff] %vm2238, %v2143
  %2401 = vst.msk [vmem:[%s2 + $0x510] sm:$0xff] %vm2238, %v2144
  %2402 = vst.msk [vmem:[%s2 + $0x518] sm:$0xff] %vm2238, %v2145
  %2403 = vst.msk [vmem:[%s2 + $0x520] sm:$0xff] %vm2238, %v2146
  %2404 = vst.msk [vmem:[%s2 + $0x528] sm:$0xff] %vm2238, %v2147
  %2405 = vst.msk [vmem:[%s2 + $0x530] sm:$0xff] %vm2238, %v2148
  %2406 = vst.msk [vmem:[%s2 + $0x538] sm:$0xff] %vm2238, %v2149
  %2407 = vst.msk [vmem:[%s2 + $0x540] sm:$0xff] %vm2238, %v2150
  %2408 = vst.msk [vmem:[%s2 + $0x548] sm:$0xff] %vm2238, %v2151
  %2409 = vst.msk [vmem:[%s2 + $0x550] sm:$0xff] %vm2238, %v2152
  %2410 = vst.msk [vmem:[%s2 + $0x558] sm:$0xff] %vm2238, %v2153
  %2411 = vst.msk [vmem:[%s2 + $0x560] sm:$0xff] %vm2238, %v2154
  %2412 = vst.msk [vmem:[%s2 + $0x568] sm:$0xff] %vm2238, %v2155
  %2413 = vst.msk [vmem:[%s2 + $0x570] sm:$0xff] %vm2238, %v2156
  %2414 = vst.msk [vmem:[%s2 + $0x578] sm:$0xff] %vm2238, %v2157
  %2415 = vst.msk [vmem:[%s2 + $0x580] sm:$0xff] %vm2238, %v2158
  %2416 = vst.msk [vmem:[%s2 + $0x588] sm:$0xff] %vm2238, %v2159
  %2417 = vst.msk [vmem:[%s2 + $0x590] sm:$0xff] %vm2238, %v2160
  %2418 = vst.msk [vmem:[%s2 + $0x598] sm:$0xff] %vm2238, %v2161
  %2419 = vst.msk [vmem:[%s2 + $0x5a0] sm:$0xff] %vm2238, %v2162
  %2420 = vst.msk [vmem:[%s2 + $0x5a8] sm:$0xff] %vm2238, %v2163
  %2421 = vst.msk [vmem:[%s2 + $0x5b0] sm:$0xff] %vm2238, %v2164
  %2422 = vst.msk [vmem:[%s2 + $0x5b8] sm:$0xff] %vm2238, %v2165
  %2423 = vst.msk [vmem:[%s2 + $0x5c0] sm:$0xff] %vm2238, %v2166
  %2424 = vst.msk [vmem:[%s2 + $0x5c8] sm:$0xff] %vm2238, %v2167
  %2425 = vst.msk [vmem:[%s2 + $0x5d0] sm:$0xff] %vm2238, %v2168
  %2426 = vst.msk [vmem:[%s2 + $0x5d8] sm:$0xff] %vm2238, %v2169
  %2427 = vst.msk [vmem:[%s2 + $0x5e0] sm:$0xff] %vm2238, %v2170
  %2428 = vst.msk [vmem:[%s2 + $0x5e8] sm:$0xff] %vm2238, %v2171
  %2429 = vst.msk [vmem:[%s2 + $0x5f0] sm:$0xff] %vm2238, %v2172
  %2430 = vst.msk [vmem:[%s2 + $0x5f8] sm:$0xff] %vm2238, %v2173
  %2431 = vst.msk [vmem:[%s2 + $0x600] sm:$0xff] %vm2238, %v2174
  %2432 = vst.msk [vmem:[%s2 + $0x608] sm:$0xff] %vm2238, %v2175
  %2433 = vst.msk [vmem:[%s2 + $0x610] sm:$0xff] %vm2238, %v2176
  %2434 = vst.msk [vmem:[%s2 + $0x618] sm:$0xff] %vm2238, %v2177
  %2435 = vst.msk [vmem:[%s2 + $0x620] sm:$0xff] %vm2238, %v2178
  %2436 = vst.msk [vmem:[%s2 + $0x628] sm:$0xff] %vm2238, %v2179
  %2437 = vst.msk [vmem:[%s2 + $0x630] sm:$0xff] %vm2238, %v2180
  %2438 = vst.msk [vmem:[%s2 + $0x638] sm:$0xff] %vm2238, %v2181
  %2439 = vst.msk [vmem:[%s2 + $0x640] sm:$0xff] %vm2238, %v2182
  %2440 = vst.msk [vmem:[%s2 + $0x648] sm:$0xff] %vm2238, %v2183
  %2441 = vst.msk [vmem:[%s2 + $0x650] sm:$0xff] %vm2238, %v2184
  %2442 = vst.msk [vmem:[%s2 + $0x658] sm:$0xff] %vm2238, %v2185
  %2443 = vst.msk [vmem:[%s2 + $0x660] sm:$0xff] %vm2238, %v2186
  %2444 = vst.msk [vmem:[%s2 + $0x668] sm:$0xff] %vm2238, %v2187
  %2445 = vst.msk [vmem:[%s2 + $0x670] sm:$0xff] %vm2238, %v2188
  %2446 = vst.msk [vmem:[%s2 + $0x678] sm:$0xff] %vm2238, %v2189
  %2447 = vst.msk [vmem:[%s2 + $0x680] sm:$0xff] %vm2238, %v2190
  %2448 = vst.msk [vmem:[%s2 + $0x688] sm:$0xff] %vm2238, %v2191
  %2449 = vst.msk [vmem:[%s2 + $0x690] sm:$0xff] %vm2238, %v2192
  %2450 = vst.msk [vmem:[%s2 + $0x698] sm:$0xff] %vm2238, %v2193
  %2451 = vst.msk [vmem:[%s2 + $0x6a0] sm:$0xff] %vm2238, %v2194
  %2452 = vst.msk [vmem:[%s2 + $0x6a8] sm:$0xff] %vm2238, %v2195
  %2453 = vst.msk [vmem:[%s2 + $0x6b0] sm:$0xff] %vm2238, %v2196
  %2454 = vst.msk [vmem:[%s2 + $0x6b8] sm:$0xff] %vm2238, %v2197
  %2455 = vst.msk [vmem:[%s2 + $0x6c0] sm:$0xff] %vm2238, %v2198
  %2456 = vst.msk [vmem:[%s2 + $0x6c8] sm:$0xff] %vm2238, %v2199
  %2457 = vst.msk [vmem:[%s2 + $0x6d0] sm:$0xff] %vm2238, %v2200
  %2458 = vst.msk [vmem:[%s2 + $0x6d8] sm:$0xff] %vm2238, %v2201
  %2459 = vst.msk [vmem:[%s2 + $0x6e0] sm:$0xff] %vm2238, %v2202
  %2460 = vst.msk [vmem:[%s2 + $0x6e8] sm:$0xff] %vm2238, %v2203
  %2461 = vst.msk [vmem:[%s2 + $0x6f0] sm:$0xff] %vm2238, %v2204
  %2462 = vst.msk [vmem:[%s2 + $0x6f8] sm:$0xff] %vm2238, %v2205
  %2463 = vst.msk [vmem:[%s2 + $0x700] sm:$0xff] %vm2238, %v2206
  %2464 = vst.msk [vmem:[%s2 + $0x708] sm:$0xff] %vm2238, %v2207
  %2465 = vst.msk [vmem:[%s2 + $0x710] sm:$0xff] %vm2238, %v2208
  %2466 = vst.msk [vmem:[%s2 + $0x718] sm:$0xff] %vm2238, %v2209
  %2467 = vst.msk [vmem:[%s2 + $0x720] sm:$0xff] %vm2238, %v2210
  %2468 = vst.msk [vmem:[%s2 + $0x728] sm:$0xff] %vm2238, %v2211
  %2469 = vst.msk [vmem:[%s2 + $0x730] sm:$0xff] %vm2238, %v2212
  %2470 = vst.msk [vmem:[%s2 + $0x738] sm:$0xff] %vm2238, %v2213
  %2471 = vst.msk [vmem:[%s2 + $0x740] sm:$0xff] %vm2238, %v2214
  %2472 = vst.msk [vmem:[%s2 + $0x748] sm:$0xff] %vm2238, %v2215
  %2473 = vst.msk [vmem:[%s2 + $0x750] sm:$0xff] %vm2238, %v2216
  %2474 = vst.msk [vmem:[%s2 + $0x758] sm:$0xff] %vm2238, %v2217
  %2475 = vst.msk [vmem:[%s2 + $0x760] sm:$0xff] %vm2238, %v2218
  %2476 = vst.msk [vmem:[%s2 + $0x768] sm:$0xff] %vm2238, %v2219
  %2477 = vst.msk [vmem:[%s2 + $0x770] sm:$0xff] %vm2238, %v2220
  %2478 = vst.msk [vmem:[%s2 + $0x778] sm:$0xff] %vm2238, %v2221
  %2479 = vst.msk [vmem:[%s2 + $0x780] sm:$0xff] %vm2238, %v2222
  %2480 = vst.msk [vmem:[%s2 + $0x788] sm:$0xff] %vm2238, %v2223
  %2481 = vst.msk [vmem:[%s2 + $0x790] sm:$0xff] %vm2238, %v2224
  %2482 = vst.msk [vmem:[%s2 + $0x798] sm:$0xff] %vm2238, %v2225
  %2483 = vst.msk [vmem:[%s2 + $0x7a0] sm:$0xff] %vm2238, %v2226
  %2484 = vst.msk [vmem:[%s2 + $0x7a8] sm:$0xff] %vm2238, %v2227
  %2485 = vst.msk [vmem:[%s2 + $0x7b0] sm:$0xff] %vm2238, %v2228
  %2486 = vst.msk [vmem:[%s2 + $0x7b8] sm:$0xff] %vm2238, %v2229
  %2487 = vst.msk [vmem:[%s2 + $0x7c0] sm:$0xff] %vm2238, %v2230
  %2488 = vst.msk [vmem:[%s2 + $0x7c8] sm:$0xff] %vm2238, %v2231
  %2489 = vst.msk [vmem:[%s2 + $0x7d0] sm:$0xff] %vm2238, %v2232
  %2490 = vst.msk [vmem:[%s2 + $0x7d8] sm:$0xff] %vm2238, %v2233
  %2491 = vst.msk [vmem:[%s2 + $0x7e0] sm:$0xff] %vm2238, %v2234
  %2492 = vst.msk [vmem:[%s2 + $0x7e8] sm:$0xff] %vm2238, %v2235
  %2493 = vst.msk [vmem:[%s2 + $0x7f0] sm:$0xff] %vm2238, %v2236
  %2494 = vst.msk [vmem:[%s2 + $0x7f8] sm:$0xff] %vm2238, %v2237
  // Predicated region
  $region10: #{netg_forward.9} parent=0 // pred_check
    _
  $region11: #{netg_forward.9} parent=0 // pred_check_branch
    %2496 = sbr.rel (0) target = $region13
  $region12: #{netg_forward.9} parent=0 // pred_region
    _
  $region13: #{netg_forward.9} parent=0 // pred_fallthru
    _
  // Predicated region
  $region14: #{netg_forward.9} parent=0 // pred_check
    _
  $region15: #{netg_forward.9} parent=0 // pred_check_branch
    %2498 = sbr.rel (0) target = $region17
  $region16: #{netg_forward.9} parent=0 // pred_region
    _
  $region17: #{netg_forward.9} parent=0 // pred_fallthru
    _

</llo_original>
